<compile_context>
chip_gen: v7x
topology: tpu7x:2x2x1
jax: 0.10.0
libtpu: 0.0.40
codegen_flags: <defaults>
</compile_context>

<pallas_src>
import functools
import math

import numpy as np
import jax
import jax.numpy as jnp
from jax.experimental import pallas as pl
from jax.experimental.pallas import tpu as pltpu

EPS = 1e-5  # nn.BatchNorm3d default eps


def pad_spectral(dim, kernel, stride):
    p = (math.ceil(dim / stride) - 1) * stride + kernel - dim
    return (max(p, 0) + 1) // 2


# ----------------------------- Pallas kernel ---------------------------------

def fused_net_kernel(z0_ref,
                     w1_ref, w2_ref, w3_ref,
                     b1_ref, g1_ref, be1_ref,
                     b2_ref, g2_ref, be2_ref,
                     b3_ref, g3_ref, be3_ref,
                     m1_ref, m2_ref, m3_ref,
                     o_ref, *, cfg):
    """Whole Net forward in one kernel.

    z0_ref : (Dpad0*C_in0, N0+SMAX) f32  layer-1 input slab, rows (d, c), cols (b, h, w),
                                         spectral zero-padding rows + SMAX zero tail cols.
    w*_ref : (9*C_out, 5*C_in)      f32  weights, row=(kh*3+kw)*C_out+co, col=kd*C_in+ci.
    b/g/be : (C_out, 1)             f32  conv bias / BN gamma / BN beta per layer.
    m*_ref : (1, N0)                f32  validity masks (1 where (h, w) is a real conv
                                         output position for that layer).
    o_ref  : (Do_f*C_out, B)        f32  pooled result, row = do*C_out + c, col = batch.
    """
    B, W0, HW0, SMAX, layer_cfgs = cfg
    N0 = B * HW0

    w_refs = (w1_ref, w2_ref, w3_ref)
    b_refs = (b1_ref, b2_ref, b3_ref)
    g_refs = (g1_ref, g2_ref, g3_ref)
    be_refs = (be1_ref, be2_ref, be3_ref)
    m_refs = (m1_ref, m2_ref, m3_ref)

    zwide = z0_ref[...]                                   # (Dpad*C_in, N0+SMAX) f32
    z_list = None

    for li, (C_in, C_out, Dpad, Do, count, pad_next) in enumerate(layer_cfgs):
        wfull = w_refs[li][...]                           # (9*C_out, 5*C_in) f32
        bias = b_refs[li][...]                            # (C_out, 1)
        gamma = g_refs[li][...]
        beta = be_refs[li][...]
        mask = m_refs[li][...]                            # (1, N0)

        # ---- Conv3d as 9 lane-shifted windows x per-depth MXU matmuls (f32 acc) ----
        accs = [None] * Do
        for kh in range(3):
            for kw in range(3):
                k = kh * 3 + kw
                s = kh * W0 + kw
                zs = zwide[:, s:s + N0]                   # shifted window, (Dpad*C_in, N0)
                wk = wfull[k * C_out:(k + 1) * C_out, :].astype(jnp.bfloat16)
                for do in range(Do):
                    slab = zs[do * 3 * C_in:(do * 3 + 5) * C_in, :].astype(jnp.bfloat16)
                    p = jnp.dot(wk, slab, preferred_element_type=jnp.float32)
                    accs[do] = p if accs[do] is None else accs[do] + p

        # ---- bias + ReLU + training-mode BatchNorm over valid positions only ----
        relu = [jnp.maximum(a + bias, 0.0) for a in accs]
        s1 = jnp.zeros((C_out, 1), jnp.float32)
        s2 = jnp.zeros((C_out, 1), jnp.float32)
        for r in relu:
            rm = r * mask                                  # zero out invalid columns
            s1 = s1 + jnp.sum(rm, axis=1, keepdims=True)
            s2 = s2 + jnp.sum(rm * r, axis=1, keepdims=True)
        inv_n = 1.0 / count
        mean = s1 * inv_n
        var = jnp.maximum(s2 * inv_n - mean * mean, 0.0)
        scale = gamma * jax.lax.rsqrt(var + EPS)
        shift = beta - mean * scale
        z_list = [r * scale + shift for r in relu]         # Do x (C_out, N0) f32

        # ---- build next layer's input slab (spectral zero padding rows + zero tail) ----
        if pad_next is not None:
            pieces = []
            if pad_next > 0:
                zpad_blk = jnp.zeros((pad_next * C_out, N0), jnp.float32)
                pieces.append(zpad_blk)
            pieces.extend(z_list)
            if pad_next > 0:
                pieces.append(zpad_blk)
            znext = jnp.concatenate(pieces, axis=0)
            tail = jnp.zeros((znext.shape[0], SMAX), jnp.float32)
            zwide = jnp.concatenate([znext, tail], axis=1)

    # ---- adaptive_max_pool3d(.., (None, 1, 1)): max over the valid (H, W) window ----
    C_out_f = layer_cfgs[-1][1]
    Do_f = layer_cfgs[-1][3]
    last_mask = m_refs[len(layer_cfgs) - 1][...]
    out_blocks = []
    for do in range(Do_f):
        z = z_list[do]
        cols = []
        for bi in range(B):
            zb = z[:, bi * HW0:(bi + 1) * HW0]             # (C_out, HW0) slice for batch bi
            mb = last_mask[:, bi * HW0:(bi + 1) * HW0] > 0.5
            zb = jnp.where(mb, zb, -jnp.inf)
            cols.append(jnp.max(zb, axis=1, keepdims=True))
        out_blocks.append(jnp.concatenate(cols, axis=1))   # (C_out, B)
    o_ref[...] = (jnp.concatenate(out_blocks, axis=0)
                  if Do_f > 1 else out_blocks[0])


# ------------------------------ wrapper (JAX) ----------------------------------

def make_net(params, *, B, C_in0, D0, H, W):
    """Build a jitted  x (B, C, D, H, W) -> (B, hidden * out_dim)  forward pass."""
    W0, H0 = W, H
    HW0 = H0 * W0
    N0 = B * HW0
    SMAX = 2 * W0 + 2                                      # max (kh, kw) lane shift

    layer_cfgs, wrs, biases, gammas, betas, masks = [], [], [], [], [], []
    D = D0
    Hv, Wv = H0, W0
    for li, (w, b, g, be, pad_d) in enumerate(params):
        C_out, C_in = int(w.shape[0]), int(w.shape[1])
        Dpad = D + 2 * pad_d
        Do = (Dpad - 5) // 3 + 1
        Hv, Wv = Hv - 2, Wv - 2                            # valid conv-output window
        count = float(B * Do * Hv * Wv)
        pad_next = params[li + 1][4] if li + 1 < len(params) else None
        layer_cfgs.append((C_in, C_out, Dpad, Do, count, pad_next))

        # weights: (co, ci, kd, kh, kw) -> rows (kh, kw, co), cols (kd, ci)
        wrs.append(jnp.transpose(w, (3, 4, 0, 2, 1)).reshape(9 * C_out, 5 * C_in)
                   .astype(jnp.float32))
        biases.append(b.reshape(C_out, 1).astype(jnp.float32))
        gammas.append(g.reshape(C_out, 1).astype(jnp.float32))
        betas.append(be.reshape(C_out, 1).astype(jnp.float32))

        m2d = ((np.arange(H0)[:, None] < Hv) & (np.arange(W0)[None, :] < Wv))
        m2d = m2d.astype(np.float32).reshape(-1)
        masks.append(jnp.asarray(np.tile(m2d, B).reshape(1, N0)))
        D = Do

    Do_f = layer_cfgs[-1][3]
    C_out_f = layer_cfgs[-1][1]
    pad0 = params[0][4]

    cfg = (B, W0, HW0, SMAX, tuple(layer_cfgs))
    kernel = functools.partial(fused_net_kernel, cfg=cfg)
    vmem = pl.BlockSpec(memory_space=pltpu.MemorySpace.VMEM)
    call = pl.pallas_call(
        kernel,
        out_shape=jax.ShapeDtypeStruct((Do_f * C_out_f, B), jnp.float32),
        in_specs=[vmem] * 16,
        out_specs=vmem,
    )

    def forward(x):
        # Only remaining XLA glue: a layout transform + zero-pad of the compact raw input.
        xt = jnp.transpose(x, (2, 1, 0, 3, 4))             # (D, C, B, H, W)
        xt = jnp.pad(xt, ((pad0, pad0), (0, 0), (0, 0), (0, 0), (0, 0)))
        z0 = xt.reshape((D0 + 2 * pad0) * C_in0, N0)
        z0 = jnp.pad(z0, ((0, 0), (0, SMAX)))              # zero tail for window shifts
        out = call(z0, wrs[0], wrs[1], wrs[2],
                   biases[0], gammas[0], betas[0],
                   biases[1], gammas[1], betas[1],
                   biases[2], gammas[2], betas[2],
                   masks[0], masks[1], masks[2])
        # (Do_f*C_out, B) -> (B, C_out*Do_f) : matches h.view(batch, -1)
        return out.reshape(Do_f, C_out_f, B).transpose(2, 1, 0).reshape(B, C_out_f * Do_f)

    return jax.jit(forward)


# --------------------------- pure-JAX reference --------------------------------
# Conv operands are bf16-rounded (f32 accumulation) to mirror the kernel's bf16-MXU
# numerics; the 1e-2 tolerance is comfortably met.

def reference_net(x, params):
    h = x
    for (w, b, gamma, beta, pad_d) in params:
        hb = h.astype(jnp.bfloat16).astype(jnp.float32)
        wb = w.astype(jnp.bfloat16).astype(jnp.float32)
        y = jax.lax.conv_general_dilated(
            hb, wb, window_strides=(3, 1, 1),
            padding=[(pad_d, pad_d), (0, 0), (0, 0)],
            dimension_numbers=('NCDHW', 'OIDHW', 'NCDHW'),
            precision=jax.lax.Precision.HIGHEST)
        y = y + b.reshape(1, -1, 1, 1, 1)
        y = jnp.maximum(y, 0.0)
        mean = jnp.mean(y, axis=(0, 2, 3, 4), keepdims=True)
        var = jnp.mean(jnp.square(y), axis=(0, 2, 3, 4), keepdims=True) - mean * mean
        var = jnp.maximum(var, 0.0)
        h = (y - mean) * jax.lax.rsqrt(var + EPS) * gamma.reshape(1, -1, 1, 1, 1) \
            + beta.reshape(1, -1, 1, 1, 1)
    pooled = jnp.max(h, axis=(3, 4))                       # adaptive_max_pool3d(h, (None,1,1))
    return pooled.reshape(h.shape[0], -1)                  # view(batch, -1)


# --------------------------------- main -----------------------------------------

if __name__ == "__main__":
    in_channel, hidden_size, dim = 4, 8, 16
    B, H, W = 2, 9, 9

    key = jax.random.PRNGKey(0)
    kx, *kp = jax.random.split(key, 13)
    x = jax.random.normal(kx, (B, in_channel, dim, H, W), dtype=jnp.float32)

    # deterministic parameter init (3 layers of Conv3d + BatchNorm3d)
    params = []
    d, c_in = dim, in_channel
    ks = iter(kp)
    for _layer in range(3):
        p = pad_spectral(d, 5, 3)
        w = 0.1 * jax.random.normal(next(ks), (hidden_size, c_in, 5, 3, 3), jnp.float32)
        b = 0.1 * jax.random.normal(next(ks), (hidden_size,), jnp.float32)
        gamma = 1.0 + 0.1 * jax.random.normal(next(ks), (hidden_size,), jnp.float32)
        beta = 0.1 * jax.random.normal(next(ks), (hidden_size,), jnp.float32)
        params.append((w, b, gamma, beta, p))
        d = (d - 5 + 2 * p) // 3 + 1
        c_in = hidden_size
    out_dim = d                                            # Encoder.out_dim

    net = make_net(params, B=B, C_in0=in_channel, D0=dim, H=H, W=W)
    out = jax.block_until_ready(net(x))

    ref = reference_net(x, params)
    assert out.shape == ref.shape == (B, hidden_size * out_dim), (out.shape, ref.shape)
    max_err = float(jnp.max(jnp.abs(out - ref)))
    if not jnp.allclose(out, ref, rtol=1e-2, atol=1e-2):
        raise AssertionError(f"Pallas Net mismatch vs reference, max abs err = {max_err}")
    print("KERNEL_OK")
</pallas_src>

<mosaic_0001>
module attributes {stable_mosaic.version = 11 : i64} {
  func.func @fused_net_kernel(%arg0: memref<80x182xf32, #tpu.memory_space<vmem>>, %arg1: memref<72x20xf32, #tpu.memory_space<vmem>>, %arg2: memref<72x40xf32, #tpu.memory_space<vmem>>, %arg3: memref<72x40xf32, #tpu.memory_space<vmem>>, %arg4: memref<8x1xf32, #tpu.memory_space<vmem>>, %arg5: memref<8x1xf32, #tpu.memory_space<vmem>>, %arg6: memref<8x1xf32, #tpu.memory_space<vmem>>, %arg7: memref<8x1xf32, #tpu.memory_space<vmem>>, %arg8: memref<8x1xf32, #tpu.memory_space<vmem>>, %arg9: memref<8x1xf32, #tpu.memory_space<vmem>>, %arg10: memref<8x1xf32, #tpu.memory_space<vmem>>, %arg11: memref<8x1xf32, #tpu.memory_space<vmem>>, %arg12: memref<8x1xf32, #tpu.memory_space<vmem>>, %arg13: memref<1x162xf32, #tpu.memory_space<vmem>>, %arg14: memref<1x162xf32, #tpu.memory_space<vmem>>, %arg15: memref<1x162xf32, #tpu.memory_space<vmem>>, %arg16: memref<8x2xf32, #tpu.memory_space<vmem>>) attributes {dimension_semantics = [], scalar_prefetch = 0 : i64, scratch_operands = 0 : i64, tpu.core_type = #tpu.core_type<tc>} {
    %c0 = arith.constant 0 : index
    %c0_0 = arith.constant 0 : index
    %0 = vector.load %arg0[%c0, %c0_0] : memref<80x182xf32, #tpu.memory_space<vmem>>, vector<80x182xf32>
    %c0_1 = arith.constant 0 : index
    %c0_2 = arith.constant 0 : index
    %1 = vector.load %arg1[%c0_1, %c0_2] : memref<72x20xf32, #tpu.memory_space<vmem>>, vector<72x20xf32>
    %c0_3 = arith.constant 0 : index
    %c0_4 = arith.constant 0 : index
    %2 = vector.load %arg4[%c0_3, %c0_4] : memref<8x1xf32, #tpu.memory_space<vmem>>, vector<8x1xf32>
    %c0_5 = arith.constant 0 : index
    %c0_6 = arith.constant 0 : index
    %3 = vector.load %arg5[%c0_5, %c0_6] : memref<8x1xf32, #tpu.memory_space<vmem>>, vector<8x1xf32>
    %c0_7 = arith.constant 0 : index
    %c0_8 = arith.constant 0 : index
    %4 = vector.load %arg6[%c0_7, %c0_8] : memref<8x1xf32, #tpu.memory_space<vmem>>, vector<8x1xf32>
    %c0_9 = arith.constant 0 : index
    %c0_10 = arith.constant 0 : index
    %5 = vector.load %arg13[%c0_9, %c0_10] : memref<1x162xf32, #tpu.memory_space<vmem>>, vector<1x162xf32>
    %6 = vector.extract_strided_slice %0 {offsets = [0, 0], sizes = [80, 162], strides = [1, 1]} : vector<80x182xf32> to vector<80x162xf32>
    %7 = vector.extract_strided_slice %1 {offsets = [0, 0], sizes = [8, 20], strides = [1, 1]} : vector<72x20xf32> to vector<8x20xf32>
    %8 = arith.truncf %7 : vector<8x20xf32> to vector<8x20xbf16>
    %9 = vector.extract_strided_slice %6 {offsets = [0, 0], sizes = [20, 162], strides = [1, 1]} : vector<80x162xf32> to vector<20x162xf32>
    %10 = arith.truncf %9 : vector<20x162xf32> to vector<20x162xbf16>
    %cst = arith.constant dense<0.000000e+00> : vector<8x162xf32>
    %11 = tpu.matmul %8, %10, %cst {dimension_numbers = #tpu.dot_dimension_numbers<[1], [0], [0], [1], [0, 0, 1, 1], [], []>} : vector<8x20xbf16>, vector<20x162xbf16>, vector<8x162xf32> -> vector<8x162xf32>
    %12 = vector.extract_strided_slice %6 {offsets = [12, 0], sizes = [20, 162], strides = [1, 1]} : vector<80x162xf32> to vector<20x162xf32>
    %13 = arith.truncf %12 : vector<20x162xf32> to vector<20x162xbf16>
    %cst_11 = arith.constant dense<0.000000e+00> : vector<8x162xf32>
    %14 = tpu.matmul %8, %13, %cst_11 {dimension_numbers = #tpu.dot_dimension_numbers<[1], [0], [0], [1], [0, 0, 1, 1], [], []>} : vector<8x20xbf16>, vector<20x162xbf16>, vector<8x162xf32> -> vector<8x162xf32>
    %15 = vector.extract_strided_slice %6 {offsets = [24, 0], sizes = [20, 162], strides = [1, 1]} : vector<80x162xf32> to vector<20x162xf32>
    %16 = arith.truncf %15 : vector<20x162xf32> to vector<20x162xbf16>
    %cst_12 = arith.constant dense<0.000000e+00> : vector<8x162xf32>
    %17 = tpu.matmul %8, %16, %cst_12 {dimension_numbers = #tpu.dot_dimension_numbers<[1], [0], [0], [1], [0, 0, 1, 1], [], []>} : vector<8x20xbf16>, vector<20x162xbf16>, vector<8x162xf32> -> vector<8x162xf32>
    %18 = vector.extract_strided_slice %6 {offsets = [36, 0], sizes = [20, 162], strides = [1, 1]} : vector<80x162xf32> to vector<20x162xf32>
    %19 = arith.truncf %18 : vector<20x162xf32> to vector<20x162xbf16>
    %cst_13 = arith.constant dense<0.000000e+00> : vector<8x162xf32>
    %20 = tpu.matmul %8, %19, %cst_13 {dimension_numbers = #tpu.dot_dimension_numbers<[1], [0], [0], [1], [0, 0, 1, 1], [], []>} : vector<8x20xbf16>, vector<20x162xbf16>, vector<8x162xf32> -> vector<8x162xf32>
    %21 = vector.extract_strided_slice %6 {offsets = [48, 0], sizes = [20, 162], strides = [1, 1]} : vector<80x162xf32> to vector<20x162xf32>
    %22 = arith.truncf %21 : vector<20x162xf32> to vector<20x162xbf16>
    %cst_14 = arith.constant dense<0.000000e+00> : vector<8x162xf32>
    %23 = tpu.matmul %8, %22, %cst_14 {dimension_numbers = #tpu.dot_dimension_numbers<[1], [0], [0], [1], [0, 0, 1, 1], [], []>} : vector<8x20xbf16>, vector<20x162xbf16>, vector<8x162xf32> -> vector<8x162xf32>
    %24 = vector.extract_strided_slice %6 {offsets = [60, 0], sizes = [20, 162], strides = [1, 1]} : vector<80x162xf32> to vector<20x162xf32>
    %25 = arith.truncf %24 : vector<20x162xf32> to vector<20x162xbf16>
    %cst_15 = arith.constant dense<0.000000e+00> : vector<8x162xf32>
    %26 = tpu.matmul %8, %25, %cst_15 {dimension_numbers = #tpu.dot_dimension_numbers<[1], [0], [0], [1], [0, 0, 1, 1], [], []>} : vector<8x20xbf16>, vector<20x162xbf16>, vector<8x162xf32> -> vector<8x162xf32>
    %27 = vector.extract_strided_slice %0 {offsets = [0, 1], sizes = [80, 162], strides = [1, 1]} : vector<80x182xf32> to vector<80x162xf32>
    %28 = vector.extract_strided_slice %1 {offsets = [8, 0], sizes = [8, 20], strides = [1, 1]} : vector<72x20xf32> to vector<8x20xf32>
    %29 = arith.truncf %28 : vector<8x20xf32> to vector<8x20xbf16>
    %30 = vector.extract_strided_slice %27 {offsets = [0, 0], sizes = [20, 162], strides = [1, 1]} : vector<80x162xf32> to vector<20x162xf32>
    %31 = arith.truncf %30 : vector<20x162xf32> to vector<20x162xbf16>
    %cst_16 = arith.constant dense<0.000000e+00> : vector<8x162xf32>
    %32 = tpu.matmul %29, %31, %cst_16 {dimension_numbers = #tpu.dot_dimension_numbers<[1], [0], [0], [1], [0, 0, 1, 1], [], []>} : vector<8x20xbf16>, vector<20x162xbf16>, vector<8x162xf32> -> vector<8x162xf32>
    %33 = arith.addf %11, %32 : vector<8x162xf32>
    %34 = vector.extract_strided_slice %27 {offsets = [12, 0], sizes = [20, 162], strides = [1, 1]} : vector<80x162xf32> to vector<20x162xf32>
    %35 = arith.truncf %34 : vector<20x162xf32> to vector<20x162xbf16>
    %cst_17 = arith.constant dense<0.000000e+00> : vector<8x162xf32>
    %36 = tpu.matmul %29, %35, %cst_17 {dimension_numbers = #tpu.dot_dimension_numbers<[1], [0], [0], [1], [0, 0, 1, 1], [], []>} : vector<8x20xbf16>, vector<20x162xbf16>, vector<8x162xf32> -> vector<8x162xf32>
    %37 = arith.addf %14, %36 : vector<8x162xf32>
    %38 = vector.extract_strided_slice %27 {offsets = [24, 0], sizes = [20, 162], strides = [1, 1]} : vector<80x162xf32> to vector<20x162xf32>
    %39 = arith.truncf %38 : vector<20x162xf32> to vector<20x162xbf16>
    %cst_18 = arith.constant dense<0.000000e+00> : vector<8x162xf32>
    %40 = tpu.matmul %29, %39, %cst_18 {dimension_numbers = #tpu.dot_dimension_numbers<[1], [0], [0], [1], [0, 0, 1, 1], [], []>} : vector<8x20xbf16>, vector<20x162xbf16>, vector<8x162xf32> -> vector<8x162xf32>
    %41 = arith.addf %17, %40 : vector<8x162xf32>
    %42 = vector.extract_strided_slice %27 {offsets = [36, 0], sizes = [20, 162], strides = [1, 1]} : vector<80x162xf32> to vector<20x162xf32>
    %43 = arith.truncf %42 : vector<20x162xf32> to vector<20x162xbf16>
    %cst_19 = arith.constant dense<0.000000e+00> : vector<8x162xf32>
    %44 = tpu.matmul %29, %43, %cst_19 {dimension_numbers = #tpu.dot_dimension_numbers<[1], [0], [0], [1], [0, 0, 1, 1], [], []>} : vector<8x20xbf16>, vector<20x162xbf16>, vector<8x162xf32> -> vector<8x162xf32>
    %45 = arith.addf %20, %44 : vector<8x162xf32>
    %46 = vector.extract_strided_slice %27 {offsets = [48, 0], sizes = [20, 162], strides = [1, 1]} : vector<80x162xf32> to vector<20x162xf32>
    %47 = arith.truncf %46 : vector<20x162xf32> to vector<20x162xbf16>
    %cst_20 = arith.constant dense<0.000000e+00> : vector<8x162xf32>
    %48 = tpu.matmul %29, %47, %cst_20 {dimension_numbers = #tpu.dot_dimension_numbers<[1], [0], [0], [1], [0, 0, 1, 1], [], []>} : vector<8x20xbf16>, vector<20x162xbf16>, vector<8x162xf32> -> vector<8x162xf32>
    %49 = arith.addf %23, %48 : vector<8x162xf32>
    %50 = vector.extract_strided_slice %27 {offsets = [60, 0], sizes = [20, 162], strides = [1, 1]} : vector<80x162xf32> to vector<20x162xf32>
    %51 = arith.truncf %50 : vector<20x162xf32> to vector<20x162xbf16>
    %cst_21 = arith.constant dense<0.000000e+00> : vector<8x162xf32>
    %52 = tpu.matmul %29, %51, %cst_21 {dimension_numbers = #tpu.dot_dimension_numbers<[1], [0], [0], [1], [0, 0, 1, 1], [], []>} : vector<8x20xbf16>, vector<20x162xbf16>, vector<8x162xf32> -> vector<8x162xf32>
    %53 = arith.addf %26, %52 : vector<8x162xf32>
    %54 = vector.extract_strided_slice %0 {offsets = [0, 2], sizes = [80, 162], strides = [1, 1]} : vector<80x182xf32> to vector<80x162xf32>
    %55 = vector.extract_strided_slice %1 {offsets = [16, 0], sizes = [8, 20], strides = [1, 1]} : vector<72x20xf32> to vector<8x20xf32>
    %56 = arith.truncf %55 : vector<8x20xf32> to vector<8x20xbf16>
    %57 = vector.extract_strided_slice %54 {offsets = [0, 0], sizes = [20, 162], strides = [1, 1]} : vector<80x162xf32> to vector<20x162xf32>
    %58 = arith.truncf %57 : vector<20x162xf32> to vector<20x162xbf16>
    %cst_22 = arith.constant dense<0.000000e+00> : vector<8x162xf32>
    %59 = tpu.matmul %56, %58, %cst_22 {dimension_numbers = #tpu.dot_dimension_numbers<[1], [0], [0], [1], [0, 0, 1, 1], [], []>} : vector<8x20xbf16>, vector<20x162xbf16>, vector<8x162xf32> -> vector<8x162xf32>
    %60 = arith.addf %33, %59 : vector<8x162xf32>
    %61 = vector.extract_strided_slice %54 {offsets = [12, 0], sizes = [20, 162], strides = [1, 1]} : vector<80x162xf32> to vector<20x162xf32>
    %62 = arith.truncf %61 : vector<20x162xf32> to vector<20x162xbf16>
    %cst_23 = arith.constant dense<0.000000e+00> : vector<8x162xf32>
    %63 = tpu.matmul %56, %62, %cst_23 {dimension_numbers = #tpu.dot_dimension_numbers<[1], [0], [0], [1], [0, 0, 1, 1], [], []>} : vector<8x20xbf16>, vector<20x162xbf16>, vector<8x162xf32> -> vector<8x162xf32>
    %64 = arith.addf %37, %63 : vector<8x162xf32>
    %65 = vector.extract_strided_slice %54 {offsets = [24, 0], sizes = [20, 162], strides = [1, 1]} : vector<80x162xf32> to vector<20x162xf32>
    %66 = arith.truncf %65 : vector<20x162xf32> to vector<20x162xbf16>
    %cst_24 = arith.constant dense<0.000000e+00> : vector<8x162xf32>
    %67 = tpu.matmul %56, %66, %cst_24 {dimension_numbers = #tpu.dot_dimension_numbers<[1], [0], [0], [1], [0, 0, 1, 1], [], []>} : vector<8x20xbf16>, vector<20x162xbf16>, vector<8x162xf32> -> vector<8x162xf32>
    %68 = arith.addf %41, %67 : vector<8x162xf32>
    %69 = vector.extract_strided_slice %54 {offsets = [36, 0], sizes = [20, 162], strides = [1, 1]} : vector<80x162xf32> to vector<20x162xf32>
    %70 = arith.truncf %69 : vector<20x162xf32> to vector<20x162xbf16>
    %cst_25 = arith.constant dense<0.000000e+00> : vector<8x162xf32>
    %71 = tpu.matmul %56, %70, %cst_25 {dimension_numbers = #tpu.dot_dimension_numbers<[1], [0], [0], [1], [0, 0, 1, 1], [], []>} : vector<8x20xbf16>, vector<20x162xbf16>, vector<8x162xf32> -> vector<8x162xf32>
    %72 = arith.addf %45, %71 : vector<8x162xf32>
    %73 = vector.extract_strided_slice %54 {offsets = [48, 0], sizes = [20, 162], strides = [1, 1]} : vector<80x162xf32> to vector<20x162xf32>
    %74 = arith.truncf %73 : vector<20x162xf32> to vector<20x162xbf16>
    %cst_26 = arith.constant dense<0.000000e+00> : vector<8x162xf32>
    %75 = tpu.matmul %56, %74, %cst_26 {dimension_numbers = #tpu.dot_dimension_numbers<[1], [0], [0], [1], [0, 0, 1, 1], [], []>} : vector<8x20xbf16>, vector<20x162xbf16>, vector<8x162xf32> -> vector<8x162xf32>
    %76 = arith.addf %49, %75 : vector<8x162xf32>
    %77 = vector.extract_strided_slice %54 {offsets = [60, 0], sizes = [20, 162], strides = [1, 1]} : vector<80x162xf32> to vector<20x162xf32>
    %78 = arith.truncf %77 : vector<20x162xf32> to vector<20x162xbf16>
    %cst_27 = arith.constant dense<0.000000e+00> : vector<8x162xf32>
    %79 = tpu.matmul %56, %78, %cst_27 {dimension_numbers = #tpu.dot_dimension_numbers<[1], [0], [0], [1], [0, 0, 1, 1], [], []>} : vector<8x20xbf16>, vector<20x162xbf16>, vector<8x162xf32> -> vector<8x162xf32>
    %80 = arith.addf %53, %79 : vector<8x162xf32>
    %81 = vector.extract_strided_slice %0 {offsets = [0, 9], sizes = [80, 162], strides = [1, 1]} : vector<80x182xf32> to vector<80x162xf32>
    %82 = vector.extract_strided_slice %1 {offsets = [24, 0], sizes = [8, 20], strides = [1, 1]} : vector<72x20xf32> to vector<8x20xf32>
    %83 = arith.truncf %82 : vector<8x20xf32> to vector<8x20xbf16>
    %84 = vector.extract_strided_slice %81 {offsets = [0, 0], sizes = [20, 162], strides = [1, 1]} : vector<80x162xf32> to vector<20x162xf32>
    %85 = arith.truncf %84 : vector<20x162xf32> to vector<20x162xbf16>
    %cst_28 = arith.constant dense<0.000000e+00> : vector<8x162xf32>
    %86 = tpu.matmul %83, %85, %cst_28 {dimension_numbers = #tpu.dot_dimension_numbers<[1], [0], [0], [1], [0, 0, 1, 1], [], []>} : vector<8x20xbf16>, vector<20x162xbf16>, vector<8x162xf32> -> vector<8x162xf32>
    %87 = arith.addf %60, %86 : vector<8x162xf32>
    %88 = vector.extract_strided_slice %81 {offsets = [12, 0], sizes = [20, 162], strides = [1, 1]} : vector<80x162xf32> to vector<20x162xf32>
    %89 = arith.truncf %88 : vector<20x162xf32> to vector<20x162xbf16>
    %cst_29 = arith.constant dense<0.000000e+00> : vector<8x162xf32>
    %90 = tpu.matmul %83, %89, %cst_29 {dimension_numbers = #tpu.dot_dimension_numbers<[1], [0], [0], [1], [0, 0, 1, 1], [], []>} : vector<8x20xbf16>, vector<20x162xbf16>, vector<8x162xf32> -> vector<8x162xf32>
    %91 = arith.addf %64, %90 : vector<8x162xf32>
    %92 = vector.extract_strided_slice %81 {offsets = [24, 0], sizes = [20, 162], strides = [1, 1]} : vector<80x162xf32> to vector<20x162xf32>
    %93 = arith.truncf %92 : vector<20x162xf32> to vector<20x162xbf16>
    %cst_30 = arith.constant dense<0.000000e+00> : vector<8x162xf32>
    %94 = tpu.matmul %83, %93, %cst_30 {dimension_numbers = #tpu.dot_dimension_numbers<[1], [0], [0], [1], [0, 0, 1, 1], [], []>} : vector<8x20xbf16>, vector<20x162xbf16>, vector<8x162xf32> -> vector<8x162xf32>
    %95 = arith.addf %68, %94 : vector<8x162xf32>
    %96 = vector.extract_strided_slice %81 {offsets = [36, 0], sizes = [20, 162], strides = [1, 1]} : vector<80x162xf32> to vector<20x162xf32>
    %97 = arith.truncf %96 : vector<20x162xf32> to vector<20x162xbf16>
    %cst_31 = arith.constant dense<0.000000e+00> : vector<8x162xf32>
    %98 = tpu.matmul %83, %97, %cst_31 {dimension_numbers = #tpu.dot_dimension_numbers<[1], [0], [0], [1], [0, 0, 1, 1], [], []>} : vector<8x20xbf16>, vector<20x162xbf16>, vector<8x162xf32> -> vector<8x162xf32>
    %99 = arith.addf %72, %98 : vector<8x162xf32>
    %100 = vector.extract_strided_slice %81 {offsets = [48, 0], sizes = [20, 162], strides = [1, 1]} : vector<80x162xf32> to vector<20x162xf32>
    %101 = arith.truncf %100 : vector<20x162xf32> to vector<20x162xbf16>
    %cst_32 = arith.constant dense<0.000000e+00> : vector<8x162xf32>
    %102 = tpu.matmul %83, %101, %cst_32 {dimension_numbers = #tpu.dot_dimension_numbers<[1], [0], [0], [1], [0, 0, 1, 1], [], []>} : vector<8x20xbf16>, vector<20x162xbf16>, vector<8x162xf32> -> vector<8x162xf32>
    %103 = arith.addf %76, %102 : vector<8x162xf32>
    %104 = vector.extract_strided_slice %81 {offsets = [60, 0], sizes = [20, 162], strides = [1, 1]} : vector<80x162xf32> to vector<20x162xf32>
    %105 = arith.truncf %104 : vector<20x162xf32> to vector<20x162xbf16>
    %cst_33 = arith.constant dense<0.000000e+00> : vector<8x162xf32>
    %106 = tpu.matmul %83, %105, %cst_33 {dimension_numbers = #tpu.dot_dimension_numbers<[1], [0], [0], [1], [0, 0, 1, 1], [], []>} : vector<8x20xbf16>, vector<20x162xbf16>, vector<8x162xf32> -> vector<8x162xf32>
    %107 = arith.addf %80, %106 : vector<8x162xf32>
    %108 = vector.extract_strided_slice %0 {offsets = [0, 10], sizes = [80, 162], strides = [1, 1]} : vector<80x182xf32> to vector<80x162xf32>
    %109 = vector.extract_strided_slice %1 {offsets = [32, 0], sizes = [8, 20], strides = [1, 1]} : vector<72x20xf32> to vector<8x20xf32>
    %110 = arith.truncf %109 : vector<8x20xf32> to vector<8x20xbf16>
    %111 = vector.extract_strided_slice %108 {offsets = [0, 0], sizes = [20, 162], strides = [1, 1]} : vector<80x162xf32> to vector<20x162xf32>
    %112 = arith.truncf %111 : vector<20x162xf32> to vector<20x162xbf16>
    %cst_34 = arith.constant dense<0.000000e+00> : vector<8x162xf32>
    %113 = tpu.matmul %110, %112, %cst_34 {dimension_numbers = #tpu.dot_dimension_numbers<[1], [0], [0], [1], [0, 0, 1, 1], [], []>} : vector<8x20xbf16>, vector<20x162xbf16>, vector<8x162xf32> -> vector<8x162xf32>
    %114 = arith.addf %87, %113 : vector<8x162xf32>
    %115 = vector.extract_strided_slice %108 {offsets = [12, 0], sizes = [20, 162], strides = [1, 1]} : vector<80x162xf32> to vector<20x162xf32>
    %116 = arith.truncf %115 : vector<20x162xf32> to vector<20x162xbf16>
    %cst_35 = arith.constant dense<0.000000e+00> : vector<8x162xf32>
    %117 = tpu.matmul %110, %116, %cst_35 {dimension_numbers = #tpu.dot_dimension_numbers<[1], [0], [0], [1], [0, 0, 1, 1], [], []>} : vector<8x20xbf16>, vector<20x162xbf16>, vector<8x162xf32> -> vector<8x162xf32>
    %118 = arith.addf %91, %117 : vector<8x162xf32>
    %119 = vector.extract_strided_slice %108 {offsets = [24, 0], sizes = [20, 162], strides = [1, 1]} : vector<80x162xf32> to vector<20x162xf32>
    %120 = arith.truncf %119 : vector<20x162xf32> to vector<20x162xbf16>
    %cst_36 = arith.constant dense<0.000000e+00> : vector<8x162xf32>
    %121 = tpu.matmul %110, %120, %cst_36 {dimension_numbers = #tpu.dot_dimension_numbers<[1], [0], [0], [1], [0, 0, 1, 1], [], []>} : vector<8x20xbf16>, vector<20x162xbf16>, vector<8x162xf32> -> vector<8x162xf32>
    %122 = arith.addf %95, %121 : vector<8x162xf32>
    %123 = vector.extract_strided_slice %108 {offsets = [36, 0], sizes = [20, 162], strides = [1, 1]} : vector<80x162xf32> to vector<20x162xf32>
    %124 = arith.truncf %123 : vector<20x162xf32> to vector<20x162xbf16>
    %cst_37 = arith.constant dense<0.000000e+00> : vector<8x162xf32>
    %125 = tpu.matmul %110, %124, %cst_37 {dimension_numbers = #tpu.dot_dimension_numbers<[1], [0], [0], [1], [0, 0, 1, 1], [], []>} : vector<8x20xbf16>, vector<20x162xbf16>, vector<8x162xf32> -> vector<8x162xf32>
    %126 = arith.addf %99, %125 : vector<8x162xf32>
    %127 = vector.extract_strided_slice %108 {offsets = [48, 0], sizes = [20, 162], strides = [1, 1]} : vector<80x162xf32> to vector<20x162xf32>
    %128 = arith.truncf %127 : vector<20x162xf32> to vector<20x162xbf16>
    %cst_38 = arith.constant dense<0.000000e+00> : vector<8x162xf32>
    %129 = tpu.matmul %110, %128, %cst_38 {dimension_numbers = #tpu.dot_dimension_numbers<[1], [0], [0], [1], [0, 0, 1, 1], [], []>} : vector<8x20xbf16>, vector<20x162xbf16>, vector<8x162xf32> -> vector<8x162xf32>
    %130 = arith.addf %103, %129 : vector<8x162xf32>
    %131 = vector.extract_strided_slice %108 {offsets = [60, 0], sizes = [20, 162], strides = [1, 1]} : vector<80x162xf32> to vector<20x162xf32>
    %132 = arith.truncf %131 : vector<20x162xf32> to vector<20x162xbf16>
    %cst_39 = arith.constant dense<0.000000e+00> : vector<8x162xf32>
    %133 = tpu.matmul %110, %132, %cst_39 {dimension_numbers = #tpu.dot_dimension_numbers<[1], [0], [0], [1], [0, 0, 1, 1], [], []>} : vector<8x20xbf16>, vector<20x162xbf16>, vector<8x162xf32> -> vector<8x162xf32>
    %134 = arith.addf %107, %133 : vector<8x162xf32>
    %135 = vector.extract_strided_slice %0 {offsets = [0, 11], sizes = [80, 162], strides = [1, 1]} : vector<80x182xf32> to vector<80x162xf32>
    %136 = vector.extract_strided_slice %1 {offsets = [40, 0], sizes = [8, 20], strides = [1, 1]} : vector<72x20xf32> to vector<8x20xf32>
    %137 = arith.truncf %136 : vector<8x20xf32> to vector<8x20xbf16>
    %138 = vector.extract_strided_slice %135 {offsets = [0, 0], sizes = [20, 162], strides = [1, 1]} : vector<80x162xf32> to vector<20x162xf32>
    %139 = arith.truncf %138 : vector<20x162xf32> to vector<20x162xbf16>
    %cst_40 = arith.constant dense<0.000000e+00> : vector<8x162xf32>
    %140 = tpu.matmul %137, %139, %cst_40 {dimension_numbers = #tpu.dot_dimension_numbers<[1], [0], [0], [1], [0, 0, 1, 1], [], []>} : vector<8x20xbf16>, vector<20x162xbf16>, vector<8x162xf32> -> vector<8x162xf32>
    %141 = arith.addf %114, %140 : vector<8x162xf32>
    %142 = vector.extract_strided_slice %135 {offsets = [12, 0], sizes = [20, 162], strides = [1, 1]} : vector<80x162xf32> to vector<20x162xf32>
    %143 = arith.truncf %142 : vector<20x162xf32> to vector<20x162xbf16>
    %cst_41 = arith.constant dense<0.000000e+00> : vector<8x162xf32>
    %144 = tpu.matmul %137, %143, %cst_41 {dimension_numbers = #tpu.dot_dimension_numbers<[1], [0], [0], [1], [0, 0, 1, 1], [], []>} : vector<8x20xbf16>, vector<20x162xbf16>, vector<8x162xf32> -> vector<8x162xf32>
    %145 = arith.addf %118, %144 : vector<8x162xf32>
    %146 = vector.extract_strided_slice %135 {offsets = [24, 0], sizes = [20, 162], strides = [1, 1]} : vector<80x162xf32> to vector<20x162xf32>
    %147 = arith.truncf %146 : vector<20x162xf32> to vector<20x162xbf16>
    %cst_42 = arith.constant dense<0.000000e+00> : vector<8x162xf32>
    %148 = tpu.matmul %137, %147, %cst_42 {dimension_numbers = #tpu.dot_dimension_numbers<[1], [0], [0], [1], [0, 0, 1, 1], [], []>} : vector<8x20xbf16>, vector<20x162xbf16>, vector<8x162xf32> -> vector<8x162xf32>
    %149 = arith.addf %122, %148 : vector<8x162xf32>
    %150 = vector.extract_strided_slice %135 {offsets = [36, 0], sizes = [20, 162], strides = [1, 1]} : vector<80x162xf32> to vector<20x162xf32>
    %151 = arith.truncf %150 : vector<20x162xf32> to vector<20x162xbf16>
    %cst_43 = arith.constant dense<0.000000e+00> : vector<8x162xf32>
    %152 = tpu.matmul %137, %151, %cst_43 {dimension_numbers = #tpu.dot_dimension_numbers<[1], [0], [0], [1], [0, 0, 1, 1], [], []>} : vector<8x20xbf16>, vector<20x162xbf16>, vector<8x162xf32> -> vector<8x162xf32>
    %153 = arith.addf %126, %152 : vector<8x162xf32>
    %154 = vector.extract_strided_slice %135 {offsets = [48, 0], sizes = [20, 162], strides = [1, 1]} : vector<80x162xf32> to vector<20x162xf32>
    %155 = arith.truncf %154 : vector<20x162xf32> to vector<20x162xbf16>
    %cst_44 = arith.constant dense<0.000000e+00> : vector<8x162xf32>
    %156 = tpu.matmul %137, %155, %cst_44 {dimension_numbers = #tpu.dot_dimension_numbers<[1], [0], [0], [1], [0, 0, 1, 1], [], []>} : vector<8x20xbf16>, vector<20x162xbf16>, vector<8x162xf32> -> vector<8x162xf32>
    %157 = arith.addf %130, %156 : vector<8x162xf32>
    %158 = vector.extract_strided_slice %135 {offsets = [60, 0], sizes = [20, 162], strides = [1, 1]} : vector<80x162xf32> to vector<20x162xf32>
    %159 = arith.truncf %158 : vector<20x162xf32> to vector<20x162xbf16>
    %cst_45 = arith.constant dense<0.000000e+00> : vector<8x162xf32>
    %160 = tpu.matmul %137, %159, %cst_45 {dimension_numbers = #tpu.dot_dimension_numbers<[1], [0], [0], [1], [0, 0, 1, 1], [], []>} : vector<8x20xbf16>, vector<20x162xbf16>, vector<8x162xf32> -> vector<8x162xf32>
    %161 = arith.addf %134, %160 : vector<8x162xf32>
    %162 = vector.extract_strided_slice %0 {offsets = [0, 18], sizes = [80, 162], strides = [1, 1]} : vector<80x182xf32> to vector<80x162xf32>
    %163 = vector.extract_strided_slice %1 {offsets = [48, 0], sizes = [8, 20], strides = [1, 1]} : vector<72x20xf32> to vector<8x20xf32>
    %164 = arith.truncf %163 : vector<8x20xf32> to vector<8x20xbf16>
    %165 = vector.extract_strided_slice %162 {offsets = [0, 0], sizes = [20, 162], strides = [1, 1]} : vector<80x162xf32> to vector<20x162xf32>
    %166 = arith.truncf %165 : vector<20x162xf32> to vector<20x162xbf16>
    %cst_46 = arith.constant dense<0.000000e+00> : vector<8x162xf32>
    %167 = tpu.matmul %164, %166, %cst_46 {dimension_numbers = #tpu.dot_dimension_numbers<[1], [0], [0], [1], [0, 0, 1, 1], [], []>} : vector<8x20xbf16>, vector<20x162xbf16>, vector<8x162xf32> -> vector<8x162xf32>
    %168 = arith.addf %141, %167 : vector<8x162xf32>
    %169 = vector.extract_strided_slice %162 {offsets = [12, 0], sizes = [20, 162], strides = [1, 1]} : vector<80x162xf32> to vector<20x162xf32>
    %170 = arith.truncf %169 : vector<20x162xf32> to vector<20x162xbf16>
    %cst_47 = arith.constant dense<0.000000e+00> : vector<8x162xf32>
    %171 = tpu.matmul %164, %170, %cst_47 {dimension_numbers = #tpu.dot_dimension_numbers<[1], [0], [0], [1], [0, 0, 1, 1], [], []>} : vector<8x20xbf16>, vector<20x162xbf16>, vector<8x162xf32> -> vector<8x162xf32>
    %172 = arith.addf %145, %171 : vector<8x162xf32>
    %173 = vector.extract_strided_slice %162 {offsets = [24, 0], sizes = [20, 162], strides = [1, 1]} : vector<80x162xf32> to vector<20x162xf32>
    %174 = arith.truncf %173 : vector<20x162xf32> to vector<20x162xbf16>
    %cst_48 = arith.constant dense<0.000000e+00> : vector<8x162xf32>
    %175 = tpu.matmul %164, %174, %cst_48 {dimension_numbers = #tpu.dot_dimension_numbers<[1], [0], [0], [1], [0, 0, 1, 1], [], []>} : vector<8x20xbf16>, vector<20x162xbf16>, vector<8x162xf32> -> vector<8x162xf32>
    %176 = arith.addf %149, %175 : vector<8x162xf32>
    %177 = vector.extract_strided_slice %162 {offsets = [36, 0], sizes = [20, 162], strides = [1, 1]} : vector<80x162xf32> to vector<20x162xf32>
    %178 = arith.truncf %177 : vector<20x162xf32> to vector<20x162xbf16>
    %cst_49 = arith.constant dense<0.000000e+00> : vector<8x162xf32>
    %179 = tpu.matmul %164, %178, %cst_49 {dimension_numbers = #tpu.dot_dimension_numbers<[1], [0], [0], [1], [0, 0, 1, 1], [], []>} : vector<8x20xbf16>, vector<20x162xbf16>, vector<8x162xf32> -> vector<8x162xf32>
    %180 = arith.addf %153, %179 : vector<8x162xf32>
    %181 = vector.extract_strided_slice %162 {offsets = [48, 0], sizes = [20, 162], strides = [1, 1]} : vector<80x162xf32> to vector<20x162xf32>
    %182 = arith.truncf %181 : vector<20x162xf32> to vector<20x162xbf16>
    %cst_50 = arith.constant dense<0.000000e+00> : vector<8x162xf32>
    %183 = tpu.matmul %164, %182, %cst_50 {dimension_numbers = #tpu.dot_dimension_numbers<[1], [0], [0], [1], [0, 0, 1, 1], [], []>} : vector<8x20xbf16>, vector<20x162xbf16>, vector<8x162xf32> -> vector<8x162xf32>
    %184 = arith.addf %157, %183 : vector<8x162xf32>
    %185 = vector.extract_strided_slice %162 {offsets = [60, 0], sizes = [20, 162], strides = [1, 1]} : vector<80x162xf32> to vector<20x162xf32>
    %186 = arith.truncf %185 : vector<20x162xf32> to vector<20x162xbf16>
    %cst_51 = arith.constant dense<0.000000e+00> : vector<8x162xf32>
    %187 = tpu.matmul %164, %186, %cst_51 {dimension_numbers = #tpu.dot_dimension_numbers<[1], [0], [0], [1], [0, 0, 1, 1], [], []>} : vector<8x20xbf16>, vector<20x162xbf16>, vector<8x162xf32> -> vector<8x162xf32>
    %188 = arith.addf %161, %187 : vector<8x162xf32>
    %189 = vector.extract_strided_slice %0 {offsets = [0, 19], sizes = [80, 162], strides = [1, 1]} : vector<80x182xf32> to vector<80x162xf32>
    %190 = vector.extract_strided_slice %1 {offsets = [56, 0], sizes = [8, 20], strides = [1, 1]} : vector<72x20xf32> to vector<8x20xf32>
    %191 = arith.truncf %190 : vector<8x20xf32> to vector<8x20xbf16>
    %192 = vector.extract_strided_slice %189 {offsets = [0, 0], sizes = [20, 162], strides = [1, 1]} : vector<80x162xf32> to vector<20x162xf32>
    %193 = arith.truncf %192 : vector<20x162xf32> to vector<20x162xbf16>
    %cst_52 = arith.constant dense<0.000000e+00> : vector<8x162xf32>
    %194 = tpu.matmul %191, %193, %cst_52 {dimension_numbers = #tpu.dot_dimension_numbers<[1], [0], [0], [1], [0, 0, 1, 1], [], []>} : vector<8x20xbf16>, vector<20x162xbf16>, vector<8x162xf32> -> vector<8x162xf32>
    %195 = arith.addf %168, %194 : vector<8x162xf32>
    %196 = vector.extract_strided_slice %189 {offsets = [12, 0], sizes = [20, 162], strides = [1, 1]} : vector<80x162xf32> to vector<20x162xf32>
    %197 = arith.truncf %196 : vector<20x162xf32> to vector<20x162xbf16>
    %cst_53 = arith.constant dense<0.000000e+00> : vector<8x162xf32>
    %198 = tpu.matmul %191, %197, %cst_53 {dimension_numbers = #tpu.dot_dimension_numbers<[1], [0], [0], [1], [0, 0, 1, 1], [], []>} : vector<8x20xbf16>, vector<20x162xbf16>, vector<8x162xf32> -> vector<8x162xf32>
    %199 = arith.addf %172, %198 : vector<8x162xf32>
    %200 = vector.extract_strided_slice %189 {offsets = [24, 0], sizes = [20, 162], strides = [1, 1]} : vector<80x162xf32> to vector<20x162xf32>
    %201 = arith.truncf %200 : vector<20x162xf32> to vector<20x162xbf16>
    %cst_54 = arith.constant dense<0.000000e+00> : vector<8x162xf32>
    %202 = tpu.matmul %191, %201, %cst_54 {dimension_numbers = #tpu.dot_dimension_numbers<[1], [0], [0], [1], [0, 0, 1, 1], [], []>} : vector<8x20xbf16>, vector<20x162xbf16>, vector<8x162xf32> -> vector<8x162xf32>
    %203 = arith.addf %176, %202 : vector<8x162xf32>
    %204 = vector.extract_strided_slice %189 {offsets = [36, 0], sizes = [20, 162], strides = [1, 1]} : vector<80x162xf32> to vector<20x162xf32>
    %205 = arith.truncf %204 : vector<20x162xf32> to vector<20x162xbf16>
    %cst_55 = arith.constant dense<0.000000e+00> : vector<8x162xf32>
    %206 = tpu.matmul %191, %205, %cst_55 {dimension_numbers = #tpu.dot_dimension_numbers<[1], [0], [0], [1], [0, 0, 1, 1], [], []>} : vector<8x20xbf16>, vector<20x162xbf16>, vector<8x162xf32> -> vector<8x162xf32>
    %207 = arith.addf %180, %206 : vector<8x162xf32>
    %208 = vector.extract_strided_slice %189 {offsets = [48, 0], sizes = [20, 162], strides = [1, 1]} : vector<80x162xf32> to vector<20x162xf32>
    %209 = arith.truncf %208 : vector<20x162xf32> to vector<20x162xbf16>
    %cst_56 = arith.constant dense<0.000000e+00> : vector<8x162xf32>
    %210 = tpu.matmul %191, %209, %cst_56 {dimension_numbers = #tpu.dot_dimension_numbers<[1], [0], [0], [1], [0, 0, 1, 1], [], []>} : vector<8x20xbf16>, vector<20x162xbf16>, vector<8x162xf32> -> vector<8x162xf32>
    %211 = arith.addf %184, %210 : vector<8x162xf32>
    %212 = vector.extract_strided_slice %189 {offsets = [60, 0], sizes = [20, 162], strides = [1, 1]} : vector<80x162xf32> to vector<20x162xf32>
    %213 = arith.truncf %212 : vector<20x162xf32> to vector<20x162xbf16>
    %cst_57 = arith.constant dense<0.000000e+00> : vector<8x162xf32>
    %214 = tpu.matmul %191, %213, %cst_57 {dimension_numbers = #tpu.dot_dimension_numbers<[1], [0], [0], [1], [0, 0, 1, 1], [], []>} : vector<8x20xbf16>, vector<20x162xbf16>, vector<8x162xf32> -> vector<8x162xf32>
    %215 = arith.addf %188, %214 : vector<8x162xf32>
    %216 = vector.extract_strided_slice %0 {offsets = [0, 20], sizes = [80, 162], strides = [1, 1]} : vector<80x182xf32> to vector<80x162xf32>
    %217 = vector.extract_strided_slice %1 {offsets = [64, 0], sizes = [8, 20], strides = [1, 1]} : vector<72x20xf32> to vector<8x20xf32>
    %218 = arith.truncf %217 : vector<8x20xf32> to vector<8x20xbf16>
    %219 = vector.extract_strided_slice %216 {offsets = [0, 0], sizes = [20, 162], strides = [1, 1]} : vector<80x162xf32> to vector<20x162xf32>
    %220 = arith.truncf %219 : vector<20x162xf32> to vector<20x162xbf16>
    %cst_58 = arith.constant dense<0.000000e+00> : vector<8x162xf32>
    %221 = tpu.matmul %218, %220, %cst_58 {dimension_numbers = #tpu.dot_dimension_numbers<[1], [0], [0], [1], [0, 0, 1, 1], [], []>} : vector<8x20xbf16>, vector<20x162xbf16>, vector<8x162xf32> -> vector<8x162xf32>
    %222 = arith.addf %195, %221 : vector<8x162xf32>
    %223 = vector.extract_strided_slice %216 {offsets = [12, 0], sizes = [20, 162], strides = [1, 1]} : vector<80x162xf32> to vector<20x162xf32>
    %224 = arith.truncf %223 : vector<20x162xf32> to vector<20x162xbf16>
    %cst_59 = arith.constant dense<0.000000e+00> : vector<8x162xf32>
    %225 = tpu.matmul %218, %224, %cst_59 {dimension_numbers = #tpu.dot_dimension_numbers<[1], [0], [0], [1], [0, 0, 1, 1], [], []>} : vector<8x20xbf16>, vector<20x162xbf16>, vector<8x162xf32> -> vector<8x162xf32>
    %226 = arith.addf %199, %225 : vector<8x162xf32>
    %227 = vector.extract_strided_slice %216 {offsets = [24, 0], sizes = [20, 162], strides = [1, 1]} : vector<80x162xf32> to vector<20x162xf32>
    %228 = arith.truncf %227 : vector<20x162xf32> to vector<20x162xbf16>
    %cst_60 = arith.constant dense<0.000000e+00> : vector<8x162xf32>
    %229 = tpu.matmul %218, %228, %cst_60 {dimension_numbers = #tpu.dot_dimension_numbers<[1], [0], [0], [1], [0, 0, 1, 1], [], []>} : vector<8x20xbf16>, vector<20x162xbf16>, vector<8x162xf32> -> vector<8x162xf32>
    %230 = arith.addf %203, %229 : vector<8x162xf32>
    %231 = vector.extract_strided_slice %216 {offsets = [36, 0], sizes = [20, 162], strides = [1, 1]} : vector<80x162xf32> to vector<20x162xf32>
    %232 = arith.truncf %231 : vector<20x162xf32> to vector<20x162xbf16>
    %cst_61 = arith.constant dense<0.000000e+00> : vector<8x162xf32>
    %233 = tpu.matmul %218, %232, %cst_61 {dimension_numbers = #tpu.dot_dimension_numbers<[1], [0], [0], [1], [0, 0, 1, 1], [], []>} : vector<8x20xbf16>, vector<20x162xbf16>, vector<8x162xf32> -> vector<8x162xf32>
    %234 = arith.addf %207, %233 : vector<8x162xf32>
    %235 = vector.extract_strided_slice %216 {offsets = [48, 0], sizes = [20, 162], strides = [1, 1]} : vector<80x162xf32> to vector<20x162xf32>
    %236 = arith.truncf %235 : vector<20x162xf32> to vector<20x162xbf16>
    %cst_62 = arith.constant dense<0.000000e+00> : vector<8x162xf32>
    %237 = tpu.matmul %218, %236, %cst_62 {dimension_numbers = #tpu.dot_dimension_numbers<[1], [0], [0], [1], [0, 0, 1, 1], [], []>} : vector<8x20xbf16>, vector<20x162xbf16>, vector<8x162xf32> -> vector<8x162xf32>
    %238 = arith.addf %211, %237 : vector<8x162xf32>
    %239 = vector.extract_strided_slice %216 {offsets = [60, 0], sizes = [20, 162], strides = [1, 1]} : vector<80x162xf32> to vector<20x162xf32>
    %240 = arith.truncf %239 : vector<20x162xf32> to vector<20x162xbf16>
    %cst_63 = arith.constant dense<0.000000e+00> : vector<8x162xf32>
    %241 = tpu.matmul %218, %240, %cst_63 {dimension_numbers = #tpu.dot_dimension_numbers<[1], [0], [0], [1], [0, 0, 1, 1], [], []>} : vector<8x20xbf16>, vector<20x162xbf16>, vector<8x162xf32> -> vector<8x162xf32>
    %242 = arith.addf %215, %241 : vector<8x162xf32>
    %243 = vector.broadcast %2 : vector<8x1xf32> to vector<8x162xf32>
    %244 = arith.addf %222, %243 : vector<8x162xf32>
    %cst_64 = arith.constant 0.000000e+00 : f32
    %245 = vector.broadcast %cst_64 : f32 to vector<8x162xf32>
    %246 = arith.maximumf %244, %245 : vector<8x162xf32>
    %247 = vector.broadcast %2 : vector<8x1xf32> to vector<8x162xf32>
    %248 = arith.addf %226, %247 : vector<8x162xf32>
    %cst_65 = arith.constant 0.000000e+00 : f32
    %249 = vector.broadcast %cst_65 : f32 to vector<8x162xf32>
    %250 = arith.maximumf %248, %249 : vector<8x162xf32>
    %251 = vector.broadcast %2 : vector<8x1xf32> to vector<8x162xf32>
    %252 = arith.addf %230, %251 : vector<8x162xf32>
    %cst_66 = arith.constant 0.000000e+00 : f32
    %253 = vector.broadcast %cst_66 : f32 to vector<8x162xf32>
    %254 = arith.maximumf %252, %253 : vector<8x162xf32>
    %255 = vector.broadcast %2 : vector<8x1xf32> to vector<8x162xf32>
    %256 = arith.addf %234, %255 : vector<8x162xf32>
    %cst_67 = arith.constant 0.000000e+00 : f32
    %257 = vector.broadcast %cst_67 : f32 to vector<8x162xf32>
    %258 = arith.maximumf %256, %257 : vector<8x162xf32>
    %259 = vector.broadcast %2 : vector<8x1xf32> to vector<8x162xf32>
    %260 = arith.addf %238, %259 : vector<8x162xf32>
    %cst_68 = arith.constant 0.000000e+00 : f32
    %261 = vector.broadcast %cst_68 : f32 to vector<8x162xf32>
    %262 = arith.maximumf %260, %261 : vector<8x162xf32>
    %263 = vector.broadcast %2 : vector<8x1xf32> to vector<8x162xf32>
    %264 = arith.addf %242, %263 : vector<8x162xf32>
    %cst_69 = arith.constant 0.000000e+00 : f32
    %265 = vector.broadcast %cst_69 : f32 to vector<8x162xf32>
    %266 = arith.maximumf %264, %265 : vector<8x162xf32>
    %cst_70 = arith.constant 0.000000e+00 : f32
    %267 = vector.broadcast %cst_70 : f32 to vector<8x1xf32>
    %cst_71 = arith.constant 0.000000e+00 : f32
    %268 = vector.broadcast %cst_71 : f32 to vector<8x1xf32>
    %269 = vector.broadcast %5 : vector<1x162xf32> to vector<8x162xf32>
    %270 = arith.mulf %246, %269 : vector<8x162xf32>
    %cst_72 = arith.constant dense<0.000000e+00> : vector<8xf32>
    %271 = vector.multi_reduction <add>, %270, %cst_72 [1] : vector<8x162xf32> to vector<8xf32>
    %272 = vector.shape_cast %271 : vector<8xf32> to vector<8x1xf32>
    %273 = arith.addf %267, %272 : vector<8x1xf32>
    %274 = arith.mulf %270, %246 : vector<8x162xf32>
    %cst_73 = arith.constant dense<0.000000e+00> : vector<8xf32>
    %275 = vector.multi_reduction <add>, %274, %cst_73 [1] : vector<8x162xf32> to vector<8xf32>
    %276 = vector.shape_cast %275 : vector<8xf32> to vector<8x1xf32>
    %277 = arith.addf %268, %276 : vector<8x1xf32>
    %278 = vector.broadcast %5 : vector<1x162xf32> to vector<8x162xf32>
    %279 = arith.mulf %250, %278 : vector<8x162xf32>
    %cst_74 = arith.constant dense<0.000000e+00> : vector<8xf32>
    %280 = vector.multi_reduction <add>, %279, %cst_74 [1] : vector<8x162xf32> to vector<8xf32>
    %281 = vector.shape_cast %280 : vector<8xf32> to vector<8x1xf32>
    %282 = arith.addf %273, %281 : vector<8x1xf32>
    %283 = arith.mulf %279, %250 : vector<8x162xf32>
    %cst_75 = arith.constant dense<0.000000e+00> : vector<8xf32>
    %284 = vector.multi_reduction <add>, %283, %cst_75 [1] : vector<8x162xf32> to vector<8xf32>
    %285 = vector.shape_cast %284 : vector<8xf32> to vector<8x1xf32>
    %286 = arith.addf %277, %285 : vector<8x1xf32>
    %287 = vector.broadcast %5 : vector<1x162xf32> to vector<8x162xf32>
    %288 = arith.mulf %254, %287 : vector<8x162xf32>
    %cst_76 = arith.constant dense<0.000000e+00> : vector<8xf32>
    %289 = vector.multi_reduction <add>, %288, %cst_76 [1] : vector<8x162xf32> to vector<8xf32>
    %290 = vector.shape_cast %289 : vector<8xf32> to vector<8x1xf32>
    %291 = arith.addf %282, %290 : vector<8x1xf32>
    %292 = arith.mulf %288, %254 : vector<8x162xf32>
    %cst_77 = arith.constant dense<0.000000e+00> : vector<8xf32>
    %293 = vector.multi_reduction <add>, %292, %cst_77 [1] : vector<8x162xf32> to vector<8xf32>
    %294 = vector.shape_cast %293 : vector<8xf32> to vector<8x1xf32>
    %295 = arith.addf %286, %294 : vector<8x1xf32>
    %296 = vector.broadcast %5 : vector<1x162xf32> to vector<8x162xf32>
    %297 = arith.mulf %258, %296 : vector<8x162xf32>
    %cst_78 = arith.constant dense<0.000000e+00> : vector<8xf32>
    %298 = vector.multi_reduction <add>, %297, %cst_78 [1] : vector<8x162xf32> to vector<8xf32>
    %299 = vector.shape_cast %298 : vector<8xf32> to vector<8x1xf32>
    %300 = arith.addf %291, %299 : vector<8x1xf32>
    %301 = arith.mulf %297, %258 : vector<8x162xf32>
    %cst_79 = arith.constant dense<0.000000e+00> : vector<8xf32>
    %302 = vector.multi_reduction <add>, %301, %cst_79 [1] : vector<8x162xf32> to vector<8xf32>
    %303 = vector.shape_cast %302 : vector<8xf32> to vector<8x1xf32>
    %304 = arith.addf %295, %303 : vector<8x1xf32>
    %305 = vector.broadcast %5 : vector<1x162xf32> to vector<8x162xf32>
    %306 = arith.mulf %262, %305 : vector<8x162xf32>
    %cst_80 = arith.constant dense<0.000000e+00> : vector<8xf32>
    %307 = vector.multi_reduction <add>, %306, %cst_80 [1] : vector<8x162xf32> to vector<8xf32>
    %308 = vector.shape_cast %307 : vector<8xf32> to vector<8x1xf32>
    %309 = arith.addf %300, %308 : vector<8x1xf32>
    %310 = arith.mulf %306, %262 : vector<8x162xf32>
    %cst_81 = arith.constant dense<0.000000e+00> : vector<8xf32>
    %311 = vector.multi_reduction <add>, %310, %cst_81 [1] : vector<8x162xf32> to vector<8xf32>
    %312 = vector.shape_cast %311 : vector<8xf32> to vector<8x1xf32>
    %313 = arith.addf %304, %312 : vector<8x1xf32>
    %314 = vector.broadcast %5 : vector<1x162xf32> to vector<8x162xf32>
    %315 = arith.mulf %266, %314 : vector<8x162xf32>
    %cst_82 = arith.constant dense<0.000000e+00> : vector<8xf32>
    %316 = vector.multi_reduction <add>, %315, %cst_82 [1] : vector<8x162xf32> to vector<8xf32>
    %317 = vector.shape_cast %316 : vector<8xf32> to vector<8x1xf32>
    %318 = arith.addf %309, %317 : vector<8x1xf32>
    %319 = arith.mulf %315, %266 : vector<8x162xf32>
    %cst_83 = arith.constant dense<0.000000e+00> : vector<8xf32>
    %320 = vector.multi_reduction <add>, %319, %cst_83 [1] : vector<8x162xf32> to vector<8xf32>
    %321 = vector.shape_cast %320 : vector<8xf32> to vector<8x1xf32>
    %322 = arith.addf %313, %321 : vector<8x1xf32>
    %cst_84 = arith.constant 0.00170068024 : f32
    %323 = vector.broadcast %cst_84 : f32 to vector<8x1xf32>
    %324 = arith.mulf %318, %323 : vector<8x1xf32>
    %cst_85 = arith.constant 0.00170068024 : f32
    %325 = vector.broadcast %cst_85 : f32 to vector<8x1xf32>
    %326 = arith.mulf %322, %325 : vector<8x1xf32>
    %327 = arith.mulf %324, %324 : vector<8x1xf32>
    %328 = arith.subf %326, %327 : vector<8x1xf32>
    %cst_86 = arith.constant 0.000000e+00 : f32
    %329 = vector.broadcast %cst_86 : f32 to vector<8x1xf32>
    %330 = arith.maximumf %328, %329 : vector<8x1xf32>
    %cst_87 = arith.constant 9.99999974E-6 : f32
    %331 = vector.broadcast %cst_87 : f32 to vector<8x1xf32>
    %332 = arith.addf %330, %331 : vector<8x1xf32>
    %333 = math.rsqrt %332 : vector<8x1xf32>
    %334 = arith.mulf %3, %333 : vector<8x1xf32>
    %335 = arith.mulf %324, %334 : vector<8x1xf32>
    %336 = arith.subf %4, %335 : vector<8x1xf32>
    %337 = vector.broadcast %334 : vector<8x1xf32> to vector<8x162xf32>
    %338 = arith.mulf %246, %337 : vector<8x162xf32>
    %339 = vector.broadcast %336 : vector<8x1xf32> to vector<8x162xf32>
    %340 = arith.addf %338, %339 : vector<8x162xf32>
    %341 = vector.broadcast %334 : vector<8x1xf32> to vector<8x162xf32>
    %342 = arith.mulf %250, %341 : vector<8x162xf32>
    %343 = vector.broadcast %336 : vector<8x1xf32> to vector<8x162xf32>
    %344 = arith.addf %342, %343 : vector<8x162xf32>
    %345 = vector.broadcast %334 : vector<8x1xf32> to vector<8x162xf32>
    %346 = arith.mulf %254, %345 : vector<8x162xf32>
    %347 = vector.broadcast %336 : vector<8x1xf32> to vector<8x162xf32>
    %348 = arith.addf %346, %347 : vector<8x162xf32>
    %349 = vector.broadcast %334 : vector<8x1xf32> to vector<8x162xf32>
    %350 = arith.mulf %258, %349 : vector<8x162xf32>
    %351 = vector.broadcast %336 : vector<8x1xf32> to vector<8x162xf32>
    %352 = arith.addf %350, %351 : vector<8x162xf32>
    %353 = vector.broadcast %334 : vector<8x1xf32> to vector<8x162xf32>
    %354 = arith.mulf %262, %353 : vector<8x162xf32>
    %355 = vector.broadcast %336 : vector<8x1xf32> to vector<8x162xf32>
    %356 = arith.addf %354, %355 : vector<8x162xf32>
    %357 = vector.broadcast %334 : vector<8x1xf32> to vector<8x162xf32>
    %358 = arith.mulf %266, %357 : vector<8x162xf32>
    %359 = vector.broadcast %336 : vector<8x1xf32> to vector<8x162xf32>
    %360 = arith.addf %358, %359 : vector<8x162xf32>
    %cst_88 = arith.constant 0.000000e+00 : f32
    %361 = vector.broadcast %cst_88 : f32 to vector<8x162xf32>
    %362 = tpu.concatenate %361, %340, %344, %348, %352, %356, %360, %361 in 0 : vector<8x162xf32>, vector<8x162xf32>, vector<8x162xf32>, vector<8x162xf32>, vector<8x162xf32>, vector<8x162xf32>, vector<8x162xf32>, vector<8x162xf32> -> vector<64x162xf32>
    %cst_89 = arith.constant 0.000000e+00 : f32
    %363 = vector.broadcast %cst_89 : f32 to vector<64x20xf32>
    %364 = tpu.concatenate %362, %363 in 1 : vector<64x162xf32>, vector<64x20xf32> -> vector<64x182xf32>
    %c0_90 = arith.constant 0 : index
    %c0_91 = arith.constant 0 : index
    %365 = vector.load %arg2[%c0_90, %c0_91] : memref<72x40xf32, #tpu.memory_space<vmem>>, vector<72x40xf32>
    %c0_92 = arith.constant 0 : index
    %c0_93 = arith.constant 0 : index
    %366 = vector.load %arg7[%c0_92, %c0_93] : memref<8x1xf32, #tpu.memory_space<vmem>>, vector<8x1xf32>
    %c0_94 = arith.constant 0 : index
    %c0_95 = arith.constant 0 : index
    %367 = vector.load %arg8[%c0_94, %c0_95] : memref<8x1xf32, #tpu.memory_space<vmem>>, vector<8x1xf32>
    %c0_96 = arith.constant 0 : index
    %c0_97 = arith.constant 0 : index
    %368 = vector.load %arg9[%c0_96, %c0_97] : memref<8x1xf32, #tpu.memory_space<vmem>>, vector<8x1xf32>
    %c0_98 = arith.constant 0 : index
    %c0_99 = arith.constant 0 : index
    %369 = vector.load %arg14[%c0_98, %c0_99] : memref<1x162xf32, #tpu.memory_space<vmem>>, vector<1x162xf32>
    %370 = vector.extract_strided_slice %364 {offsets = [0, 0], sizes = [64, 162], strides = [1, 1]} : vector<64x182xf32> to vector<64x162xf32>
    %371 = vector.extract_strided_slice %365 {offsets = [0, 0], sizes = [8, 40], strides = [1, 1]} : vector<72x40xf32> to vector<8x40xf32>
    %372 = arith.truncf %371 : vector<8x40xf32> to vector<8x40xbf16>
    %373 = vector.extract_strided_slice %370 {offsets = [0, 0], sizes = [40, 162], strides = [1, 1]} : vector<64x162xf32> to vector<40x162xf32>
    %374 = arith.truncf %373 : vector<40x162xf32> to vector<40x162xbf16>
    %cst_100 = arith.constant dense<0.000000e+00> : vector<8x162xf32>
    %375 = tpu.matmul %372, %374, %cst_100 {dimension_numbers = #tpu.dot_dimension_numbers<[1], [0], [0], [1], [0, 0, 1, 1], [], []>} : vector<8x40xbf16>, vector<40x162xbf16>, vector<8x162xf32> -> vector<8x162xf32>
    %376 = vector.extract_strided_slice %370 {offsets = [24, 0], sizes = [40, 162], strides = [1, 1]} : vector<64x162xf32> to vector<40x162xf32>
    %377 = arith.truncf %376 : vector<40x162xf32> to vector<40x162xbf16>
    %cst_101 = arith.constant dense<0.000000e+00> : vector<8x162xf32>
    %378 = tpu.matmul %372, %377, %cst_101 {dimension_numbers = #tpu.dot_dimension_numbers<[1], [0], [0], [1], [0, 0, 1, 1], [], []>} : vector<8x40xbf16>, vector<40x162xbf16>, vector<8x162xf32> -> vector<8x162xf32>
    %379 = vector.extract_strided_slice %364 {offsets = [0, 1], sizes = [64, 162], strides = [1, 1]} : vector<64x182xf32> to vector<64x162xf32>
    %380 = vector.extract_strided_slice %365 {offsets = [8, 0], sizes = [8, 40], strides = [1, 1]} : vector<72x40xf32> to vector<8x40xf32>
    %381 = arith.truncf %380 : vector<8x40xf32> to vector<8x40xbf16>
    %382 = vector.extract_strided_slice %379 {offsets = [0, 0], sizes = [40, 162], strides = [1, 1]} : vector<64x162xf32> to vector<40x162xf32>
    %383 = arith.truncf %382 : vector<40x162xf32> to vector<40x162xbf16>
    %cst_102 = arith.constant dense<0.000000e+00> : vector<8x162xf32>
    %384 = tpu.matmul %381, %383, %cst_102 {dimension_numbers = #tpu.dot_dimension_numbers<[1], [0], [0], [1], [0, 0, 1, 1], [], []>} : vector<8x40xbf16>, vector<40x162xbf16>, vector<8x162xf32> -> vector<8x162xf32>
    %385 = arith.addf %375, %384 : vector<8x162xf32>
    %386 = vector.extract_strided_slice %379 {offsets = [24, 0], sizes = [40, 162], strides = [1, 1]} : vector<64x162xf32> to vector<40x162xf32>
    %387 = arith.truncf %386 : vector<40x162xf32> to vector<40x162xbf16>
    %cst_103 = arith.constant dense<0.000000e+00> : vector<8x162xf32>
    %388 = tpu.matmul %381, %387, %cst_103 {dimension_numbers = #tpu.dot_dimension_numbers<[1], [0], [0], [1], [0, 0, 1, 1], [], []>} : vector<8x40xbf16>, vector<40x162xbf16>, vector<8x162xf32> -> vector<8x162xf32>
    %389 = arith.addf %378, %388 : vector<8x162xf32>
    %390 = vector.extract_strided_slice %364 {offsets = [0, 2], sizes = [64, 162], strides = [1, 1]} : vector<64x182xf32> to vector<64x162xf32>
    %391 = vector.extract_strided_slice %365 {offsets = [16, 0], sizes = [8, 40], strides = [1, 1]} : vector<72x40xf32> to vector<8x40xf32>
    %392 = arith.truncf %391 : vector<8x40xf32> to vector<8x40xbf16>
    %393 = vector.extract_strided_slice %390 {offsets = [0, 0], sizes = [40, 162], strides = [1, 1]} : vector<64x162xf32> to vector<40x162xf32>
    %394 = arith.truncf %393 : vector<40x162xf32> to vector<40x162xbf16>
    %cst_104 = arith.constant dense<0.000000e+00> : vector<8x162xf32>
    %395 = tpu.matmul %392, %394, %cst_104 {dimension_numbers = #tpu.dot_dimension_numbers<[1], [0], [0], [1], [0, 0, 1, 1], [], []>} : vector<8x40xbf16>, vector<40x162xbf16>, vector<8x162xf32> -> vector<8x162xf32>
    %396 = arith.addf %385, %395 : vector<8x162xf32>
    %397 = vector.extract_strided_slice %390 {offsets = [24, 0], sizes = [40, 162], strides = [1, 1]} : vector<64x162xf32> to vector<40x162xf32>
    %398 = arith.truncf %397 : vector<40x162xf32> to vector<40x162xbf16>
    %cst_105 = arith.constant dense<0.000000e+00> : vector<8x162xf32>
    %399 = tpu.matmul %392, %398, %cst_105 {dimension_numbers = #tpu.dot_dimension_numbers<[1], [0], [0], [1], [0, 0, 1, 1], [], []>} : vector<8x40xbf16>, vector<40x162xbf16>, vector<8x162xf32> -> vector<8x162xf32>
    %400 = arith.addf %389, %399 : vector<8x162xf32>
    %401 = vector.extract_strided_slice %364 {offsets = [0, 9], sizes = [64, 162], strides = [1, 1]} : vector<64x182xf32> to vector<64x162xf32>
    %402 = vector.extract_strided_slice %365 {offsets = [24, 0], sizes = [8, 40], strides = [1, 1]} : vector<72x40xf32> to vector<8x40xf32>
    %403 = arith.truncf %402 : vector<8x40xf32> to vector<8x40xbf16>
    %404 = vector.extract_strided_slice %401 {offsets = [0, 0], sizes = [40, 162], strides = [1, 1]} : vector<64x162xf32> to vector<40x162xf32>
    %405 = arith.truncf %404 : vector<40x162xf32> to vector<40x162xbf16>
    %cst_106 = arith.constant dense<0.000000e+00> : vector<8x162xf32>
    %406 = tpu.matmul %403, %405, %cst_106 {dimension_numbers = #tpu.dot_dimension_numbers<[1], [0], [0], [1], [0, 0, 1, 1], [], []>} : vector<8x40xbf16>, vector<40x162xbf16>, vector<8x162xf32> -> vector<8x162xf32>
    %407 = arith.addf %396, %406 : vector<8x162xf32>
    %408 = vector.extract_strided_slice %401 {offsets = [24, 0], sizes = [40, 162], strides = [1, 1]} : vector<64x162xf32> to vector<40x162xf32>
    %409 = arith.truncf %408 : vector<40x162xf32> to vector<40x162xbf16>
    %cst_107 = arith.constant dense<0.000000e+00> : vector<8x162xf32>
    %410 = tpu.matmul %403, %409, %cst_107 {dimension_numbers = #tpu.dot_dimension_numbers<[1], [0], [0], [1], [0, 0, 1, 1], [], []>} : vector<8x40xbf16>, vector<40x162xbf16>, vector<8x162xf32> -> vector<8x162xf32>
    %411 = arith.addf %400, %410 : vector<8x162xf32>
    %412 = vector.extract_strided_slice %364 {offsets = [0, 10], sizes = [64, 162], strides = [1, 1]} : vector<64x182xf32> to vector<64x162xf32>
    %413 = vector.extract_strided_slice %365 {offsets = [32, 0], sizes = [8, 40], strides = [1, 1]} : vector<72x40xf32> to vector<8x40xf32>
    %414 = arith.truncf %413 : vector<8x40xf32> to vector<8x40xbf16>
    %415 = vector.extract_strided_slice %412 {offsets = [0, 0], sizes = [40, 162], strides = [1, 1]} : vector<64x162xf32> to vector<40x162xf32>
    %416 = arith.truncf %415 : vector<40x162xf32> to vector<40x162xbf16>
    %cst_108 = arith.constant dense<0.000000e+00> : vector<8x162xf32>
    %417 = tpu.matmul %414, %416, %cst_108 {dimension_numbers = #tpu.dot_dimension_numbers<[1], [0], [0], [1], [0, 0, 1, 1], [], []>} : vector<8x40xbf16>, vector<40x162xbf16>, vector<8x162xf32> -> vector<8x162xf32>
    %418 = arith.addf %407, %417 : vector<8x162xf32>
    %419 = vector.extract_strided_slice %412 {offsets = [24, 0], sizes = [40, 162], strides = [1, 1]} : vector<64x162xf32> to vector<40x162xf32>
    %420 = arith.truncf %419 : vector<40x162xf32> to vector<40x162xbf16>
    %cst_109 = arith.constant dense<0.000000e+00> : vector<8x162xf32>
    %421 = tpu.matmul %414, %420, %cst_109 {dimension_numbers = #tpu.dot_dimension_numbers<[1], [0], [0], [1], [0, 0, 1, 1], [], []>} : vector<8x40xbf16>, vector<40x162xbf16>, vector<8x162xf32> -> vector<8x162xf32>
    %422 = arith.addf %411, %421 : vector<8x162xf32>
    %423 = vector.extract_strided_slice %364 {offsets = [0, 11], sizes = [64, 162], strides = [1, 1]} : vector<64x182xf32> to vector<64x162xf32>
    %424 = vector.extract_strided_slice %365 {offsets = [40, 0], sizes = [8, 40], strides = [1, 1]} : vector<72x40xf32> to vector<8x40xf32>
    %425 = arith.truncf %424 : vector<8x40xf32> to vector<8x40xbf16>
    %426 = vector.extract_strided_slice %423 {offsets = [0, 0], sizes = [40, 162], strides = [1, 1]} : vector<64x162xf32> to vector<40x162xf32>
    %427 = arith.truncf %426 : vector<40x162xf32> to vector<40x162xbf16>
    %cst_110 = arith.constant dense<0.000000e+00> : vector<8x162xf32>
    %428 = tpu.matmul %425, %427, %cst_110 {dimension_numbers = #tpu.dot_dimension_numbers<[1], [0], [0], [1], [0, 0, 1, 1], [], []>} : vector<8x40xbf16>, vector<40x162xbf16>, vector<8x162xf32> -> vector<8x162xf32>
    %429 = arith.addf %418, %428 : vector<8x162xf32>
    %430 = vector.extract_strided_slice %423 {offsets = [24, 0], sizes = [40, 162], strides = [1, 1]} : vector<64x162xf32> to vector<40x162xf32>
    %431 = arith.truncf %430 : vector<40x162xf32> to vector<40x162xbf16>
    %cst_111 = arith.constant dense<0.000000e+00> : vector<8x162xf32>
    %432 = tpu.matmul %425, %431, %cst_111 {dimension_numbers = #tpu.dot_dimension_numbers<[1], [0], [0], [1], [0, 0, 1, 1], [], []>} : vector<8x40xbf16>, vector<40x162xbf16>, vector<8x162xf32> -> vector<8x162xf32>
    %433 = arith.addf %422, %432 : vector<8x162xf32>
    %434 = vector.extract_strided_slice %364 {offsets = [0, 18], sizes = [64, 162], strides = [1, 1]} : vector<64x182xf32> to vector<64x162xf32>
    %435 = vector.extract_strided_slice %365 {offsets = [48, 0], sizes = [8, 40], strides = [1, 1]} : vector<72x40xf32> to vector<8x40xf32>
    %436 = arith.truncf %435 : vector<8x40xf32> to vector<8x40xbf16>
    %437 = vector.extract_strided_slice %434 {offsets = [0, 0], sizes = [40, 162], strides = [1, 1]} : vector<64x162xf32> to vector<40x162xf32>
    %438 = arith.truncf %437 : vector<40x162xf32> to vector<40x162xbf16>
    %cst_112 = arith.constant dense<0.000000e+00> : vector<8x162xf32>
    %439 = tpu.matmul %436, %438, %cst_112 {dimension_numbers = #tpu.dot_dimension_numbers<[1], [0], [0], [1], [0, 0, 1, 1], [], []>} : vector<8x40xbf16>, vector<40x162xbf16>, vector<8x162xf32> -> vector<8x162xf32>
    %440 = arith.addf %429, %439 : vector<8x162xf32>
    %441 = vector.extract_strided_slice %434 {offsets = [24, 0], sizes = [40, 162], strides = [1, 1]} : vector<64x162xf32> to vector<40x162xf32>
    %442 = arith.truncf %441 : vector<40x162xf32> to vector<40x162xbf16>
    %cst_113 = arith.constant dense<0.000000e+00> : vector<8x162xf32>
    %443 = tpu.matmul %436, %442, %cst_113 {dimension_numbers = #tpu.dot_dimension_numbers<[1], [0], [0], [1], [0, 0, 1, 1], [], []>} : vector<8x40xbf16>, vector<40x162xbf16>, vector<8x162xf32> -> vector<8x162xf32>
    %444 = arith.addf %433, %443 : vector<8x162xf32>
    %445 = vector.extract_strided_slice %364 {offsets = [0, 19], sizes = [64, 162], strides = [1, 1]} : vector<64x182xf32> to vector<64x162xf32>
    %446 = vector.extract_strided_slice %365 {offsets = [56, 0], sizes = [8, 40], strides = [1, 1]} : vector<72x40xf32> to vector<8x40xf32>
    %447 = arith.truncf %446 : vector<8x40xf32> to vector<8x40xbf16>
    %448 = vector.extract_strided_slice %445 {offsets = [0, 0], sizes = [40, 162], strides = [1, 1]} : vector<64x162xf32> to vector<40x162xf32>
    %449 = arith.truncf %448 : vector<40x162xf32> to vector<40x162xbf16>
    %cst_114 = arith.constant dense<0.000000e+00> : vector<8x162xf32>
    %450 = tpu.matmul %447, %449, %cst_114 {dimension_numbers = #tpu.dot_dimension_numbers<[1], [0], [0], [1], [0, 0, 1, 1], [], []>} : vector<8x40xbf16>, vector<40x162xbf16>, vector<8x162xf32> -> vector<8x162xf32>
    %451 = arith.addf %440, %450 : vector<8x162xf32>
    %452 = vector.extract_strided_slice %445 {offsets = [24, 0], sizes = [40, 162], strides = [1, 1]} : vector<64x162xf32> to vector<40x162xf32>
    %453 = arith.truncf %452 : vector<40x162xf32> to vector<40x162xbf16>
    %cst_115 = arith.constant dense<0.000000e+00> : vector<8x162xf32>
    %454 = tpu.matmul %447, %453, %cst_115 {dimension_numbers = #tpu.dot_dimension_numbers<[1], [0], [0], [1], [0, 0, 1, 1], [], []>} : vector<8x40xbf16>, vector<40x162xbf16>, vector<8x162xf32> -> vector<8x162xf32>
    %455 = arith.addf %444, %454 : vector<8x162xf32>
    %456 = vector.extract_strided_slice %364 {offsets = [0, 20], sizes = [64, 162], strides = [1, 1]} : vector<64x182xf32> to vector<64x162xf32>
    %457 = vector.extract_strided_slice %365 {offsets = [64, 0], sizes = [8, 40], strides = [1, 1]} : vector<72x40xf32> to vector<8x40xf32>
    %458 = arith.truncf %457 : vector<8x40xf32> to vector<8x40xbf16>
    %459 = vector.extract_strided_slice %456 {offsets = [0, 0], sizes = [40, 162], strides = [1, 1]} : vector<64x162xf32> to vector<40x162xf32>
    %460 = arith.truncf %459 : vector<40x162xf32> to vector<40x162xbf16>
    %cst_116 = arith.constant dense<0.000000e+00> : vector<8x162xf32>
    %461 = tpu.matmul %458, %460, %cst_116 {dimension_numbers = #tpu.dot_dimension_numbers<[1], [0], [0], [1], [0, 0, 1, 1], [], []>} : vector<8x40xbf16>, vector<40x162xbf16>, vector<8x162xf32> -> vector<8x162xf32>
    %462 = arith.addf %451, %461 : vector<8x162xf32>
    %463 = vector.extract_strided_slice %456 {offsets = [24, 0], sizes = [40, 162], strides = [1, 1]} : vector<64x162xf32> to vector<40x162xf32>
    %464 = arith.truncf %463 : vector<40x162xf32> to vector<40x162xbf16>
    %cst_117 = arith.constant dense<0.000000e+00> : vector<8x162xf32>
    %465 = tpu.matmul %458, %464, %cst_117 {dimension_numbers = #tpu.dot_dimension_numbers<[1], [0], [0], [1], [0, 0, 1, 1], [], []>} : vector<8x40xbf16>, vector<40x162xbf16>, vector<8x162xf32> -> vector<8x162xf32>
    %466 = arith.addf %455, %465 : vector<8x162xf32>
    %467 = vector.broadcast %366 : vector<8x1xf32> to vector<8x162xf32>
    %468 = arith.addf %462, %467 : vector<8x162xf32>
    %cst_118 = arith.constant 0.000000e+00 : f32
    %469 = vector.broadcast %cst_118 : f32 to vector<8x162xf32>
    %470 = arith.maximumf %468, %469 : vector<8x162xf32>
    %471 = vector.broadcast %366 : vector<8x1xf32> to vector<8x162xf32>
    %472 = arith.addf %466, %471 : vector<8x162xf32>
    %cst_119 = arith.constant 0.000000e+00 : f32
    %473 = vector.broadcast %cst_119 : f32 to vector<8x162xf32>
    %474 = arith.maximumf %472, %473 : vector<8x162xf32>
    %cst_120 = arith.constant 0.000000e+00 : f32
    %475 = vector.broadcast %cst_120 : f32 to vector<8x1xf32>
    %cst_121 = arith.constant 0.000000e+00 : f32
    %476 = vector.broadcast %cst_121 : f32 to vector<8x1xf32>
    %477 = vector.broadcast %369 : vector<1x162xf32> to vector<8x162xf32>
    %478 = arith.mulf %470, %477 : vector<8x162xf32>
    %cst_122 = arith.constant dense<0.000000e+00> : vector<8xf32>
    %479 = vector.multi_reduction <add>, %478, %cst_122 [1] : vector<8x162xf32> to vector<8xf32>
    %480 = vector.shape_cast %479 : vector<8xf32> to vector<8x1xf32>
    %481 = arith.addf %475, %480 : vector<8x1xf32>
    %482 = arith.mulf %478, %470 : vector<8x162xf32>
    %cst_123 = arith.constant dense<0.000000e+00> : vector<8xf32>
    %483 = vector.multi_reduction <add>, %482, %cst_123 [1] : vector<8x162xf32> to vector<8xf32>
    %484 = vector.shape_cast %483 : vector<8xf32> to vector<8x1xf32>
    %485 = arith.addf %476, %484 : vector<8x1xf32>
    %486 = vector.broadcast %369 : vector<1x162xf32> to vector<8x162xf32>
    %487 = arith.mulf %474, %486 : vector<8x162xf32>
    %cst_124 = arith.constant dense<0.000000e+00> : vector<8xf32>
    %488 = vector.multi_reduction <add>, %487, %cst_124 [1] : vector<8x162xf32> to vector<8xf32>
    %489 = vector.shape_cast %488 : vector<8xf32> to vector<8x1xf32>
    %490 = arith.addf %481, %489 : vector<8x1xf32>
    %491 = arith.mulf %487, %474 : vector<8x162xf32>
    %cst_125 = arith.constant dense<0.000000e+00> : vector<8xf32>
    %492 = vector.multi_reduction <add>, %491, %cst_125 [1] : vector<8x162xf32> to vector<8xf32>
    %493 = vector.shape_cast %492 : vector<8xf32> to vector<8x1xf32>
    %494 = arith.addf %485, %493 : vector<8x1xf32>
    %cst_126 = arith.constant 0.00999999977 : f32
    %495 = vector.broadcast %cst_126 : f32 to vector<8x1xf32>
    %496 = arith.mulf %490, %495 : vector<8x1xf32>
    %cst_127 = arith.constant 0.00999999977 : f32
    %497 = vector.broadcast %cst_127 : f32 to vector<8x1xf32>
    %498 = arith.mulf %494, %497 : vector<8x1xf32>
    %499 = arith.mulf %496, %496 : vector<8x1xf32>
    %500 = arith.subf %498, %499 : vector<8x1xf32>
    %cst_128 = arith.constant 0.000000e+00 : f32
    %501 = vector.broadcast %cst_128 : f32 to vector<8x1xf32>
    %502 = arith.maximumf %500, %501 : vector<8x1xf32>
    %cst_129 = arith.constant 9.99999974E-6 : f32
    %503 = vector.broadcast %cst_129 : f32 to vector<8x1xf32>
    %504 = arith.addf %502, %503 : vector<8x1xf32>
    %505 = math.rsqrt %504 : vector<8x1xf32>
    %506 = arith.mulf %367, %505 : vector<8x1xf32>
    %507 = arith.mulf %496, %506 : vector<8x1xf32>
    %508 = arith.subf %368, %507 : vector<8x1xf32>
    %509 = vector.broadcast %506 : vector<8x1xf32> to vector<8x162xf32>
    %510 = arith.mulf %470, %509 : vector<8x162xf32>
    %511 = vector.broadcast %508 : vector<8x1xf32> to vector<8x162xf32>
    %512 = arith.addf %510, %511 : vector<8x162xf32>
    %513 = vector.broadcast %506 : vector<8x1xf32> to vector<8x162xf32>
    %514 = arith.mulf %474, %513 : vector<8x162xf32>
    %515 = vector.broadcast %508 : vector<8x1xf32> to vector<8x162xf32>
    %516 = arith.addf %514, %515 : vector<8x162xf32>
    %cst_130 = arith.constant 0.000000e+00 : f32
    %517 = vector.broadcast %cst_130 : f32 to vector<16x162xf32>
    %518 = tpu.concatenate %517, %512, %516, %517 in 0 : vector<16x162xf32>, vector<8x162xf32>, vector<8x162xf32>, vector<16x162xf32> -> vector<48x162xf32>
    %cst_131 = arith.constant 0.000000e+00 : f32
    %519 = vector.broadcast %cst_131 : f32 to vector<48x20xf32>
    %520 = tpu.concatenate %518, %519 in 1 : vector<48x162xf32>, vector<48x20xf32> -> vector<48x182xf32>
    %c0_132 = arith.constant 0 : index
    %c0_133 = arith.constant 0 : index
    %521 = vector.load %arg3[%c0_132, %c0_133] : memref<72x40xf32, #tpu.memory_space<vmem>>, vector<72x40xf32>
    %c0_134 = arith.constant 0 : index
    %c0_135 = arith.constant 0 : index
    %522 = vector.load %arg10[%c0_134, %c0_135] : memref<8x1xf32, #tpu.memory_space<vmem>>, vector<8x1xf32>
    %c0_136 = arith.constant 0 : index
    %c0_137 = arith.constant 0 : index
    %523 = vector.load %arg11[%c0_136, %c0_137] : memref<8x1xf32, #tpu.memory_space<vmem>>, vector<8x1xf32>
    %c0_138 = arith.constant 0 : index
    %c0_139 = arith.constant 0 : index
    %524 = vector.load %arg12[%c0_138, %c0_139] : memref<8x1xf32, #tpu.memory_space<vmem>>, vector<8x1xf32>
    %c0_140 = arith.constant 0 : index
    %c0_141 = arith.constant 0 : index
    %525 = vector.load %arg15[%c0_140, %c0_141] : memref<1x162xf32, #tpu.memory_space<vmem>>, vector<1x162xf32>
    %526 = vector.extract_strided_slice %520 {offsets = [0, 0], sizes = [48, 162], strides = [1, 1]} : vector<48x182xf32> to vector<48x162xf32>
    %527 = vector.extract_strided_slice %521 {offsets = [0, 0], sizes = [8, 40], strides = [1, 1]} : vector<72x40xf32> to vector<8x40xf32>
    %528 = arith.truncf %527 : vector<8x40xf32> to vector<8x40xbf16>
    %529 = vector.extract_strided_slice %526 {offsets = [0, 0], sizes = [40, 162], strides = [1, 1]} : vector<48x162xf32> to vector<40x162xf32>
    %530 = arith.truncf %529 : vector<40x162xf32> to vector<40x162xbf16>
    %cst_142 = arith.constant dense<0.000000e+00> : vector<8x162xf32>
    %531 = tpu.matmul %528, %530, %cst_142 {dimension_numbers = #tpu.dot_dimension_numbers<[1], [0], [0], [1], [0, 0, 1, 1], [], []>} : vector<8x40xbf16>, vector<40x162xbf16>, vector<8x162xf32> -> vector<8x162xf32>
    %532 = vector.extract_strided_slice %520 {offsets = [0, 1], sizes = [48, 162], strides = [1, 1]} : vector<48x182xf32> to vector<48x162xf32>
    %533 = vector.extract_strided_slice %521 {offsets = [8, 0], sizes = [8, 40], strides = [1, 1]} : vector<72x40xf32> to vector<8x40xf32>
    %534 = arith.truncf %533 : vector<8x40xf32> to vector<8x40xbf16>
    %535 = vector.extract_strided_slice %532 {offsets = [0, 0], sizes = [40, 162], strides = [1, 1]} : vector<48x162xf32> to vector<40x162xf32>
    %536 = arith.truncf %535 : vector<40x162xf32> to vector<40x162xbf16>
    %cst_143 = arith.constant dense<0.000000e+00> : vector<8x162xf32>
    %537 = tpu.matmul %534, %536, %cst_143 {dimension_numbers = #tpu.dot_dimension_numbers<[1], [0], [0], [1], [0, 0, 1, 1], [], []>} : vector<8x40xbf16>, vector<40x162xbf16>, vector<8x162xf32> -> vector<8x162xf32>
    %538 = arith.addf %531, %537 : vector<8x162xf32>
    %539 = vector.extract_strided_slice %520 {offsets = [0, 2], sizes = [48, 162], strides = [1, 1]} : vector<48x182xf32> to vector<48x162xf32>
    %540 = vector.extract_strided_slice %521 {offsets = [16, 0], sizes = [8, 40], strides = [1, 1]} : vector<72x40xf32> to vector<8x40xf32>
    %541 = arith.truncf %540 : vector<8x40xf32> to vector<8x40xbf16>
    %542 = vector.extract_strided_slice %539 {offsets = [0, 0], sizes = [40, 162], strides = [1, 1]} : vector<48x162xf32> to vector<40x162xf32>
    %543 = arith.truncf %542 : vector<40x162xf32> to vector<40x162xbf16>
    %cst_144 = arith.constant dense<0.000000e+00> : vector<8x162xf32>
    %544 = tpu.matmul %541, %543, %cst_144 {dimension_numbers = #tpu.dot_dimension_numbers<[1], [0], [0], [1], [0, 0, 1, 1], [], []>} : vector<8x40xbf16>, vector<40x162xbf16>, vector<8x162xf32> -> vector<8x162xf32>
    %545 = arith.addf %538, %544 : vector<8x162xf32>
    %546 = vector.extract_strided_slice %520 {offsets = [0, 9], sizes = [48, 162], strides = [1, 1]} : vector<48x182xf32> to vector<48x162xf32>
    %547 = vector.extract_strided_slice %521 {offsets = [24, 0], sizes = [8, 40], strides = [1, 1]} : vector<72x40xf32> to vector<8x40xf32>
    %548 = arith.truncf %547 : vector<8x40xf32> to vector<8x40xbf16>
    %549 = vector.extract_strided_slice %546 {offsets = [0, 0], sizes = [40, 162], strides = [1, 1]} : vector<48x162xf32> to vector<40x162xf32>
    %550 = arith.truncf %549 : vector<40x162xf32> to vector<40x162xbf16>
    %cst_145 = arith.constant dense<0.000000e+00> : vector<8x162xf32>
    %551 = tpu.matmul %548, %550, %cst_145 {dimension_numbers = #tpu.dot_dimension_numbers<[1], [0], [0], [1], [0, 0, 1, 1], [], []>} : vector<8x40xbf16>, vector<40x162xbf16>, vector<8x162xf32> -> vector<8x162xf32>
    %552 = arith.addf %545, %551 : vector<8x162xf32>
    %553 = vector.extract_strided_slice %520 {offsets = [0, 10], sizes = [48, 162], strides = [1, 1]} : vector<48x182xf32> to vector<48x162xf32>
    %554 = vector.extract_strided_slice %521 {offsets = [32, 0], sizes = [8, 40], strides = [1, 1]} : vector<72x40xf32> to vector<8x40xf32>
    %555 = arith.truncf %554 : vector<8x40xf32> to vector<8x40xbf16>
    %556 = vector.extract_strided_slice %553 {offsets = [0, 0], sizes = [40, 162], strides = [1, 1]} : vector<48x162xf32> to vector<40x162xf32>
    %557 = arith.truncf %556 : vector<40x162xf32> to vector<40x162xbf16>
    %cst_146 = arith.constant dense<0.000000e+00> : vector<8x162xf32>
    %558 = tpu.matmul %555, %557, %cst_146 {dimension_numbers = #tpu.dot_dimension_numbers<[1], [0], [0], [1], [0, 0, 1, 1], [], []>} : vector<8x40xbf16>, vector<40x162xbf16>, vector<8x162xf32> -> vector<8x162xf32>
    %559 = arith.addf %552, %558 : vector<8x162xf32>
    %560 = vector.extract_strided_slice %520 {offsets = [0, 11], sizes = [48, 162], strides = [1, 1]} : vector<48x182xf32> to vector<48x162xf32>
    %561 = vector.extract_strided_slice %521 {offsets = [40, 0], sizes = [8, 40], strides = [1, 1]} : vector<72x40xf32> to vector<8x40xf32>
    %562 = arith.truncf %561 : vector<8x40xf32> to vector<8x40xbf16>
    %563 = vector.extract_strided_slice %560 {offsets = [0, 0], sizes = [40, 162], strides = [1, 1]} : vector<48x162xf32> to vector<40x162xf32>
    %564 = arith.truncf %563 : vector<40x162xf32> to vector<40x162xbf16>
    %cst_147 = arith.constant dense<0.000000e+00> : vector<8x162xf32>
    %565 = tpu.matmul %562, %564, %cst_147 {dimension_numbers = #tpu.dot_dimension_numbers<[1], [0], [0], [1], [0, 0, 1, 1], [], []>} : vector<8x40xbf16>, vector<40x162xbf16>, vector<8x162xf32> -> vector<8x162xf32>
    %566 = arith.addf %559, %565 : vector<8x162xf32>
    %567 = vector.extract_strided_slice %520 {offsets = [0, 18], sizes = [48, 162], strides = [1, 1]} : vector<48x182xf32> to vector<48x162xf32>
    %568 = vector.extract_strided_slice %521 {offsets = [48, 0], sizes = [8, 40], strides = [1, 1]} : vector<72x40xf32> to vector<8x40xf32>
    %569 = arith.truncf %568 : vector<8x40xf32> to vector<8x40xbf16>
    %570 = vector.extract_strided_slice %567 {offsets = [0, 0], sizes = [40, 162], strides = [1, 1]} : vector<48x162xf32> to vector<40x162xf32>
    %571 = arith.truncf %570 : vector<40x162xf32> to vector<40x162xbf16>
    %cst_148 = arith.constant dense<0.000000e+00> : vector<8x162xf32>
    %572 = tpu.matmul %569, %571, %cst_148 {dimension_numbers = #tpu.dot_dimension_numbers<[1], [0], [0], [1], [0, 0, 1, 1], [], []>} : vector<8x40xbf16>, vector<40x162xbf16>, vector<8x162xf32> -> vector<8x162xf32>
    %573 = arith.addf %566, %572 : vector<8x162xf32>
    %574 = vector.extract_strided_slice %520 {offsets = [0, 19], sizes = [48, 162], strides = [1, 1]} : vector<48x182xf32> to vector<48x162xf32>
    %575 = vector.extract_strided_slice %521 {offsets = [56, 0], sizes = [8, 40], strides = [1, 1]} : vector<72x40xf32> to vector<8x40xf32>
    %576 = arith.truncf %575 : vector<8x40xf32> to vector<8x40xbf16>
    %577 = vector.extract_strided_slice %574 {offsets = [0, 0], sizes = [40, 162], strides = [1, 1]} : vector<48x162xf32> to vector<40x162xf32>
    %578 = arith.truncf %577 : vector<40x162xf32> to vector<40x162xbf16>
    %cst_149 = arith.constant dense<0.000000e+00> : vector<8x162xf32>
    %579 = tpu.matmul %576, %578, %cst_149 {dimension_numbers = #tpu.dot_dimension_numbers<[1], [0], [0], [1], [0, 0, 1, 1], [], []>} : vector<8x40xbf16>, vector<40x162xbf16>, vector<8x162xf32> -> vector<8x162xf32>
    %580 = arith.addf %573, %579 : vector<8x162xf32>
    %581 = vector.extract_strided_slice %520 {offsets = [0, 20], sizes = [48, 162], strides = [1, 1]} : vector<48x182xf32> to vector<48x162xf32>
    %582 = vector.extract_strided_slice %521 {offsets = [64, 0], sizes = [8, 40], strides = [1, 1]} : vector<72x40xf32> to vector<8x40xf32>
    %583 = arith.truncf %582 : vector<8x40xf32> to vector<8x40xbf16>
    %584 = vector.extract_strided_slice %581 {offsets = [0, 0], sizes = [40, 162], strides = [1, 1]} : vector<48x162xf32> to vector<40x162xf32>
    %585 = arith.truncf %584 : vector<40x162xf32> to vector<40x162xbf16>
    %cst_150 = arith.constant dense<0.000000e+00> : vector<8x162xf32>
    %586 = tpu.matmul %583, %585, %cst_150 {dimension_numbers = #tpu.dot_dimension_numbers<[1], [0], [0], [1], [0, 0, 1, 1], [], []>} : vector<8x40xbf16>, vector<40x162xbf16>, vector<8x162xf32> -> vector<8x162xf32>
    %587 = arith.addf %580, %586 : vector<8x162xf32>
    %588 = vector.broadcast %522 : vector<8x1xf32> to vector<8x162xf32>
    %589 = arith.addf %587, %588 : vector<8x162xf32>
    %cst_151 = arith.constant 0.000000e+00 : f32
    %590 = vector.broadcast %cst_151 : f32 to vector<8x162xf32>
    %591 = arith.maximumf %589, %590 : vector<8x162xf32>
    %cst_152 = arith.constant 0.000000e+00 : f32
    %592 = vector.broadcast %cst_152 : f32 to vector<8x1xf32>
    %cst_153 = arith.constant 0.000000e+00 : f32
    %593 = vector.broadcast %cst_153 : f32 to vector<8x1xf32>
    %594 = vector.broadcast %525 : vector<1x162xf32> to vector<8x162xf32>
    %595 = arith.mulf %591, %594 : vector<8x162xf32>
    %cst_154 = arith.constant dense<0.000000e+00> : vector<8xf32>
    %596 = vector.multi_reduction <add>, %595, %cst_154 [1] : vector<8x162xf32> to vector<8xf32>
    %597 = vector.shape_cast %596 : vector<8xf32> to vector<8x1xf32>
    %598 = arith.addf %592, %597 : vector<8x1xf32>
    %599 = arith.mulf %595, %591 : vector<8x162xf32>
    %cst_155 = arith.constant dense<0.000000e+00> : vector<8xf32>
    %600 = vector.multi_reduction <add>, %599, %cst_155 [1] : vector<8x162xf32> to vector<8xf32>
    %601 = vector.shape_cast %600 : vector<8xf32> to vector<8x1xf32>
    %602 = arith.addf %593, %601 : vector<8x1xf32>
    %cst_156 = arith.constant 0.055555556 : f32
    %603 = vector.broadcast %cst_156 : f32 to vector<8x1xf32>
    %604 = arith.mulf %598, %603 : vector<8x1xf32>
    %cst_157 = arith.constant 0.055555556 : f32
    %605 = vector.broadcast %cst_157 : f32 to vector<8x1xf32>
    %606 = arith.mulf %602, %605 : vector<8x1xf32>
    %607 = arith.mulf %604, %604 : vector<8x1xf32>
    %608 = arith.subf %606, %607 : vector<8x1xf32>
    %cst_158 = arith.constant 0.000000e+00 : f32
    %609 = vector.broadcast %cst_158 : f32 to vector<8x1xf32>
    %610 = arith.maximumf %608, %609 : vector<8x1xf32>
    %cst_159 = arith.constant 9.99999974E-6 : f32
    %611 = vector.broadcast %cst_159 : f32 to vector<8x1xf32>
    %612 = arith.addf %610, %611 : vector<8x1xf32>
    %613 = math.rsqrt %612 : vector<8x1xf32>
    %614 = arith.mulf %523, %613 : vector<8x1xf32>
    %615 = arith.mulf %604, %614 : vector<8x1xf32>
    %616 = arith.subf %524, %615 : vector<8x1xf32>
    %617 = vector.broadcast %614 : vector<8x1xf32> to vector<8x162xf32>
    %618 = arith.mulf %591, %617 : vector<8x162xf32>
    %619 = vector.broadcast %616 : vector<8x1xf32> to vector<8x162xf32>
    %620 = arith.addf %618, %619 : vector<8x162xf32>
    %c0_160 = arith.constant 0 : index
    %c0_161 = arith.constant 0 : index
    %621 = vector.load %arg15[%c0_160, %c0_161] : memref<1x162xf32, #tpu.memory_space<vmem>>, vector<1x162xf32>
    %622 = vector.extract_strided_slice %620 {offsets = [0, 0], sizes = [8, 81], strides = [1, 1]} : vector<8x162xf32> to vector<8x81xf32>
    %623 = vector.extract_strided_slice %621 {offsets = [0, 0], sizes = [1, 81], strides = [1, 1]} : vector<1x162xf32> to vector<1x81xf32>
    %cst_162 = arith.constant 5.000000e-01 : f32
    %624 = vector.broadcast %cst_162 : f32 to vector<1x81xf32>
    %625 = arith.cmpf ogt, %623, %624 : vector<1x81xf32>
    %cst_163 = arith.constant 0xFF800000 : f32
    %626 = vector.shape_cast %625 : vector<1x81xi1> to vector<1x81xi1>
    %627 = vector.broadcast %626 : vector<1x81xi1> to vector<8x81xi1>
    %628 = vector.broadcast %cst_163 : f32 to vector<8x81xf32>
    %629 = arith.select %627, %622, %628 : vector<8x81xi1>, vector<8x81xf32>
    %cst_164 = arith.constant dense<0xFF800000> : vector<8xf32>
    %630 = vector.multi_reduction <maximumf>, %629, %cst_164 [1] : vector<8x81xf32> to vector<8xf32>
    %631 = vector.shape_cast %630 : vector<8xf32> to vector<8x1xf32>
    %632 = vector.extract_strided_slice %620 {offsets = [0, 81], sizes = [8, 81], strides = [1, 1]} : vector<8x162xf32> to vector<8x81xf32>
    %633 = vector.extract_strided_slice %621 {offsets = [0, 81], sizes = [1, 81], strides = [1, 1]} : vector<1x162xf32> to vector<1x81xf32>
    %cst_165 = arith.constant 5.000000e-01 : f32
    %634 = vector.broadcast %cst_165 : f32 to vector<1x81xf32>
    %635 = arith.cmpf ogt, %633, %634 : vector<1x81xf32>
    %cst_166 = arith.constant 0xFF800000 : f32
    %636 = vector.shape_cast %635 : vector<1x81xi1> to vector<1x81xi1>
    %637 = vector.broadcast %636 : vector<1x81xi1> to vector<8x81xi1>
    %638 = vector.broadcast %cst_166 : f32 to vector<8x81xf32>
    %639 = arith.select %637, %632, %638 : vector<8x81xi1>, vector<8x81xf32>
    %cst_167 = arith.constant dense<0xFF800000> : vector<8xf32>
    %640 = vector.multi_reduction <maximumf>, %639, %cst_167 [1] : vector<8x81xf32> to vector<8xf32>
    %641 = vector.shape_cast %640 : vector<8xf32> to vector<8x1xf32>
    %642 = tpu.concatenate %631, %641 in 1 : vector<8x1xf32>, vector<8x1xf32> -> vector<8x2xf32>
    %c0_168 = arith.constant 0 : index
    %c0_169 = arith.constant 0 : index
    %643 = vector.load %arg16[%c0_168, %c0_169] : memref<8x2xf32, #tpu.memory_space<vmem>>, vector<8x2xf32>
    tpu.vector_store %arg16[%c0_168, %c0_169], %642 {strides = array<i32>} : memref<8x2xf32, #tpu.memory_space<vmem>>, vector<8x2xf32>,
    return
  }
}

</mosaic_0001>

<llo_original>
// kernel: forward.1
$region0: #{forward.1}
  #allocation0 [shape = 'u32[]', space=smem, size = 0x4, offset = 0x4, fixed_abs, tag = 'smem constant byte address 0x4 - core index']
  #allocation1 [shape = 'u32[144,128]{1,0:T(1,128)}', space=vmem, size = 0x12000, scoped, tag = 'internal scratch']
  %s0 = inlined_call_operand.vmem [shape: f32[80,182], index: 0, kind: input, shape index: {}]
  %s1 = inlined_call_operand.vmem [shape: f32[72,20], index: 1, kind: input, shape index: {}]
  %s2 = inlined_call_operand.vmem [shape: f32[72,40], index: 2, kind: input, shape index: {}]
  %s3 = inlined_call_operand.vmem [shape: f32[72,40], index: 3, kind: input, shape index: {}]
  %s4 = inlined_call_operand.vmem [shape: f32[8,1], index: 4, kind: input, shape index: {}]
  %s5 = inlined_call_operand.vmem [shape: f32[8,1], index: 5, kind: input, shape index: {}]
  %s6 = inlined_call_operand.vmem [shape: f32[8,1], index: 6, kind: input, shape index: {}]
  %s7 = inlined_call_operand.vmem [shape: f32[8,1], index: 7, kind: input, shape index: {}]
  %s8 = inlined_call_operand.vmem [shape: f32[8,1], index: 8, kind: input, shape index: {}]
  %s9 = inlined_call_operand.vmem [shape: f32[8,1], index: 9, kind: input, shape index: {}]
  %s10 = inlined_call_operand.vmem [shape: f32[8,1], index: 10, kind: input, shape index: {}]
  %s11 = inlined_call_operand.vmem [shape: f32[8,1], index: 11, kind: input, shape index: {}]
  %s12 = inlined_call_operand.vmem [shape: f32[8,1], index: 12, kind: input, shape index: {}]
  %s13 = inlined_call_operand.vmem [shape: f32[1,162], index: 13, kind: input, shape index: {}]
  %s14 = inlined_call_operand.vmem [shape: f32[1,162], index: 14, kind: input, shape index: {}]
  %s15 = inlined_call_operand.vmem [shape: f32[1,162], index: 15, kind: input, shape index: {}]
  %s16 = inlined_call_operand.vmem [shape: f32[8,2], index: 16, kind: output, shape index: {}]
  %s17 = sld [smem:[#allocation0]]
  $region74: #{forward.1} parent=0
    _
  %s19 = ssub.s32 1, %s17
  %s20 = scalar_select 0, %s19, %s17
  // Predicated region
  $region2: #{forward.1} parent=0 // pred_check
    _
  $region3: #{forward.1} parent=0 // pred_check_branch
    %22 = sbr.rel (0) target = $region5
  $region4: #{forward.1} parent=0 // pred_region
    _
  $region5: #{forward.1} parent=0 // pred_fallthru
    _
  // Predicated region
  $region6: #{forward.1} parent=0 // pred_check
    _
  $region7: #{forward.1} parent=0 // pred_check_branch
    %24 = sbr.rel (0) target = $region9
  $region8: #{forward.1} parent=0 // pred_region
    _
  $region9: #{forward.1} parent=0 // pred_fallthru
    _
  // Predicated region
  $region10: #{forward.1} parent=0 // pred_check
    _
  $region11: #{forward.1} parent=0 // pred_check_branch
    %26 = sbr.rel (0) target = $region13
  $region12: #{forward.1} parent=0 // pred_region
    _
  $region13: #{forward.1} parent=0 // pred_fallthru
    _
  // Predicated region
  $region14: #{forward.1} parent=0 // pred_check
    _
  $region15: #{forward.1} parent=0 // pred_check_branch
    %28 = sbr.rel (0) target = $region17
  $region16: #{forward.1} parent=0 // pred_region
    _
  $region17: #{forward.1} parent=0 // pred_fallthru
    _
  // Predicated region
  $region18: #{forward.1} parent=0 // pred_check
    _
  $region19: #{forward.1} parent=0 // pred_check_branch
    %30 = sbr.rel (0) target = $region21
  $region20: #{forward.1} parent=0 // pred_region
    _
  $region21: #{forward.1} parent=0 // pred_fallthru
    _
  // Predicated region
  $region22: #{forward.1} parent=0 // pred_check
    _
  $region23: #{forward.1} parent=0 // pred_check_branch
    %32 = sbr.rel (0) target = $region25
  $region24: #{forward.1} parent=0 // pred_region
    _
  $region25: #{forward.1} parent=0 // pred_fallthru
    _
  // Predicated region
  $region26: #{forward.1} parent=0 // pred_check
    _
  $region27: #{forward.1} parent=0 // pred_check_branch
    %34 = sbr.rel (0) target = $region29
  $region28: #{forward.1} parent=0 // pred_region
    _
  $region29: #{forward.1} parent=0 // pred_fallthru
    _
  // Predicated region
  $region30: #{forward.1} parent=0 // pred_check
    _
  $region31: #{forward.1} parent=0 // pred_check_branch
    %36 = sbr.rel (0) target = $region33
  $region32: #{forward.1} parent=0 // pred_region
    _
  $region33: #{forward.1} parent=0 // pred_fallthru
    _
  // Predicated region
  $region34: #{forward.1} parent=0 // pred_check
    _
  $region35: #{forward.1} parent=0 // pred_check_branch
    %38 = sbr.rel (0) target = $region37
  $region36: #{forward.1} parent=0 // pred_region
    _
  $region37: #{forward.1} parent=0 // pred_fallthru
    _
  // Predicated region
  $region38: #{forward.1} parent=0 // pred_check
    _
  $region39: #{forward.1} parent=0 // pred_check_branch
    %40 = sbr.rel (0) target = $region41
  $region40: #{forward.1} parent=0 // pred_region
    _
  $region41: #{forward.1} parent=0 // pred_fallthru
    _
  // Predicated region
  $region42: #{forward.1} parent=0 // pred_check
    _
  $region43: #{forward.1} parent=0 // pred_check_branch
    %42 = sbr.rel (0) target = $region45
  $region44: #{forward.1} parent=0 // pred_region
    _
  $region45: #{forward.1} parent=0 // pred_fallthru
    _
  // Predicated region
  $region46: #{forward.1} parent=0 // pred_check
    _
  $region47: #{forward.1} parent=0 // pred_check_branch
    %44 = sbr.rel (0) target = $region49
  $region48: #{forward.1} parent=0 // pred_region
    _
  $region49: #{forward.1} parent=0 // pred_fallthru
    _
  // Predicated region
  $region50: #{forward.1} parent=0 // pred_check
    _
  $region51: #{forward.1} parent=0 // pred_check_branch
    %46 = sbr.rel (0) target = $region53
  $region52: #{forward.1} parent=0 // pred_region
    _
  $region53: #{forward.1} parent=0 // pred_fallthru
    _
  // Predicated region
  $region54: #{forward.1} parent=0 // pred_check
    _
  $region55: #{forward.1} parent=0 // pred_check_branch
    %48 = sbr.rel (0) target = $region57
  $region56: #{forward.1} parent=0 // pred_region
    _
  $region57: #{forward.1} parent=0 // pred_fallthru
    _
  // Predicated region
  $region58: #{forward.1} parent=0 // pred_check
    _
  $region59: #{forward.1} parent=0 // pred_check_branch
    %50 = sbr.rel (0) target = $region61
  $region60: #{forward.1} parent=0 // pred_region
    _
  $region61: #{forward.1} parent=0 // pred_fallthru
    _
  // Predicated region
  $region62: #{forward.1} parent=0 // pred_check
    _
  $region63: #{forward.1} parent=0 // pred_check_branch
    %52 = sbr.rel (0) target = $region65
  $region64: #{forward.1} parent=0 // pred_region
    _
  $region65: #{forward.1} parent=0 // pred_fallthru
    _
  %v54 = vld [vmem:[%s0] sm:$0xff]
  %v55 = vld [vmem:[%s0 + $0x8] sm:$0xff]
  %v56 = vld [vmem:[%s0 + $0x10] sm:$0xff]
  %v57 = vld [vmem:[%s0 + $0x18] sm:$0xff]
  %v58 = vld [vmem:[%s0 + $0x20] sm:$0xff]
  %v59 = vld [vmem:[%s0 + $0x28] sm:$0xff]
  %v60 = vld [vmem:[%s0 + $0x30] sm:$0xff]
  %v61 = vld [vmem:[%s0 + $0x38] sm:$0xff]
  %v62 = vld [vmem:[%s0 + $0x40] sm:$0xff]
  %v63 = vld [vmem:[%s0 + $0x48] sm:$0xff]
  %v64 = vld [vmem:[%s0 + $0x50] sm:$0xff]
  %v65 = vld [vmem:[%s0 + $0x58] sm:$0xff]
  %v66 = vld [vmem:[%s0 + $0x60] sm:$0xff]
  %v67 = vld [vmem:[%s0 + $0x68] sm:$0xff]
  %v68 = vld [vmem:[%s0 + $0x70] sm:$0xff]
  %v69 = vld [vmem:[%s0 + $0x78] sm:$0xff]
  %v70 = vld [vmem:[%s0 + $0x80] sm:$0xff]
  %v71 = vld [vmem:[%s0 + $0x88] sm:$0xff]
  %v72 = vld [vmem:[%s0 + $0x90] sm:$0xff]
  %v73 = vld [vmem:[%s0 + $0x98] sm:$0xff]
  %v74 = vld [vmem:[%s1] sm:$0xff]
  %v75 = vld [vmem:[%s1 + $0x8] sm:$0xff]
  %v76 = vld [vmem:[%s1 + $0x10] sm:$0xff]
  %v77 = vld [vmem:[%s1 + $0x18] sm:$0xff]
  %v78 = vld [vmem:[%s1 + $0x20] sm:$0xff]
  %v79 = vld [vmem:[%s1 + $0x28] sm:$0xff]
  %v80 = vld [vmem:[%s1 + $0x30] sm:$0xff]
  %v81 = vld [vmem:[%s1 + $0x38] sm:$0xff]
  %v82 = vld [vmem:[%s1 + $0x40] sm:$0xff]
  %v83 = vld [vmem:[%s4] sm:$0xff]
  %v84 = vld [vmem:[%s5] sm:$0xff]
  %v85 = vld [vmem:[%s6] sm:$0xff]
  %v86 = vld [vmem:[%s13] sm:$0x3]
  %v87 = vpack.c.bf16 %v74, %v74
  %v88 = vpack.c.bf16 %v56, %v54
  %v89 = vpack.c.bf16 %v57, %v55
  %v90 = vpack.c.bf16 %v58, %v58
  %v91 = vpack.c.bf16 %v59, %v59
  %v92 = vpack.c.bf16 %v58, %v56
  %v93 = vpack.c.bf16 %v59, %v57
  %v94 = vpack.c.bf16 %v60, %v60
  %v95 = vpack.c.bf16 %v61, %v61
  %v96 = vpack.c.bf16 %v62, %v60
  %v97 = vpack.c.bf16 %v63, %v61
  %v98 = vpack.c.bf16 %v64, %v64
  %v99 = vpack.c.bf16 %v65, %v65
  %v100 = vpack.c.bf16 %v64, %v62
  %v101 = vpack.c.bf16 %v65, %v63
  %v102 = vpack.c.bf16 %v66, %v66
  %v103 = vpack.c.bf16 %v67, %v67
  %v104 = vpack.c.bf16 %v68, %v66
  %v105 = vpack.c.bf16 %v69, %v67
  %v106 = vpack.c.bf16 %v70, %v70
  %v107 = vpack.c.bf16 %v71, %v71
  %v108 = vpack.c.bf16 %v70, %v68
  %v109 = vpack.c.bf16 %v71, %v69
  %v110 = vpack.c.bf16 %v72, %v72
  %v111 = vpack.c.bf16 %v73, %v73
  %v112 = vpack.c.bf16 %v75, %v75
  %117 = vrot.lane.b32.xlu0 %v88, 127
  %v118 = vpop.permute.xlu0 %117
  %119 = vrot.lane.b32.xlu0 %v89, 127
  %v120 = vpop.permute.xlu0 %119
  %121 = vrot.lane.b32.xlu0 %v90, 127
  %v122 = vpop.permute.xlu0 %121
  %123 = vrot.lane.b32.xlu0 %v91, 127
  %v124 = vpop.permute.xlu0 %123
  %vm125 = vcmask 1039360
  %v126 = vsel %vm125, %v118, %v120
  %v127 = vsel %vm125, %v122, %v124
  %vm130 = vcmask 162816
  %v132 = vsel %vm130, %v112, 0
  %vm134 = vcmask 1041408
  %v136 = vsel %vm134, %v127, 0
  %v139 = vsel %vm134, %v124, 0
  %141 = vmatprep.subr.bf16.mxu0 %v120
  %142 = vmatpush1.bf16.msra.mxu0 %v126
  %143 = vmatprep.subr.bf16.mxu0 %v139
  %144 = vmatpush1.bf16.msra.mxu0 %v136
  %145 = vmatprep.subr.bf16.mxu0 0
  %146 = vmatpush1.bf16.msra.mxu0 0
  %147 = vmatprep.subr.bf16.mxu0 0
  %148 = vmatpush1.bf16.msra.mxu0 0
  %149 = vmatprep.subr.bf16.mxu0 0
  %150 = vmatpush1.bf16.msra.mxu0 0
  %151 = vmatprep.subr.bf16.mxu0 0
  %152 = vmatpush1.bf16.msra.mxu0 0
  %153 = vmatprep.subr.bf16.mxu0 0
  %154 = vmatpush1.bf16.msra.mxu0 0
  %155 = vmatprep.subr.bf16.mxu0 0
  %156 = vmatpush1.bf16.msra.mxu0 0
  %157 = vmatprep.subr.bf16.mxu0 0
  %158 = vmatpush1.bf16.msra.mxu0 0
  %159 = vmatprep.subr.bf16.mxu0 0
  %160 = vmatpush1.bf16.msra.mxu0 0
  %161 = vmatprep.subr.bf16.mxu0 0
  %162 = vmatpush1.bf16.msra.mxu0 0
  %163 = vmatprep.subr.bf16.mxu0 0
  %164 = vmatpush1.bf16.msra.mxu0 0
  %165 = vmatprep.subr.bf16.mxu0 0
  %166 = vmatpush1.bf16.msra.mxu0 0
  %167 = vmatprep.subr.bf16.mxu0 0
  %168 = vmatpush1.bf16.msra.mxu0 0
  %169 = vmatprep.subr.bf16.mxu0 0
  %170 = vmatpush1.bf16.msra.mxu0 0
  %171 = vmatprep.subr.bf16.mxu0 0
  %172 = vmatpush1.bf16.msra.mxu0 0
  %173 = vmatprep.mubr.bf16.mxu0 0
  %174 = vmatmul.mubr.bf16.gmra.mrb[0].mxu0 %v132
  %v175 = vpop.f32.mrb[0].mxu0
  %v176 = vadd.f32 0.0, %v175
  %v177 = vpop.f32.mrb[0].mxu0
  %v178 = vadd.f32 0.0, %v177
  %v179 = vpop.f32.mrb[0].mxu0
  %v180 = vpop.f32.mrb[0].mxu0
  %181 = vdwg.mxu0
  %v183 = vsel %vm130, %v87, 0
  %v186 = vsel %vm134, %v90, 0
  %v189 = vsel %vm134, %v91, 0
  %191 = vmatprep.subr.bf16.mxu0 %v89
  %192 = vmatpush1.bf16.msra.mxu0 %v88
  %193 = vmatprep.subr.bf16.mxu0 %v189
  %194 = vmatpush1.bf16.msra.mxu0 %v186
  %195 = vmatprep.subr.bf16.mxu0 0
  %196 = vmatpush1.bf16.msra.mxu0 0
  %197 = vmatprep.subr.bf16.mxu0 0
  %198 = vmatpush1.bf16.msra.mxu0 0
  %199 = vmatprep.subr.bf16.mxu0 0
  %200 = vmatpush1.bf16.msra.mxu0 0
  %201 = vmatprep.subr.bf16.mxu0 0
  %202 = vmatpush1.bf16.msra.mxu0 0
  %203 = vmatprep.subr.bf16.mxu0 0
  %204 = vmatpush1.bf16.msra.mxu0 0
  %205 = vmatprep.subr.bf16.mxu0 0
  %206 = vmatpush1.bf16.msra.mxu0 0
  %207 = vmatprep.subr.bf16.mxu0 0
  %208 = vmatpush1.bf16.msra.mxu0 0
  %209 = vmatprep.subr.bf16.mxu0 0
  %210 = vmatpush1.bf16.msra.mxu0 0
  %211 = vmatprep.subr.bf16.mxu0 0
  %212 = vmatpush1.bf16.msra.mxu0 0
  %213 = vmatprep.subr.bf16.mxu0 0
  %214 = vmatpush1.bf16.msra.mxu0 0
  %215 = vmatprep.subr.bf16.mxu0 0
  %216 = vmatpush1.bf16.msra.mxu0 0
  %217 = vmatprep.subr.bf16.mxu0 0
  %218 = vmatpush1.bf16.msra.mxu0 0
  %219 = vmatprep.subr.bf16.mxu0 0
  %220 = vmatpush1.bf16.msra.mxu0 0
  %221 = vmatprep.subr.bf16.mxu0 0
  %222 = vmatpush1.bf16.msra.mxu0 0
  %223 = vmatprep.mubr.bf16.mxu0 0
  %224 = vmatmul.mubr.bf16.gmra.mrb[0].mxu0 %v183
  %v225 = vpop.f32.mrb[0].mxu0
  %v226 = vadd.f32 %v176, %v225
  %v227 = vpop.f32.mrb[0].mxu0
  %v228 = vadd.f32 %v178, %v227
  %v229 = vpop.f32.mrb[0].mxu0
  %v230 = vpop.f32.mrb[0].mxu0
  %231 = vdwg.mxu0
  %vm236 = vcmask 1045504
  %v237 = vrot.slane %v92, 2
  %v238 = vrot.slane %v94, 2
  %v239 = vsel %vm236, %v237, %v238
  %v240 = vrot.slane %v93, 2
  %v241 = vrot.slane %v95, 2
  %v242 = vsel %vm236, %v240, %v241
  %243 = vrot.lane.b32.xlu0 %v239, 127
  %v244 = vpop.permute.xlu0 %243
  %245 = vrot.lane.b32.xlu0 %v242, 127
  %v246 = vpop.permute.xlu0 %245
  %247 = vrot.lane.b32.xlu0 %v238, 127
  %v248 = vpop.permute.xlu0 %247
  %249 = vrot.lane.b32.xlu0 %v241, 127
  %v250 = vpop.permute.xlu0 %249
  %v251 = vsel %vm125, %v244, %v246
  %v252 = vsel %vm125, %v248, %v250
  %v256 = vsel %vm134, %v252, 0
  %v259 = vsel %vm134, %v250, 0
  %261 = vmatprep.subr.bf16.mxu0 %v246
  %262 = vmatpush1.bf16.msra.mxu0 %v251
  %263 = vmatprep.subr.bf16.mxu0 %v259
  %264 = vmatpush1.bf16.msra.mxu0 %v256
  %265 = vmatprep.subr.bf16.mxu0 0
  %266 = vmatpush1.bf16.msra.mxu0 0
  %267 = vmatprep.subr.bf16.mxu0 0
  %268 = vmatpush1.bf16.msra.mxu0 0
  %269 = vmatprep.subr.bf16.mxu0 0
  %270 = vmatpush1.bf16.msra.mxu0 0
  %271 = vmatprep.subr.bf16.mxu0 0
  %272 = vmatpush1.bf16.msra.mxu0 0
  %273 = vmatprep.subr.bf16.mxu0 0
  %274 = vmatpush1.bf16.msra.mxu0 0
  %275 = vmatprep.subr.bf16.mxu0 0
  %276 = vmatpush1.bf16.msra.mxu0 0
  %277 = vmatprep.subr.bf16.mxu0 0
  %278 = vmatpush1.bf16.msra.mxu0 0
  %279 = vmatprep.subr.bf16.mxu0 0
  %280 = vmatpush1.bf16.msra.mxu0 0
  %281 = vmatprep.subr.bf16.mxu0 0
  %282 = vmatpush1.bf16.msra.mxu0 0
  %283 = vmatprep.subr.bf16.mxu0 0
  %284 = vmatpush1.bf16.msra.mxu0 0
  %285 = vmatprep.subr.bf16.mxu0 0
  %286 = vmatpush1.bf16.msra.mxu0 0
  %287 = vmatprep.subr.bf16.mxu0 0
  %288 = vmatpush1.bf16.msra.mxu0 0
  %289 = vmatprep.subr.bf16.mxu0 0
  %290 = vmatpush1.bf16.msra.mxu0 0
  %291 = vmatprep.subr.bf16.mxu0 0
  %292 = vmatpush1.bf16.msra.mxu0 0
  %293 = vmatprep.mubr.bf16.mxu0 0
  %294 = vmatmul.mubr.bf16.gmra.mrb[0].mxu0 %v132
  %v295 = vpop.f32.mrb[0].mxu0
  %v296 = vadd.f32 0.0, %v295
  %v297 = vpop.f32.mrb[0].mxu0
  %v298 = vadd.f32 0.0, %v297
  %v299 = vpop.f32.mrb[0].mxu0
  %v300 = vpop.f32.mrb[0].mxu0
  %301 = vdwg.mxu0
  %v305 = vsel %vm134, %v238, 0
  %v308 = vsel %vm134, %v241, 0
  %310 = vmatprep.subr.bf16.mxu0 %v242
  %311 = vmatpush1.bf16.msra.mxu0 %v239
  %312 = vmatprep.subr.bf16.mxu0 %v308
  %313 = vmatpush1.bf16.msra.mxu0 %v305
  %314 = vmatprep.subr.bf16.mxu0 0
  %315 = vmatpush1.bf16.msra.mxu0 0
  %316 = vmatprep.subr.bf16.mxu0 0
  %317 = vmatpush1.bf16.msra.mxu0 0
  %318 = vmatprep.subr.bf16.mxu0 0
  %319 = vmatpush1.bf16.msra.mxu0 0
  %320 = vmatprep.subr.bf16.mxu0 0
  %321 = vmatpush1.bf16.msra.mxu0 0
  %322 = vmatprep.subr.bf16.mxu0 0
  %323 = vmatpush1.bf16.msra.mxu0 0
  %324 = vmatprep.subr.bf16.mxu0 0
  %325 = vmatpush1.bf16.msra.mxu0 0
  %326 = vmatprep.subr.bf16.mxu0 0
  %327 = vmatpush1.bf16.msra.mxu0 0
  %328 = vmatprep.subr.bf16.mxu0 0
  %329 = vmatpush1.bf16.msra.mxu0 0
  %330 = vmatprep.subr.bf16.mxu0 0
  %331 = vmatpush1.bf16.msra.mxu0 0
  %332 = vmatprep.subr.bf16.mxu0 0
  %333 = vmatpush1.bf16.msra.mxu0 0
  %334 = vmatprep.subr.bf16.mxu0 0
  %335 = vmatpush1.bf16.msra.mxu0 0
  %336 = vmatprep.subr.bf16.mxu0 0
  %337 = vmatpush1.bf16.msra.mxu0 0
  %338 = vmatprep.subr.bf16.mxu0 0
  %339 = vmatpush1.bf16.msra.mxu0 0
  %340 = vmatprep.subr.bf16.mxu0 0
  %341 = vmatpush1.bf16.msra.mxu0 0
  %342 = vmatprep.mubr.bf16.mxu0 0
  %343 = vmatmul.mubr.bf16.gmra.mrb[0].mxu0 %v183
  %v344 = vpop.f32.mrb[0].mxu0
  %v345 = vadd.f32 %v296, %v344
  %v346 = vpop.f32.mrb[0].mxu0
  %v347 = vadd.f32 %v298, %v346
  %v348 = vpop.f32.mrb[0].mxu0
  %v349 = vpop.f32.mrb[0].mxu0
  %350 = vdwg.mxu0
  %355 = vrot.lane.b32.xlu0 %v96, 127
  %v356 = vpop.permute.xlu0 %355
  %357 = vrot.lane.b32.xlu0 %v97, 127
  %v358 = vpop.permute.xlu0 %357
  %359 = vrot.lane.b32.xlu0 %v98, 127
  %v360 = vpop.permute.xlu0 %359
  %361 = vrot.lane.b32.xlu0 %v99, 127
  %v362 = vpop.permute.xlu0 %361
  %v363 = vsel %vm125, %v356, %v358
  %v364 = vsel %vm125, %v360, %v362
  %v368 = vsel %vm134, %v364, 0
  %v371 = vsel %vm134, %v362, 0
  %373 = vmatprep.subr.bf16.mxu0 %v358
  %374 = vmatpush1.bf16.msra.mxu0 %v363
  %375 = vmatprep.subr.bf16.mxu0 %v371
  %376 = vmatpush1.bf16.msra.mxu0 %v368
  %377 = vmatprep.subr.bf16.mxu0 0
  %378 = vmatpush1.bf16.msra.mxu0 0
  %379 = vmatprep.subr.bf16.mxu0 0
  %380 = vmatpush1.bf16.msra.mxu0 0
  %381 = vmatprep.subr.bf16.mxu0 0
  %382 = vmatpush1.bf16.msra.mxu0 0
  %383 = vmatprep.subr.bf16.mxu0 0
  %384 = vmatpush1.bf16.msra.mxu0 0
  %385 = vmatprep.subr.bf16.mxu0 0
  %386 = vmatpush1.bf16.msra.mxu0 0
  %387 = vmatprep.subr.bf16.mxu0 0
  %388 = vmatpush1.bf16.msra.mxu0 0
  %389 = vmatprep.subr.bf16.mxu0 0
  %390 = vmatpush1.bf16.msra.mxu0 0
  %391 = vmatprep.subr.bf16.mxu0 0
  %392 = vmatpush1.bf16.msra.mxu0 0
  %393 = vmatprep.subr.bf16.mxu0 0
  %394 = vmatpush1.bf16.msra.mxu0 0
  %395 = vmatprep.subr.bf16.mxu0 0
  %396 = vmatpush1.bf16.msra.mxu0 0
  %397 = vmatprep.subr.bf16.mxu0 0
  %398 = vmatpush1.bf16.msra.mxu0 0
  %399 = vmatprep.subr.bf16.mxu0 0
  %400 = vmatpush1.bf16.msra.mxu0 0
  %401 = vmatprep.subr.bf16.mxu0 0
  %402 = vmatpush1.bf16.msra.mxu0 0
  %403 = vmatprep.subr.bf16.mxu0 0
  %404 = vmatpush1.bf16.msra.mxu0 0
  %405 = vmatprep.mubr.bf16.mxu0 0
  %406 = vmatmul.mubr.bf16.gmra.mrb[0].mxu0 %v132
  %v407 = vpop.f32.mrb[0].mxu0
  %v408 = vadd.f32 0.0, %v407
  %v409 = vpop.f32.mrb[0].mxu0
  %v410 = vadd.f32 0.0, %v409
  %v411 = vpop.f32.mrb[0].mxu0
  %v412 = vpop.f32.mrb[0].mxu0
  %413 = vdwg.mxu0
  %v415 = vsel %vm134, %v98, 0
  %v418 = vsel %vm134, %v99, 0
  %420 = vmatprep.subr.bf16.mxu0 %v97
  %421 = vmatpush1.bf16.msra.mxu0 %v96
  %422 = vmatprep.subr.bf16.mxu0 %v418
  %423 = vmatpush1.bf16.msra.mxu0 %v415
  %424 = vmatprep.subr.bf16.mxu0 0
  %425 = vmatpush1.bf16.msra.mxu0 0
  %426 = vmatprep.subr.bf16.mxu0 0
  %427 = vmatpush1.bf16.msra.mxu0 0
  %428 = vmatprep.subr.bf16.mxu0 0
  %429 = vmatpush1.bf16.msra.mxu0 0
  %430 = vmatprep.subr.bf16.mxu0 0
  %431 = vmatpush1.bf16.msra.mxu0 0
  %432 = vmatprep.subr.bf16.mxu0 0
  %433 = vmatpush1.bf16.msra.mxu0 0
  %434 = vmatprep.subr.bf16.mxu0 0
  %435 = vmatpush1.bf16.msra.mxu0 0
  %436 = vmatprep.subr.bf16.mxu0 0
  %437 = vmatpush1.bf16.msra.mxu0 0
  %438 = vmatprep.subr.bf16.mxu0 0
  %439 = vmatpush1.bf16.msra.mxu0 0
  %440 = vmatprep.subr.bf16.mxu0 0
  %441 = vmatpush1.bf16.msra.mxu0 0
  %442 = vmatprep.subr.bf16.mxu0 0
  %443 = vmatpush1.bf16.msra.mxu0 0
  %444 = vmatprep.subr.bf16.mxu0 0
  %445 = vmatpush1.bf16.msra.mxu0 0
  %446 = vmatprep.subr.bf16.mxu0 0
  %447 = vmatpush1.bf16.msra.mxu0 0
  %448 = vmatprep.subr.bf16.mxu0 0
  %449 = vmatpush1.bf16.msra.mxu0 0
  %450 = vmatprep.subr.bf16.mxu0 0
  %451 = vmatpush1.bf16.msra.mxu0 0
  %452 = vmatprep.mubr.bf16.mxu0 0
  %453 = vmatmul.mubr.bf16.gmra.mrb[0].mxu0 %v183
  %v454 = vpop.f32.mrb[0].mxu0
  %v455 = vadd.f32 %v408, %v454
  %v456 = vpop.f32.mrb[0].mxu0
  %v457 = vadd.f32 %v410, %v456
  %v458 = vpop.f32.mrb[0].mxu0
  %v459 = vpop.f32.mrb[0].mxu0
  %460 = vdwg.mxu0
  %v465 = vrot.slane %v100, 2
  %v466 = vrot.slane %v102, 2
  %v467 = vsel %vm236, %v465, %v466
  %v468 = vrot.slane %v101, 2
  %v469 = vrot.slane %v103, 2
  %v470 = vsel %vm236, %v468, %v469
  %471 = vrot.lane.b32.xlu0 %v467, 127
  %v472 = vpop.permute.xlu0 %471
  %473 = vrot.lane.b32.xlu0 %v470, 127
  %v474 = vpop.permute.xlu0 %473
  %475 = vrot.lane.b32.xlu0 %v466, 127
  %v476 = vpop.permute.xlu0 %475
  %477 = vrot.lane.b32.xlu0 %v469, 127
  %v478 = vpop.permute.xlu0 %477
  %v479 = vsel %vm125, %v472, %v474
  %v480 = vsel %vm125, %v476, %v478
  %v484 = vsel %vm134, %v480, 0
  %v487 = vsel %vm134, %v478, 0
  %489 = vmatprep.subr.bf16.mxu0 %v474
  %490 = vmatpush1.bf16.msra.mxu0 %v479
  %491 = vmatprep.subr.bf16.mxu0 %v487
  %492 = vmatpush1.bf16.msra.mxu0 %v484
  %493 = vmatprep.subr.bf16.mxu0 0
  %494 = vmatpush1.bf16.msra.mxu0 0
  %495 = vmatprep.subr.bf16.mxu0 0
  %496 = vmatpush1.bf16.msra.mxu0 0
  %497 = vmatprep.subr.bf16.mxu0 0
  %498 = vmatpush1.bf16.msra.mxu0 0
  %499 = vmatprep.subr.bf16.mxu0 0
  %500 = vmatpush1.bf16.msra.mxu0 0
  %501 = vmatprep.subr.bf16.mxu0 0
  %502 = vmatpush1.bf16.msra.mxu0 0
  %503 = vmatprep.subr.bf16.mxu0 0
  %504 = vmatpush1.bf16.msra.mxu0 0
  %505 = vmatprep.subr.bf16.mxu0 0
  %506 = vmatpush1.bf16.msra.mxu0 0
  %507 = vmatprep.subr.bf16.mxu0 0
  %508 = vmatpush1.bf16.msra.mxu0 0
  %509 = vmatprep.subr.bf16.mxu0 0
  %510 = vmatpush1.bf16.msra.mxu0 0
  %511 = vmatprep.subr.bf16.mxu0 0
  %512 = vmatpush1.bf16.msra.mxu0 0
  %513 = vmatprep.subr.bf16.mxu0 0
  %514 = vmatpush1.bf16.msra.mxu0 0
  %515 = vmatprep.subr.bf16.mxu0 0
  %516 = vmatpush1.bf16.msra.mxu0 0
  %517 = vmatprep.subr.bf16.mxu0 0
  %518 = vmatpush1.bf16.msra.mxu0 0
  %519 = vmatprep.subr.bf16.mxu0 0
  %520 = vmatpush1.bf16.msra.mxu0 0
  %521 = vmatprep.mubr.bf16.mxu0 0
  %522 = vmatmul.mubr.bf16.gmra.mrb[0].mxu0 %v132
  %v523 = vpop.f32.mrb[0].mxu0
  %v524 = vadd.f32 0.0, %v523
  %v525 = vpop.f32.mrb[0].mxu0
  %v526 = vadd.f32 0.0, %v525
  %v527 = vpop.f32.mrb[0].mxu0
  %v528 = vpop.f32.mrb[0].mxu0
  %529 = vdwg.mxu0
  %v533 = vsel %vm134, %v466, 0
  %v536 = vsel %vm134, %v469, 0
  %538 = vmatprep.subr.bf16.mxu0 %v470
  %539 = vmatpush1.bf16.msra.mxu0 %v467
  %540 = vmatprep.subr.bf16.mxu0 %v536
  %541 = vmatpush1.bf16.msra.mxu0 %v533
  %542 = vmatprep.subr.bf16.mxu0 0
  %543 = vmatpush1.bf16.msra.mxu0 0
  %544 = vmatprep.subr.bf16.mxu0 0
  %545 = vmatpush1.bf16.msra.mxu0 0
  %546 = vmatprep.subr.bf16.mxu0 0
  %547 = vmatpush1.bf16.msra.mxu0 0
  %548 = vmatprep.subr.bf16.mxu0 0
  %549 = vmatpush1.bf16.msra.mxu0 0
  %550 = vmatprep.subr.bf16.mxu0 0
  %551 = vmatpush1.bf16.msra.mxu0 0
  %552 = vmatprep.subr.bf16.mxu0 0
  %553 = vmatpush1.bf16.msra.mxu0 0
  %554 = vmatprep.subr.bf16.mxu0 0
  %555 = vmatpush1.bf16.msra.mxu0 0
  %556 = vmatprep.subr.bf16.mxu0 0
  %557 = vmatpush1.bf16.msra.mxu0 0
  %558 = vmatprep.subr.bf16.mxu0 0
  %559 = vmatpush1.bf16.msra.mxu0 0
  %560 = vmatprep.subr.bf16.mxu0 0
  %561 = vmatpush1.bf16.msra.mxu0 0
  %562 = vmatprep.subr.bf16.mxu0 0
  %563 = vmatpush1.bf16.msra.mxu0 0
  %564 = vmatprep.subr.bf16.mxu0 0
  %565 = vmatpush1.bf16.msra.mxu0 0
  %566 = vmatprep.subr.bf16.mxu0 0
  %567 = vmatpush1.bf16.msra.mxu0 0
  %568 = vmatprep.subr.bf16.mxu0 0
  %569 = vmatpush1.bf16.msra.mxu0 0
  %570 = vmatprep.mubr.bf16.mxu0 0
  %571 = vmatmul.mubr.bf16.gmra.mrb[0].mxu0 %v183
  %v572 = vpop.f32.mrb[0].mxu0
  %v573 = vadd.f32 %v524, %v572
  %v574 = vpop.f32.mrb[0].mxu0
  %v575 = vadd.f32 %v526, %v574
  %v576 = vpop.f32.mrb[0].mxu0
  %v577 = vpop.f32.mrb[0].mxu0
  %578 = vdwg.mxu0
  %583 = vrot.lane.b32.xlu0 %v104, 127
  %v584 = vpop.permute.xlu0 %583
  %585 = vrot.lane.b32.xlu0 %v105, 127
  %v586 = vpop.permute.xlu0 %585
  %587 = vrot.lane.b32.xlu0 %v106, 127
  %v588 = vpop.permute.xlu0 %587
  %589 = vrot.lane.b32.xlu0 %v107, 127
  %v590 = vpop.permute.xlu0 %589
  %v591 = vsel %vm125, %v584, %v586
  %v592 = vsel %vm125, %v588, %v590
  %v596 = vsel %vm134, %v592, 0
  %v599 = vsel %vm134, %v590, 0
  %601 = vmatprep.subr.bf16.mxu0 %v586
  %602 = vmatpush1.bf16.msra.mxu0 %v591
  %603 = vmatprep.subr.bf16.mxu0 %v599
  %604 = vmatpush1.bf16.msra.mxu0 %v596
  %605 = vmatprep.subr.bf16.mxu0 0
  %606 = vmatpush1.bf16.msra.mxu0 0
  %607 = vmatprep.subr.bf16.mxu0 0
  %608 = vmatpush1.bf16.msra.mxu0 0
  %609 = vmatprep.subr.bf16.mxu0 0
  %610 = vmatpush1.bf16.msra.mxu0 0
  %611 = vmatprep.subr.bf16.mxu0 0
  %612 = vmatpush1.bf16.msra.mxu0 0
  %613 = vmatprep.subr.bf16.mxu0 0
  %614 = vmatpush1.bf16.msra.mxu0 0
  %615 = vmatprep.subr.bf16.mxu0 0
  %616 = vmatpush1.bf16.msra.mxu0 0
  %617 = vmatprep.subr.bf16.mxu0 0
  %618 = vmatpush1.bf16.msra.mxu0 0
  %619 = vmatprep.subr.bf16.mxu0 0
  %620 = vmatpush1.bf16.msra.mxu0 0
  %621 = vmatprep.subr.bf16.mxu0 0
  %622 = vmatpush1.bf16.msra.mxu0 0
  %623 = vmatprep.subr.bf16.mxu0 0
  %624 = vmatpush1.bf16.msra.mxu0 0
  %625 = vmatprep.subr.bf16.mxu0 0
  %626 = vmatpush1.bf16.msra.mxu0 0
  %627 = vmatprep.subr.bf16.mxu0 0
  %628 = vmatpush1.bf16.msra.mxu0 0
  %629 = vmatprep.subr.bf16.mxu0 0
  %630 = vmatpush1.bf16.msra.mxu0 0
  %631 = vmatprep.subr.bf16.mxu0 0
  %632 = vmatpush1.bf16.msra.mxu0 0
  %633 = vmatprep.mubr.bf16.mxu0 0
  %634 = vmatmul.mubr.bf16.gmra.mrb[0].mxu0 %v132
  %v635 = vpop.f32.mrb[0].mxu0
  %v636 = vadd.f32 0.0, %v635
  %v637 = vpop.f32.mrb[0].mxu0
  %v638 = vadd.f32 0.0, %v637
  %v639 = vpop.f32.mrb[0].mxu0
  %v640 = vpop.f32.mrb[0].mxu0
  %641 = vdwg.mxu0
  %v643 = vsel %vm134, %v106, 0
  %v646 = vsel %vm134, %v107, 0
  %648 = vmatprep.subr.bf16.mxu0 %v105
  %649 = vmatpush1.bf16.msra.mxu0 %v104
  %650 = vmatprep.subr.bf16.mxu0 %v646
  %651 = vmatpush1.bf16.msra.mxu0 %v643
  %652 = vmatprep.subr.bf16.mxu0 0
  %653 = vmatpush1.bf16.msra.mxu0 0
  %654 = vmatprep.subr.bf16.mxu0 0
  %655 = vmatpush1.bf16.msra.mxu0 0
  %656 = vmatprep.subr.bf16.mxu0 0
  %657 = vmatpush1.bf16.msra.mxu0 0
  %658 = vmatprep.subr.bf16.mxu0 0
  %659 = vmatpush1.bf16.msra.mxu0 0
  %660 = vmatprep.subr.bf16.mxu0 0
  %661 = vmatpush1.bf16.msra.mxu0 0
  %662 = vmatprep.subr.bf16.mxu0 0
  %663 = vmatpush1.bf16.msra.mxu0 0
  %664 = vmatprep.subr.bf16.mxu0 0
  %665 = vmatpush1.bf16.msra.mxu0 0
  %666 = vmatprep.subr.bf16.mxu0 0
  %667 = vmatpush1.bf16.msra.mxu0 0
  %668 = vmatprep.subr.bf16.mxu0 0
  %669 = vmatpush1.bf16.msra.mxu0 0
  %670 = vmatprep.subr.bf16.mxu0 0
  %671 = vmatpush1.bf16.msra.mxu0 0
  %672 = vmatprep.subr.bf16.mxu0 0
  %673 = vmatpush1.bf16.msra.mxu0 0
  %674 = vmatprep.subr.bf16.mxu0 0
  %675 = vmatpush1.bf16.msra.mxu0 0
  %676 = vmatprep.subr.bf16.mxu0 0
  %677 = vmatpush1.bf16.msra.mxu0 0
  %678 = vmatprep.subr.bf16.mxu0 0
  %679 = vmatpush1.bf16.msra.mxu0 0
  %680 = vmatprep.mubr.bf16.mxu0 0
  %681 = vmatmul.mubr.bf16.gmra.mrb[0].mxu0 %v183
  %v682 = vpop.f32.mrb[0].mxu0
  %v683 = vadd.f32 %v636, %v682
  %v684 = vpop.f32.mrb[0].mxu0
  %v685 = vadd.f32 %v638, %v684
  %v686 = vpop.f32.mrb[0].mxu0
  %v687 = vpop.f32.mrb[0].mxu0
  %688 = vdwg.mxu0
  %v693 = vrot.slane %v108, 2
  %v694 = vrot.slane %v110, 2
  %v695 = vsel %vm236, %v693, %v694
  %v696 = vrot.slane %v109, 2
  %v697 = vrot.slane %v111, 2
  %v698 = vsel %vm236, %v696, %v697
  %699 = vrot.lane.b32.xlu0 %v695, 127
  %v700 = vpop.permute.xlu0 %699
  %701 = vrot.lane.b32.xlu0 %v698, 127
  %v702 = vpop.permute.xlu0 %701
  %703 = vrot.lane.b32.xlu0 %v694, 127
  %v704 = vpop.permute.xlu0 %703
  %705 = vrot.lane.b32.xlu0 %v697, 127
  %v706 = vpop.permute.xlu0 %705
  %v707 = vsel %vm125, %v700, %v702
  %v708 = vsel %vm125, %v704, %v706
  %v712 = vsel %vm134, %v708, 0
  %v715 = vsel %vm134, %v706, 0
  %717 = vmatprep.subr.bf16.mxu0 %v702
  %718 = vmatpush1.bf16.msra.mxu0 %v707
  %719 = vmatprep.subr.bf16.mxu0 %v715
  %720 = vmatpush1.bf16.msra.mxu0 %v712
  %721 = vmatprep.subr.bf16.mxu0 0
  %722 = vmatpush1.bf16.msra.mxu0 0
  %723 = vmatprep.subr.bf16.mxu0 0
  %724 = vmatpush1.bf16.msra.mxu0 0
  %725 = vmatprep.subr.bf16.mxu0 0
  %726 = vmatpush1.bf16.msra.mxu0 0
  %727 = vmatprep.subr.bf16.mxu0 0
  %728 = vmatpush1.bf16.msra.mxu0 0
  %729 = vmatprep.subr.bf16.mxu0 0
  %730 = vmatpush1.bf16.msra.mxu0 0
  %731 = vmatprep.subr.bf16.mxu0 0
  %732 = vmatpush1.bf16.msra.mxu0 0
  %733 = vmatprep.subr.bf16.mxu0 0
  %734 = vmatpush1.bf16.msra.mxu0 0
  %735 = vmatprep.subr.bf16.mxu0 0
  %736 = vmatpush1.bf16.msra.mxu0 0
  %737 = vmatprep.subr.bf16.mxu0 0
  %738 = vmatpush1.bf16.msra.mxu0 0
  %739 = vmatprep.subr.bf16.mxu0 0
  %740 = vmatpush1.bf16.msra.mxu0 0
  %741 = vmatprep.subr.bf16.mxu0 0
  %742 = vmatpush1.bf16.msra.mxu0 0
  %743 = vmatprep.subr.bf16.mxu0 0
  %744 = vmatpush1.bf16.msra.mxu0 0
  %745 = vmatprep.subr.bf16.mxu0 0
  %746 = vmatpush1.bf16.msra.mxu0 0
  %747 = vmatprep.subr.bf16.mxu0 0
  %748 = vmatpush1.bf16.msra.mxu0 0
  %749 = vmatprep.mubr.bf16.mxu0 0
  %750 = vmatmul.mubr.bf16.gmra.mrb[0].mxu0 %v132
  %v751 = vpop.f32.mrb[0].mxu0
  %v752 = vadd.f32 0.0, %v751
  %v753 = vpop.f32.mrb[0].mxu0
  %v754 = vadd.f32 0.0, %v753
  %v755 = vpop.f32.mrb[0].mxu0
  %v756 = vpop.f32.mrb[0].mxu0
  %757 = vdwg.mxu0
  %v761 = vsel %vm134, %v694, 0
  %v764 = vsel %vm134, %v697, 0
  %766 = vmatprep.subr.bf16.mxu0 %v698
  %767 = vmatpush1.bf16.msra.mxu0 %v695
  %768 = vmatprep.subr.bf16.mxu0 %v764
  %769 = vmatpush1.bf16.msra.mxu0 %v761
  %770 = vmatprep.subr.bf16.mxu0 0
  %771 = vmatpush1.bf16.msra.mxu0 0
  %772 = vmatprep.subr.bf16.mxu0 0
  %773 = vmatpush1.bf16.msra.mxu0 0
  %774 = vmatprep.subr.bf16.mxu0 0
  %775 = vmatpush1.bf16.msra.mxu0 0
  %776 = vmatprep.subr.bf16.mxu0 0
  %777 = vmatpush1.bf16.msra.mxu0 0
  %778 = vmatprep.subr.bf16.mxu0 0
  %779 = vmatpush1.bf16.msra.mxu0 0
  %780 = vmatprep.subr.bf16.mxu0 0
  %781 = vmatpush1.bf16.msra.mxu0 0
  %782 = vmatprep.subr.bf16.mxu0 0
  %783 = vmatpush1.bf16.msra.mxu0 0
  %784 = vmatprep.subr.bf16.mxu0 0
  %785 = vmatpush1.bf16.msra.mxu0 0
  %786 = vmatprep.subr.bf16.mxu0 0
  %787 = vmatpush1.bf16.msra.mxu0 0
  %788 = vmatprep.subr.bf16.mxu0 0
  %789 = vmatpush1.bf16.msra.mxu0 0
  %790 = vmatprep.subr.bf16.mxu0 0
  %791 = vmatpush1.bf16.msra.mxu0 0
  %792 = vmatprep.subr.bf16.mxu0 0
  %793 = vmatpush1.bf16.msra.mxu0 0
  %794 = vmatprep.subr.bf16.mxu0 0
  %795 = vmatpush1.bf16.msra.mxu0 0
  %796 = vmatprep.subr.bf16.mxu0 0
  %797 = vmatpush1.bf16.msra.mxu0 0
  %798 = vmatprep.mubr.bf16.mxu0 0
  %799 = vmatmul.mubr.bf16.gmra.mrb[0].mxu0 %v183
  %v800 = vpop.f32.mrb[0].mxu0
  %v801 = vadd.f32 %v752, %v800
  %v802 = vpop.f32.mrb[0].mxu0
  %v803 = vadd.f32 %v754, %v802
  %v804 = vpop.f32.mrb[0].mxu0
  %v805 = vpop.f32.mrb[0].mxu0
  %806 = vdwg.mxu0
  %v807 = vpack.c.bf16 %v76, %v76
  %808 = vrot.lane.b32.xlu0 %v88, 126
  %v809 = vpop.permute.xlu0 %808
  %810 = vrot.lane.b32.xlu0 %v89, 126
  %v811 = vpop.permute.xlu0 %810
  %812 = vrot.lane.b32.xlu0 %v90, 126
  %v813 = vpop.permute.xlu0 %812
  %814 = vrot.lane.b32.xlu0 %v91, 126
  %v815 = vpop.permute.xlu0 %814
  %vm816 = vcmask 1031168
  %v817 = vsel %vm816, %v809, %v811
  %v818 = vsel %vm816, %v813, %v815
  %v822 = vsel %vm130, %v807, 0
  %v825 = vsel %vm134, %v818, 0
  %v828 = vsel %vm134, %v815, 0
  %830 = vmatprep.subr.bf16.mxu0 %v811
  %831 = vmatpush1.bf16.msra.mxu0 %v817
  %832 = vmatprep.subr.bf16.mxu0 %v828
  %833 = vmatpush1.bf16.msra.mxu0 %v825
  %834 = vmatprep.subr.bf16.mxu0 0
  %835 = vmatpush1.bf16.msra.mxu0 0
  %836 = vmatprep.subr.bf16.mxu0 0
  %837 = vmatpush1.bf16.msra.mxu0 0
  %838 = vmatprep.subr.bf16.mxu0 0
  %839 = vmatpush1.bf16.msra.mxu0 0
  %840 = vmatprep.subr.bf16.mxu0 0
  %841 = vmatpush1.bf16.msra.mxu0 0
  %842 = vmatprep.subr.bf16.mxu0 0
  %843 = vmatpush1.bf16.msra.mxu0 0
  %844 = vmatprep.subr.bf16.mxu0 0
  %845 = vmatpush1.bf16.msra.mxu0 0
  %846 = vmatprep.subr.bf16.mxu0 0
  %847 = vmatpush1.bf16.msra.mxu0 0
  %848 = vmatprep.subr.bf16.mxu0 0
  %849 = vmatpush1.bf16.msra.mxu0 0
  %850 = vmatprep.subr.bf16.mxu0 0
  %851 = vmatpush1.bf16.msra.mxu0 0
  %852 = vmatprep.subr.bf16.mxu0 0
  %853 = vmatpush1.bf16.msra.mxu0 0
  %854 = vmatprep.subr.bf16.mxu0 0
  %855 = vmatpush1.bf16.msra.mxu0 0
  %856 = vmatprep.subr.bf16.mxu0 0
  %857 = vmatpush1.bf16.msra.mxu0 0
  %858 = vmatprep.subr.bf16.mxu0 0
  %859 = vmatpush1.bf16.msra.mxu0 0
  %860 = vmatprep.subr.bf16.mxu0 0
  %861 = vmatpush1.bf16.msra.mxu0 0
  %862 = vmatprep.mubr.bf16.mxu0 0
  %863 = vmatmul.mubr.bf16.gmra.mrb[0].mxu0 %v822
  %v864 = vpop.f32.mrb[0].mxu0
  %v865 = vadd.f32 0.0, %v864
  %v866 = vpop.f32.mrb[0].mxu0
  %v867 = vadd.f32 0.0, %v866
  %v868 = vpop.f32.mrb[0].mxu0
  %v869 = vpop.f32.mrb[0].mxu0
  %870 = vdwg.mxu0
  %v871 = vadd.f32 %v226, %v865
  %v872 = vadd.f32 %v228, %v867
  %873 = vrot.lane.b32.xlu0 %v239, 126
  %v874 = vpop.permute.xlu0 %873
  %875 = vrot.lane.b32.xlu0 %v242, 126
  %v876 = vpop.permute.xlu0 %875
  %877 = vrot.lane.b32.xlu0 %v238, 126
  %v878 = vpop.permute.xlu0 %877
  %879 = vrot.lane.b32.xlu0 %v241, 126
  %v880 = vpop.permute.xlu0 %879
  %v881 = vsel %vm816, %v874, %v876
  %v882 = vsel %vm816, %v878, %v880
  %v886 = vsel %vm134, %v882, 0
  %v889 = vsel %vm134, %v880, 0
  %891 = vmatprep.subr.bf16.mxu0 %v876
  %892 = vmatpush1.bf16.msra.mxu0 %v881
  %893 = vmatprep.subr.bf16.mxu0 %v889
  %894 = vmatpush1.bf16.msra.mxu0 %v886
  %895 = vmatprep.subr.bf16.mxu0 0
  %896 = vmatpush1.bf16.msra.mxu0 0
  %897 = vmatprep.subr.bf16.mxu0 0
  %898 = vmatpush1.bf16.msra.mxu0 0
  %899 = vmatprep.subr.bf16.mxu0 0
  %900 = vmatpush1.bf16.msra.mxu0 0
  %901 = vmatprep.subr.bf16.mxu0 0
  %902 = vmatpush1.bf16.msra.mxu0 0
  %903 = vmatprep.subr.bf16.mxu0 0
  %904 = vmatpush1.bf16.msra.mxu0 0
  %905 = vmatprep.subr.bf16.mxu0 0
  %906 = vmatpush1.bf16.msra.mxu0 0
  %907 = vmatprep.subr.bf16.mxu0 0
  %908 = vmatpush1.bf16.msra.mxu0 0
  %909 = vmatprep.subr.bf16.mxu0 0
  %910 = vmatpush1.bf16.msra.mxu0 0
  %911 = vmatprep.subr.bf16.mxu0 0
  %912 = vmatpush1.bf16.msra.mxu0 0
  %913 = vmatprep.subr.bf16.mxu0 0
  %914 = vmatpush1.bf16.msra.mxu0 0
  %915 = vmatprep.subr.bf16.mxu0 0
  %916 = vmatpush1.bf16.msra.mxu0 0
  %917 = vmatprep.subr.bf16.mxu0 0
  %918 = vmatpush1.bf16.msra.mxu0 0
  %919 = vmatprep.subr.bf16.mxu0 0
  %920 = vmatpush1.bf16.msra.mxu0 0
  %921 = vmatprep.subr.bf16.mxu0 0
  %922 = vmatpush1.bf16.msra.mxu0 0
  %923 = vmatprep.mubr.bf16.mxu0 0
  %924 = vmatmul.mubr.bf16.gmra.mrb[0].mxu0 %v822
  %v925 = vpop.f32.mrb[0].mxu0
  %v926 = vadd.f32 0.0, %v925
  %v927 = vpop.f32.mrb[0].mxu0
  %v928 = vadd.f32 0.0, %v927
  %v929 = vpop.f32.mrb[0].mxu0
  %v930 = vpop.f32.mrb[0].mxu0
  %931 = vdwg.mxu0
  %v932 = vadd.f32 %v345, %v926
  %v933 = vadd.f32 %v347, %v928
  %934 = vrot.lane.b32.xlu0 %v96, 126
  %v935 = vpop.permute.xlu0 %934
  %936 = vrot.lane.b32.xlu0 %v97, 126
  %v937 = vpop.permute.xlu0 %936
  %938 = vrot.lane.b32.xlu0 %v98, 126
  %v939 = vpop.permute.xlu0 %938
  %940 = vrot.lane.b32.xlu0 %v99, 126
  %v941 = vpop.permute.xlu0 %940
  %v942 = vsel %vm816, %v935, %v937
  %v943 = vsel %vm816, %v939, %v941
  %v947 = vsel %vm134, %v943, 0
  %v950 = vsel %vm134, %v941, 0
  %952 = vmatprep.subr.bf16.mxu0 %v937
  %953 = vmatpush1.bf16.msra.mxu0 %v942
  %954 = vmatprep.subr.bf16.mxu0 %v950
  %955 = vmatpush1.bf16.msra.mxu0 %v947
  %956 = vmatprep.subr.bf16.mxu0 0
  %957 = vmatpush1.bf16.msra.mxu0 0
  %958 = vmatprep.subr.bf16.mxu0 0
  %959 = vmatpush1.bf16.msra.mxu0 0
  %960 = vmatprep.subr.bf16.mxu0 0
  %961 = vmatpush1.bf16.msra.mxu0 0
  %962 = vmatprep.subr.bf16.mxu0 0
  %963 = vmatpush1.bf16.msra.mxu0 0
  %964 = vmatprep.subr.bf16.mxu0 0
  %965 = vmatpush1.bf16.msra.mxu0 0
  %966 = vmatprep.subr.bf16.mxu0 0
  %967 = vmatpush1.bf16.msra.mxu0 0
  %968 = vmatprep.subr.bf16.mxu0 0
  %969 = vmatpush1.bf16.msra.mxu0 0
  %970 = vmatprep.subr.bf16.mxu0 0
  %971 = vmatpush1.bf16.msra.mxu0 0
  %972 = vmatprep.subr.bf16.mxu0 0
  %973 = vmatpush1.bf16.msra.mxu0 0
  %974 = vmatprep.subr.bf16.mxu0 0
  %975 = vmatpush1.bf16.msra.mxu0 0
  %976 = vmatprep.subr.bf16.mxu0 0
  %977 = vmatpush1.bf16.msra.mxu0 0
  %978 = vmatprep.subr.bf16.mxu0 0
  %979 = vmatpush1.bf16.msra.mxu0 0
  %980 = vmatprep.subr.bf16.mxu0 0
  %981 = vmatpush1.bf16.msra.mxu0 0
  %982 = vmatprep.subr.bf16.mxu0 0
  %983 = vmatpush1.bf16.msra.mxu0 0
  %984 = vmatprep.mubr.bf16.mxu0 0
  %985 = vmatmul.mubr.bf16.gmra.mrb[0].mxu0 %v822
  %v986 = vpop.f32.mrb[0].mxu0
  %v987 = vadd.f32 0.0, %v986
  %v988 = vpop.f32.mrb[0].mxu0
  %v989 = vadd.f32 0.0, %v988
  %v990 = vpop.f32.mrb[0].mxu0
  %v991 = vpop.f32.mrb[0].mxu0
  %992 = vdwg.mxu0
  %v993 = vadd.f32 %v455, %v987
  %v994 = vadd.f32 %v457, %v989
  %995 = vrot.lane.b32.xlu0 %v467, 126
  %v996 = vpop.permute.xlu0 %995
  %997 = vrot.lane.b32.xlu0 %v470, 126
  %v998 = vpop.permute.xlu0 %997
  %999 = vrot.lane.b32.xlu0 %v466, 126
  %v1000 = vpop.permute.xlu0 %999
  %1001 = vrot.lane.b32.xlu0 %v469, 126
  %v1002 = vpop.permute.xlu0 %1001
  %v1003 = vsel %vm816, %v996, %v998
  %v1004 = vsel %vm816, %v1000, %v1002
  %v1008 = vsel %vm134, %v1004, 0
  %v1011 = vsel %vm134, %v1002, 0
  %1013 = vmatprep.subr.bf16.mxu0 %v998
  %1014 = vmatpush1.bf16.msra.mxu0 %v1003
  %1015 = vmatprep.subr.bf16.mxu0 %v1011
  %1016 = vmatpush1.bf16.msra.mxu0 %v1008
  %1017 = vmatprep.subr.bf16.mxu0 0
  %1018 = vmatpush1.bf16.msra.mxu0 0
  %1019 = vmatprep.subr.bf16.mxu0 0
  %1020 = vmatpush1.bf16.msra.mxu0 0
  %1021 = vmatprep.subr.bf16.mxu0 0
  %1022 = vmatpush1.bf16.msra.mxu0 0
  %1023 = vmatprep.subr.bf16.mxu0 0
  %1024 = vmatpush1.bf16.msra.mxu0 0
  %1025 = vmatprep.subr.bf16.mxu0 0
  %1026 = vmatpush1.bf16.msra.mxu0 0
  %1027 = vmatprep.subr.bf16.mxu0 0
  %1028 = vmatpush1.bf16.msra.mxu0 0
  %1029 = vmatprep.subr.bf16.mxu0 0
  %1030 = vmatpush1.bf16.msra.mxu0 0
  %1031 = vmatprep.subr.bf16.mxu0 0
  %1032 = vmatpush1.bf16.msra.mxu0 0
  %1033 = vmatprep.subr.bf16.mxu0 0
  %1034 = vmatpush1.bf16.msra.mxu0 0
  %1035 = vmatprep.subr.bf16.mxu0 0
  %1036 = vmatpush1.bf16.msra.mxu0 0
  %1037 = vmatprep.subr.bf16.mxu0 0
  %1038 = vmatpush1.bf16.msra.mxu0 0
  %1039 = vmatprep.subr.bf16.mxu0 0
  %1040 = vmatpush1.bf16.msra.mxu0 0
  %1041 = vmatprep.subr.bf16.mxu0 0
  %1042 = vmatpush1.bf16.msra.mxu0 0
  %1043 = vmatprep.subr.bf16.mxu0 0
  %1044 = vmatpush1.bf16.msra.mxu0 0
  %1045 = vmatprep.mubr.bf16.mxu0 0
  %1046 = vmatmul.mubr.bf16.gmra.mrb[0].mxu0 %v822
  %v1047 = vpop.f32.mrb[0].mxu0
  %v1048 = vadd.f32 0.0, %v1047
  %v1049 = vpop.f32.mrb[0].mxu0
  %v1050 = vadd.f32 0.0, %v1049
  %v1051 = vpop.f32.mrb[0].mxu0
  %v1052 = vpop.f32.mrb[0].mxu0
  %1053 = vdwg.mxu0
  %v1054 = vadd.f32 %v573, %v1048
  %v1055 = vadd.f32 %v575, %v1050
  %1056 = vrot.lane.b32.xlu0 %v104, 126
  %v1057 = vpop.permute.xlu0 %1056
  %1058 = vrot.lane.b32.xlu0 %v105, 126
  %v1059 = vpop.permute.xlu0 %1058
  %1060 = vrot.lane.b32.xlu0 %v106, 126
  %v1061 = vpop.permute.xlu0 %1060
  %1062 = vrot.lane.b32.xlu0 %v107, 126
  %v1063 = vpop.permute.xlu0 %1062
  %v1064 = vsel %vm816, %v1057, %v1059
  %v1065 = vsel %vm816, %v1061, %v1063
  %v1069 = vsel %vm134, %v1065, 0
  %v1072 = vsel %vm134, %v1063, 0
  %1074 = vmatprep.subr.bf16.mxu0 %v1059
  %1075 = vmatpush1.bf16.msra.mxu0 %v1064
  %1076 = vmatprep.subr.bf16.mxu0 %v1072
  %1077 = vmatpush1.bf16.msra.mxu0 %v1069
  %1078 = vmatprep.subr.bf16.mxu0 0
  %1079 = vmatpush1.bf16.msra.mxu0 0
  %1080 = vmatprep.subr.bf16.mxu0 0
  %1081 = vmatpush1.bf16.msra.mxu0 0
  %1082 = vmatprep.subr.bf16.mxu0 0
  %1083 = vmatpush1.bf16.msra.mxu0 0
  %1084 = vmatprep.subr.bf16.mxu0 0
  %1085 = vmatpush1.bf16.msra.mxu0 0
  %1086 = vmatprep.subr.bf16.mxu0 0
  %1087 = vmatpush1.bf16.msra.mxu0 0
  %1088 = vmatprep.subr.bf16.mxu0 0
  %1089 = vmatpush1.bf16.msra.mxu0 0
  %1090 = vmatprep.subr.bf16.mxu0 0
  %1091 = vmatpush1.bf16.msra.mxu0 0
  %1092 = vmatprep.subr.bf16.mxu0 0
  %1093 = vmatpush1.bf16.msra.mxu0 0
  %1094 = vmatprep.subr.bf16.mxu0 0
  %1095 = vmatpush1.bf16.msra.mxu0 0
  %1096 = vmatprep.subr.bf16.mxu0 0
  %1097 = vmatpush1.bf16.msra.mxu0 0
  %1098 = vmatprep.subr.bf16.mxu0 0
  %1099 = vmatpush1.bf16.msra.mxu0 0
  %1100 = vmatprep.subr.bf16.mxu0 0
  %1101 = vmatpush1.bf16.msra.mxu0 0
  %1102 = vmatprep.subr.bf16.mxu0 0
  %1103 = vmatpush1.bf16.msra.mxu0 0
  %1104 = vmatprep.subr.bf16.mxu0 0
  %1105 = vmatpush1.bf16.msra.mxu0 0
  %1106 = vmatprep.mubr.bf16.mxu0 0
  %1107 = vmatmul.mubr.bf16.gmra.mrb[0].mxu0 %v822
  %v1108 = vpop.f32.mrb[0].mxu0
  %v1109 = vadd.f32 0.0, %v1108
  %v1110 = vpop.f32.mrb[0].mxu0
  %v1111 = vadd.f32 0.0, %v1110
  %v1112 = vpop.f32.mrb[0].mxu0
  %v1113 = vpop.f32.mrb[0].mxu0
  %1114 = vdwg.mxu0
  %v1115 = vadd.f32 %v683, %v1109
  %v1116 = vadd.f32 %v685, %v1111
  %1117 = vrot.lane.b32.xlu0 %v695, 126
  %v1118 = vpop.permute.xlu0 %1117
  %1119 = vrot.lane.b32.xlu0 %v698, 126
  %v1120 = vpop.permute.xlu0 %1119
  %1121 = vrot.lane.b32.xlu0 %v694, 126
  %v1122 = vpop.permute.xlu0 %1121
  %1123 = vrot.lane.b32.xlu0 %v697, 126
  %v1124 = vpop.permute.xlu0 %1123
  %v1125 = vsel %vm816, %v1118, %v1120
  %v1126 = vsel %vm816, %v1122, %v1124
  %v1130 = vsel %vm134, %v1126, 0
  %v1133 = vsel %vm134, %v1124, 0
  %1135 = vmatprep.subr.bf16.mxu0 %v1120
  %1136 = vmatpush1.bf16.msra.mxu0 %v1125
  %1137 = vmatprep.subr.bf16.mxu0 %v1133
  %1138 = vmatpush1.bf16.msra.mxu0 %v1130
  %1139 = vmatprep.subr.bf16.mxu0 0
  %1140 = vmatpush1.bf16.msra.mxu0 0
  %1141 = vmatprep.subr.bf16.mxu0 0
  %1142 = vmatpush1.bf16.msra.mxu0 0
  %1143 = vmatprep.subr.bf16.mxu0 0
  %1144 = vmatpush1.bf16.msra.mxu0 0
  %1145 = vmatprep.subr.bf16.mxu0 0
  %1146 = vmatpush1.bf16.msra.mxu0 0
  %1147 = vmatprep.subr.bf16.mxu0 0
  %1148 = vmatpush1.bf16.msra.mxu0 0
  %1149 = vmatprep.subr.bf16.mxu0 0
  %1150 = vmatpush1.bf16.msra.mxu0 0
  %1151 = vmatprep.subr.bf16.mxu0 0
  %1152 = vmatpush1.bf16.msra.mxu0 0
  %1153 = vmatprep.subr.bf16.mxu0 0
  %1154 = vmatpush1.bf16.msra.mxu0 0
  %1155 = vmatprep.subr.bf16.mxu0 0
  %1156 = vmatpush1.bf16.msra.mxu0 0
  %1157 = vmatprep.subr.bf16.mxu0 0
  %1158 = vmatpush1.bf16.msra.mxu0 0
  %1159 = vmatprep.subr.bf16.mxu0 0
  %1160 = vmatpush1.bf16.msra.mxu0 0
  %1161 = vmatprep.subr.bf16.mxu0 0
  %1162 = vmatpush1.bf16.msra.mxu0 0
  %1163 = vmatprep.subr.bf16.mxu0 0
  %1164 = vmatpush1.bf16.msra.mxu0 0
  %1165 = vmatprep.subr.bf16.mxu0 0
  %1166 = vmatpush1.bf16.msra.mxu0 0
  %1167 = vmatprep.mubr.bf16.mxu0 0
  %1168 = vmatmul.mubr.bf16.gmra.mrb[0].mxu0 %v822
  %v1169 = vpop.f32.mrb[0].mxu0
  %v1170 = vadd.f32 0.0, %v1169
  %v1171 = vpop.f32.mrb[0].mxu0
  %v1172 = vadd.f32 0.0, %v1171
  %v1173 = vpop.f32.mrb[0].mxu0
  %v1174 = vpop.f32.mrb[0].mxu0
  %1175 = vdwg.mxu0
  %v1176 = vadd.f32 %v801, %v1170
  %v1177 = vadd.f32 %v803, %v1172
  %v1178 = vpack.c.bf16 %v77, %v77
  %1179 = vrot.lane.b32.xlu0 %v88, 119
  %v1180 = vpop.permute.xlu0 %1179
  %1181 = vrot.lane.b32.xlu0 %v89, 119
  %v1182 = vpop.permute.xlu0 %1181
  %1183 = vrot.lane.b32.xlu0 %v90, 119
  %v1184 = vpop.permute.xlu0 %1183
  %1185 = vrot.lane.b32.xlu0 %v91, 119
  %v1186 = vpop.permute.xlu0 %1185
  %vm1187 = vcmask 973824
  %v1188 = vsel %vm1187, %v1180, %v1182
  %v1189 = vsel %vm1187, %v1184, %v1186
  %v1193 = vsel %vm130, %v1178, 0
  %v1196 = vsel %vm134, %v1189, 0
  %v1199 = vsel %vm134, %v1186, 0
  %1201 = vmatprep.subr.bf16.mxu0 %v1182
  %1202 = vmatpush1.bf16.msra.mxu0 %v1188
  %1203 = vmatprep.subr.bf16.mxu0 %v1199
  %1204 = vmatpush1.bf16.msra.mxu0 %v1196
  %1205 = vmatprep.subr.bf16.mxu0 0
  %1206 = vmatpush1.bf16.msra.mxu0 0
  %1207 = vmatprep.subr.bf16.mxu0 0
  %1208 = vmatpush1.bf16.msra.mxu0 0
  %1209 = vmatprep.subr.bf16.mxu0 0
  %1210 = vmatpush1.bf16.msra.mxu0 0
  %1211 = vmatprep.subr.bf16.mxu0 0
  %1212 = vmatpush1.bf16.msra.mxu0 0
  %1213 = vmatprep.subr.bf16.mxu0 0
  %1214 = vmatpush1.bf16.msra.mxu0 0
  %1215 = vmatprep.subr.bf16.mxu0 0
  %1216 = vmatpush1.bf16.msra.mxu0 0
  %1217 = vmatprep.subr.bf16.mxu0 0
  %1218 = vmatpush1.bf16.msra.mxu0 0
  %1219 = vmatprep.subr.bf16.mxu0 0
  %1220 = vmatpush1.bf16.msra.mxu0 0
  %1221 = vmatprep.subr.bf16.mxu0 0
  %1222 = vmatpush1.bf16.msra.mxu0 0
  %1223 = vmatprep.subr.bf16.mxu0 0
  %1224 = vmatpush1.bf16.msra.mxu0 0
  %1225 = vmatprep.subr.bf16.mxu0 0
  %1226 = vmatpush1.bf16.msra.mxu0 0
  %1227 = vmatprep.subr.bf16.mxu0 0
  %1228 = vmatpush1.bf16.msra.mxu0 0
  %1229 = vmatprep.subr.bf16.mxu0 0
  %1230 = vmatpush1.bf16.msra.mxu0 0
  %1231 = vmatprep.subr.bf16.mxu0 0
  %1232 = vmatpush1.bf16.msra.mxu0 0
  %1233 = vmatprep.mubr.bf16.mxu0 0
  %1234 = vmatmul.mubr.bf16.gmra.mrb[0].mxu0 %v1193
  %v1235 = vpop.f32.mrb[0].mxu0
  %v1236 = vadd.f32 0.0, %v1235
  %v1237 = vpop.f32.mrb[0].mxu0
  %v1238 = vadd.f32 0.0, %v1237
  %v1239 = vpop.f32.mrb[0].mxu0
  %v1240 = vpop.f32.mrb[0].mxu0
  %1241 = vdwg.mxu0
  %v1242 = vadd.f32 %v871, %v1236
  %v1243 = vadd.f32 %v872, %v1238
  %1244 = vrot.lane.b32.xlu0 %v239, 119
  %v1245 = vpop.permute.xlu0 %1244
  %1246 = vrot.lane.b32.xlu0 %v242, 119
  %v1247 = vpop.permute.xlu0 %1246
  %1248 = vrot.lane.b32.xlu0 %v238, 119
  %v1249 = vpop.permute.xlu0 %1248
  %1250 = vrot.lane.b32.xlu0 %v241, 119
  %v1251 = vpop.permute.xlu0 %1250
  %v1252 = vsel %vm1187, %v1245, %v1247
  %v1253 = vsel %vm1187, %v1249, %v1251
  %v1257 = vsel %vm134, %v1253, 0
  %v1260 = vsel %vm134, %v1251, 0
  %1262 = vmatprep.subr.bf16.mxu0 %v1247
  %1263 = vmatpush1.bf16.msra.mxu0 %v1252
  %1264 = vmatprep.subr.bf16.mxu0 %v1260
  %1265 = vmatpush1.bf16.msra.mxu0 %v1257
  %1266 = vmatprep.subr.bf16.mxu0 0
  %1267 = vmatpush1.bf16.msra.mxu0 0
  %1268 = vmatprep.subr.bf16.mxu0 0
  %1269 = vmatpush1.bf16.msra.mxu0 0
  %1270 = vmatprep.subr.bf16.mxu0 0
  %1271 = vmatpush1.bf16.msra.mxu0 0
  %1272 = vmatprep.subr.bf16.mxu0 0
  %1273 = vmatpush1.bf16.msra.mxu0 0
  %1274 = vmatprep.subr.bf16.mxu0 0
  %1275 = vmatpush1.bf16.msra.mxu0 0
  %1276 = vmatprep.subr.bf16.mxu0 0
  %1277 = vmatpush1.bf16.msra.mxu0 0
  %1278 = vmatprep.subr.bf16.mxu0 0
  %1279 = vmatpush1.bf16.msra.mxu0 0
  %1280 = vmatprep.subr.bf16.mxu0 0
  %1281 = vmatpush1.bf16.msra.mxu0 0
  %1282 = vmatprep.subr.bf16.mxu0 0
  %1283 = vmatpush1.bf16.msra.mxu0 0
  %1284 = vmatprep.subr.bf16.mxu0 0
  %1285 = vmatpush1.bf16.msra.mxu0 0
  %1286 = vmatprep.subr.bf16.mxu0 0
  %1287 = vmatpush1.bf16.msra.mxu0 0
  %1288 = vmatprep.subr.bf16.mxu0 0
  %1289 = vmatpush1.bf16.msra.mxu0 0
  %1290 = vmatprep.subr.bf16.mxu0 0
  %1291 = vmatpush1.bf16.msra.mxu0 0
  %1292 = vmatprep.subr.bf16.mxu0 0
  %1293 = vmatpush1.bf16.msra.mxu0 0
  %1294 = vmatprep.mubr.bf16.mxu0 0
  %1295 = vmatmul.mubr.bf16.gmra.mrb[0].mxu0 %v1193
  %v1296 = vpop.f32.mrb[0].mxu0
  %v1297 = vadd.f32 0.0, %v1296
  %v1298 = vpop.f32.mrb[0].mxu0
  %v1299 = vadd.f32 0.0, %v1298
  %v1300 = vpop.f32.mrb[0].mxu0
  %v1301 = vpop.f32.mrb[0].mxu0
  %1302 = vdwg.mxu0
  %v1303 = vadd.f32 %v932, %v1297
  %v1304 = vadd.f32 %v933, %v1299
  %1305 = vrot.lane.b32.xlu0 %v96, 119
  %v1306 = vpop.permute.xlu0 %1305
  %1307 = vrot.lane.b32.xlu0 %v97, 119
  %v1308 = vpop.permute.xlu0 %1307
  %1309 = vrot.lane.b32.xlu0 %v98, 119
  %v1310 = vpop.permute.xlu0 %1309
  %1311 = vrot.lane.b32.xlu0 %v99, 119
  %v1312 = vpop.permute.xlu0 %1311
  %v1313 = vsel %vm1187, %v1306, %v1308
  %v1314 = vsel %vm1187, %v1310, %v1312
  %v1318 = vsel %vm134, %v1314, 0
  %v1321 = vsel %vm134, %v1312, 0
  %1323 = vmatprep.subr.bf16.mxu0 %v1308
  %1324 = vmatpush1.bf16.msra.mxu0 %v1313
  %1325 = vmatprep.subr.bf16.mxu0 %v1321
  %1326 = vmatpush1.bf16.msra.mxu0 %v1318
  %1327 = vmatprep.subr.bf16.mxu0 0
  %1328 = vmatpush1.bf16.msra.mxu0 0
  %1329 = vmatprep.subr.bf16.mxu0 0
  %1330 = vmatpush1.bf16.msra.mxu0 0
  %1331 = vmatprep.subr.bf16.mxu0 0
  %1332 = vmatpush1.bf16.msra.mxu0 0
  %1333 = vmatprep.subr.bf16.mxu0 0
  %1334 = vmatpush1.bf16.msra.mxu0 0
  %1335 = vmatprep.subr.bf16.mxu0 0
  %1336 = vmatpush1.bf16.msra.mxu0 0
  %1337 = vmatprep.subr.bf16.mxu0 0
  %1338 = vmatpush1.bf16.msra.mxu0 0
  %1339 = vmatprep.subr.bf16.mxu0 0
  %1340 = vmatpush1.bf16.msra.mxu0 0
  %1341 = vmatprep.subr.bf16.mxu0 0
  %1342 = vmatpush1.bf16.msra.mxu0 0
  %1343 = vmatprep.subr.bf16.mxu0 0
  %1344 = vmatpush1.bf16.msra.mxu0 0
  %1345 = vmatprep.subr.bf16.mxu0 0
  %1346 = vmatpush1.bf16.msra.mxu0 0
  %1347 = vmatprep.subr.bf16.mxu0 0
  %1348 = vmatpush1.bf16.msra.mxu0 0
  %1349 = vmatprep.subr.bf16.mxu0 0
  %1350 = vmatpush1.bf16.msra.mxu0 0
  %1351 = vmatprep.subr.bf16.mxu0 0
  %1352 = vmatpush1.bf16.msra.mxu0 0
  %1353 = vmatprep.subr.bf16.mxu0 0
  %1354 = vmatpush1.bf16.msra.mxu0 0
  %1355 = vmatprep.mubr.bf16.mxu0 0
  %1356 = vmatmul.mubr.bf16.gmra.mrb[0].mxu0 %v1193
  %v1357 = vpop.f32.mrb[0].mxu0
  %v1358 = vadd.f32 0.0, %v1357
  %v1359 = vpop.f32.mrb[0].mxu0
  %v1360 = vadd.f32 0.0, %v1359
  %v1361 = vpop.f32.mrb[0].mxu0
  %v1362 = vpop.f32.mrb[0].mxu0
  %1363 = vdwg.mxu0
  %v1364 = vadd.f32 %v993, %v1358
  %v1365 = vadd.f32 %v994, %v1360
  %1366 = vrot.lane.b32.xlu0 %v467, 119
  %v1367 = vpop.permute.xlu0 %1366
  %1368 = vrot.lane.b32.xlu0 %v470, 119
  %v1369 = vpop.permute.xlu0 %1368
  %1370 = vrot.lane.b32.xlu0 %v466, 119
  %v1371 = vpop.permute.xlu0 %1370
  %1372 = vrot.lane.b32.xlu0 %v469, 119
  %v1373 = vpop.permute.xlu0 %1372
  %v1374 = vsel %vm1187, %v1367, %v1369
  %v1375 = vsel %vm1187, %v1371, %v1373
  %v1379 = vsel %vm134, %v1375, 0
  %v1382 = vsel %vm134, %v1373, 0
  %1384 = vmatprep.subr.bf16.mxu0 %v1369
  %1385 = vmatpush1.bf16.msra.mxu0 %v1374
  %1386 = vmatprep.subr.bf16.mxu0 %v1382
  %1387 = vmatpush1.bf16.msra.mxu0 %v1379
  %1388 = vmatprep.subr.bf16.mxu0 0
  %1389 = vmatpush1.bf16.msra.mxu0 0
  %1390 = vmatprep.subr.bf16.mxu0 0
  %1391 = vmatpush1.bf16.msra.mxu0 0
  %1392 = vmatprep.subr.bf16.mxu0 0
  %1393 = vmatpush1.bf16.msra.mxu0 0
  %1394 = vmatprep.subr.bf16.mxu0 0
  %1395 = vmatpush1.bf16.msra.mxu0 0
  %1396 = vmatprep.subr.bf16.mxu0 0
  %1397 = vmatpush1.bf16.msra.mxu0 0
  %1398 = vmatprep.subr.bf16.mxu0 0
  %1399 = vmatpush1.bf16.msra.mxu0 0
  %1400 = vmatprep.subr.bf16.mxu0 0
  %1401 = vmatpush1.bf16.msra.mxu0 0
  %1402 = vmatprep.subr.bf16.mxu0 0
  %1403 = vmatpush1.bf16.msra.mxu0 0
  %1404 = vmatprep.subr.bf16.mxu0 0
  %1405 = vmatpush1.bf16.msra.mxu0 0
  %1406 = vmatprep.subr.bf16.mxu0 0
  %1407 = vmatpush1.bf16.msra.mxu0 0
  %1408 = vmatprep.subr.bf16.mxu0 0
  %1409 = vmatpush1.bf16.msra.mxu0 0
  %1410 = vmatprep.subr.bf16.mxu0 0
  %1411 = vmatpush1.bf16.msra.mxu0 0
  %1412 = vmatprep.subr.bf16.mxu0 0
  %1413 = vmatpush1.bf16.msra.mxu0 0
  %1414 = vmatprep.subr.bf16.mxu0 0
  %1415 = vmatpush1.bf16.msra.mxu0 0
  %1416 = vmatprep.mubr.bf16.mxu0 0
  %1417 = vmatmul.mubr.bf16.gmra.mrb[0].mxu0 %v1193
  %v1418 = vpop.f32.mrb[0].mxu0
  %v1419 = vadd.f32 0.0, %v1418
  %v1420 = vpop.f32.mrb[0].mxu0
  %v1421 = vadd.f32 0.0, %v1420
  %v1422 = vpop.f32.mrb[0].mxu0
  %v1423 = vpop.f32.mrb[0].mxu0
  %1424 = vdwg.mxu0
  %v1425 = vadd.f32 %v1054, %v1419
  %v1426 = vadd.f32 %v1055, %v1421
  %1427 = vrot.lane.b32.xlu0 %v104, 119
  %v1428 = vpop.permute.xlu0 %1427
  %1429 = vrot.lane.b32.xlu0 %v105, 119
  %v1430 = vpop.permute.xlu0 %1429
  %1431 = vrot.lane.b32.xlu0 %v106, 119
  %v1432 = vpop.permute.xlu0 %1431
  %1433 = vrot.lane.b32.xlu0 %v107, 119
  %v1434 = vpop.permute.xlu0 %1433
  %v1435 = vsel %vm1187, %v1428, %v1430
  %v1436 = vsel %vm1187, %v1432, %v1434
  %v1440 = vsel %vm134, %v1436, 0
  %v1443 = vsel %vm134, %v1434, 0
  %1445 = vmatprep.subr.bf16.mxu0 %v1430
  %1446 = vmatpush1.bf16.msra.mxu0 %v1435
  %1447 = vmatprep.subr.bf16.mxu0 %v1443
  %1448 = vmatpush1.bf16.msra.mxu0 %v1440
  %1449 = vmatprep.subr.bf16.mxu0 0
  %1450 = vmatpush1.bf16.msra.mxu0 0
  %1451 = vmatprep.subr.bf16.mxu0 0
  %1452 = vmatpush1.bf16.msra.mxu0 0
  %1453 = vmatprep.subr.bf16.mxu0 0
  %1454 = vmatpush1.bf16.msra.mxu0 0
  %1455 = vmatprep.subr.bf16.mxu0 0
  %1456 = vmatpush1.bf16.msra.mxu0 0
  %1457 = vmatprep.subr.bf16.mxu0 0
  %1458 = vmatpush1.bf16.msra.mxu0 0
  %1459 = vmatprep.subr.bf16.mxu0 0
  %1460 = vmatpush1.bf16.msra.mxu0 0
  %1461 = vmatprep.subr.bf16.mxu0 0
  %1462 = vmatpush1.bf16.msra.mxu0 0
  %1463 = vmatprep.subr.bf16.mxu0 0
  %1464 = vmatpush1.bf16.msra.mxu0 0
  %1465 = vmatprep.subr.bf16.mxu0 0
  %1466 = vmatpush1.bf16.msra.mxu0 0
  %1467 = vmatprep.subr.bf16.mxu0 0
  %1468 = vmatpush1.bf16.msra.mxu0 0
  %1469 = vmatprep.subr.bf16.mxu0 0
  %1470 = vmatpush1.bf16.msra.mxu0 0
  %1471 = vmatprep.subr.bf16.mxu0 0
  %1472 = vmatpush1.bf16.msra.mxu0 0
  %1473 = vmatprep.subr.bf16.mxu0 0
  %1474 = vmatpush1.bf16.msra.mxu0 0
  %1475 = vmatprep.subr.bf16.mxu0 0
  %1476 = vmatpush1.bf16.msra.mxu0 0
  %1477 = vmatprep.mubr.bf16.mxu0 0
  %1478 = vmatmul.mubr.bf16.gmra.mrb[0].mxu0 %v1193
  %v1479 = vpop.f32.mrb[0].mxu0
  %v1480 = vadd.f32 0.0, %v1479
  %v1481 = vpop.f32.mrb[0].mxu0
  %v1482 = vadd.f32 0.0, %v1481
  %v1483 = vpop.f32.mrb[0].mxu0
  %v1484 = vpop.f32.mrb[0].mxu0
  %1485 = vdwg.mxu0
  %v1486 = vadd.f32 %v1115, %v1480
  %v1487 = vadd.f32 %v1116, %v1482
  %1488 = vrot.lane.b32.xlu0 %v695, 119
  %v1489 = vpop.permute.xlu0 %1488
  %1490 = vrot.lane.b32.xlu0 %v698, 119
  %v1491 = vpop.permute.xlu0 %1490
  %1492 = vrot.lane.b32.xlu0 %v694, 119
  %v1493 = vpop.permute.xlu0 %1492
  %1494 = vrot.lane.b32.xlu0 %v697, 119
  %v1495 = vpop.permute.xlu0 %1494
  %v1496 = vsel %vm1187, %v1489, %v1491
  %v1497 = vsel %vm1187, %v1493, %v1495
  %v1501 = vsel %vm134, %v1497, 0
  %v1504 = vsel %vm134, %v1495, 0
  %1506 = vmatprep.subr.bf16.mxu0 %v1491
  %1507 = vmatpush1.bf16.msra.mxu0 %v1496
  %1508 = vmatprep.subr.bf16.mxu0 %v1504
  %1509 = vmatpush1.bf16.msra.mxu0 %v1501
  %1510 = vmatprep.subr.bf16.mxu0 0
  %1511 = vmatpush1.bf16.msra.mxu0 0
  %1512 = vmatprep.subr.bf16.mxu0 0
  %1513 = vmatpush1.bf16.msra.mxu0 0
  %1514 = vmatprep.subr.bf16.mxu0 0
  %1515 = vmatpush1.bf16.msra.mxu0 0
  %1516 = vmatprep.subr.bf16.mxu0 0
  %1517 = vmatpush1.bf16.msra.mxu0 0
  %1518 = vmatprep.subr.bf16.mxu0 0
  %1519 = vmatpush1.bf16.msra.mxu0 0
  %1520 = vmatprep.subr.bf16.mxu0 0
  %1521 = vmatpush1.bf16.msra.mxu0 0
  %1522 = vmatprep.subr.bf16.mxu0 0
  %1523 = vmatpush1.bf16.msra.mxu0 0
  %1524 = vmatprep.subr.bf16.mxu0 0
  %1525 = vmatpush1.bf16.msra.mxu0 0
  %1526 = vmatprep.subr.bf16.mxu0 0
  %1527 = vmatpush1.bf16.msra.mxu0 0
  %1528 = vmatprep.subr.bf16.mxu0 0
  %1529 = vmatpush1.bf16.msra.mxu0 0
  %1530 = vmatprep.subr.bf16.mxu0 0
  %1531 = vmatpush1.bf16.msra.mxu0 0
  %1532 = vmatprep.subr.bf16.mxu0 0
  %1533 = vmatpush1.bf16.msra.mxu0 0
  %1534 = vmatprep.subr.bf16.mxu0 0
  %1535 = vmatpush1.bf16.msra.mxu0 0
  %1536 = vmatprep.subr.bf16.mxu0 0
  %1537 = vmatpush1.bf16.msra.mxu0 0
  %1538 = vmatprep.mubr.bf16.mxu0 0
  %1539 = vmatmul.mubr.bf16.gmra.mrb[0].mxu0 %v1193
  %v1540 = vpop.f32.mrb[0].mxu0
  %v1541 = vadd.f32 0.0, %v1540
  %v1542 = vpop.f32.mrb[0].mxu0
  %v1543 = vadd.f32 0.0, %v1542
  %v1544 = vpop.f32.mrb[0].mxu0
  %v1545 = vpop.f32.mrb[0].mxu0
  %1546 = vdwg.mxu0
  %v1547 = vadd.f32 %v1176, %v1541
  %v1548 = vadd.f32 %v1177, %v1543
  %v1549 = vpack.c.bf16 %v78, %v78
  %1550 = vrot.lane.b32.xlu0 %v88, 118
  %v1551 = vpop.permute.xlu0 %1550
  %1552 = vrot.lane.b32.xlu0 %v89, 118
  %v1553 = vpop.permute.xlu0 %1552
  %1554 = vrot.lane.b32.xlu0 %v90, 118
  %v1555 = vpop.permute.xlu0 %1554
  %1556 = vrot.lane.b32.xlu0 %v91, 118
  %v1557 = vpop.permute.xlu0 %1556
  %vm1558 = vcmask 965632
  %v1559 = vsel %vm1558, %v1551, %v1553
  %v1560 = vsel %vm1558, %v1555, %v1557
  %v1564 = vsel %vm130, %v1549, 0
  %v1567 = vsel %vm134, %v1560, 0
  %v1570 = vsel %vm134, %v1557, 0
  %1572 = vmatprep.subr.bf16.mxu0 %v1553
  %1573 = vmatpush1.bf16.msra.mxu0 %v1559
  %1574 = vmatprep.subr.bf16.mxu0 %v1570
  %1575 = vmatpush1.bf16.msra.mxu0 %v1567
  %1576 = vmatprep.subr.bf16.mxu0 0
  %1577 = vmatpush1.bf16.msra.mxu0 0
  %1578 = vmatprep.subr.bf16.mxu0 0
  %1579 = vmatpush1.bf16.msra.mxu0 0
  %1580 = vmatprep.subr.bf16.mxu0 0
  %1581 = vmatpush1.bf16.msra.mxu0 0
  %1582 = vmatprep.subr.bf16.mxu0 0
  %1583 = vmatpush1.bf16.msra.mxu0 0
  %1584 = vmatprep.subr.bf16.mxu0 0
  %1585 = vmatpush1.bf16.msra.mxu0 0
  %1586 = vmatprep.subr.bf16.mxu0 0
  %1587 = vmatpush1.bf16.msra.mxu0 0
  %1588 = vmatprep.subr.bf16.mxu0 0
  %1589 = vmatpush1.bf16.msra.mxu0 0
  %1590 = vmatprep.subr.bf16.mxu0 0
  %1591 = vmatpush1.bf16.msra.mxu0 0
  %1592 = vmatprep.subr.bf16.mxu0 0
  %1593 = vmatpush1.bf16.msra.mxu0 0
  %1594 = vmatprep.subr.bf16.mxu0 0
  %1595 = vmatpush1.bf16.msra.mxu0 0
  %1596 = vmatprep.subr.bf16.mxu0 0
  %1597 = vmatpush1.bf16.msra.mxu0 0
  %1598 = vmatprep.subr.bf16.mxu0 0
  %1599 = vmatpush1.bf16.msra.mxu0 0
  %1600 = vmatprep.subr.bf16.mxu0 0
  %1601 = vmatpush1.bf16.msra.mxu0 0
  %1602 = vmatprep.subr.bf16.mxu0 0
  %1603 = vmatpush1.bf16.msra.mxu0 0
  %1604 = vmatprep.mubr.bf16.mxu0 0
  %1605 = vmatmul.mubr.bf16.gmra.mrb[0].mxu0 %v1564
  %v1606 = vpop.f32.mrb[0].mxu0
  %v1607 = vadd.f32 0.0, %v1606
  %v1608 = vpop.f32.mrb[0].mxu0
  %v1609 = vadd.f32 0.0, %v1608
  %v1610 = vpop.f32.mrb[0].mxu0
  %v1611 = vpop.f32.mrb[0].mxu0
  %1612 = vdwg.mxu0
  %v1613 = vadd.f32 %v1242, %v1607
  %v1614 = vadd.f32 %v1243, %v1609
  %1615 = vrot.lane.b32.xlu0 %v239, 118
  %v1616 = vpop.permute.xlu0 %1615
  %1617 = vrot.lane.b32.xlu0 %v242, 118
  %v1618 = vpop.permute.xlu0 %1617
  %1619 = vrot.lane.b32.xlu0 %v238, 118
  %v1620 = vpop.permute.xlu0 %1619
  %1621 = vrot.lane.b32.xlu0 %v241, 118
  %v1622 = vpop.permute.xlu0 %1621
  %v1623 = vsel %vm1558, %v1616, %v1618
  %v1624 = vsel %vm1558, %v1620, %v1622
  %v1628 = vsel %vm134, %v1624, 0
  %v1631 = vsel %vm134, %v1622, 0
  %1633 = vmatprep.subr.bf16.mxu0 %v1618
  %1634 = vmatpush1.bf16.msra.mxu0 %v1623
  %1635 = vmatprep.subr.bf16.mxu0 %v1631
  %1636 = vmatpush1.bf16.msra.mxu0 %v1628
  %1637 = vmatprep.subr.bf16.mxu0 0
  %1638 = vmatpush1.bf16.msra.mxu0 0
  %1639 = vmatprep.subr.bf16.mxu0 0
  %1640 = vmatpush1.bf16.msra.mxu0 0
  %1641 = vmatprep.subr.bf16.mxu0 0
  %1642 = vmatpush1.bf16.msra.mxu0 0
  %1643 = vmatprep.subr.bf16.mxu0 0
  %1644 = vmatpush1.bf16.msra.mxu0 0
  %1645 = vmatprep.subr.bf16.mxu0 0
  %1646 = vmatpush1.bf16.msra.mxu0 0
  %1647 = vmatprep.subr.bf16.mxu0 0
  %1648 = vmatpush1.bf16.msra.mxu0 0
  %1649 = vmatprep.subr.bf16.mxu0 0
  %1650 = vmatpush1.bf16.msra.mxu0 0
  %1651 = vmatprep.subr.bf16.mxu0 0
  %1652 = vmatpush1.bf16.msra.mxu0 0
  %1653 = vmatprep.subr.bf16.mxu0 0
  %1654 = vmatpush1.bf16.msra.mxu0 0
  %1655 = vmatprep.subr.bf16.mxu0 0
  %1656 = vmatpush1.bf16.msra.mxu0 0
  %1657 = vmatprep.subr.bf16.mxu0 0
  %1658 = vmatpush1.bf16.msra.mxu0 0
  %1659 = vmatprep.subr.bf16.mxu0 0
  %1660 = vmatpush1.bf16.msra.mxu0 0
  %1661 = vmatprep.subr.bf16.mxu0 0
  %1662 = vmatpush1.bf16.msra.mxu0 0
  %1663 = vmatprep.subr.bf16.mxu0 0
  %1664 = vmatpush1.bf16.msra.mxu0 0
  %1665 = vmatprep.mubr.bf16.mxu0 0
  %1666 = vmatmul.mubr.bf16.gmra.mrb[0].mxu0 %v1564
  %v1667 = vpop.f32.mrb[0].mxu0
  %v1668 = vadd.f32 0.0, %v1667
  %v1669 = vpop.f32.mrb[0].mxu0
  %v1670 = vadd.f32 0.0, %v1669
  %v1671 = vpop.f32.mrb[0].mxu0
  %v1672 = vpop.f32.mrb[0].mxu0
  %1673 = vdwg.mxu0
  %v1674 = vadd.f32 %v1303, %v1668
  %v1675 = vadd.f32 %v1304, %v1670
  %1676 = vrot.lane.b32.xlu0 %v96, 118
  %v1677 = vpop.permute.xlu0 %1676
  %1678 = vrot.lane.b32.xlu0 %v97, 118
  %v1679 = vpop.permute.xlu0 %1678
  %1680 = vrot.lane.b32.xlu0 %v98, 118
  %v1681 = vpop.permute.xlu0 %1680
  %1682 = vrot.lane.b32.xlu0 %v99, 118
  %v1683 = vpop.permute.xlu0 %1682
  %v1684 = vsel %vm1558, %v1677, %v1679
  %v1685 = vsel %vm1558, %v1681, %v1683
  %v1689 = vsel %vm134, %v1685, 0
  %v1692 = vsel %vm134, %v1683, 0
  %1694 = vmatprep.subr.bf16.mxu0 %v1679
  %1695 = vmatpush1.bf16.msra.mxu0 %v1684
  %1696 = vmatprep.subr.bf16.mxu0 %v1692
  %1697 = vmatpush1.bf16.msra.mxu0 %v1689
  %1698 = vmatprep.subr.bf16.mxu0 0
  %1699 = vmatpush1.bf16.msra.mxu0 0
  %1700 = vmatprep.subr.bf16.mxu0 0
  %1701 = vmatpush1.bf16.msra.mxu0 0
  %1702 = vmatprep.subr.bf16.mxu0 0
  %1703 = vmatpush1.bf16.msra.mxu0 0
  %1704 = vmatprep.subr.bf16.mxu0 0
  %1705 = vmatpush1.bf16.msra.mxu0 0
  %1706 = vmatprep.subr.bf16.mxu0 0
  %1707 = vmatpush1.bf16.msra.mxu0 0
  %1708 = vmatprep.subr.bf16.mxu0 0
  %1709 = vmatpush1.bf16.msra.mxu0 0
  %1710 = vmatprep.subr.bf16.mxu0 0
  %1711 = vmatpush1.bf16.msra.mxu0 0
  %1712 = vmatprep.subr.bf16.mxu0 0
  %1713 = vmatpush1.bf16.msra.mxu0 0
  %1714 = vmatprep.subr.bf16.mxu0 0
  %1715 = vmatpush1.bf16.msra.mxu0 0
  %1716 = vmatprep.subr.bf16.mxu0 0
  %1717 = vmatpush1.bf16.msra.mxu0 0
  %1718 = vmatprep.subr.bf16.mxu0 0
  %1719 = vmatpush1.bf16.msra.mxu0 0
  %1720 = vmatprep.subr.bf16.mxu0 0
  %1721 = vmatpush1.bf16.msra.mxu0 0
  %1722 = vmatprep.subr.bf16.mxu0 0
  %1723 = vmatpush1.bf16.msra.mxu0 0
  %1724 = vmatprep.subr.bf16.mxu0 0
  %1725 = vmatpush1.bf16.msra.mxu0 0
  %1726 = vmatprep.mubr.bf16.mxu0 0
  %1727 = vmatmul.mubr.bf16.gmra.mrb[0].mxu0 %v1564
  %v1728 = vpop.f32.mrb[0].mxu0
  %v1729 = vadd.f32 0.0, %v1728
  %v1730 = vpop.f32.mrb[0].mxu0
  %v1731 = vadd.f32 0.0, %v1730
  %v1732 = vpop.f32.mrb[0].mxu0
  %v1733 = vpop.f32.mrb[0].mxu0
  %1734 = vdwg.mxu0
  %v1735 = vadd.f32 %v1364, %v1729
  %v1736 = vadd.f32 %v1365, %v1731
  %1737 = vrot.lane.b32.xlu0 %v467, 118
  %v1738 = vpop.permute.xlu0 %1737
  %1739 = vrot.lane.b32.xlu0 %v470, 118
  %v1740 = vpop.permute.xlu0 %1739
  %1741 = vrot.lane.b32.xlu0 %v466, 118
  %v1742 = vpop.permute.xlu0 %1741
  %1743 = vrot.lane.b32.xlu0 %v469, 118
  %v1744 = vpop.permute.xlu0 %1743
  %v1745 = vsel %vm1558, %v1738, %v1740
  %v1746 = vsel %vm1558, %v1742, %v1744
  %v1750 = vsel %vm134, %v1746, 0
  %v1753 = vsel %vm134, %v1744, 0
  %1755 = vmatprep.subr.bf16.mxu0 %v1740
  %1756 = vmatpush1.bf16.msra.mxu0 %v1745
  %1757 = vmatprep.subr.bf16.mxu0 %v1753
  %1758 = vmatpush1.bf16.msra.mxu0 %v1750
  %1759 = vmatprep.subr.bf16.mxu0 0
  %1760 = vmatpush1.bf16.msra.mxu0 0
  %1761 = vmatprep.subr.bf16.mxu0 0
  %1762 = vmatpush1.bf16.msra.mxu0 0
  %1763 = vmatprep.subr.bf16.mxu0 0
  %1764 = vmatpush1.bf16.msra.mxu0 0
  %1765 = vmatprep.subr.bf16.mxu0 0
  %1766 = vmatpush1.bf16.msra.mxu0 0
  %1767 = vmatprep.subr.bf16.mxu0 0
  %1768 = vmatpush1.bf16.msra.mxu0 0
  %1769 = vmatprep.subr.bf16.mxu0 0
  %1770 = vmatpush1.bf16.msra.mxu0 0
  %1771 = vmatprep.subr.bf16.mxu0 0
  %1772 = vmatpush1.bf16.msra.mxu0 0
  %1773 = vmatprep.subr.bf16.mxu0 0
  %1774 = vmatpush1.bf16.msra.mxu0 0
  %1775 = vmatprep.subr.bf16.mxu0 0
  %1776 = vmatpush1.bf16.msra.mxu0 0
  %1777 = vmatprep.subr.bf16.mxu0 0
  %1778 = vmatpush1.bf16.msra.mxu0 0
  %1779 = vmatprep.subr.bf16.mxu0 0
  %1780 = vmatpush1.bf16.msra.mxu0 0
  %1781 = vmatprep.subr.bf16.mxu0 0
  %1782 = vmatpush1.bf16.msra.mxu0 0
  %1783 = vmatprep.subr.bf16.mxu0 0
  %1784 = vmatpush1.bf16.msra.mxu0 0
  %1785 = vmatprep.subr.bf16.mxu0 0
  %1786 = vmatpush1.bf16.msra.mxu0 0
  %1787 = vmatprep.mubr.bf16.mxu0 0
  %1788 = vmatmul.mubr.bf16.gmra.mrb[0].mxu0 %v1564
  %v1789 = vpop.f32.mrb[0].mxu0
  %v1790 = vadd.f32 0.0, %v1789
  %v1791 = vpop.f32.mrb[0].mxu0
  %v1792 = vadd.f32 0.0, %v1791
  %v1793 = vpop.f32.mrb[0].mxu0
  %v1794 = vpop.f32.mrb[0].mxu0
  %1795 = vdwg.mxu0
  %v1796 = vadd.f32 %v1425, %v1790
  %v1797 = vadd.f32 %v1426, %v1792
  %1798 = vrot.lane.b32.xlu0 %v104, 118
  %v1799 = vpop.permute.xlu0 %1798
  %1800 = vrot.lane.b32.xlu0 %v105, 118
  %v1801 = vpop.permute.xlu0 %1800
  %1802 = vrot.lane.b32.xlu0 %v106, 118
  %v1803 = vpop.permute.xlu0 %1802
  %1804 = vrot.lane.b32.xlu0 %v107, 118
  %v1805 = vpop.permute.xlu0 %1804
  %v1806 = vsel %vm1558, %v1799, %v1801
  %v1807 = vsel %vm1558, %v1803, %v1805
  %v1811 = vsel %vm134, %v1807, 0
  %v1814 = vsel %vm134, %v1805, 0
  %1816 = vmatprep.subr.bf16.mxu0 %v1801
  %1817 = vmatpush1.bf16.msra.mxu0 %v1806
  %1818 = vmatprep.subr.bf16.mxu0 %v1814
  %1819 = vmatpush1.bf16.msra.mxu0 %v1811
  %1820 = vmatprep.subr.bf16.mxu0 0
  %1821 = vmatpush1.bf16.msra.mxu0 0
  %1822 = vmatprep.subr.bf16.mxu0 0
  %1823 = vmatpush1.bf16.msra.mxu0 0
  %1824 = vmatprep.subr.bf16.mxu0 0
  %1825 = vmatpush1.bf16.msra.mxu0 0
  %1826 = vmatprep.subr.bf16.mxu0 0
  %1827 = vmatpush1.bf16.msra.mxu0 0
  %1828 = vmatprep.subr.bf16.mxu0 0
  %1829 = vmatpush1.bf16.msra.mxu0 0
  %1830 = vmatprep.subr.bf16.mxu0 0
  %1831 = vmatpush1.bf16.msra.mxu0 0
  %1832 = vmatprep.subr.bf16.mxu0 0
  %1833 = vmatpush1.bf16.msra.mxu0 0
  %1834 = vmatprep.subr.bf16.mxu0 0
  %1835 = vmatpush1.bf16.msra.mxu0 0
  %1836 = vmatprep.subr.bf16.mxu0 0
  %1837 = vmatpush1.bf16.msra.mxu0 0
  %1838 = vmatprep.subr.bf16.mxu0 0
  %1839 = vmatpush1.bf16.msra.mxu0 0
  %1840 = vmatprep.subr.bf16.mxu0 0
  %1841 = vmatpush1.bf16.msra.mxu0 0
  %1842 = vmatprep.subr.bf16.mxu0 0
  %1843 = vmatpush1.bf16.msra.mxu0 0
  %1844 = vmatprep.subr.bf16.mxu0 0
  %1845 = vmatpush1.bf16.msra.mxu0 0
  %1846 = vmatprep.subr.bf16.mxu0 0
  %1847 = vmatpush1.bf16.msra.mxu0 0
  %1848 = vmatprep.mubr.bf16.mxu0 0
  %1849 = vmatmul.mubr.bf16.gmra.mrb[0].mxu0 %v1564
  %v1850 = vpop.f32.mrb[0].mxu0
  %v1851 = vadd.f32 0.0, %v1850
  %v1852 = vpop.f32.mrb[0].mxu0
  %v1853 = vadd.f32 0.0, %v1852
  %v1854 = vpop.f32.mrb[0].mxu0
  %v1855 = vpop.f32.mrb[0].mxu0
  %1856 = vdwg.mxu0
  %v1857 = vadd.f32 %v1486, %v1851
  %v1858 = vadd.f32 %v1487, %v1853
  %1859 = vrot.lane.b32.xlu0 %v695, 118
  %v1860 = vpop.permute.xlu0 %1859
  %1861 = vrot.lane.b32.xlu0 %v698, 118
  %v1862 = vpop.permute.xlu0 %1861
  %1863 = vrot.lane.b32.xlu0 %v694, 118
  %v1864 = vpop.permute.xlu0 %1863
  %1865 = vrot.lane.b32.xlu0 %v697, 118
  %v1866 = vpop.permute.xlu0 %1865
  %v1867 = vsel %vm1558, %v1860, %v1862
  %v1868 = vsel %vm1558, %v1864, %v1866
  %v1872 = vsel %vm134, %v1868, 0
  %v1875 = vsel %vm134, %v1866, 0
  %1877 = vmatprep.subr.bf16.mxu0 %v1862
  %1878 = vmatpush1.bf16.msra.mxu0 %v1867
  %1879 = vmatprep.subr.bf16.mxu0 %v1875
  %1880 = vmatpush1.bf16.msra.mxu0 %v1872
  %1881 = vmatprep.subr.bf16.mxu0 0
  %1882 = vmatpush1.bf16.msra.mxu0 0
  %1883 = vmatprep.subr.bf16.mxu0 0
  %1884 = vmatpush1.bf16.msra.mxu0 0
  %1885 = vmatprep.subr.bf16.mxu0 0
  %1886 = vmatpush1.bf16.msra.mxu0 0
  %1887 = vmatprep.subr.bf16.mxu0 0
  %1888 = vmatpush1.bf16.msra.mxu0 0
  %1889 = vmatprep.subr.bf16.mxu0 0
  %1890 = vmatpush1.bf16.msra.mxu0 0
  %1891 = vmatprep.subr.bf16.mxu0 0
  %1892 = vmatpush1.bf16.msra.mxu0 0
  %1893 = vmatprep.subr.bf16.mxu0 0
  %1894 = vmatpush1.bf16.msra.mxu0 0
  %1895 = vmatprep.subr.bf16.mxu0 0
  %1896 = vmatpush1.bf16.msra.mxu0 0
  %1897 = vmatprep.subr.bf16.mxu0 0
  %1898 = vmatpush1.bf16.msra.mxu0 0
  %1899 = vmatprep.subr.bf16.mxu0 0
  %1900 = vmatpush1.bf16.msra.mxu0 0
  %1901 = vmatprep.subr.bf16.mxu0 0
  %1902 = vmatpush1.bf16.msra.mxu0 0
  %1903 = vmatprep.subr.bf16.mxu0 0
  %1904 = vmatpush1.bf16.msra.mxu0 0
  %1905 = vmatprep.subr.bf16.mxu0 0
  %1906 = vmatpush1.bf16.msra.mxu0 0
  %1907 = vmatprep.subr.bf16.mxu0 0
  %1908 = vmatpush1.bf16.msra.mxu0 0
  %1909 = vmatprep.mubr.bf16.mxu0 0
  %1910 = vmatmul.mubr.bf16.gmra.mrb[0].mxu0 %v1564
  %v1911 = vpop.f32.mrb[0].mxu0
  %v1912 = vadd.f32 0.0, %v1911
  %v1913 = vpop.f32.mrb[0].mxu0
  %v1914 = vadd.f32 0.0, %v1913
  %v1915 = vpop.f32.mrb[0].mxu0
  %v1916 = vpop.f32.mrb[0].mxu0
  %1917 = vdwg.mxu0
  %v1918 = vadd.f32 %v1547, %v1912
  %v1919 = vadd.f32 %v1548, %v1914
  %v1920 = vpack.c.bf16 %v79, %v79
  %1921 = vrot.lane.b32.xlu0 %v88, 117
  %v1922 = vpop.permute.xlu0 %1921
  %1923 = vrot.lane.b32.xlu0 %v89, 117
  %v1924 = vpop.permute.xlu0 %1923
  %1925 = vrot.lane.b32.xlu0 %v90, 117
  %v1926 = vpop.permute.xlu0 %1925
  %1927 = vrot.lane.b32.xlu0 %v91, 117
  %v1928 = vpop.permute.xlu0 %1927
  %vm1929 = vcmask 957440
  %v1930 = vsel %vm1929, %v1922, %v1924
  %v1931 = vsel %vm1929, %v1926, %v1928
  %v1935 = vsel %vm130, %v1920, 0
  %v1938 = vsel %vm134, %v1931, 0
  %v1941 = vsel %vm134, %v1928, 0
  %1943 = vmatprep.subr.bf16.mxu0 %v1924
  %1944 = vmatpush1.bf16.msra.mxu0 %v1930
  %1945 = vmatprep.subr.bf16.mxu0 %v1941
  %1946 = vmatpush1.bf16.msra.mxu0 %v1938
  %1947 = vmatprep.subr.bf16.mxu0 0
  %1948 = vmatpush1.bf16.msra.mxu0 0
  %1949 = vmatprep.subr.bf16.mxu0 0
  %1950 = vmatpush1.bf16.msra.mxu0 0
  %1951 = vmatprep.subr.bf16.mxu0 0
  %1952 = vmatpush1.bf16.msra.mxu0 0
  %1953 = vmatprep.subr.bf16.mxu0 0
  %1954 = vmatpush1.bf16.msra.mxu0 0
  %1955 = vmatprep.subr.bf16.mxu0 0
  %1956 = vmatpush1.bf16.msra.mxu0 0
  %1957 = vmatprep.subr.bf16.mxu0 0
  %1958 = vmatpush1.bf16.msra.mxu0 0
  %1959 = vmatprep.subr.bf16.mxu0 0
  %1960 = vmatpush1.bf16.msra.mxu0 0
  %1961 = vmatprep.subr.bf16.mxu0 0
  %1962 = vmatpush1.bf16.msra.mxu0 0
  %1963 = vmatprep.subr.bf16.mxu0 0
  %1964 = vmatpush1.bf16.msra.mxu0 0
  %1965 = vmatprep.subr.bf16.mxu0 0
  %1966 = vmatpush1.bf16.msra.mxu0 0
  %1967 = vmatprep.subr.bf16.mxu0 0
  %1968 = vmatpush1.bf16.msra.mxu0 0
  %1969 = vmatprep.subr.bf16.mxu0 0
  %1970 = vmatpush1.bf16.msra.mxu0 0
  %1971 = vmatprep.subr.bf16.mxu0 0
  %1972 = vmatpush1.bf16.msra.mxu0 0
  %1973 = vmatprep.subr.bf16.mxu0 0
  %1974 = vmatpush1.bf16.msra.mxu0 0
  %1975 = vmatprep.mubr.bf16.mxu0 0
  %1976 = vmatmul.mubr.bf16.gmra.mrb[0].mxu0 %v1935
  %v1977 = vpop.f32.mrb[0].mxu0
  %v1978 = vadd.f32 0.0, %v1977
  %v1979 = vpop.f32.mrb[0].mxu0
  %v1980 = vadd.f32 0.0, %v1979
  %v1981 = vpop.f32.mrb[0].mxu0
  %v1982 = vpop.f32.mrb[0].mxu0
  %1983 = vdwg.mxu0
  %v1984 = vadd.f32 %v1613, %v1978
  %v1985 = vadd.f32 %v1614, %v1980
  %1986 = vrot.lane.b32.xlu0 %v239, 117
  %v1987 = vpop.permute.xlu0 %1986
  %1988 = vrot.lane.b32.xlu0 %v242, 117
  %v1989 = vpop.permute.xlu0 %1988
  %1990 = vrot.lane.b32.xlu0 %v238, 117
  %v1991 = vpop.permute.xlu0 %1990
  %1992 = vrot.lane.b32.xlu0 %v241, 117
  %v1993 = vpop.permute.xlu0 %1992
  %v1994 = vsel %vm1929, %v1987, %v1989
  %v1995 = vsel %vm1929, %v1991, %v1993
  %v1999 = vsel %vm134, %v1995, 0
  %v2002 = vsel %vm134, %v1993, 0
  %2004 = vmatprep.subr.bf16.mxu0 %v1989
  %2005 = vmatpush1.bf16.msra.mxu0 %v1994
  %2006 = vmatprep.subr.bf16.mxu0 %v2002
  %2007 = vmatpush1.bf16.msra.mxu0 %v1999
  %2008 = vmatprep.subr.bf16.mxu0 0
  %2009 = vmatpush1.bf16.msra.mxu0 0
  %2010 = vmatprep.subr.bf16.mxu0 0
  %2011 = vmatpush1.bf16.msra.mxu0 0
  %2012 = vmatprep.subr.bf16.mxu0 0
  %2013 = vmatpush1.bf16.msra.mxu0 0
  %2014 = vmatprep.subr.bf16.mxu0 0
  %2015 = vmatpush1.bf16.msra.mxu0 0
  %2016 = vmatprep.subr.bf16.mxu0 0
  %2017 = vmatpush1.bf16.msra.mxu0 0
  %2018 = vmatprep.subr.bf16.mxu0 0
  %2019 = vmatpush1.bf16.msra.mxu0 0
  %2020 = vmatprep.subr.bf16.mxu0 0
  %2021 = vmatpush1.bf16.msra.mxu0 0
  %2022 = vmatprep.subr.bf16.mxu0 0
  %2023 = vmatpush1.bf16.msra.mxu0 0
  %2024 = vmatprep.subr.bf16.mxu0 0
  %2025 = vmatpush1.bf16.msra.mxu0 0
  %2026 = vmatprep.subr.bf16.mxu0 0
  %2027 = vmatpush1.bf16.msra.mxu0 0
  %2028 = vmatprep.subr.bf16.mxu0 0
  %2029 = vmatpush1.bf16.msra.mxu0 0
  %2030 = vmatprep.subr.bf16.mxu0 0
  %2031 = vmatpush1.bf16.msra.mxu0 0
  %2032 = vmatprep.subr.bf16.mxu0 0
  %2033 = vmatpush1.bf16.msra.mxu0 0
  %2034 = vmatprep.subr.bf16.mxu0 0
  %2035 = vmatpush1.bf16.msra.mxu0 0
  %2036 = vmatprep.mubr.bf16.mxu0 0
  %2037 = vmatmul.mubr.bf16.gmra.mrb[0].mxu0 %v1935
  %v2038 = vpop.f32.mrb[0].mxu0
  %v2039 = vadd.f32 0.0, %v2038
  %v2040 = vpop.f32.mrb[0].mxu0
  %v2041 = vadd.f32 0.0, %v2040
  %v2042 = vpop.f32.mrb[0].mxu0
  %v2043 = vpop.f32.mrb[0].mxu0
  %2044 = vdwg.mxu0
  %v2045 = vadd.f32 %v1674, %v2039
  %v2046 = vadd.f32 %v1675, %v2041
  %2047 = vrot.lane.b32.xlu0 %v96, 117
  %v2048 = vpop.permute.xlu0 %2047
  %2049 = vrot.lane.b32.xlu0 %v97, 117
  %v2050 = vpop.permute.xlu0 %2049
  %2051 = vrot.lane.b32.xlu0 %v98, 117
  %v2052 = vpop.permute.xlu0 %2051
  %2053 = vrot.lane.b32.xlu0 %v99, 117
  %v2054 = vpop.permute.xlu0 %2053
  %v2055 = vsel %vm1929, %v2048, %v2050
  %v2056 = vsel %vm1929, %v2052, %v2054
  %v2060 = vsel %vm134, %v2056, 0
  %v2063 = vsel %vm134, %v2054, 0
  %2065 = vmatprep.subr.bf16.mxu0 %v2050
  %2066 = vmatpush1.bf16.msra.mxu0 %v2055
  %2067 = vmatprep.subr.bf16.mxu0 %v2063
  %2068 = vmatpush1.bf16.msra.mxu0 %v2060
  %2069 = vmatprep.subr.bf16.mxu0 0
  %2070 = vmatpush1.bf16.msra.mxu0 0
  %2071 = vmatprep.subr.bf16.mxu0 0
  %2072 = vmatpush1.bf16.msra.mxu0 0
  %2073 = vmatprep.subr.bf16.mxu0 0
  %2074 = vmatpush1.bf16.msra.mxu0 0
  %2075 = vmatprep.subr.bf16.mxu0 0
  %2076 = vmatpush1.bf16.msra.mxu0 0
  %2077 = vmatprep.subr.bf16.mxu0 0
  %2078 = vmatpush1.bf16.msra.mxu0 0
  %2079 = vmatprep.subr.bf16.mxu0 0
  %2080 = vmatpush1.bf16.msra.mxu0 0
  %2081 = vmatprep.subr.bf16.mxu0 0
  %2082 = vmatpush1.bf16.msra.mxu0 0
  %2083 = vmatprep.subr.bf16.mxu0 0
  %2084 = vmatpush1.bf16.msra.mxu0 0
  %2085 = vmatprep.subr.bf16.mxu0 0
  %2086 = vmatpush1.bf16.msra.mxu0 0
  %2087 = vmatprep.subr.bf16.mxu0 0
  %2088 = vmatpush1.bf16.msra.mxu0 0
  %2089 = vmatprep.subr.bf16.mxu0 0
  %2090 = vmatpush1.bf16.msra.mxu0 0
  %2091 = vmatprep.subr.bf16.mxu0 0
  %2092 = vmatpush1.bf16.msra.mxu0 0
  %2093 = vmatprep.subr.bf16.mxu0 0
  %2094 = vmatpush1.bf16.msra.mxu0 0
  %2095 = vmatprep.subr.bf16.mxu0 0
  %2096 = vmatpush1.bf16.msra.mxu0 0
  %2097 = vmatprep.mubr.bf16.mxu0 0
  %2098 = vmatmul.mubr.bf16.gmra.mrb[0].mxu0 %v1935
  %v2099 = vpop.f32.mrb[0].mxu0
  %v2100 = vadd.f32 0.0, %v2099
  %v2101 = vpop.f32.mrb[0].mxu0
  %v2102 = vadd.f32 0.0, %v2101
  %v2103 = vpop.f32.mrb[0].mxu0
  %v2104 = vpop.f32.mrb[0].mxu0
  %2105 = vdwg.mxu0
  %v2106 = vadd.f32 %v1735, %v2100
  %v2107 = vadd.f32 %v1736, %v2102
  %2108 = vrot.lane.b32.xlu0 %v467, 117
  %v2109 = vpop.permute.xlu0 %2108
  %2110 = vrot.lane.b32.xlu0 %v470, 117
  %v2111 = vpop.permute.xlu0 %2110
  %2112 = vrot.lane.b32.xlu0 %v466, 117
  %v2113 = vpop.permute.xlu0 %2112
  %2114 = vrot.lane.b32.xlu0 %v469, 117
  %v2115 = vpop.permute.xlu0 %2114
  %v2116 = vsel %vm1929, %v2109, %v2111
  %v2117 = vsel %vm1929, %v2113, %v2115
  %v2121 = vsel %vm134, %v2117, 0
  %v2124 = vsel %vm134, %v2115, 0
  %2126 = vmatprep.subr.bf16.mxu0 %v2111
  %2127 = vmatpush1.bf16.msra.mxu0 %v2116
  %2128 = vmatprep.subr.bf16.mxu0 %v2124
  %2129 = vmatpush1.bf16.msra.mxu0 %v2121
  %2130 = vmatprep.subr.bf16.mxu0 0
  %2131 = vmatpush1.bf16.msra.mxu0 0
  %2132 = vmatprep.subr.bf16.mxu0 0
  %2133 = vmatpush1.bf16.msra.mxu0 0
  %2134 = vmatprep.subr.bf16.mxu0 0
  %2135 = vmatpush1.bf16.msra.mxu0 0
  %2136 = vmatprep.subr.bf16.mxu0 0
  %2137 = vmatpush1.bf16.msra.mxu0 0
  %2138 = vmatprep.subr.bf16.mxu0 0
  %2139 = vmatpush1.bf16.msra.mxu0 0
  %2140 = vmatprep.subr.bf16.mxu0 0
  %2141 = vmatpush1.bf16.msra.mxu0 0
  %2142 = vmatprep.subr.bf16.mxu0 0
  %2143 = vmatpush1.bf16.msra.mxu0 0
  %2144 = vmatprep.subr.bf16.mxu0 0
  %2145 = vmatpush1.bf16.msra.mxu0 0
  %2146 = vmatprep.subr.bf16.mxu0 0
  %2147 = vmatpush1.bf16.msra.mxu0 0
  %2148 = vmatprep.subr.bf16.mxu0 0
  %2149 = vmatpush1.bf16.msra.mxu0 0
  %2150 = vmatprep.subr.bf16.mxu0 0
  %2151 = vmatpush1.bf16.msra.mxu0 0
  %2152 = vmatprep.subr.bf16.mxu0 0
  %2153 = vmatpush1.bf16.msra.mxu0 0
  %2154 = vmatprep.subr.bf16.mxu0 0
  %2155 = vmatpush1.bf16.msra.mxu0 0
  %2156 = vmatprep.subr.bf16.mxu0 0
  %2157 = vmatpush1.bf16.msra.mxu0 0
  %2158 = vmatprep.mubr.bf16.mxu0 0
  %2159 = vmatmul.mubr.bf16.gmra.mrb[0].mxu0 %v1935
  %v2160 = vpop.f32.mrb[0].mxu0
  %v2161 = vadd.f32 0.0, %v2160
  %v2162 = vpop.f32.mrb[0].mxu0
  %v2163 = vadd.f32 0.0, %v2162
  %v2164 = vpop.f32.mrb[0].mxu0
  %v2165 = vpop.f32.mrb[0].mxu0
  %2166 = vdwg.mxu0
  %v2167 = vadd.f32 %v1796, %v2161
  %v2168 = vadd.f32 %v1797, %v2163
  %2169 = vrot.lane.b32.xlu0 %v104, 117
  %v2170 = vpop.permute.xlu0 %2169
  %2171 = vrot.lane.b32.xlu0 %v105, 117
  %v2172 = vpop.permute.xlu0 %2171
  %2173 = vrot.lane.b32.xlu0 %v106, 117
  %v2174 = vpop.permute.xlu0 %2173
  %2175 = vrot.lane.b32.xlu0 %v107, 117
  %v2176 = vpop.permute.xlu0 %2175
  %v2177 = vsel %vm1929, %v2170, %v2172
  %v2178 = vsel %vm1929, %v2174, %v2176
  %v2182 = vsel %vm134, %v2178, 0
  %v2185 = vsel %vm134, %v2176, 0
  %2187 = vmatprep.subr.bf16.mxu0 %v2172
  %2188 = vmatpush1.bf16.msra.mxu0 %v2177
  %2189 = vmatprep.subr.bf16.mxu0 %v2185
  %2190 = vmatpush1.bf16.msra.mxu0 %v2182
  %2191 = vmatprep.subr.bf16.mxu0 0
  %2192 = vmatpush1.bf16.msra.mxu0 0
  %2193 = vmatprep.subr.bf16.mxu0 0
  %2194 = vmatpush1.bf16.msra.mxu0 0
  %2195 = vmatprep.subr.bf16.mxu0 0
  %2196 = vmatpush1.bf16.msra.mxu0 0
  %2197 = vmatprep.subr.bf16.mxu0 0
  %2198 = vmatpush1.bf16.msra.mxu0 0
  %2199 = vmatprep.subr.bf16.mxu0 0
  %2200 = vmatpush1.bf16.msra.mxu0 0
  %2201 = vmatprep.subr.bf16.mxu0 0
  %2202 = vmatpush1.bf16.msra.mxu0 0
  %2203 = vmatprep.subr.bf16.mxu0 0
  %2204 = vmatpush1.bf16.msra.mxu0 0
  %2205 = vmatprep.subr.bf16.mxu0 0
  %2206 = vmatpush1.bf16.msra.mxu0 0
  %2207 = vmatprep.subr.bf16.mxu0 0
  %2208 = vmatpush1.bf16.msra.mxu0 0
  %2209 = vmatprep.subr.bf16.mxu0 0
  %2210 = vmatpush1.bf16.msra.mxu0 0
  %2211 = vmatprep.subr.bf16.mxu0 0
  %2212 = vmatpush1.bf16.msra.mxu0 0
  %2213 = vmatprep.subr.bf16.mxu0 0
  %2214 = vmatpush1.bf16.msra.mxu0 0
  %2215 = vmatprep.subr.bf16.mxu0 0
  %2216 = vmatpush1.bf16.msra.mxu0 0
  %2217 = vmatprep.subr.bf16.mxu0 0
  %2218 = vmatpush1.bf16.msra.mxu0 0
  %2219 = vmatprep.mubr.bf16.mxu0 0
  %2220 = vmatmul.mubr.bf16.gmra.mrb[0].mxu0 %v1935
  %v2221 = vpop.f32.mrb[0].mxu0
  %v2222 = vadd.f32 0.0, %v2221
  %v2223 = vpop.f32.mrb[0].mxu0
  %v2224 = vadd.f32 0.0, %v2223
  %v2225 = vpop.f32.mrb[0].mxu0
  %v2226 = vpop.f32.mrb[0].mxu0
  %2227 = vdwg.mxu0
  %v2228 = vadd.f32 %v1857, %v2222
  %v2229 = vadd.f32 %v1858, %v2224
  %2230 = vrot.lane.b32.xlu0 %v695, 117
  %v2231 = vpop.permute.xlu0 %2230
  %2232 = vrot.lane.b32.xlu0 %v698, 117
  %v2233 = vpop.permute.xlu0 %2232
  %2234 = vrot.lane.b32.xlu0 %v694, 117
  %v2235 = vpop.permute.xlu0 %2234
  %2236 = vrot.lane.b32.xlu0 %v697, 117
  %v2237 = vpop.permute.xlu0 %2236
  %v2238 = vsel %vm1929, %v2231, %v2233
  %v2239 = vsel %vm1929, %v2235, %v2237
  %v2243 = vsel %vm134, %v2239, 0
  %v2246 = vsel %vm134, %v2237, 0
  %2248 = vmatprep.subr.bf16.mxu0 %v2233
  %2249 = vmatpush1.bf16.msra.mxu0 %v2238
  %2250 = vmatprep.subr.bf16.mxu0 %v2246
  %2251 = vmatpush1.bf16.msra.mxu0 %v2243
  %2252 = vmatprep.subr.bf16.mxu0 0
  %2253 = vmatpush1.bf16.msra.mxu0 0
  %2254 = vmatprep.subr.bf16.mxu0 0
  %2255 = vmatpush1.bf16.msra.mxu0 0
  %2256 = vmatprep.subr.bf16.mxu0 0
  %2257 = vmatpush1.bf16.msra.mxu0 0
  %2258 = vmatprep.subr.bf16.mxu0 0
  %2259 = vmatpush1.bf16.msra.mxu0 0
  %2260 = vmatprep.subr.bf16.mxu0 0
  %2261 = vmatpush1.bf16.msra.mxu0 0
  %2262 = vmatprep.subr.bf16.mxu0 0
  %2263 = vmatpush1.bf16.msra.mxu0 0
  %2264 = vmatprep.subr.bf16.mxu0 0
  %2265 = vmatpush1.bf16.msra.mxu0 0
  %2266 = vmatprep.subr.bf16.mxu0 0
  %2267 = vmatpush1.bf16.msra.mxu0 0
  %2268 = vmatprep.subr.bf16.mxu0 0
  %2269 = vmatpush1.bf16.msra.mxu0 0
  %2270 = vmatprep.subr.bf16.mxu0 0
  %2271 = vmatpush1.bf16.msra.mxu0 0
  %2272 = vmatprep.subr.bf16.mxu0 0
  %2273 = vmatpush1.bf16.msra.mxu0 0
  %2274 = vmatprep.subr.bf16.mxu0 0
  %2275 = vmatpush1.bf16.msra.mxu0 0
  %2276 = vmatprep.subr.bf16.mxu0 0
  %2277 = vmatpush1.bf16.msra.mxu0 0
  %2278 = vmatprep.subr.bf16.mxu0 0
  %2279 = vmatpush1.bf16.msra.mxu0 0
  %2280 = vmatprep.mubr.bf16.mxu0 0
  %2281 = vmatmul.mubr.bf16.gmra.mrb[0].mxu0 %v1935
  %v2282 = vpop.f32.mrb[0].mxu0
  %v2283 = vadd.f32 0.0, %v2282
  %v2284 = vpop.f32.mrb[0].mxu0
  %v2285 = vadd.f32 0.0, %v2284
  %v2286 = vpop.f32.mrb[0].mxu0
  %v2287 = vpop.f32.mrb[0].mxu0
  %2288 = vdwg.mxu0
  %v2289 = vadd.f32 %v1918, %v2283
  %v2290 = vadd.f32 %v1919, %v2285
  %v2291 = vpack.c.bf16 %v80, %v80
  %2292 = vrot.lane.b32.xlu0 %v88, 110
  %v2293 = vpop.permute.xlu0 %2292
  %2294 = vrot.lane.b32.xlu0 %v89, 110
  %v2295 = vpop.permute.xlu0 %2294
  %2296 = vrot.lane.b32.xlu0 %v90, 110
  %v2297 = vpop.permute.xlu0 %2296
  %2298 = vrot.lane.b32.xlu0 %v91, 110
  %v2299 = vpop.permute.xlu0 %2298
  %vm2300 = vcmask 900096
  %v2301 = vsel %vm2300, %v2293, %v2295
  %v2302 = vsel %vm2300, %v2297, %v2299
  %v2306 = vsel %vm130, %v2291, 0
  %v2309 = vsel %vm134, %v2302, 0
  %v2312 = vsel %vm134, %v2299, 0
  %2314 = vmatprep.subr.bf16.mxu0 %v2295
  %2315 = vmatpush1.bf16.msra.mxu0 %v2301
  %2316 = vmatprep.subr.bf16.mxu0 %v2312
  %2317 = vmatpush1.bf16.msra.mxu0 %v2309
  %2318 = vmatprep.subr.bf16.mxu0 0
  %2319 = vmatpush1.bf16.msra.mxu0 0
  %2320 = vmatprep.subr.bf16.mxu0 0
  %2321 = vmatpush1.bf16.msra.mxu0 0
  %2322 = vmatprep.subr.bf16.mxu0 0
  %2323 = vmatpush1.bf16.msra.mxu0 0
  %2324 = vmatprep.subr.bf16.mxu0 0
  %2325 = vmatpush1.bf16.msra.mxu0 0
  %2326 = vmatprep.subr.bf16.mxu0 0
  %2327 = vmatpush1.bf16.msra.mxu0 0
  %2328 = vmatprep.subr.bf16.mxu0 0
  %2329 = vmatpush1.bf16.msra.mxu0 0
  %2330 = vmatprep.subr.bf16.mxu0 0
  %2331 = vmatpush1.bf16.msra.mxu0 0
  %2332 = vmatprep.subr.bf16.mxu0 0
  %2333 = vmatpush1.bf16.msra.mxu0 0
  %2334 = vmatprep.subr.bf16.mxu0 0
  %2335 = vmatpush1.bf16.msra.mxu0 0
  %2336 = vmatprep.subr.bf16.mxu0 0
  %2337 = vmatpush1.bf16.msra.mxu0 0
  %2338 = vmatprep.subr.bf16.mxu0 0
  %2339 = vmatpush1.bf16.msra.mxu0 0
  %2340 = vmatprep.subr.bf16.mxu0 0
  %2341 = vmatpush1.bf16.msra.mxu0 0
  %2342 = vmatprep.subr.bf16.mxu0 0
  %2343 = vmatpush1.bf16.msra.mxu0 0
  %2344 = vmatprep.subr.bf16.mxu0 0
  %2345 = vmatpush1.bf16.msra.mxu0 0
  %2346 = vmatprep.mubr.bf16.mxu0 0
  %2347 = vmatmul.mubr.bf16.gmra.mrb[0].mxu0 %v2306
  %v2348 = vpop.f32.mrb[0].mxu0
  %v2349 = vadd.f32 0.0, %v2348
  %v2350 = vpop.f32.mrb[0].mxu0
  %v2351 = vadd.f32 0.0, %v2350
  %v2352 = vpop.f32.mrb[0].mxu0
  %v2353 = vpop.f32.mrb[0].mxu0
  %2354 = vdwg.mxu0
  %v2355 = vadd.f32 %v1984, %v2349
  %v2356 = vadd.f32 %v1985, %v2351
  %2357 = vrot.lane.b32.xlu0 %v239, 110
  %v2358 = vpop.permute.xlu0 %2357
  %2359 = vrot.lane.b32.xlu0 %v242, 110
  %v2360 = vpop.permute.xlu0 %2359
  %2361 = vrot.lane.b32.xlu0 %v238, 110
  %v2362 = vpop.permute.xlu0 %2361
  %2363 = vrot.lane.b32.xlu0 %v241, 110
  %v2364 = vpop.permute.xlu0 %2363
  %v2365 = vsel %vm2300, %v2358, %v2360
  %v2366 = vsel %vm2300, %v2362, %v2364
  %v2370 = vsel %vm134, %v2366, 0
  %v2373 = vsel %vm134, %v2364, 0
  %2375 = vmatprep.subr.bf16.mxu0 %v2360
  %2376 = vmatpush1.bf16.msra.mxu0 %v2365
  %2377 = vmatprep.subr.bf16.mxu0 %v2373
  %2378 = vmatpush1.bf16.msra.mxu0 %v2370
  %2379 = vmatprep.subr.bf16.mxu0 0
  %2380 = vmatpush1.bf16.msra.mxu0 0
  %2381 = vmatprep.subr.bf16.mxu0 0
  %2382 = vmatpush1.bf16.msra.mxu0 0
  %2383 = vmatprep.subr.bf16.mxu0 0
  %2384 = vmatpush1.bf16.msra.mxu0 0
  %2385 = vmatprep.subr.bf16.mxu0 0
  %2386 = vmatpush1.bf16.msra.mxu0 0
  %2387 = vmatprep.subr.bf16.mxu0 0
  %2388 = vmatpush1.bf16.msra.mxu0 0
  %2389 = vmatprep.subr.bf16.mxu0 0
  %2390 = vmatpush1.bf16.msra.mxu0 0
  %2391 = vmatprep.subr.bf16.mxu0 0
  %2392 = vmatpush1.bf16.msra.mxu0 0
  %2393 = vmatprep.subr.bf16.mxu0 0
  %2394 = vmatpush1.bf16.msra.mxu0 0
  %2395 = vmatprep.subr.bf16.mxu0 0
  %2396 = vmatpush1.bf16.msra.mxu0 0
  %2397 = vmatprep.subr.bf16.mxu0 0
  %2398 = vmatpush1.bf16.msra.mxu0 0
  %2399 = vmatprep.subr.bf16.mxu0 0
  %2400 = vmatpush1.bf16.msra.mxu0 0
  %2401 = vmatprep.subr.bf16.mxu0 0
  %2402 = vmatpush1.bf16.msra.mxu0 0
  %2403 = vmatprep.subr.bf16.mxu0 0
  %2404 = vmatpush1.bf16.msra.mxu0 0
  %2405 = vmatprep.subr.bf16.mxu0 0
  %2406 = vmatpush1.bf16.msra.mxu0 0
  %2407 = vmatprep.mubr.bf16.mxu0 0
  %2408 = vmatmul.mubr.bf16.gmra.mrb[0].mxu0 %v2306
  %v2409 = vpop.f32.mrb[0].mxu0
  %v2410 = vadd.f32 0.0, %v2409
  %v2411 = vpop.f32.mrb[0].mxu0
  %v2412 = vadd.f32 0.0, %v2411
  %v2413 = vpop.f32.mrb[0].mxu0
  %v2414 = vpop.f32.mrb[0].mxu0
  %2415 = vdwg.mxu0
  %v2416 = vadd.f32 %v2045, %v2410
  %v2417 = vadd.f32 %v2046, %v2412
  %2418 = vrot.lane.b32.xlu0 %v96, 110
  %v2419 = vpop.permute.xlu0 %2418
  %2420 = vrot.lane.b32.xlu0 %v97, 110
  %v2421 = vpop.permute.xlu0 %2420
  %2422 = vrot.lane.b32.xlu0 %v98, 110
  %v2423 = vpop.permute.xlu0 %2422
  %2424 = vrot.lane.b32.xlu0 %v99, 110
  %v2425 = vpop.permute.xlu0 %2424
  %v2426 = vsel %vm2300, %v2419, %v2421
  %v2427 = vsel %vm2300, %v2423, %v2425
  %v2431 = vsel %vm134, %v2427, 0
  %v2434 = vsel %vm134, %v2425, 0
  %2436 = vmatprep.subr.bf16.mxu0 %v2421
  %2437 = vmatpush1.bf16.msra.mxu0 %v2426
  %2438 = vmatprep.subr.bf16.mxu0 %v2434
  %2439 = vmatpush1.bf16.msra.mxu0 %v2431
  %2440 = vmatprep.subr.bf16.mxu0 0
  %2441 = vmatpush1.bf16.msra.mxu0 0
  %2442 = vmatprep.subr.bf16.mxu0 0
  %2443 = vmatpush1.bf16.msra.mxu0 0
  %2444 = vmatprep.subr.bf16.mxu0 0
  %2445 = vmatpush1.bf16.msra.mxu0 0
  %2446 = vmatprep.subr.bf16.mxu0 0
  %2447 = vmatpush1.bf16.msra.mxu0 0
  %2448 = vmatprep.subr.bf16.mxu0 0
  %2449 = vmatpush1.bf16.msra.mxu0 0
  %2450 = vmatprep.subr.bf16.mxu0 0
  %2451 = vmatpush1.bf16.msra.mxu0 0
  %2452 = vmatprep.subr.bf16.mxu0 0
  %2453 = vmatpush1.bf16.msra.mxu0 0
  %2454 = vmatprep.subr.bf16.mxu0 0
  %2455 = vmatpush1.bf16.msra.mxu0 0
  %2456 = vmatprep.subr.bf16.mxu0 0
  %2457 = vmatpush1.bf16.msra.mxu0 0
  %2458 = vmatprep.subr.bf16.mxu0 0
  %2459 = vmatpush1.bf16.msra.mxu0 0
  %2460 = vmatprep.subr.bf16.mxu0 0
  %2461 = vmatpush1.bf16.msra.mxu0 0
  %2462 = vmatprep.subr.bf16.mxu0 0
  %2463 = vmatpush1.bf16.msra.mxu0 0
  %2464 = vmatprep.subr.bf16.mxu0 0
  %2465 = vmatpush1.bf16.msra.mxu0 0
  %2466 = vmatprep.subr.bf16.mxu0 0
  %2467 = vmatpush1.bf16.msra.mxu0 0
  %2468 = vmatprep.mubr.bf16.mxu0 0
  %2469 = vmatmul.mubr.bf16.gmra.mrb[0].mxu0 %v2306
  %v2470 = vpop.f32.mrb[0].mxu0
  %v2471 = vadd.f32 0.0, %v2470
  %v2472 = vpop.f32.mrb[0].mxu0
  %v2473 = vadd.f32 0.0, %v2472
  %v2474 = vpop.f32.mrb[0].mxu0
  %v2475 = vpop.f32.mrb[0].mxu0
  %2476 = vdwg.mxu0
  %v2477 = vadd.f32 %v2106, %v2471
  %v2478 = vadd.f32 %v2107, %v2473
  %2479 = vrot.lane.b32.xlu0 %v467, 110
  %v2480 = vpop.permute.xlu0 %2479
  %2481 = vrot.lane.b32.xlu0 %v470, 110
  %v2482 = vpop.permute.xlu0 %2481
  %2483 = vrot.lane.b32.xlu0 %v466, 110
  %v2484 = vpop.permute.xlu0 %2483
  %2485 = vrot.lane.b32.xlu0 %v469, 110
  %v2486 = vpop.permute.xlu0 %2485
  %v2487 = vsel %vm2300, %v2480, %v2482
  %v2488 = vsel %vm2300, %v2484, %v2486
  %v2492 = vsel %vm134, %v2488, 0
  %v2495 = vsel %vm134, %v2486, 0
  %2497 = vmatprep.subr.bf16.mxu0 %v2482
  %2498 = vmatpush1.bf16.msra.mxu0 %v2487
  %2499 = vmatprep.subr.bf16.mxu0 %v2495
  %2500 = vmatpush1.bf16.msra.mxu0 %v2492
  %2501 = vmatprep.subr.bf16.mxu0 0
  %2502 = vmatpush1.bf16.msra.mxu0 0
  %2503 = vmatprep.subr.bf16.mxu0 0
  %2504 = vmatpush1.bf16.msra.mxu0 0
  %2505 = vmatprep.subr.bf16.mxu0 0
  %2506 = vmatpush1.bf16.msra.mxu0 0
  %2507 = vmatprep.subr.bf16.mxu0 0
  %2508 = vmatpush1.bf16.msra.mxu0 0
  %2509 = vmatprep.subr.bf16.mxu0 0
  %2510 = vmatpush1.bf16.msra.mxu0 0
  %2511 = vmatprep.subr.bf16.mxu0 0
  %2512 = vmatpush1.bf16.msra.mxu0 0
  %2513 = vmatprep.subr.bf16.mxu0 0
  %2514 = vmatpush1.bf16.msra.mxu0 0
  %2515 = vmatprep.subr.bf16.mxu0 0
  %2516 = vmatpush1.bf16.msra.mxu0 0
  %2517 = vmatprep.subr.bf16.mxu0 0
  %2518 = vmatpush1.bf16.msra.mxu0 0
  %2519 = vmatprep.subr.bf16.mxu0 0
  %2520 = vmatpush1.bf16.msra.mxu0 0
  %2521 = vmatprep.subr.bf16.mxu0 0
  %2522 = vmatpush1.bf16.msra.mxu0 0
  %2523 = vmatprep.subr.bf16.mxu0 0
  %2524 = vmatpush1.bf16.msra.mxu0 0
  %2525 = vmatprep.subr.bf16.mxu0 0
  %2526 = vmatpush1.bf16.msra.mxu0 0
  %2527 = vmatprep.subr.bf16.mxu0 0
  %2528 = vmatpush1.bf16.msra.mxu0 0
  %2529 = vmatprep.mubr.bf16.mxu0 0
  %2530 = vmatmul.mubr.bf16.gmra.mrb[0].mxu0 %v2306
  %v2531 = vpop.f32.mrb[0].mxu0
  %v2532 = vadd.f32 0.0, %v2531
  %v2533 = vpop.f32.mrb[0].mxu0
  %v2534 = vadd.f32 0.0, %v2533
  %v2535 = vpop.f32.mrb[0].mxu0
  %v2536 = vpop.f32.mrb[0].mxu0
  %2537 = vdwg.mxu0
  %v2538 = vadd.f32 %v2167, %v2532
  %v2539 = vadd.f32 %v2168, %v2534
  %2540 = vrot.lane.b32.xlu0 %v104, 110
  %v2541 = vpop.permute.xlu0 %2540
  %2542 = vrot.lane.b32.xlu0 %v105, 110
  %v2543 = vpop.permute.xlu0 %2542
  %2544 = vrot.lane.b32.xlu0 %v106, 110
  %v2545 = vpop.permute.xlu0 %2544
  %2546 = vrot.lane.b32.xlu0 %v107, 110
  %v2547 = vpop.permute.xlu0 %2546
  %v2548 = vsel %vm2300, %v2541, %v2543
  %v2549 = vsel %vm2300, %v2545, %v2547
  %v2553 = vsel %vm134, %v2549, 0
  %v2556 = vsel %vm134, %v2547, 0
  %2558 = vmatprep.subr.bf16.mxu0 %v2543
  %2559 = vmatpush1.bf16.msra.mxu0 %v2548
  %2560 = vmatprep.subr.bf16.mxu0 %v2556
  %2561 = vmatpush1.bf16.msra.mxu0 %v2553
  %2562 = vmatprep.subr.bf16.mxu0 0
  %2563 = vmatpush1.bf16.msra.mxu0 0
  %2564 = vmatprep.subr.bf16.mxu0 0
  %2565 = vmatpush1.bf16.msra.mxu0 0
  %2566 = vmatprep.subr.bf16.mxu0 0
  %2567 = vmatpush1.bf16.msra.mxu0 0
  %2568 = vmatprep.subr.bf16.mxu0 0
  %2569 = vmatpush1.bf16.msra.mxu0 0
  %2570 = vmatprep.subr.bf16.mxu0 0
  %2571 = vmatpush1.bf16.msra.mxu0 0
  %2572 = vmatprep.subr.bf16.mxu0 0
  %2573 = vmatpush1.bf16.msra.mxu0 0
  %2574 = vmatprep.subr.bf16.mxu0 0
  %2575 = vmatpush1.bf16.msra.mxu0 0
  %2576 = vmatprep.subr.bf16.mxu0 0
  %2577 = vmatpush1.bf16.msra.mxu0 0
  %2578 = vmatprep.subr.bf16.mxu0 0
  %2579 = vmatpush1.bf16.msra.mxu0 0
  %2580 = vmatprep.subr.bf16.mxu0 0
  %2581 = vmatpush1.bf16.msra.mxu0 0
  %2582 = vmatprep.subr.bf16.mxu0 0
  %2583 = vmatpush1.bf16.msra.mxu0 0
  %2584 = vmatprep.subr.bf16.mxu0 0
  %2585 = vmatpush1.bf16.msra.mxu0 0
  %2586 = vmatprep.subr.bf16.mxu0 0
  %2587 = vmatpush1.bf16.msra.mxu0 0
  %2588 = vmatprep.subr.bf16.mxu0 0
  %2589 = vmatpush1.bf16.msra.mxu0 0
  %2590 = vmatprep.mubr.bf16.mxu0 0
  %2591 = vmatmul.mubr.bf16.gmra.mrb[0].mxu0 %v2306
  %v2592 = vpop.f32.mrb[0].mxu0
  %v2593 = vadd.f32 0.0, %v2592
  %v2594 = vpop.f32.mrb[0].mxu0
  %v2595 = vadd.f32 0.0, %v2594
  %v2596 = vpop.f32.mrb[0].mxu0
  %v2597 = vpop.f32.mrb[0].mxu0
  %2598 = vdwg.mxu0
  %v2599 = vadd.f32 %v2228, %v2593
  %v2600 = vadd.f32 %v2229, %v2595
  %2601 = vrot.lane.b32.xlu0 %v695, 110
  %v2602 = vpop.permute.xlu0 %2601
  %2603 = vrot.lane.b32.xlu0 %v698, 110
  %v2604 = vpop.permute.xlu0 %2603
  %2605 = vrot.lane.b32.xlu0 %v694, 110
  %v2606 = vpop.permute.xlu0 %2605
  %2607 = vrot.lane.b32.xlu0 %v697, 110
  %v2608 = vpop.permute.xlu0 %2607
  %v2609 = vsel %vm2300, %v2602, %v2604
  %v2610 = vsel %vm2300, %v2606, %v2608
  %v2614 = vsel %vm134, %v2610, 0
  %v2617 = vsel %vm134, %v2608, 0
  %2619 = vmatprep.subr.bf16.mxu0 %v2604
  %2620 = vmatpush1.bf16.msra.mxu0 %v2609
  %2621 = vmatprep.subr.bf16.mxu0 %v2617
  %2622 = vmatpush1.bf16.msra.mxu0 %v2614
  %2623 = vmatprep.subr.bf16.mxu0 0
  %2624 = vmatpush1.bf16.msra.mxu0 0
  %2625 = vmatprep.subr.bf16.mxu0 0
  %2626 = vmatpush1.bf16.msra.mxu0 0
  %2627 = vmatprep.subr.bf16.mxu0 0
  %2628 = vmatpush1.bf16.msra.mxu0 0
  %2629 = vmatprep.subr.bf16.mxu0 0
  %2630 = vmatpush1.bf16.msra.mxu0 0
  %2631 = vmatprep.subr.bf16.mxu0 0
  %2632 = vmatpush1.bf16.msra.mxu0 0
  %2633 = vmatprep.subr.bf16.mxu0 0
  %2634 = vmatpush1.bf16.msra.mxu0 0
  %2635 = vmatprep.subr.bf16.mxu0 0
  %2636 = vmatpush1.bf16.msra.mxu0 0
  %2637 = vmatprep.subr.bf16.mxu0 0
  %2638 = vmatpush1.bf16.msra.mxu0 0
  %2639 = vmatprep.subr.bf16.mxu0 0
  %2640 = vmatpush1.bf16.msra.mxu0 0
  %2641 = vmatprep.subr.bf16.mxu0 0
  %2642 = vmatpush1.bf16.msra.mxu0 0
  %2643 = vmatprep.subr.bf16.mxu0 0
  %2644 = vmatpush1.bf16.msra.mxu0 0
  %2645 = vmatprep.subr.bf16.mxu0 0
  %2646 = vmatpush1.bf16.msra.mxu0 0
  %2647 = vmatprep.subr.bf16.mxu0 0
  %2648 = vmatpush1.bf16.msra.mxu0 0
  %2649 = vmatprep.subr.bf16.mxu0 0
  %2650 = vmatpush1.bf16.msra.mxu0 0
  %2651 = vmatprep.mubr.bf16.mxu0 0
  %2652 = vmatmul.mubr.bf16.gmra.mrb[0].mxu0 %v2306
  %v2653 = vpop.f32.mrb[0].mxu0
  %v2654 = vadd.f32 0.0, %v2653
  %v2655 = vpop.f32.mrb[0].mxu0
  %v2656 = vadd.f32 0.0, %v2655
  %v2657 = vpop.f32.mrb[0].mxu0
  %v2658 = vpop.f32.mrb[0].mxu0
  %2659 = vdwg.mxu0
  %v2660 = vadd.f32 %v2289, %v2654
  %v2661 = vadd.f32 %v2290, %v2656
  %v2662 = vpack.c.bf16 %v81, %v81
  %2663 = vrot.lane.b32.xlu0 %v88, 109
  %v2664 = vpop.permute.xlu0 %2663
  %2665 = vrot.lane.b32.xlu0 %v89, 109
  %v2666 = vpop.permute.xlu0 %2665
  %2667 = vrot.lane.b32.xlu0 %v90, 109
  %v2668 = vpop.permute.xlu0 %2667
  %2669 = vrot.lane.b32.xlu0 %v91, 109
  %v2670 = vpop.permute.xlu0 %2669
  %vm2671 = vcmask 891904
  %v2672 = vsel %vm2671, %v2664, %v2666
  %v2673 = vsel %vm2671, %v2668, %v2670
  %v2677 = vsel %vm130, %v2662, 0
  %v2680 = vsel %vm134, %v2673, 0
  %v2683 = vsel %vm134, %v2670, 0
  %2685 = vmatprep.subr.bf16.mxu0 %v2666
  %2686 = vmatpush1.bf16.msra.mxu0 %v2672
  %2687 = vmatprep.subr.bf16.mxu0 %v2683
  %2688 = vmatpush1.bf16.msra.mxu0 %v2680
  %2689 = vmatprep.subr.bf16.mxu0 0
  %2690 = vmatpush1.bf16.msra.mxu0 0
  %2691 = vmatprep.subr.bf16.mxu0 0
  %2692 = vmatpush1.bf16.msra.mxu0 0
  %2693 = vmatprep.subr.bf16.mxu0 0
  %2694 = vmatpush1.bf16.msra.mxu0 0
  %2695 = vmatprep.subr.bf16.mxu0 0
  %2696 = vmatpush1.bf16.msra.mxu0 0
  %2697 = vmatprep.subr.bf16.mxu0 0
  %2698 = vmatpush1.bf16.msra.mxu0 0
  %2699 = vmatprep.subr.bf16.mxu0 0
  %2700 = vmatpush1.bf16.msra.mxu0 0
  %2701 = vmatprep.subr.bf16.mxu0 0
  %2702 = vmatpush1.bf16.msra.mxu0 0
  %2703 = vmatprep.subr.bf16.mxu0 0
  %2704 = vmatpush1.bf16.msra.mxu0 0
  %2705 = vmatprep.subr.bf16.mxu0 0
  %2706 = vmatpush1.bf16.msra.mxu0 0
  %2707 = vmatprep.subr.bf16.mxu0 0
  %2708 = vmatpush1.bf16.msra.mxu0 0
  %2709 = vmatprep.subr.bf16.mxu0 0
  %2710 = vmatpush1.bf16.msra.mxu0 0
  %2711 = vmatprep.subr.bf16.mxu0 0
  %2712 = vmatpush1.bf16.msra.mxu0 0
  %2713 = vmatprep.subr.bf16.mxu0 0
  %2714 = vmatpush1.bf16.msra.mxu0 0
  %2715 = vmatprep.subr.bf16.mxu0 0
  %2716 = vmatpush1.bf16.msra.mxu0 0
  %2717 = vmatprep.mubr.bf16.mxu0 0
  %2718 = vmatmul.mubr.bf16.gmra.mrb[0].mxu0 %v2677
  %v2719 = vpop.f32.mrb[0].mxu0
  %v2720 = vadd.f32 0.0, %v2719
  %v2721 = vpop.f32.mrb[0].mxu0
  %v2722 = vadd.f32 0.0, %v2721
  %v2723 = vpop.f32.mrb[0].mxu0
  %v2724 = vpop.f32.mrb[0].mxu0
  %2725 = vdwg.mxu0
  %v2726 = vadd.f32 %v2355, %v2720
  %v2727 = vadd.f32 %v2356, %v2722
  %2728 = vrot.lane.b32.xlu0 %v239, 109
  %v2729 = vpop.permute.xlu0 %2728
  %2730 = vrot.lane.b32.xlu0 %v242, 109
  %v2731 = vpop.permute.xlu0 %2730
  %2732 = vrot.lane.b32.xlu0 %v238, 109
  %v2733 = vpop.permute.xlu0 %2732
  %2734 = vrot.lane.b32.xlu0 %v241, 109
  %v2735 = vpop.permute.xlu0 %2734
  %v2736 = vsel %vm2671, %v2729, %v2731
  %v2737 = vsel %vm2671, %v2733, %v2735
  %v2741 = vsel %vm134, %v2737, 0
  %v2744 = vsel %vm134, %v2735, 0
  %2746 = vmatprep.subr.bf16.mxu0 %v2731
  %2747 = vmatpush1.bf16.msra.mxu0 %v2736
  %2748 = vmatprep.subr.bf16.mxu0 %v2744
  %2749 = vmatpush1.bf16.msra.mxu0 %v2741
  %2750 = vmatprep.subr.bf16.mxu0 0
  %2751 = vmatpush1.bf16.msra.mxu0 0
  %2752 = vmatprep.subr.bf16.mxu0 0
  %2753 = vmatpush1.bf16.msra.mxu0 0
  %2754 = vmatprep.subr.bf16.mxu0 0
  %2755 = vmatpush1.bf16.msra.mxu0 0
  %2756 = vmatprep.subr.bf16.mxu0 0
  %2757 = vmatpush1.bf16.msra.mxu0 0
  %2758 = vmatprep.subr.bf16.mxu0 0
  %2759 = vmatpush1.bf16.msra.mxu0 0
  %2760 = vmatprep.subr.bf16.mxu0 0
  %2761 = vmatpush1.bf16.msra.mxu0 0
  %2762 = vmatprep.subr.bf16.mxu0 0
  %2763 = vmatpush1.bf16.msra.mxu0 0
  %2764 = vmatprep.subr.bf16.mxu0 0
  %2765 = vmatpush1.bf16.msra.mxu0 0
  %2766 = vmatprep.subr.bf16.mxu0 0
  %2767 = vmatpush1.bf16.msra.mxu0 0
  %2768 = vmatprep.subr.bf16.mxu0 0
  %2769 = vmatpush1.bf16.msra.mxu0 0
  %2770 = vmatprep.subr.bf16.mxu0 0
  %2771 = vmatpush1.bf16.msra.mxu0 0
  %2772 = vmatprep.subr.bf16.mxu0 0
  %2773 = vmatpush1.bf16.msra.mxu0 0
  %2774 = vmatprep.subr.bf16.mxu0 0
  %2775 = vmatpush1.bf16.msra.mxu0 0
  %2776 = vmatprep.subr.bf16.mxu0 0
  %2777 = vmatpush1.bf16.msra.mxu0 0
  %2778 = vmatprep.mubr.bf16.mxu0 0
  %2779 = vmatmul.mubr.bf16.gmra.mrb[0].mxu0 %v2677
  %v2780 = vpop.f32.mrb[0].mxu0
  %v2781 = vadd.f32 0.0, %v2780
  %v2782 = vpop.f32.mrb[0].mxu0
  %v2783 = vadd.f32 0.0, %v2782
  %v2784 = vpop.f32.mrb[0].mxu0
  %v2785 = vpop.f32.mrb[0].mxu0
  %2786 = vdwg.mxu0
  %v2787 = vadd.f32 %v2416, %v2781
  %v2788 = vadd.f32 %v2417, %v2783
  %2789 = vrot.lane.b32.xlu0 %v96, 109
  %v2790 = vpop.permute.xlu0 %2789
  %2791 = vrot.lane.b32.xlu0 %v97, 109
  %v2792 = vpop.permute.xlu0 %2791
  %2793 = vrot.lane.b32.xlu0 %v98, 109
  %v2794 = vpop.permute.xlu0 %2793
  %2795 = vrot.lane.b32.xlu0 %v99, 109
  %v2796 = vpop.permute.xlu0 %2795
  %v2797 = vsel %vm2671, %v2790, %v2792
  %v2798 = vsel %vm2671, %v2794, %v2796
  %v2802 = vsel %vm134, %v2798, 0
  %v2805 = vsel %vm134, %v2796, 0
  %2807 = vmatprep.subr.bf16.mxu0 %v2792
  %2808 = vmatpush1.bf16.msra.mxu0 %v2797
  %2809 = vmatprep.subr.bf16.mxu0 %v2805
  %2810 = vmatpush1.bf16.msra.mxu0 %v2802
  %2811 = vmatprep.subr.bf16.mxu0 0
  %2812 = vmatpush1.bf16.msra.mxu0 0
  %2813 = vmatprep.subr.bf16.mxu0 0
  %2814 = vmatpush1.bf16.msra.mxu0 0
  %2815 = vmatprep.subr.bf16.mxu0 0
  %2816 = vmatpush1.bf16.msra.mxu0 0
  %2817 = vmatprep.subr.bf16.mxu0 0
  %2818 = vmatpush1.bf16.msra.mxu0 0
  %2819 = vmatprep.subr.bf16.mxu0 0
  %2820 = vmatpush1.bf16.msra.mxu0 0
  %2821 = vmatprep.subr.bf16.mxu0 0
  %2822 = vmatpush1.bf16.msra.mxu0 0
  %2823 = vmatprep.subr.bf16.mxu0 0
  %2824 = vmatpush1.bf16.msra.mxu0 0
  %2825 = vmatprep.subr.bf16.mxu0 0
  %2826 = vmatpush1.bf16.msra.mxu0 0
  %2827 = vmatprep.subr.bf16.mxu0 0
  %2828 = vmatpush1.bf16.msra.mxu0 0
  %2829 = vmatprep.subr.bf16.mxu0 0
  %2830 = vmatpush1.bf16.msra.mxu0 0
  %2831 = vmatprep.subr.bf16.mxu0 0
  %2832 = vmatpush1.bf16.msra.mxu0 0
  %2833 = vmatprep.subr.bf16.mxu0 0
  %2834 = vmatpush1.bf16.msra.mxu0 0
  %2835 = vmatprep.subr.bf16.mxu0 0
  %2836 = vmatpush1.bf16.msra.mxu0 0
  %2837 = vmatprep.subr.bf16.mxu0 0
  %2838 = vmatpush1.bf16.msra.mxu0 0
  %2839 = vmatprep.mubr.bf16.mxu0 0
  %2840 = vmatmul.mubr.bf16.gmra.mrb[0].mxu0 %v2677
  %v2841 = vpop.f32.mrb[0].mxu0
  %v2842 = vadd.f32 0.0, %v2841
  %v2843 = vpop.f32.mrb[0].mxu0
  %v2844 = vadd.f32 0.0, %v2843
  %v2845 = vpop.f32.mrb[0].mxu0
  %v2846 = vpop.f32.mrb[0].mxu0
  %2847 = vdwg.mxu0
  %v2848 = vadd.f32 %v2477, %v2842
  %v2849 = vadd.f32 %v2478, %v2844
  %2850 = vrot.lane.b32.xlu0 %v467, 109
  %v2851 = vpop.permute.xlu0 %2850
  %2852 = vrot.lane.b32.xlu0 %v470, 109
  %v2853 = vpop.permute.xlu0 %2852
  %2854 = vrot.lane.b32.xlu0 %v466, 109
  %v2855 = vpop.permute.xlu0 %2854
  %2856 = vrot.lane.b32.xlu0 %v469, 109
  %v2857 = vpop.permute.xlu0 %2856
  %v2858 = vsel %vm2671, %v2851, %v2853
  %v2859 = vsel %vm2671, %v2855, %v2857
  %v2863 = vsel %vm134, %v2859, 0
  %v2866 = vsel %vm134, %v2857, 0
  %2868 = vmatprep.subr.bf16.mxu0 %v2853
  %2869 = vmatpush1.bf16.msra.mxu0 %v2858
  %2870 = vmatprep.subr.bf16.mxu0 %v2866
  %2871 = vmatpush1.bf16.msra.mxu0 %v2863
  %2872 = vmatprep.subr.bf16.mxu0 0
  %2873 = vmatpush1.bf16.msra.mxu0 0
  %2874 = vmatprep.subr.bf16.mxu0 0
  %2875 = vmatpush1.bf16.msra.mxu0 0
  %2876 = vmatprep.subr.bf16.mxu0 0
  %2877 = vmatpush1.bf16.msra.mxu0 0
  %2878 = vmatprep.subr.bf16.mxu0 0
  %2879 = vmatpush1.bf16.msra.mxu0 0
  %2880 = vmatprep.subr.bf16.mxu0 0
  %2881 = vmatpush1.bf16.msra.mxu0 0
  %2882 = vmatprep.subr.bf16.mxu0 0
  %2883 = vmatpush1.bf16.msra.mxu0 0
  %2884 = vmatprep.subr.bf16.mxu0 0
  %2885 = vmatpush1.bf16.msra.mxu0 0
  %2886 = vmatprep.subr.bf16.mxu0 0
  %2887 = vmatpush1.bf16.msra.mxu0 0
  %2888 = vmatprep.subr.bf16.mxu0 0
  %2889 = vmatpush1.bf16.msra.mxu0 0
  %2890 = vmatprep.subr.bf16.mxu0 0
  %2891 = vmatpush1.bf16.msra.mxu0 0
  %2892 = vmatprep.subr.bf16.mxu0 0
  %2893 = vmatpush1.bf16.msra.mxu0 0
  %2894 = vmatprep.subr.bf16.mxu0 0
  %2895 = vmatpush1.bf16.msra.mxu0 0
  %2896 = vmatprep.subr.bf16.mxu0 0
  %2897 = vmatpush1.bf16.msra.mxu0 0
  %2898 = vmatprep.subr.bf16.mxu0 0
  %2899 = vmatpush1.bf16.msra.mxu0 0
  %2900 = vmatprep.mubr.bf16.mxu0 0
  %2901 = vmatmul.mubr.bf16.gmra.mrb[0].mxu0 %v2677
  %v2902 = vpop.f32.mrb[0].mxu0
  %v2903 = vadd.f32 0.0, %v2902
  %v2904 = vpop.f32.mrb[0].mxu0
  %v2905 = vadd.f32 0.0, %v2904
  %v2906 = vpop.f32.mrb[0].mxu0
  %v2907 = vpop.f32.mrb[0].mxu0
  %2908 = vdwg.mxu0
  %v2909 = vadd.f32 %v2538, %v2903
  %v2910 = vadd.f32 %v2539, %v2905
  %2911 = vrot.lane.b32.xlu0 %v104, 109
  %v2912 = vpop.permute.xlu0 %2911
  %2913 = vrot.lane.b32.xlu0 %v105, 109
  %v2914 = vpop.permute.xlu0 %2913
  %2915 = vrot.lane.b32.xlu0 %v106, 109
  %v2916 = vpop.permute.xlu0 %2915
  %2917 = vrot.lane.b32.xlu0 %v107, 109
  %v2918 = vpop.permute.xlu0 %2917
  %v2919 = vsel %vm2671, %v2912, %v2914
  %v2920 = vsel %vm2671, %v2916, %v2918
  %v2924 = vsel %vm134, %v2920, 0
  %v2927 = vsel %vm134, %v2918, 0
  %2929 = vmatprep.subr.bf16.mxu0 %v2914
  %2930 = vmatpush1.bf16.msra.mxu0 %v2919
  %2931 = vmatprep.subr.bf16.mxu0 %v2927
  %2932 = vmatpush1.bf16.msra.mxu0 %v2924
  %2933 = vmatprep.subr.bf16.mxu0 0
  %2934 = vmatpush1.bf16.msra.mxu0 0
  %2935 = vmatprep.subr.bf16.mxu0 0
  %2936 = vmatpush1.bf16.msra.mxu0 0
  %2937 = vmatprep.subr.bf16.mxu0 0
  %2938 = vmatpush1.bf16.msra.mxu0 0
  %2939 = vmatprep.subr.bf16.mxu0 0
  %2940 = vmatpush1.bf16.msra.mxu0 0
  %2941 = vmatprep.subr.bf16.mxu0 0
  %2942 = vmatpush1.bf16.msra.mxu0 0
  %2943 = vmatprep.subr.bf16.mxu0 0
  %2944 = vmatpush1.bf16.msra.mxu0 0
  %2945 = vmatprep.subr.bf16.mxu0 0
  %2946 = vmatpush1.bf16.msra.mxu0 0
  %2947 = vmatprep.subr.bf16.mxu0 0
  %2948 = vmatpush1.bf16.msra.mxu0 0
  %2949 = vmatprep.subr.bf16.mxu0 0
  %2950 = vmatpush1.bf16.msra.mxu0 0
  %2951 = vmatprep.subr.bf16.mxu0 0
  %2952 = vmatpush1.bf16.msra.mxu0 0
  %2953 = vmatprep.subr.bf16.mxu0 0
  %2954 = vmatpush1.bf16.msra.mxu0 0
  %2955 = vmatprep.subr.bf16.mxu0 0
  %2956 = vmatpush1.bf16.msra.mxu0 0
  %2957 = vmatprep.subr.bf16.mxu0 0
  %2958 = vmatpush1.bf16.msra.mxu0 0
  %2959 = vmatprep.subr.bf16.mxu0 0
  %2960 = vmatpush1.bf16.msra.mxu0 0
  %2961 = vmatprep.mubr.bf16.mxu0 0
  %2962 = vmatmul.mubr.bf16.gmra.mrb[0].mxu0 %v2677
  %v2963 = vpop.f32.mrb[0].mxu0
  %v2964 = vadd.f32 0.0, %v2963
  %v2965 = vpop.f32.mrb[0].mxu0
  %v2966 = vadd.f32 0.0, %v2965
  %v2967 = vpop.f32.mrb[0].mxu0
  %v2968 = vpop.f32.mrb[0].mxu0
  %2969 = vdwg.mxu0
  %v2970 = vadd.f32 %v2599, %v2964
  %v2971 = vadd.f32 %v2600, %v2966
  %2972 = vrot.lane.b32.xlu0 %v695, 109
  %v2973 = vpop.permute.xlu0 %2972
  %2974 = vrot.lane.b32.xlu0 %v698, 109
  %v2975 = vpop.permute.xlu0 %2974
  %2976 = vrot.lane.b32.xlu0 %v694, 109
  %v2977 = vpop.permute.xlu0 %2976
  %2978 = vrot.lane.b32.xlu0 %v697, 109
  %v2979 = vpop.permute.xlu0 %2978
  %v2980 = vsel %vm2671, %v2973, %v2975
  %v2981 = vsel %vm2671, %v2977, %v2979
  %v2985 = vsel %vm134, %v2981, 0
  %v2988 = vsel %vm134, %v2979, 0
  %2990 = vmatprep.subr.bf16.mxu0 %v2975
  %2991 = vmatpush1.bf16.msra.mxu0 %v2980
  %2992 = vmatprep.subr.bf16.mxu0 %v2988
  %2993 = vmatpush1.bf16.msra.mxu0 %v2985
  %2994 = vmatprep.subr.bf16.mxu0 0
  %2995 = vmatpush1.bf16.msra.mxu0 0
  %2996 = vmatprep.subr.bf16.mxu0 0
  %2997 = vmatpush1.bf16.msra.mxu0 0
  %2998 = vmatprep.subr.bf16.mxu0 0
  %2999 = vmatpush1.bf16.msra.mxu0 0
  %3000 = vmatprep.subr.bf16.mxu0 0
  %3001 = vmatpush1.bf16.msra.mxu0 0
  %3002 = vmatprep.subr.bf16.mxu0 0
  %3003 = vmatpush1.bf16.msra.mxu0 0
  %3004 = vmatprep.subr.bf16.mxu0 0
  %3005 = vmatpush1.bf16.msra.mxu0 0
  %3006 = vmatprep.subr.bf16.mxu0 0
  %3007 = vmatpush1.bf16.msra.mxu0 0
  %3008 = vmatprep.subr.bf16.mxu0 0
  %3009 = vmatpush1.bf16.msra.mxu0 0
  %3010 = vmatprep.subr.bf16.mxu0 0
  %3011 = vmatpush1.bf16.msra.mxu0 0
  %3012 = vmatprep.subr.bf16.mxu0 0
  %3013 = vmatpush1.bf16.msra.mxu0 0
  %3014 = vmatprep.subr.bf16.mxu0 0
  %3015 = vmatpush1.bf16.msra.mxu0 0
  %3016 = vmatprep.subr.bf16.mxu0 0
  %3017 = vmatpush1.bf16.msra.mxu0 0
  %3018 = vmatprep.subr.bf16.mxu0 0
  %3019 = vmatpush1.bf16.msra.mxu0 0
  %3020 = vmatprep.subr.bf16.mxu0 0
  %3021 = vmatpush1.bf16.msra.mxu0 0
  %3022 = vmatprep.mubr.bf16.mxu0 0
  %3023 = vmatmul.mubr.bf16.gmra.mrb[0].mxu0 %v2677
  %v3024 = vpop.f32.mrb[0].mxu0
  %v3025 = vadd.f32 0.0, %v3024
  %v3026 = vpop.f32.mrb[0].mxu0
  %v3027 = vadd.f32 0.0, %v3026
  %v3028 = vpop.f32.mrb[0].mxu0
  %v3029 = vpop.f32.mrb[0].mxu0
  %3030 = vdwg.mxu0
  %v3031 = vadd.f32 %v2660, %v3025
  %v3032 = vadd.f32 %v2661, %v3027
  %v3033 = vpack.c.bf16 %v82, %v82
  %3034 = vrot.lane.b32.xlu0 %v88, 108
  %v3035 = vpop.permute.xlu0 %3034
  %3036 = vrot.lane.b32.xlu0 %v89, 108
  %v3037 = vpop.permute.xlu0 %3036
  %3038 = vrot.lane.b32.xlu0 %v90, 108
  %v3039 = vpop.permute.xlu0 %3038
  %3040 = vrot.lane.b32.xlu0 %v91, 108
  %v3041 = vpop.permute.xlu0 %3040
  %vm3042 = vcmask 883712
  %v3043 = vsel %vm3042, %v3035, %v3037
  %v3044 = vsel %vm3042, %v3039, %v3041
  %v3048 = vsel %vm130, %v3033, 0
  %v3051 = vsel %vm134, %v3044, 0
  %v3054 = vsel %vm134, %v3041, 0
  %3056 = vmatprep.subr.bf16.mxu0 %v3037
  %3057 = vmatpush1.bf16.msra.mxu0 %v3043
  %3058 = vmatprep.subr.bf16.mxu0 %v3054
  %3059 = vmatpush1.bf16.msra.mxu0 %v3051
  %3060 = vmatprep.subr.bf16.mxu0 0
  %3061 = vmatpush1.bf16.msra.mxu0 0
  %3062 = vmatprep.subr.bf16.mxu0 0
  %3063 = vmatpush1.bf16.msra.mxu0 0
  %3064 = vmatprep.subr.bf16.mxu0 0
  %3065 = vmatpush1.bf16.msra.mxu0 0
  %3066 = vmatprep.subr.bf16.mxu0 0
  %3067 = vmatpush1.bf16.msra.mxu0 0
  %3068 = vmatprep.subr.bf16.mxu0 0
  %3069 = vmatpush1.bf16.msra.mxu0 0
  %3070 = vmatprep.subr.bf16.mxu0 0
  %3071 = vmatpush1.bf16.msra.mxu0 0
  %3072 = vmatprep.subr.bf16.mxu0 0
  %3073 = vmatpush1.bf16.msra.mxu0 0
  %3074 = vmatprep.subr.bf16.mxu0 0
  %3075 = vmatpush1.bf16.msra.mxu0 0
  %3076 = vmatprep.subr.bf16.mxu0 0
  %3077 = vmatpush1.bf16.msra.mxu0 0
  %3078 = vmatprep.subr.bf16.mxu0 0
  %3079 = vmatpush1.bf16.msra.mxu0 0
  %3080 = vmatprep.subr.bf16.mxu0 0
  %3081 = vmatpush1.bf16.msra.mxu0 0
  %3082 = vmatprep.subr.bf16.mxu0 0
  %3083 = vmatpush1.bf16.msra.mxu0 0
  %3084 = vmatprep.subr.bf16.mxu0 0
  %3085 = vmatpush1.bf16.msra.mxu0 0
  %3086 = vmatprep.subr.bf16.mxu0 0
  %3087 = vmatpush1.bf16.msra.mxu0 0
  %3088 = vmatprep.mubr.bf16.mxu0 0
  %3089 = vmatmul.mubr.bf16.gmra.mrb[0].mxu0 %v3048
  %v3090 = vpop.f32.mrb[0].mxu0
  %v3091 = vadd.f32 0.0, %v3090
  %v3092 = vpop.f32.mrb[0].mxu0
  %v3093 = vadd.f32 0.0, %v3092
  %v3094 = vpop.f32.mrb[0].mxu0
  %v3095 = vpop.f32.mrb[0].mxu0
  %3096 = vdwg.mxu0
  %v3097 = vadd.f32 %v2726, %v3091
  %v3098 = vadd.f32 %v2727, %v3093
  %3099 = vrot.lane.b32.xlu0 %v239, 108
  %v3100 = vpop.permute.xlu0 %3099
  %3101 = vrot.lane.b32.xlu0 %v242, 108
  %v3102 = vpop.permute.xlu0 %3101
  %3103 = vrot.lane.b32.xlu0 %v238, 108
  %v3104 = vpop.permute.xlu0 %3103
  %3105 = vrot.lane.b32.xlu0 %v241, 108
  %v3106 = vpop.permute.xlu0 %3105
  %v3107 = vsel %vm3042, %v3100, %v3102
  %v3108 = vsel %vm3042, %v3104, %v3106
  %v3112 = vsel %vm134, %v3108, 0
  %v3115 = vsel %vm134, %v3106, 0
  %3117 = vmatprep.subr.bf16.mxu0 %v3102
  %3118 = vmatpush1.bf16.msra.mxu0 %v3107
  %3119 = vmatprep.subr.bf16.mxu0 %v3115
  %3120 = vmatpush1.bf16.msra.mxu0 %v3112
  %3121 = vmatprep.subr.bf16.mxu0 0
  %3122 = vmatpush1.bf16.msra.mxu0 0
  %3123 = vmatprep.subr.bf16.mxu0 0
  %3124 = vmatpush1.bf16.msra.mxu0 0
  %3125 = vmatprep.subr.bf16.mxu0 0
  %3126 = vmatpush1.bf16.msra.mxu0 0
  %3127 = vmatprep.subr.bf16.mxu0 0
  %3128 = vmatpush1.bf16.msra.mxu0 0
  %3129 = vmatprep.subr.bf16.mxu0 0
  %3130 = vmatpush1.bf16.msra.mxu0 0
  %3131 = vmatprep.subr.bf16.mxu0 0
  %3132 = vmatpush1.bf16.msra.mxu0 0
  %3133 = vmatprep.subr.bf16.mxu0 0
  %3134 = vmatpush1.bf16.msra.mxu0 0
  %3135 = vmatprep.subr.bf16.mxu0 0
  %3136 = vmatpush1.bf16.msra.mxu0 0
  %3137 = vmatprep.subr.bf16.mxu0 0
  %3138 = vmatpush1.bf16.msra.mxu0 0
  %3139 = vmatprep.subr.bf16.mxu0 0
  %3140 = vmatpush1.bf16.msra.mxu0 0
  %3141 = vmatprep.subr.bf16.mxu0 0
  %3142 = vmatpush1.bf16.msra.mxu0 0
  %3143 = vmatprep.subr.bf16.mxu0 0
  %3144 = vmatpush1.bf16.msra.mxu0 0
  %3145 = vmatprep.subr.bf16.mxu0 0
  %3146 = vmatpush1.bf16.msra.mxu0 0
  %3147 = vmatprep.subr.bf16.mxu0 0
  %3148 = vmatpush1.bf16.msra.mxu0 0
  %3149 = vmatprep.mubr.bf16.mxu0 0
  %3150 = vmatmul.mubr.bf16.gmra.mrb[0].mxu0 %v3048
  %v3151 = vpop.f32.mrb[0].mxu0
  %v3152 = vadd.f32 0.0, %v3151
  %v3153 = vpop.f32.mrb[0].mxu0
  %v3154 = vadd.f32 0.0, %v3153
  %v3155 = vpop.f32.mrb[0].mxu0
  %v3156 = vpop.f32.mrb[0].mxu0
  %3157 = vdwg.mxu0
  %v3158 = vadd.f32 %v2787, %v3152
  %v3159 = vadd.f32 %v2788, %v3154
  %3160 = vrot.lane.b32.xlu0 %v96, 108
  %v3161 = vpop.permute.xlu0 %3160
  %3162 = vrot.lane.b32.xlu0 %v97, 108
  %v3163 = vpop.permute.xlu0 %3162
  %3164 = vrot.lane.b32.xlu0 %v98, 108
  %v3165 = vpop.permute.xlu0 %3164
  %3166 = vrot.lane.b32.xlu0 %v99, 108
  %v3167 = vpop.permute.xlu0 %3166
  %v3168 = vsel %vm3042, %v3161, %v3163
  %v3169 = vsel %vm3042, %v3165, %v3167
  %v3173 = vsel %vm134, %v3169, 0
  %v3176 = vsel %vm134, %v3167, 0
  %3178 = vmatprep.subr.bf16.mxu0 %v3163
  %3179 = vmatpush1.bf16.msra.mxu0 %v3168
  %3180 = vmatprep.subr.bf16.mxu0 %v3176
  %3181 = vmatpush1.bf16.msra.mxu0 %v3173
  %3182 = vmatprep.subr.bf16.mxu0 0
  %3183 = vmatpush1.bf16.msra.mxu0 0
  %3184 = vmatprep.subr.bf16.mxu0 0
  %3185 = vmatpush1.bf16.msra.mxu0 0
  %3186 = vmatprep.subr.bf16.mxu0 0
  %3187 = vmatpush1.bf16.msra.mxu0 0
  %3188 = vmatprep.subr.bf16.mxu0 0
  %3189 = vmatpush1.bf16.msra.mxu0 0
  %3190 = vmatprep.subr.bf16.mxu0 0
  %3191 = vmatpush1.bf16.msra.mxu0 0
  %3192 = vmatprep.subr.bf16.mxu0 0
  %3193 = vmatpush1.bf16.msra.mxu0 0
  %3194 = vmatprep.subr.bf16.mxu0 0
  %3195 = vmatpush1.bf16.msra.mxu0 0
  %3196 = vmatprep.subr.bf16.mxu0 0
  %3197 = vmatpush1.bf16.msra.mxu0 0
  %3198 = vmatprep.subr.bf16.mxu0 0
  %3199 = vmatpush1.bf16.msra.mxu0 0
  %3200 = vmatprep.subr.bf16.mxu0 0
  %3201 = vmatpush1.bf16.msra.mxu0 0
  %3202 = vmatprep.subr.bf16.mxu0 0
  %3203 = vmatpush1.bf16.msra.mxu0 0
  %3204 = vmatprep.subr.bf16.mxu0 0
  %3205 = vmatpush1.bf16.msra.mxu0 0
  %3206 = vmatprep.subr.bf16.mxu0 0
  %3207 = vmatpush1.bf16.msra.mxu0 0
  %3208 = vmatprep.subr.bf16.mxu0 0
  %3209 = vmatpush1.bf16.msra.mxu0 0
  %3210 = vmatprep.mubr.bf16.mxu0 0
  %3211 = vmatmul.mubr.bf16.gmra.mrb[0].mxu0 %v3048
  %v3212 = vpop.f32.mrb[0].mxu0
  %v3213 = vadd.f32 0.0, %v3212
  %v3214 = vpop.f32.mrb[0].mxu0
  %v3215 = vadd.f32 0.0, %v3214
  %v3216 = vpop.f32.mrb[0].mxu0
  %v3217 = vpop.f32.mrb[0].mxu0
  %3218 = vdwg.mxu0
  %v3219 = vadd.f32 %v2848, %v3213
  %v3220 = vadd.f32 %v2849, %v3215
  %3221 = vrot.lane.b32.xlu0 %v467, 108
  %v3222 = vpop.permute.xlu0 %3221
  %3223 = vrot.lane.b32.xlu0 %v470, 108
  %v3224 = vpop.permute.xlu0 %3223
  %3225 = vrot.lane.b32.xlu0 %v466, 108
  %v3226 = vpop.permute.xlu0 %3225
  %3227 = vrot.lane.b32.xlu0 %v469, 108
  %v3228 = vpop.permute.xlu0 %3227
  %v3229 = vsel %vm3042, %v3222, %v3224
  %v3230 = vsel %vm3042, %v3226, %v3228
  %v3234 = vsel %vm134, %v3230, 0
  %v3237 = vsel %vm134, %v3228, 0
  %3239 = vmatprep.subr.bf16.mxu0 %v3224
  %3240 = vmatpush1.bf16.msra.mxu0 %v3229
  %3241 = vmatprep.subr.bf16.mxu0 %v3237
  %3242 = vmatpush1.bf16.msra.mxu0 %v3234
  %3243 = vmatprep.subr.bf16.mxu0 0
  %3244 = vmatpush1.bf16.msra.mxu0 0
  %3245 = vmatprep.subr.bf16.mxu0 0
  %3246 = vmatpush1.bf16.msra.mxu0 0
  %3247 = vmatprep.subr.bf16.mxu0 0
  %3248 = vmatpush1.bf16.msra.mxu0 0
  %3249 = vmatprep.subr.bf16.mxu0 0
  %3250 = vmatpush1.bf16.msra.mxu0 0
  %3251 = vmatprep.subr.bf16.mxu0 0
  %3252 = vmatpush1.bf16.msra.mxu0 0
  %3253 = vmatprep.subr.bf16.mxu0 0
  %3254 = vmatpush1.bf16.msra.mxu0 0
  %3255 = vmatprep.subr.bf16.mxu0 0
  %3256 = vmatpush1.bf16.msra.mxu0 0
  %3257 = vmatprep.subr.bf16.mxu0 0
  %3258 = vmatpush1.bf16.msra.mxu0 0
  %3259 = vmatprep.subr.bf16.mxu0 0
  %3260 = vmatpush1.bf16.msra.mxu0 0
  %3261 = vmatprep.subr.bf16.mxu0 0
  %3262 = vmatpush1.bf16.msra.mxu0 0
  %3263 = vmatprep.subr.bf16.mxu0 0
  %3264 = vmatpush1.bf16.msra.mxu0 0
  %3265 = vmatprep.subr.bf16.mxu0 0
  %3266 = vmatpush1.bf16.msra.mxu0 0
  %3267 = vmatprep.subr.bf16.mxu0 0
  %3268 = vmatpush1.bf16.msra.mxu0 0
  %3269 = vmatprep.subr.bf16.mxu0 0
  %3270 = vmatpush1.bf16.msra.mxu0 0
  %3271 = vmatprep.mubr.bf16.mxu0 0
  %3272 = vmatmul.mubr.bf16.gmra.mrb[0].mxu0 %v3048
  %v3273 = vpop.f32.mrb[0].mxu0
  %v3274 = vadd.f32 0.0, %v3273
  %v3275 = vpop.f32.mrb[0].mxu0
  %v3276 = vadd.f32 0.0, %v3275
  %v3277 = vpop.f32.mrb[0].mxu0
  %v3278 = vpop.f32.mrb[0].mxu0
  %3279 = vdwg.mxu0
  %v3280 = vadd.f32 %v2909, %v3274
  %v3281 = vadd.f32 %v2910, %v3276
  %3282 = vrot.lane.b32.xlu0 %v104, 108
  %v3283 = vpop.permute.xlu0 %3282
  %3284 = vrot.lane.b32.xlu0 %v105, 108
  %v3285 = vpop.permute.xlu0 %3284
  %3286 = vrot.lane.b32.xlu0 %v106, 108
  %v3287 = vpop.permute.xlu0 %3286
  %3288 = vrot.lane.b32.xlu0 %v107, 108
  %v3289 = vpop.permute.xlu0 %3288
  %v3290 = vsel %vm3042, %v3283, %v3285
  %v3291 = vsel %vm3042, %v3287, %v3289
  %v3295 = vsel %vm134, %v3291, 0
  %v3298 = vsel %vm134, %v3289, 0
  %3300 = vmatprep.subr.bf16.mxu0 %v3285
  %3301 = vmatpush1.bf16.msra.mxu0 %v3290
  %3302 = vmatprep.subr.bf16.mxu0 %v3298
  %3303 = vmatpush1.bf16.msra.mxu0 %v3295
  %3304 = vmatprep.subr.bf16.mxu0 0
  %3305 = vmatpush1.bf16.msra.mxu0 0
  %3306 = vmatprep.subr.bf16.mxu0 0
  %3307 = vmatpush1.bf16.msra.mxu0 0
  %3308 = vmatprep.subr.bf16.mxu0 0
  %3309 = vmatpush1.bf16.msra.mxu0 0
  %3310 = vmatprep.subr.bf16.mxu0 0
  %3311 = vmatpush1.bf16.msra.mxu0 0
  %3312 = vmatprep.subr.bf16.mxu0 0
  %3313 = vmatpush1.bf16.msra.mxu0 0
  %3314 = vmatprep.subr.bf16.mxu0 0
  %3315 = vmatpush1.bf16.msra.mxu0 0
  %3316 = vmatprep.subr.bf16.mxu0 0
  %3317 = vmatpush1.bf16.msra.mxu0 0
  %3318 = vmatprep.subr.bf16.mxu0 0
  %3319 = vmatpush1.bf16.msra.mxu0 0
  %3320 = vmatprep.subr.bf16.mxu0 0
  %3321 = vmatpush1.bf16.msra.mxu0 0
  %3322 = vmatprep.subr.bf16.mxu0 0
  %3323 = vmatpush1.bf16.msra.mxu0 0
  %3324 = vmatprep.subr.bf16.mxu0 0
  %3325 = vmatpush1.bf16.msra.mxu0 0
  %3326 = vmatprep.subr.bf16.mxu0 0
  %3327 = vmatpush1.bf16.msra.mxu0 0
  %3328 = vmatprep.subr.bf16.mxu0 0
  %3329 = vmatpush1.bf16.msra.mxu0 0
  %3330 = vmatprep.subr.bf16.mxu0 0
  %3331 = vmatpush1.bf16.msra.mxu0 0
  %3332 = vmatprep.mubr.bf16.mxu0 0
  %3333 = vmatmul.mubr.bf16.gmra.mrb[0].mxu0 %v3048
  %v3334 = vpop.f32.mrb[0].mxu0
  %v3335 = vadd.f32 0.0, %v3334
  %v3336 = vpop.f32.mrb[0].mxu0
  %v3337 = vadd.f32 0.0, %v3336
  %v3338 = vpop.f32.mrb[0].mxu0
  %v3339 = vpop.f32.mrb[0].mxu0
  %3340 = vdwg.mxu0
  %v3341 = vadd.f32 %v2970, %v3335
  %v3342 = vadd.f32 %v2971, %v3337
  %3343 = vrot.lane.b32.xlu0 %v695, 108
  %v3344 = vpop.permute.xlu0 %3343
  %3345 = vrot.lane.b32.xlu0 %v698, 108
  %v3346 = vpop.permute.xlu0 %3345
  %3347 = vrot.lane.b32.xlu0 %v694, 108
  %v3348 = vpop.permute.xlu0 %3347
  %3349 = vrot.lane.b32.xlu0 %v697, 108
  %v3350 = vpop.permute.xlu0 %3349
  %v3351 = vsel %vm3042, %v3344, %v3346
  %v3352 = vsel %vm3042, %v3348, %v3350
  %v3356 = vsel %vm134, %v3352, 0
  %v3359 = vsel %vm134, %v3350, 0
  %3361 = vmatprep.subr.bf16.mxu0 %v3346
  %3362 = vmatpush1.bf16.msra.mxu0 %v3351
  %3363 = vmatprep.subr.bf16.mxu0 %v3359
  %3364 = vmatpush1.bf16.msra.mxu0 %v3356
  %3365 = vmatprep.subr.bf16.mxu0 0
  %3366 = vmatpush1.bf16.msra.mxu0 0
  %3367 = vmatprep.subr.bf16.mxu0 0
  %3368 = vmatpush1.bf16.msra.mxu0 0
  %3369 = vmatprep.subr.bf16.mxu0 0
  %3370 = vmatpush1.bf16.msra.mxu0 0
  %3371 = vmatprep.subr.bf16.mxu0 0
  %3372 = vmatpush1.bf16.msra.mxu0 0
  %3373 = vmatprep.subr.bf16.mxu0 0
  %3374 = vmatpush1.bf16.msra.mxu0 0
  %3375 = vmatprep.subr.bf16.mxu0 0
  %3376 = vmatpush1.bf16.msra.mxu0 0
  %3377 = vmatprep.subr.bf16.mxu0 0
  %3378 = vmatpush1.bf16.msra.mxu0 0
  %3379 = vmatprep.subr.bf16.mxu0 0
  %3380 = vmatpush1.bf16.msra.mxu0 0
  %3381 = vmatprep.subr.bf16.mxu0 0
  %3382 = vmatpush1.bf16.msra.mxu0 0
  %3383 = vmatprep.subr.bf16.mxu0 0
  %3384 = vmatpush1.bf16.msra.mxu0 0
  %3385 = vmatprep.subr.bf16.mxu0 0
  %3386 = vmatpush1.bf16.msra.mxu0 0
  %3387 = vmatprep.subr.bf16.mxu0 0
  %3388 = vmatpush1.bf16.msra.mxu0 0
  %3389 = vmatprep.subr.bf16.mxu0 0
  %3390 = vmatpush1.bf16.msra.mxu0 0
  %3391 = vmatprep.subr.bf16.mxu0 0
  %3392 = vmatpush1.bf16.msra.mxu0 0
  %3393 = vmatprep.mubr.bf16.mxu0 0
  %3394 = vmatmul.mubr.bf16.gmra.mrb[0].mxu0 %v3048
  %v3395 = vpop.f32.mrb[0].mxu0
  %v3396 = vadd.f32 0.0, %v3395
  %v3397 = vpop.f32.mrb[0].mxu0
  %v3398 = vadd.f32 0.0, %v3397
  %v3399 = vpop.f32.mrb[0].mxu0
  %v3400 = vpop.f32.mrb[0].mxu0
  %3401 = vdwg.mxu0
  %v3402 = vadd.f32 %v3031, %v3396
  %v3403 = vadd.f32 %v3032, %v3398
  %3405 = vset.pattern.permute.xlu0 0
  %3406 = vperm.xlu0 %3405, %v83
  %v3407 = vpop.permute.xlu0 %3406
  %v3409 = vadd.f32 %v3097, %v3407
  %v3410 = vadd.f32 %v3098, %v3407
  %v3411 = vmax.f32 %v3409, 0.0
  %v3412 = vmax.f32 %v3410, 0.0
  %v3413 = vadd.f32 %v3158, %v3407
  %v3414 = vadd.f32 %v3159, %v3407
  %v3415 = vmax.f32 %v3413, 0.0
  %v3416 = vmax.f32 %v3414, 0.0
  %v3417 = vadd.f32 %v3219, %v3407
  %v3418 = vadd.f32 %v3220, %v3407
  %v3419 = vmax.f32 %v3417, 0.0
  %v3420 = vmax.f32 %v3418, 0.0
  %v3421 = vadd.f32 %v3280, %v3407
  %v3422 = vadd.f32 %v3281, %v3407
  %v3423 = vmax.f32 %v3421, 0.0
  %v3424 = vmax.f32 %v3422, 0.0
  %v3425 = vadd.f32 %v3341, %v3407
  %v3426 = vadd.f32 %v3342, %v3407
  %v3427 = vmax.f32 %v3425, 0.0
  %v3428 = vmax.f32 %v3426, 0.0
  %v3429 = vadd.f32 %v3402, %v3407
  %v3430 = vadd.f32 %v3403, %v3407
  %v3431 = vmax.f32 %v3429, 0.0
  %v3432 = vmax.f32 %v3430, 0.0
  %v3434 = vlaneseq
  %v3435 = vshrl.u32 %v3434, 7
  %v3436 = vsub.s32 0, %v3435
  %v3437 = vrot.slane %v86, %v3436
  %v3438 = vlaneseq
  %v3439 = vshrl.u32 %v3438, 7
  %v3440 = vsub.s32 1, %v3439
  %v3441 = vrot.slane %v86, %v3440
  %v3444 = vmul.f32 %v3411, %v3437
  %v3445 = vmul.f32 %v3412, %v3441
  %vm3446 = vcmask 277504
  %v3447 = vsel %vm3446, %v3445, 0.0
  %v3448 = vadd.f32 %v3444, %v3447
  %3449 = vadd.xlane.f32.xlu0 %v3448
  %v3450 = vpop.xlane.xlu0 %3449
  %v3451 = vadd.f32 %v3450, 0.0
  %v3452 = vmul.f32 %v3444, %v3411
  %v3453 = vmul.f32 %v3445, %v3412
  %v3454 = vsel %vm3446, %v3453, 0.0
  %v3455 = vadd.f32 %v3452, %v3454
  %3456 = vadd.xlane.f32.xlu0 %v3455
  %v3457 = vpop.xlane.xlu0 %3456
  %v3458 = vadd.f32 %v3457, 0.0
  %v3459 = vmul.f32 %v3415, %v3437
  %v3460 = vmul.f32 %v3416, %v3441
  %v3461 = vsel %vm3446, %v3460, 0.0
  %v3462 = vadd.f32 %v3459, %v3461
  %3463 = vadd.xlane.f32.xlu0 %v3462
  %v3464 = vpop.xlane.xlu0 %3463
  %v3465 = vadd.f32 %v3451, %v3464
  %v3466 = vmul.f32 %v3459, %v3415
  %v3467 = vmul.f32 %v3460, %v3416
  %v3468 = vsel %vm3446, %v3467, 0.0
  %v3469 = vadd.f32 %v3466, %v3468
  %3470 = vadd.xlane.f32.xlu0 %v3469
  %v3471 = vpop.xlane.xlu0 %3470
  %v3472 = vadd.f32 %v3458, %v3471
  %v3473 = vmul.f32 %v3419, %v3437
  %v3474 = vmul.f32 %v3420, %v3441
  %v3475 = vsel %vm3446, %v3474, 0.0
  %v3476 = vadd.f32 %v3473, %v3475
  %3477 = vadd.xlane.f32.xlu0 %v3476
  %v3478 = vpop.xlane.xlu0 %3477
  %v3479 = vadd.f32 %v3465, %v3478
  %v3480 = vmul.f32 %v3473, %v3419
  %v3481 = vmul.f32 %v3474, %v3420
  %v3482 = vsel %vm3446, %v3481, 0.0
  %v3483 = vadd.f32 %v3480, %v3482
  %3484 = vadd.xlane.f32.xlu0 %v3483
  %v3485 = vpop.xlane.xlu0 %3484
  %v3486 = vadd.f32 %v3472, %v3485
  %v3487 = vmul.f32 %v3423, %v3437
  %v3488 = vmul.f32 %v3424, %v3441
  %v3489 = vsel %vm3446, %v3488, 0.0
  %v3490 = vadd.f32 %v3487, %v3489
  %3491 = vadd.xlane.f32.xlu0 %v3490
  %v3492 = vpop.xlane.xlu0 %3491
  %v3493 = vadd.f32 %v3479, %v3492
  %v3494 = vmul.f32 %v3487, %v3423
  %v3495 = vmul.f32 %v3488, %v3424
  %v3496 = vsel %vm3446, %v3495, 0.0
  %v3497 = vadd.f32 %v3494, %v3496
  %3498 = vadd.xlane.f32.xlu0 %v3497
  %v3499 = vpop.xlane.xlu0 %3498
  %v3500 = vadd.f32 %v3486, %v3499
  %v3501 = vmul.f32 %v3427, %v3437
  %v3502 = vmul.f32 %v3428, %v3441
  %v3503 = vsel %vm3446, %v3502, 0.0
  %v3504 = vadd.f32 %v3501, %v3503
  %3505 = vadd.xlane.f32.xlu0 %v3504
  %v3506 = vpop.xlane.xlu0 %3505
  %v3507 = vadd.f32 %v3493, %v3506
  %v3508 = vmul.f32 %v3501, %v3427
  %v3509 = vmul.f32 %v3502, %v3428
  %v3510 = vsel %vm3446, %v3509, 0.0
  %v3511 = vadd.f32 %v3508, %v3510
  %3512 = vadd.xlane.f32.xlu0 %v3511
  %v3513 = vpop.xlane.xlu0 %3512
  %v3514 = vadd.f32 %v3500, %v3513
  %v3515 = vmul.f32 %v3431, %v3437
  %v3516 = vmul.f32 %v3432, %v3441
  %v3517 = vsel %vm3446, %v3516, 0.0
  %v3518 = vadd.f32 %v3515, %v3517
  %3519 = vadd.xlane.f32.xlu0 %v3518
  %v3520 = vpop.xlane.xlu0 %3519
  %v3521 = vadd.f32 %v3507, %v3520
  %v3522 = vmul.f32 %v3515, %v3431
  %v3523 = vmul.f32 %v3516, %v3432
  %v3524 = vsel %vm3446, %v3523, 0.0
  %v3525 = vadd.f32 %v3522, %v3524
  %3526 = vadd.xlane.f32.xlu0 %v3525
  %v3527 = vpop.xlane.xlu0 %3526
  %v3528 = vadd.f32 %v3514, %v3527
  %v3529 = vmul.f32 %v3521, 0.0017006802
  %v3530 = vmul.f32 %v3528, 0.0017006802
  %v3531 = vmul.f32 %v3529, %v3529
  %v3532 = vsub.f32 %v3530, %v3531
  %v3533 = vmax.f32 %v3532, 0.0
  %v3534 = vadd.f32 %v3533, 1e-05
  %v3535 = vrsqrt.pop %v3534
  %v3536 = vmul.f32 %v84, %v3535
  %v3537 = vmul.f32 %v3529, %v3536
  %v3538 = vsub.f32 %v85, %v3537
  %3540 = vset.pattern.permute.xlu0 0
  %3541 = vperm.xlu0 %3540, %v3536
  %v3542 = vpop.permute.xlu0 %3541
  %v3544 = vmul.f32 %v3411, %v3542
  %v3545 = vmul.f32 %v3412, %v3542
  %3547 = vset.pattern.permute.xlu0 0
  %3548 = vperm.xlu0 %3547, %v3538
  %v3549 = vpop.permute.xlu0 %3548
  %v3551 = vadd.f32 %v3544, %v3549
  %v3552 = vadd.f32 %v3545, %v3549
  %v3553 = vmul.f32 %v3415, %v3542
  %v3554 = vmul.f32 %v3416, %v3542
  %v3555 = vadd.f32 %v3553, %v3549
  %v3556 = vadd.f32 %v3554, %v3549
  %v3557 = vmul.f32 %v3419, %v3542
  %v3558 = vmul.f32 %v3420, %v3542
  %v3559 = vadd.f32 %v3557, %v3549
  %v3560 = vadd.f32 %v3558, %v3549
  %v3561 = vmul.f32 %v3423, %v3542
  %v3562 = vmul.f32 %v3424, %v3542
  %v3563 = vadd.f32 %v3561, %v3549
  %v3564 = vadd.f32 %v3562, %v3549
  %v3565 = vmul.f32 %v3427, %v3542
  %v3566 = vmul.f32 %v3428, %v3542
  %v3567 = vadd.f32 %v3565, %v3549
  %v3568 = vadd.f32 %v3566, %v3549
  %v3569 = vmul.f32 %v3431, %v3542
  %v3570 = vmul.f32 %v3432, %v3542
  %v3571 = vadd.f32 %v3569, %v3549
  %v3572 = vadd.f32 %v3570, %v3549
  %v3573 = vsel %vm3446, %v3552, 0.0
  %v3574 = vsel %vm3446, %v3556, 0.0
  %v3575 = vsel %vm3446, %v3560, 0.0
  %v3576 = vsel %vm3446, %v3564, 0.0
  %v3577 = vsel %vm3446, %v3568, 0.0
  %v3578 = vsel %vm3446, %v3572, 0.0
  %v3579 = vld [vmem:[%s2] sm:$0xff]
  %v3580 = vld [vmem:[%s2 + $0x8] sm:$0xff]
  %v3581 = vld [vmem:[%s2 + $0x10] sm:$0xff]
  %v3582 = vld [vmem:[%s2 + $0x18] sm:$0xff]
  %v3583 = vld [vmem:[%s2 + $0x20] sm:$0xff]
  %v3584 = vld [vmem:[%s2 + $0x28] sm:$0xff]
  %v3585 = vld [vmem:[%s2 + $0x30] sm:$0xff]
  %v3586 = vld [vmem:[%s2 + $0x38] sm:$0xff]
  %v3587 = vld [vmem:[%s2 + $0x40] sm:$0xff]
  %v3588 = vld [vmem:[%s7] sm:$0xff]
  %v3589 = vld [vmem:[%s8] sm:$0xff]
  %v3590 = vld [vmem:[%s9] sm:$0xff]
  %v3591 = vld [vmem:[%s14] sm:$0x3]
  %v3592 = vpack.c.bf16 %v3579, %v3579
  %v3593 = vpack.c.bf16 %v3551, 0.0
  %v3594 = vpack.c.bf16 %v3573, 0.0
  %v3595 = vpack.c.bf16 %v3559, %v3555
  %v3596 = vpack.c.bf16 %v3575, %v3574
  %v3597 = vpack.c.bf16 %v3563, %v3563
  %v3598 = vpack.c.bf16 %v3576, %v3576
  %v3599 = vpack.c.bf16 %v3563, %v3559
  %v3600 = vpack.c.bf16 %v3576, %v3575
  %v3601 = vpack.c.bf16 %v3571, %v3567
  %v3602 = vpack.c.bf16 %v3578, %v3577
  %v3603 = vpack.c.bf16 0.0, 0.0
  %v3604 = vpack.c.bf16 %v3580, %v3580
  %3611 = vrot.lane.b32.xlu0 %v3593, 127
  %v3612 = vpop.permute.xlu0 %3611
  %3613 = vrot.lane.b32.xlu0 %v3594, 127
  %v3614 = vpop.permute.xlu0 %3613
  %3615 = vrot.lane.b32.xlu0 %v3595, 127
  %v3616 = vpop.permute.xlu0 %3615
  %3617 = vrot.lane.b32.xlu0 %v3596, 127
  %v3618 = vpop.permute.xlu0 %3617
  %3619 = vrot.lane.b32.xlu0 %v3597, 127
  %v3620 = vpop.permute.xlu0 %3619
  %3621 = vrot.lane.b32.xlu0 %v3598, 127
  %v3622 = vpop.permute.xlu0 %3621
  %v3623 = vsel %vm125, %v3612, %v3614
  %v3624 = vsel %vm125, %v3616, %v3618
  %v3625 = vsel %vm125, %v3620, %v3622
  %vm3630 = vcmask 326656
  %v3632 = vsel %vm3630, %v3604, 0
  %vm3634 = vcmask 1043456
  %v3636 = vsel %vm3634, %v3625, 0
  %v3639 = vsel %vm3634, %v3622, 0
  %3641 = vmatprep.subr.bf16.mxu0 %v3614
  %3642 = vmatpush1.bf16.msra.mxu0 %v3623
  %3643 = vmatprep.subr.bf16.mxu0 %v3618
  %3644 = vmatpush1.bf16.msra.mxu0 %v3624
  %3645 = vmatprep.subr.bf16.mxu0 %v3639
  %3646 = vmatpush1.bf16.msra.mxu0 %v3636
  %3647 = vmatprep.subr.bf16.mxu0 0
  %3648 = vmatpush1.bf16.msra.mxu0 0
  %3649 = vmatprep.subr.bf16.mxu0 0
  %3650 = vmatpush1.bf16.msra.mxu0 0
  %3651 = vmatprep.subr.bf16.mxu0 0
  %3652 = vmatpush1.bf16.msra.mxu0 0
  %3653 = vmatprep.subr.bf16.mxu0 0
  %3654 = vmatpush1.bf16.msra.mxu0 0
  %3655 = vmatprep.subr.bf16.mxu0 0
  %3656 = vmatpush1.bf16.msra.mxu0 0
  %3657 = vmatprep.subr.bf16.mxu0 0
  %3658 = vmatpush1.bf16.msra.mxu0 0
  %3659 = vmatprep.subr.bf16.mxu0 0
  %3660 = vmatpush1.bf16.msra.mxu0 0
  %3661 = vmatprep.subr.bf16.mxu0 0
  %3662 = vmatpush1.bf16.msra.mxu0 0
  %3663 = vmatprep.subr.bf16.mxu0 0
  %3664 = vmatpush1.bf16.msra.mxu0 0
  %3665 = vmatprep.subr.bf16.mxu0 0
  %3666 = vmatpush1.bf16.msra.mxu0 0
  %3667 = vmatprep.subr.bf16.mxu0 0
  %3668 = vmatpush1.bf16.msra.mxu0 0
  %3669 = vmatprep.subr.bf16.mxu0 0
  %3670 = vmatpush1.bf16.msra.mxu0 0
  %3671 = vmatprep.subr.bf16.mxu0 0
  %3672 = vmatpush1.bf16.msra.mxu0 0
  %3673 = vmatprep.mubr.bf16.mxu0 0
  %3674 = vmatmul.mubr.bf16.gmra.mrb[0].mxu0 %v3632
  %v3675 = vpop.f32.mrb[0].mxu0
  %v3676 = vadd.f32 0.0, %v3675
  %v3677 = vpop.f32.mrb[0].mxu0
  %v3678 = vadd.f32 0.0, %v3677
  %v3679 = vpop.f32.mrb[0].mxu0
  %v3680 = vpop.f32.mrb[0].mxu0
  %3681 = vdwg.mxu0
  %v3683 = vsel %vm3630, %v3592, 0
  %v3686 = vsel %vm3634, %v3597, 0
  %v3689 = vsel %vm3634, %v3598, 0
  %3691 = vmatprep.subr.bf16.mxu0 %v3594
  %3692 = vmatpush1.bf16.msra.mxu0 %v3593
  %3693 = vmatprep.subr.bf16.mxu0 %v3596
  %3694 = vmatpush1.bf16.msra.mxu0 %v3595
  %3695 = vmatprep.subr.bf16.mxu0 %v3689
  %3696 = vmatpush1.bf16.msra.mxu0 %v3686
  %3697 = vmatprep.subr.bf16.mxu0 0
  %3698 = vmatpush1.bf16.msra.mxu0 0
  %3699 = vmatprep.subr.bf16.mxu0 0
  %3700 = vmatpush1.bf16.msra.mxu0 0
  %3701 = vmatprep.subr.bf16.mxu0 0
  %3702 = vmatpush1.bf16.msra.mxu0 0
  %3703 = vmatprep.subr.bf16.mxu0 0
  %3704 = vmatpush1.bf16.msra.mxu0 0
  %3705 = vmatprep.subr.bf16.mxu0 0
  %3706 = vmatpush1.bf16.msra.mxu0 0
  %3707 = vmatprep.subr.bf16.mxu0 0
  %3708 = vmatpush1.bf16.msra.mxu0 0
  %3709 = vmatprep.subr.bf16.mxu0 0
  %3710 = vmatpush1.bf16.msra.mxu0 0
  %3711 = vmatprep.subr.bf16.mxu0 0
  %3712 = vmatpush1.bf16.msra.mxu0 0
  %3713 = vmatprep.subr.bf16.mxu0 0
  %3714 = vmatpush1.bf16.msra.mxu0 0
  %3715 = vmatprep.subr.bf16.mxu0 0
  %3716 = vmatpush1.bf16.msra.mxu0 0
  %3717 = vmatprep.subr.bf16.mxu0 0
  %3718 = vmatpush1.bf16.msra.mxu0 0
  %3719 = vmatprep.subr.bf16.mxu0 0
  %3720 = vmatpush1.bf16.msra.mxu0 0
  %3721 = vmatprep.subr.bf16.mxu0 0
  %3722 = vmatpush1.bf16.msra.mxu0 0
  %3723 = vmatprep.mubr.bf16.mxu0 0
  %3724 = vmatmul.mubr.bf16.gmra.mrb[0].mxu0 %v3683
  %v3725 = vpop.f32.mrb[0].mxu0
  %v3726 = vadd.f32 %v3676, %v3725
  %v3727 = vpop.f32.mrb[0].mxu0
  %v3728 = vadd.f32 %v3678, %v3727
  %v3729 = vpop.f32.mrb[0].mxu0
  %v3730 = vpop.f32.mrb[0].mxu0
  %3731 = vdwg.mxu0
  %3737 = vrot.lane.b32.xlu0 %v3599, 127
  %v3738 = vpop.permute.xlu0 %3737
  %3739 = vrot.lane.b32.xlu0 %v3600, 127
  %v3740 = vpop.permute.xlu0 %3739
  %3741 = vrot.lane.b32.xlu0 %v3601, 127
  %v3742 = vpop.permute.xlu0 %3741
  %3743 = vrot.lane.b32.xlu0 %v3602, 127
  %v3744 = vpop.permute.xlu0 %3743
  %3745 = vrot.lane.b32.xlu0 %v3603, 127
  %v3746 = vpop.permute.xlu0 %3745
  %v3747 = vsel %vm125, %v3738, %v3740
  %v3748 = vsel %vm125, %v3742, %v3744
  %v3754 = vsel %vm3634, %v3746, 0
  %3756 = vmatprep.subr.bf16.mxu0 %v3740
  %3757 = vmatpush1.bf16.msra.mxu0 %v3747
  %3758 = vmatprep.subr.bf16.mxu0 %v3744
  %3759 = vmatpush1.bf16.msra.mxu0 %v3748
  %3760 = vmatprep.subr.bf16.mxu0 %v3754
  %3761 = vmatpush1.bf16.msra.mxu0 %v3754
  %3762 = vmatprep.subr.bf16.mxu0 0
  %3763 = vmatpush1.bf16.msra.mxu0 0
  %3764 = vmatprep.subr.bf16.mxu0 0
  %3765 = vmatpush1.bf16.msra.mxu0 0
  %3766 = vmatprep.subr.bf16.mxu0 0
  %3767 = vmatpush1.bf16.msra.mxu0 0
  %3768 = vmatprep.subr.bf16.mxu0 0
  %3769 = vmatpush1.bf16.msra.mxu0 0
  %3770 = vmatprep.subr.bf16.mxu0 0
  %3771 = vmatpush1.bf16.msra.mxu0 0
  %3772 = vmatprep.subr.bf16.mxu0 0
  %3773 = vmatpush1.bf16.msra.mxu0 0
  %3774 = vmatprep.subr.bf16.mxu0 0
  %3775 = vmatpush1.bf16.msra.mxu0 0
  %3776 = vmatprep.subr.bf16.mxu0 0
  %3777 = vmatpush1.bf16.msra.mxu0 0
  %3778 = vmatprep.subr.bf16.mxu0 0
  %3779 = vmatpush1.bf16.msra.mxu0 0
  %3780 = vmatprep.subr.bf16.mxu0 0
  %3781 = vmatpush1.bf16.msra.mxu0 0
  %3782 = vmatprep.subr.bf16.mxu0 0
  %3783 = vmatpush1.bf16.msra.mxu0 0
  %3784 = vmatprep.subr.bf16.mxu0 0
  %3785 = vmatpush1.bf16.msra.mxu0 0
  %3786 = vmatprep.subr.bf16.mxu0 0
  %3787 = vmatpush1.bf16.msra.mxu0 0
  %3788 = vmatprep.mubr.bf16.mxu0 0
  %3789 = vmatmul.mubr.bf16.gmra.mrb[0].mxu0 %v3632
  %v3790 = vpop.f32.mrb[0].mxu0
  %v3791 = vadd.f32 0.0, %v3790
  %v3792 = vpop.f32.mrb[0].mxu0
  %v3793 = vadd.f32 0.0, %v3792
  %v3794 = vpop.f32.mrb[0].mxu0
  %v3795 = vpop.f32.mrb[0].mxu0
  %3796 = vdwg.mxu0
  %v3798 = vsel %vm3634, %v3603, 0
  %3800 = vmatprep.subr.bf16.mxu0 %v3600
  %3801 = vmatpush1.bf16.msra.mxu0 %v3599
  %3802 = vmatprep.subr.bf16.mxu0 %v3602
  %3803 = vmatpush1.bf16.msra.mxu0 %v3601
  %3804 = vmatprep.subr.bf16.mxu0 %v3798
  %3805 = vmatpush1.bf16.msra.mxu0 %v3798
  %3806 = vmatprep.subr.bf16.mxu0 0
  %3807 = vmatpush1.bf16.msra.mxu0 0
  %3808 = vmatprep.subr.bf16.mxu0 0
  %3809 = vmatpush1.bf16.msra.mxu0 0
  %3810 = vmatprep.subr.bf16.mxu0 0
  %3811 = vmatpush1.bf16.msra.mxu0 0
  %3812 = vmatprep.subr.bf16.mxu0 0
  %3813 = vmatpush1.bf16.msra.mxu0 0
  %3814 = vmatprep.subr.bf16.mxu0 0
  %3815 = vmatpush1.bf16.msra.mxu0 0
  %3816 = vmatprep.subr.bf16.mxu0 0
  %3817 = vmatpush1.bf16.msra.mxu0 0
  %3818 = vmatprep.subr.bf16.mxu0 0
  %3819 = vmatpush1.bf16.msra.mxu0 0
  %3820 = vmatprep.subr.bf16.mxu0 0
  %3821 = vmatpush1.bf16.msra.mxu0 0
  %3822 = vmatprep.subr.bf16.mxu0 0
  %3823 = vmatpush1.bf16.msra.mxu0 0
  %3824 = vmatprep.subr.bf16.mxu0 0
  %3825 = vmatpush1.bf16.msra.mxu0 0
  %3826 = vmatprep.subr.bf16.mxu0 0
  %3827 = vmatpush1.bf16.msra.mxu0 0
  %3828 = vmatprep.subr.bf16.mxu0 0
  %3829 = vmatpush1.bf16.msra.mxu0 0
  %3830 = vmatprep.subr.bf16.mxu0 0
  %3831 = vmatpush1.bf16.msra.mxu0 0
  %3832 = vmatprep.mubr.bf16.mxu0 0
  %3833 = vmatmul.mubr.bf16.gmra.mrb[0].mxu0 %v3683
  %v3834 = vpop.f32.mrb[0].mxu0
  %v3835 = vadd.f32 %v3791, %v3834
  %v3836 = vpop.f32.mrb[0].mxu0
  %v3837 = vadd.f32 %v3793, %v3836
  %v3838 = vpop.f32.mrb[0].mxu0
  %v3839 = vpop.f32.mrb[0].mxu0
  %3840 = vdwg.mxu0
  %v3841 = vpack.c.bf16 %v3581, %v3581
  %3842 = vrot.lane.b32.xlu0 %v3593, 126
  %v3843 = vpop.permute.xlu0 %3842
  %3844 = vrot.lane.b32.xlu0 %v3594, 126
  %v3845 = vpop.permute.xlu0 %3844
  %3846 = vrot.lane.b32.xlu0 %v3595, 126
  %v3847 = vpop.permute.xlu0 %3846
  %3848 = vrot.lane.b32.xlu0 %v3596, 126
  %v3849 = vpop.permute.xlu0 %3848
  %3850 = vrot.lane.b32.xlu0 %v3597, 126
  %v3851 = vpop.permute.xlu0 %3850
  %3852 = vrot.lane.b32.xlu0 %v3598, 126
  %v3853 = vpop.permute.xlu0 %3852
  %v3854 = vsel %vm816, %v3843, %v3845
  %v3855 = vsel %vm816, %v3847, %v3849
  %v3856 = vsel %vm816, %v3851, %v3853
  %v3862 = vsel %vm3630, %v3841, 0
  %v3865 = vsel %vm3634, %v3856, 0
  %v3868 = vsel %vm3634, %v3853, 0
  %3870 = vmatprep.subr.bf16.mxu0 %v3845
  %3871 = vmatpush1.bf16.msra.mxu0 %v3854
  %3872 = vmatprep.subr.bf16.mxu0 %v3849
  %3873 = vmatpush1.bf16.msra.mxu0 %v3855
  %3874 = vmatprep.subr.bf16.mxu0 %v3868
  %3875 = vmatpush1.bf16.msra.mxu0 %v3865
  %3876 = vmatprep.subr.bf16.mxu0 0
  %3877 = vmatpush1.bf16.msra.mxu0 0
  %3878 = vmatprep.subr.bf16.mxu0 0
  %3879 = vmatpush1.bf16.msra.mxu0 0
  %3880 = vmatprep.subr.bf16.mxu0 0
  %3881 = vmatpush1.bf16.msra.mxu0 0
  %3882 = vmatprep.subr.bf16.mxu0 0
  %3883 = vmatpush1.bf16.msra.mxu0 0
  %3884 = vmatprep.subr.bf16.mxu0 0
  %3885 = vmatpush1.bf16.msra.mxu0 0
  %3886 = vmatprep.subr.bf16.mxu0 0
  %3887 = vmatpush1.bf16.msra.mxu0 0
  %3888 = vmatprep.subr.bf16.mxu0 0
  %3889 = vmatpush1.bf16.msra.mxu0 0
  %3890 = vmatprep.subr.bf16.mxu0 0
  %3891 = vmatpush1.bf16.msra.mxu0 0
  %3892 = vmatprep.subr.bf16.mxu0 0
  %3893 = vmatpush1.bf16.msra.mxu0 0
  %3894 = vmatprep.subr.bf16.mxu0 0
  %3895 = vmatpush1.bf16.msra.mxu0 0
  %3896 = vmatprep.subr.bf16.mxu0 0
  %3897 = vmatpush1.bf16.msra.mxu0 0
  %3898 = vmatprep.subr.bf16.mxu0 0
  %3899 = vmatpush1.bf16.msra.mxu0 0
  %3900 = vmatprep.subr.bf16.mxu0 0
  %3901 = vmatpush1.bf16.msra.mxu0 0
  %3902 = vmatprep.mubr.bf16.mxu0 0
  %3903 = vmatmul.mubr.bf16.gmra.mrb[0].mxu0 %v3862
  %v3904 = vpop.f32.mrb[0].mxu0
  %v3905 = vadd.f32 0.0, %v3904
  %v3906 = vpop.f32.mrb[0].mxu0
  %v3907 = vadd.f32 0.0, %v3906
  %v3908 = vpop.f32.mrb[0].mxu0
  %v3909 = vpop.f32.mrb[0].mxu0
  %3910 = vdwg.mxu0
  %v3911 = vadd.f32 %v3726, %v3905
  %v3912 = vadd.f32 %v3728, %v3907
  %3913 = vrot.lane.b32.xlu0 %v3599, 126
  %v3914 = vpop.permute.xlu0 %3913
  %3915 = vrot.lane.b32.xlu0 %v3600, 126
  %v3916 = vpop.permute.xlu0 %3915
  %3917 = vrot.lane.b32.xlu0 %v3601, 126
  %v3918 = vpop.permute.xlu0 %3917
  %3919 = vrot.lane.b32.xlu0 %v3602, 126
  %v3920 = vpop.permute.xlu0 %3919
  %3921 = vrot.lane.b32.xlu0 %v3603, 126
  %v3922 = vpop.permute.xlu0 %3921
  %v3923 = vsel %vm816, %v3914, %v3916
  %v3924 = vsel %vm816, %v3918, %v3920
  %v3930 = vsel %vm3634, %v3922, 0
  %3932 = vmatprep.subr.bf16.mxu0 %v3916
  %3933 = vmatpush1.bf16.msra.mxu0 %v3923
  %3934 = vmatprep.subr.bf16.mxu0 %v3920
  %3935 = vmatpush1.bf16.msra.mxu0 %v3924
  %3936 = vmatprep.subr.bf16.mxu0 %v3930
  %3937 = vmatpush1.bf16.msra.mxu0 %v3930
  %3938 = vmatprep.subr.bf16.mxu0 0
  %3939 = vmatpush1.bf16.msra.mxu0 0
  %3940 = vmatprep.subr.bf16.mxu0 0
  %3941 = vmatpush1.bf16.msra.mxu0 0
  %3942 = vmatprep.subr.bf16.mxu0 0
  %3943 = vmatpush1.bf16.msra.mxu0 0
  %3944 = vmatprep.subr.bf16.mxu0 0
  %3945 = vmatpush1.bf16.msra.mxu0 0
  %3946 = vmatprep.subr.bf16.mxu0 0
  %3947 = vmatpush1.bf16.msra.mxu0 0
  %3948 = vmatprep.subr.bf16.mxu0 0
  %3949 = vmatpush1.bf16.msra.mxu0 0
  %3950 = vmatprep.subr.bf16.mxu0 0
  %3951 = vmatpush1.bf16.msra.mxu0 0
  %3952 = vmatprep.subr.bf16.mxu0 0
  %3953 = vmatpush1.bf16.msra.mxu0 0
  %3954 = vmatprep.subr.bf16.mxu0 0
  %3955 = vmatpush1.bf16.msra.mxu0 0
  %3956 = vmatprep.subr.bf16.mxu0 0
  %3957 = vmatpush1.bf16.msra.mxu0 0
  %3958 = vmatprep.subr.bf16.mxu0 0
  %3959 = vmatpush1.bf16.msra.mxu0 0
  %3960 = vmatprep.subr.bf16.mxu0 0
  %3961 = vmatpush1.bf16.msra.mxu0 0
  %3962 = vmatprep.subr.bf16.mxu0 0
  %3963 = vmatpush1.bf16.msra.mxu0 0
  %3964 = vmatprep.mubr.bf16.mxu0 0
  %3965 = vmatmul.mubr.bf16.gmra.mrb[0].mxu0 %v3862
  %v3966 = vpop.f32.mrb[0].mxu0
  %v3967 = vadd.f32 0.0, %v3966
  %v3968 = vpop.f32.mrb[0].mxu0
  %v3969 = vadd.f32 0.0, %v3968
  %v3970 = vpop.f32.mrb[0].mxu0
  %v3971 = vpop.f32.mrb[0].mxu0
  %3972 = vdwg.mxu0
  %v3973 = vadd.f32 %v3835, %v3967
  %v3974 = vadd.f32 %v3837, %v3969
  %v3975 = vpack.c.bf16 %v3582, %v3582
  %3976 = vrot.lane.b32.xlu0 %v3593, 119
  %v3977 = vpop.permute.xlu0 %3976
  %3978 = vrot.lane.b32.xlu0 %v3594, 119
  %v3979 = vpop.permute.xlu0 %3978
  %3980 = vrot.lane.b32.xlu0 %v3595, 119
  %v3981 = vpop.permute.xlu0 %3980
  %3982 = vrot.lane.b32.xlu0 %v3596, 119
  %v3983 = vpop.permute.xlu0 %3982
  %3984 = vrot.lane.b32.xlu0 %v3597, 119
  %v3985 = vpop.permute.xlu0 %3984
  %3986 = vrot.lane.b32.xlu0 %v3598, 119
  %v3987 = vpop.permute.xlu0 %3986
  %v3988 = vsel %vm1187, %v3977, %v3979
  %v3989 = vsel %vm1187, %v3981, %v3983
  %v3990 = vsel %vm1187, %v3985, %v3987
  %v3996 = vsel %vm3630, %v3975, 0
  %v3999 = vsel %vm3634, %v3990, 0
  %v4002 = vsel %vm3634, %v3987, 0
  %4004 = vmatprep.subr.bf16.mxu0 %v3979
  %4005 = vmatpush1.bf16.msra.mxu0 %v3988
  %4006 = vmatprep.subr.bf16.mxu0 %v3983
  %4007 = vmatpush1.bf16.msra.mxu0 %v3989
  %4008 = vmatprep.subr.bf16.mxu0 %v4002
  %4009 = vmatpush1.bf16.msra.mxu0 %v3999
  %4010 = vmatprep.subr.bf16.mxu0 0
  %4011 = vmatpush1.bf16.msra.mxu0 0
  %4012 = vmatprep.subr.bf16.mxu0 0
  %4013 = vmatpush1.bf16.msra.mxu0 0
  %4014 = vmatprep.subr.bf16.mxu0 0
  %4015 = vmatpush1.bf16.msra.mxu0 0
  %4016 = vmatprep.subr.bf16.mxu0 0
  %4017 = vmatpush1.bf16.msra.mxu0 0
  %4018 = vmatprep.subr.bf16.mxu0 0
  %4019 = vmatpush1.bf16.msra.mxu0 0
  %4020 = vmatprep.subr.bf16.mxu0 0
  %4021 = vmatpush1.bf16.msra.mxu0 0
  %4022 = vmatprep.subr.bf16.mxu0 0
  %4023 = vmatpush1.bf16.msra.mxu0 0
  %4024 = vmatprep.subr.bf16.mxu0 0
  %4025 = vmatpush1.bf16.msra.mxu0 0
  %4026 = vmatprep.subr.bf16.mxu0 0
  %4027 = vmatpush1.bf16.msra.mxu0 0
  %4028 = vmatprep.subr.bf16.mxu0 0
  %4029 = vmatpush1.bf16.msra.mxu0 0
  %4030 = vmatprep.subr.bf16.mxu0 0
  %4031 = vmatpush1.bf16.msra.mxu0 0
  %4032 = vmatprep.subr.bf16.mxu0 0
  %4033 = vmatpush1.bf16.msra.mxu0 0
  %4034 = vmatprep.subr.bf16.mxu0 0
  %4035 = vmatpush1.bf16.msra.mxu0 0
  %4036 = vmatprep.mubr.bf16.mxu0 0
  %4037 = vmatmul.mubr.bf16.gmra.mrb[0].mxu0 %v3996
  %v4038 = vpop.f32.mrb[0].mxu0
  %v4039 = vadd.f32 0.0, %v4038
  %v4040 = vpop.f32.mrb[0].mxu0
  %v4041 = vadd.f32 0.0, %v4040
  %v4042 = vpop.f32.mrb[0].mxu0
  %v4043 = vpop.f32.mrb[0].mxu0
  %4044 = vdwg.mxu0
  %v4045 = vadd.f32 %v3911, %v4039
  %v4046 = vadd.f32 %v3912, %v4041
  %4047 = vrot.lane.b32.xlu0 %v3599, 119
  %v4048 = vpop.permute.xlu0 %4047
  %4049 = vrot.lane.b32.xlu0 %v3600, 119
  %v4050 = vpop.permute.xlu0 %4049
  %4051 = vrot.lane.b32.xlu0 %v3601, 119
  %v4052 = vpop.permute.xlu0 %4051
  %4053 = vrot.lane.b32.xlu0 %v3602, 119
  %v4054 = vpop.permute.xlu0 %4053
  %4055 = vrot.lane.b32.xlu0 %v3603, 119
  %v4056 = vpop.permute.xlu0 %4055
  %v4057 = vsel %vm1187, %v4048, %v4050
  %v4058 = vsel %vm1187, %v4052, %v4054
  %v4064 = vsel %vm3634, %v4056, 0
  %4066 = vmatprep.subr.bf16.mxu0 %v4050
  %4067 = vmatpush1.bf16.msra.mxu0 %v4057
  %4068 = vmatprep.subr.bf16.mxu0 %v4054
  %4069 = vmatpush1.bf16.msra.mxu0 %v4058
  %4070 = vmatprep.subr.bf16.mxu0 %v4064
  %4071 = vmatpush1.bf16.msra.mxu0 %v4064
  %4072 = vmatprep.subr.bf16.mxu0 0
  %4073 = vmatpush1.bf16.msra.mxu0 0
  %4074 = vmatprep.subr.bf16.mxu0 0
  %4075 = vmatpush1.bf16.msra.mxu0 0
  %4076 = vmatprep.subr.bf16.mxu0 0
  %4077 = vmatpush1.bf16.msra.mxu0 0
  %4078 = vmatprep.subr.bf16.mxu0 0
  %4079 = vmatpush1.bf16.msra.mxu0 0
  %4080 = vmatprep.subr.bf16.mxu0 0
  %4081 = vmatpush1.bf16.msra.mxu0 0
  %4082 = vmatprep.subr.bf16.mxu0 0
  %4083 = vmatpush1.bf16.msra.mxu0 0
  %4084 = vmatprep.subr.bf16.mxu0 0
  %4085 = vmatpush1.bf16.msra.mxu0 0
  %4086 = vmatprep.subr.bf16.mxu0 0
  %4087 = vmatpush1.bf16.msra.mxu0 0
  %4088 = vmatprep.subr.bf16.mxu0 0
  %4089 = vmatpush1.bf16.msra.mxu0 0
  %4090 = vmatprep.subr.bf16.mxu0 0
  %4091 = vmatpush1.bf16.msra.mxu0 0
  %4092 = vmatprep.subr.bf16.mxu0 0
  %4093 = vmatpush1.bf16.msra.mxu0 0
  %4094 = vmatprep.subr.bf16.mxu0 0
  %4095 = vmatpush1.bf16.msra.mxu0 0
  %4096 = vmatprep.subr.bf16.mxu0 0
  %4097 = vmatpush1.bf16.msra.mxu0 0
  %4098 = vmatprep.mubr.bf16.mxu0 0
  %4099 = vmatmul.mubr.bf16.gmra.mrb[0].mxu0 %v3996
  %v4100 = vpop.f32.mrb[0].mxu0
  %v4101 = vadd.f32 0.0, %v4100
  %v4102 = vpop.f32.mrb[0].mxu0
  %v4103 = vadd.f32 0.0, %v4102
  %v4104 = vpop.f32.mrb[0].mxu0
  %v4105 = vpop.f32.mrb[0].mxu0
  %4106 = vdwg.mxu0
  %v4107 = vadd.f32 %v3973, %v4101
  %v4108 = vadd.f32 %v3974, %v4103
  %v4109 = vpack.c.bf16 %v3583, %v3583
  %4110 = vrot.lane.b32.xlu0 %v3593, 118
  %v4111 = vpop.permute.xlu0 %4110
  %4112 = vrot.lane.b32.xlu0 %v3594, 118
  %v4113 = vpop.permute.xlu0 %4112
  %4114 = vrot.lane.b32.xlu0 %v3595, 118
  %v4115 = vpop.permute.xlu0 %4114
  %4116 = vrot.lane.b32.xlu0 %v3596, 118
  %v4117 = vpop.permute.xlu0 %4116
  %4118 = vrot.lane.b32.xlu0 %v3597, 118
  %v4119 = vpop.permute.xlu0 %4118
  %4120 = vrot.lane.b32.xlu0 %v3598, 118
  %v4121 = vpop.permute.xlu0 %4120
  %v4122 = vsel %vm1558, %v4111, %v4113
  %v4123 = vsel %vm1558, %v4115, %v4117
  %v4124 = vsel %vm1558, %v4119, %v4121
  %v4130 = vsel %vm3630, %v4109, 0
  %v4133 = vsel %vm3634, %v4124, 0
  %v4136 = vsel %vm3634, %v4121, 0
  %4138 = vmatprep.subr.bf16.mxu0 %v4113
  %4139 = vmatpush1.bf16.msra.mxu0 %v4122
  %4140 = vmatprep.subr.bf16.mxu0 %v4117
  %4141 = vmatpush1.bf16.msra.mxu0 %v4123
  %4142 = vmatprep.subr.bf16.mxu0 %v4136
  %4143 = vmatpush1.bf16.msra.mxu0 %v4133
  %4144 = vmatprep.subr.bf16.mxu0 0
  %4145 = vmatpush1.bf16.msra.mxu0 0
  %4146 = vmatprep.subr.bf16.mxu0 0
  %4147 = vmatpush1.bf16.msra.mxu0 0
  %4148 = vmatprep.subr.bf16.mxu0 0
  %4149 = vmatpush1.bf16.msra.mxu0 0
  %4150 = vmatprep.subr.bf16.mxu0 0
  %4151 = vmatpush1.bf16.msra.mxu0 0
  %4152 = vmatprep.subr.bf16.mxu0 0
  %4153 = vmatpush1.bf16.msra.mxu0 0
  %4154 = vmatprep.subr.bf16.mxu0 0
  %4155 = vmatpush1.bf16.msra.mxu0 0
  %4156 = vmatprep.subr.bf16.mxu0 0
  %4157 = vmatpush1.bf16.msra.mxu0 0
  %4158 = vmatprep.subr.bf16.mxu0 0
  %4159 = vmatpush1.bf16.msra.mxu0 0
  %4160 = vmatprep.subr.bf16.mxu0 0
  %4161 = vmatpush1.bf16.msra.mxu0 0
  %4162 = vmatprep.subr.bf16.mxu0 0
  %4163 = vmatpush1.bf16.msra.mxu0 0
  %4164 = vmatprep.subr.bf16.mxu0 0
  %4165 = vmatpush1.bf16.msra.mxu0 0
  %4166 = vmatprep.subr.bf16.mxu0 0
  %4167 = vmatpush1.bf16.msra.mxu0 0
  %4168 = vmatprep.subr.bf16.mxu0 0
  %4169 = vmatpush1.bf16.msra.mxu0 0
  %4170 = vmatprep.mubr.bf16.mxu0 0
  %4171 = vmatmul.mubr.bf16.gmra.mrb[0].mxu0 %v4130
  %v4172 = vpop.f32.mrb[0].mxu0
  %v4173 = vadd.f32 0.0, %v4172
  %v4174 = vpop.f32.mrb[0].mxu0
  %v4175 = vadd.f32 0.0, %v4174
  %v4176 = vpop.f32.mrb[0].mxu0
  %v4177 = vpop.f32.mrb[0].mxu0
  %4178 = vdwg.mxu0
  %v4179 = vadd.f32 %v4045, %v4173
  %v4180 = vadd.f32 %v4046, %v4175
  %4181 = vrot.lane.b32.xlu0 %v3599, 118
  %v4182 = vpop.permute.xlu0 %4181
  %4183 = vrot.lane.b32.xlu0 %v3600, 118
  %v4184 = vpop.permute.xlu0 %4183
  %4185 = vrot.lane.b32.xlu0 %v3601, 118
  %v4186 = vpop.permute.xlu0 %4185
  %4187 = vrot.lane.b32.xlu0 %v3602, 118
  %v4188 = vpop.permute.xlu0 %4187
  %4189 = vrot.lane.b32.xlu0 %v3603, 118
  %v4190 = vpop.permute.xlu0 %4189
  %v4191 = vsel %vm1558, %v4182, %v4184
  %v4192 = vsel %vm1558, %v4186, %v4188
  %v4198 = vsel %vm3634, %v4190, 0
  %4200 = vmatprep.subr.bf16.mxu0 %v4184
  %4201 = vmatpush1.bf16.msra.mxu0 %v4191
  %4202 = vmatprep.subr.bf16.mxu0 %v4188
  %4203 = vmatpush1.bf16.msra.mxu0 %v4192
  %4204 = vmatprep.subr.bf16.mxu0 %v4198
  %4205 = vmatpush1.bf16.msra.mxu0 %v4198
  %4206 = vmatprep.subr.bf16.mxu0 0
  %4207 = vmatpush1.bf16.msra.mxu0 0
  %4208 = vmatprep.subr.bf16.mxu0 0
  %4209 = vmatpush1.bf16.msra.mxu0 0
  %4210 = vmatprep.subr.bf16.mxu0 0
  %4211 = vmatpush1.bf16.msra.mxu0 0
  %4212 = vmatprep.subr.bf16.mxu0 0
  %4213 = vmatpush1.bf16.msra.mxu0 0
  %4214 = vmatprep.subr.bf16.mxu0 0
  %4215 = vmatpush1.bf16.msra.mxu0 0
  %4216 = vmatprep.subr.bf16.mxu0 0
  %4217 = vmatpush1.bf16.msra.mxu0 0
  %4218 = vmatprep.subr.bf16.mxu0 0
  %4219 = vmatpush1.bf16.msra.mxu0 0
  %4220 = vmatprep.subr.bf16.mxu0 0
  %4221 = vmatpush1.bf16.msra.mxu0 0
  %4222 = vmatprep.subr.bf16.mxu0 0
  %4223 = vmatpush1.bf16.msra.mxu0 0
  %4224 = vmatprep.subr.bf16.mxu0 0
  %4225 = vmatpush1.bf16.msra.mxu0 0
  %4226 = vmatprep.subr.bf16.mxu0 0
  %4227 = vmatpush1.bf16.msra.mxu0 0
  %4228 = vmatprep.subr.bf16.mxu0 0
  %4229 = vmatpush1.bf16.msra.mxu0 0
  %4230 = vmatprep.subr.bf16.mxu0 0
  %4231 = vmatpush1.bf16.msra.mxu0 0
  %4232 = vmatprep.mubr.bf16.mxu0 0
  %4233 = vmatmul.mubr.bf16.gmra.mrb[0].mxu0 %v4130
  %v4234 = vpop.f32.mrb[0].mxu0
  %v4235 = vadd.f32 0.0, %v4234
  %v4236 = vpop.f32.mrb[0].mxu0
  %v4237 = vadd.f32 0.0, %v4236
  %v4238 = vpop.f32.mrb[0].mxu0
  %v4239 = vpop.f32.mrb[0].mxu0
  %4240 = vdwg.mxu0
  %v4241 = vadd.f32 %v4107, %v4235
  %v4242 = vadd.f32 %v4108, %v4237
  %v4243 = vpack.c.bf16 %v3584, %v3584
  %4244 = vrot.lane.b32.xlu0 %v3593, 117
  %v4245 = vpop.permute.xlu0 %4244
  %4246 = vrot.lane.b32.xlu0 %v3594, 117
  %v4247 = vpop.permute.xlu0 %4246
  %4248 = vrot.lane.b32.xlu0 %v3595, 117
  %v4249 = vpop.permute.xlu0 %4248
  %4250 = vrot.lane.b32.xlu0 %v3596, 117
  %v4251 = vpop.permute.xlu0 %4250
  %4252 = vrot.lane.b32.xlu0 %v3597, 117
  %v4253 = vpop.permute.xlu0 %4252
  %4254 = vrot.lane.b32.xlu0 %v3598, 117
  %v4255 = vpop.permute.xlu0 %4254
  %v4256 = vsel %vm1929, %v4245, %v4247
  %v4257 = vsel %vm1929, %v4249, %v4251
  %v4258 = vsel %vm1929, %v4253, %v4255
  %v4264 = vsel %vm3630, %v4243, 0
  %v4267 = vsel %vm3634, %v4258, 0
  %v4270 = vsel %vm3634, %v4255, 0
  %4272 = vmatprep.subr.bf16.mxu0 %v4247
  %4273 = vmatpush1.bf16.msra.mxu0 %v4256
  %4274 = vmatprep.subr.bf16.mxu0 %v4251
  %4275 = vmatpush1.bf16.msra.mxu0 %v4257
  %4276 = vmatprep.subr.bf16.mxu0 %v4270
  %4277 = vmatpush1.bf16.msra.mxu0 %v4267
  %4278 = vmatprep.subr.bf16.mxu0 0
  %4279 = vmatpush1.bf16.msra.mxu0 0
  %4280 = vmatprep.subr.bf16.mxu0 0
  %4281 = vmatpush1.bf16.msra.mxu0 0
  %4282 = vmatprep.subr.bf16.mxu0 0
  %4283 = vmatpush1.bf16.msra.mxu0 0
  %4284 = vmatprep.subr.bf16.mxu0 0
  %4285 = vmatpush1.bf16.msra.mxu0 0
  %4286 = vmatprep.subr.bf16.mxu0 0
  %4287 = vmatpush1.bf16.msra.mxu0 0
  %4288 = vmatprep.subr.bf16.mxu0 0
  %4289 = vmatpush1.bf16.msra.mxu0 0
  %4290 = vmatprep.subr.bf16.mxu0 0
  %4291 = vmatpush1.bf16.msra.mxu0 0
  %4292 = vmatprep.subr.bf16.mxu0 0
  %4293 = vmatpush1.bf16.msra.mxu0 0
  %4294 = vmatprep.subr.bf16.mxu0 0
  %4295 = vmatpush1.bf16.msra.mxu0 0
  %4296 = vmatprep.subr.bf16.mxu0 0
  %4297 = vmatpush1.bf16.msra.mxu0 0
  %4298 = vmatprep.subr.bf16.mxu0 0
  %4299 = vmatpush1.bf16.msra.mxu0 0
  %4300 = vmatprep.subr.bf16.mxu0 0
  %4301 = vmatpush1.bf16.msra.mxu0 0
  %4302 = vmatprep.subr.bf16.mxu0 0
  %4303 = vmatpush1.bf16.msra.mxu0 0
  %4304 = vmatprep.mubr.bf16.mxu0 0
  %4305 = vmatmul.mubr.bf16.gmra.mrb[0].mxu0 %v4264
  %v4306 = vpop.f32.mrb[0].mxu0
  %v4307 = vadd.f32 0.0, %v4306
  %v4308 = vpop.f32.mrb[0].mxu0
  %v4309 = vadd.f32 0.0, %v4308
  %v4310 = vpop.f32.mrb[0].mxu0
  %v4311 = vpop.f32.mrb[0].mxu0
  %4312 = vdwg.mxu0
  %v4313 = vadd.f32 %v4179, %v4307
  %v4314 = vadd.f32 %v4180, %v4309
  %4315 = vrot.lane.b32.xlu0 %v3599, 117
  %v4316 = vpop.permute.xlu0 %4315
  %4317 = vrot.lane.b32.xlu0 %v3600, 117
  %v4318 = vpop.permute.xlu0 %4317
  %4319 = vrot.lane.b32.xlu0 %v3601, 117
  %v4320 = vpop.permute.xlu0 %4319
  %4321 = vrot.lane.b32.xlu0 %v3602, 117
  %v4322 = vpop.permute.xlu0 %4321
  %4323 = vrot.lane.b32.xlu0 %v3603, 117
  %v4324 = vpop.permute.xlu0 %4323
  %v4325 = vsel %vm1929, %v4316, %v4318
  %v4326 = vsel %vm1929, %v4320, %v4322
  %v4332 = vsel %vm3634, %v4324, 0
  %4334 = vmatprep.subr.bf16.mxu0 %v4318
  %4335 = vmatpush1.bf16.msra.mxu0 %v4325
  %4336 = vmatprep.subr.bf16.mxu0 %v4322
  %4337 = vmatpush1.bf16.msra.mxu0 %v4326
  %4338 = vmatprep.subr.bf16.mxu0 %v4332
  %4339 = vmatpush1.bf16.msra.mxu0 %v4332
  %4340 = vmatprep.subr.bf16.mxu0 0
  %4341 = vmatpush1.bf16.msra.mxu0 0
  %4342 = vmatprep.subr.bf16.mxu0 0
  %4343 = vmatpush1.bf16.msra.mxu0 0
  %4344 = vmatprep.subr.bf16.mxu0 0
  %4345 = vmatpush1.bf16.msra.mxu0 0
  %4346 = vmatprep.subr.bf16.mxu0 0
  %4347 = vmatpush1.bf16.msra.mxu0 0
  %4348 = vmatprep.subr.bf16.mxu0 0
  %4349 = vmatpush1.bf16.msra.mxu0 0
  %4350 = vmatprep.subr.bf16.mxu0 0
  %4351 = vmatpush1.bf16.msra.mxu0 0
  %4352 = vmatprep.subr.bf16.mxu0 0
  %4353 = vmatpush1.bf16.msra.mxu0 0
  %4354 = vmatprep.subr.bf16.mxu0 0
  %4355 = vmatpush1.bf16.msra.mxu0 0
  %4356 = vmatprep.subr.bf16.mxu0 0
  %4357 = vmatpush1.bf16.msra.mxu0 0
  %4358 = vmatprep.subr.bf16.mxu0 0
  %4359 = vmatpush1.bf16.msra.mxu0 0
  %4360 = vmatprep.subr.bf16.mxu0 0
  %4361 = vmatpush1.bf16.msra.mxu0 0
  %4362 = vmatprep.subr.bf16.mxu0 0
  %4363 = vmatpush1.bf16.msra.mxu0 0
  %4364 = vmatprep.subr.bf16.mxu0 0
  %4365 = vmatpush1.bf16.msra.mxu0 0
  %4366 = vmatprep.mubr.bf16.mxu0 0
  %4367 = vmatmul.mubr.bf16.gmra.mrb[0].mxu0 %v4264
  %v4368 = vpop.f32.mrb[0].mxu0
  %v4369 = vadd.f32 0.0, %v4368
  %v4370 = vpop.f32.mrb[0].mxu0
  %v4371 = vadd.f32 0.0, %v4370
  %v4372 = vpop.f32.mrb[0].mxu0
  %v4373 = vpop.f32.mrb[0].mxu0
  %4374 = vdwg.mxu0
  %v4375 = vadd.f32 %v4241, %v4369
  %v4376 = vadd.f32 %v4242, %v4371
  %v4377 = vpack.c.bf16 %v3585, %v3585
  %4378 = vrot.lane.b32.xlu0 %v3593, 110
  %v4379 = vpop.permute.xlu0 %4378
  %4380 = vrot.lane.b32.xlu0 %v3594, 110
  %v4381 = vpop.permute.xlu0 %4380
  %4382 = vrot.lane.b32.xlu0 %v3595, 110
  %v4383 = vpop.permute.xlu0 %4382
  %4384 = vrot.lane.b32.xlu0 %v3596, 110
  %v4385 = vpop.permute.xlu0 %4384
  %4386 = vrot.lane.b32.xlu0 %v3597, 110
  %v4387 = vpop.permute.xlu0 %4386
  %4388 = vrot.lane.b32.xlu0 %v3598, 110
  %v4389 = vpop.permute.xlu0 %4388
  %v4390 = vsel %vm2300, %v4379, %v4381
  %v4391 = vsel %vm2300, %v4383, %v4385
  %v4392 = vsel %vm2300, %v4387, %v4389
  %v4398 = vsel %vm3630, %v4377, 0
  %v4401 = vsel %vm3634, %v4392, 0
  %v4404 = vsel %vm3634, %v4389, 0
  %4406 = vmatprep.subr.bf16.mxu0 %v4381
  %4407 = vmatpush1.bf16.msra.mxu0 %v4390
  %4408 = vmatprep.subr.bf16.mxu0 %v4385
  %4409 = vmatpush1.bf16.msra.mxu0 %v4391
  %4410 = vmatprep.subr.bf16.mxu0 %v4404
  %4411 = vmatpush1.bf16.msra.mxu0 %v4401
  %4412 = vmatprep.subr.bf16.mxu0 0
  %4413 = vmatpush1.bf16.msra.mxu0 0
  %4414 = vmatprep.subr.bf16.mxu0 0
  %4415 = vmatpush1.bf16.msra.mxu0 0
  %4416 = vmatprep.subr.bf16.mxu0 0
  %4417 = vmatpush1.bf16.msra.mxu0 0
  %4418 = vmatprep.subr.bf16.mxu0 0
  %4419 = vmatpush1.bf16.msra.mxu0 0
  %4420 = vmatprep.subr.bf16.mxu0 0
  %4421 = vmatpush1.bf16.msra.mxu0 0
  %4422 = vmatprep.subr.bf16.mxu0 0
  %4423 = vmatpush1.bf16.msra.mxu0 0
  %4424 = vmatprep.subr.bf16.mxu0 0
  %4425 = vmatpush1.bf16.msra.mxu0 0
  %4426 = vmatprep.subr.bf16.mxu0 0
  %4427 = vmatpush1.bf16.msra.mxu0 0
  %4428 = vmatprep.subr.bf16.mxu0 0
  %4429 = vmatpush1.bf16.msra.mxu0 0
  %4430 = vmatprep.subr.bf16.mxu0 0
  %4431 = vmatpush1.bf16.msra.mxu0 0
  %4432 = vmatprep.subr.bf16.mxu0 0
  %4433 = vmatpush1.bf16.msra.mxu0 0
  %4434 = vmatprep.subr.bf16.mxu0 0
  %4435 = vmatpush1.bf16.msra.mxu0 0
  %4436 = vmatprep.subr.bf16.mxu0 0
  %4437 = vmatpush1.bf16.msra.mxu0 0
  %4438 = vmatprep.mubr.bf16.mxu0 0
  %4439 = vmatmul.mubr.bf16.gmra.mrb[0].mxu0 %v4398
  %v4440 = vpop.f32.mrb[0].mxu0
  %v4441 = vadd.f32 0.0, %v4440
  %v4442 = vpop.f32.mrb[0].mxu0
  %v4443 = vadd.f32 0.0, %v4442
  %v4444 = vpop.f32.mrb[0].mxu0
  %v4445 = vpop.f32.mrb[0].mxu0
  %4446 = vdwg.mxu0
  %v4447 = vadd.f32 %v4313, %v4441
  %v4448 = vadd.f32 %v4314, %v4443
  %4449 = vrot.lane.b32.xlu0 %v3599, 110
  %v4450 = vpop.permute.xlu0 %4449
  %4451 = vrot.lane.b32.xlu0 %v3600, 110
  %v4452 = vpop.permute.xlu0 %4451
  %4453 = vrot.lane.b32.xlu0 %v3601, 110
  %v4454 = vpop.permute.xlu0 %4453
  %4455 = vrot.lane.b32.xlu0 %v3602, 110
  %v4456 = vpop.permute.xlu0 %4455
  %4457 = vrot.lane.b32.xlu0 %v3603, 110
  %v4458 = vpop.permute.xlu0 %4457
  %v4459 = vsel %vm2300, %v4450, %v4452
  %v4460 = vsel %vm2300, %v4454, %v4456
  %v4466 = vsel %vm3634, %v4458, 0
  %4468 = vmatprep.subr.bf16.mxu0 %v4452
  %4469 = vmatpush1.bf16.msra.mxu0 %v4459
  %4470 = vmatprep.subr.bf16.mxu0 %v4456
  %4471 = vmatpush1.bf16.msra.mxu0 %v4460
  %4472 = vmatprep.subr.bf16.mxu0 %v4466
  %4473 = vmatpush1.bf16.msra.mxu0 %v4466
  %4474 = vmatprep.subr.bf16.mxu0 0
  %4475 = vmatpush1.bf16.msra.mxu0 0
  %4476 = vmatprep.subr.bf16.mxu0 0
  %4477 = vmatpush1.bf16.msra.mxu0 0
  %4478 = vmatprep.subr.bf16.mxu0 0
  %4479 = vmatpush1.bf16.msra.mxu0 0
  %4480 = vmatprep.subr.bf16.mxu0 0
  %4481 = vmatpush1.bf16.msra.mxu0 0
  %4482 = vmatprep.subr.bf16.mxu0 0
  %4483 = vmatpush1.bf16.msra.mxu0 0
  %4484 = vmatprep.subr.bf16.mxu0 0
  %4485 = vmatpush1.bf16.msra.mxu0 0
  %4486 = vmatprep.subr.bf16.mxu0 0
  %4487 = vmatpush1.bf16.msra.mxu0 0
  %4488 = vmatprep.subr.bf16.mxu0 0
  %4489 = vmatpush1.bf16.msra.mxu0 0
  %4490 = vmatprep.subr.bf16.mxu0 0
  %4491 = vmatpush1.bf16.msra.mxu0 0
  %4492 = vmatprep.subr.bf16.mxu0 0
  %4493 = vmatpush1.bf16.msra.mxu0 0
  %4494 = vmatprep.subr.bf16.mxu0 0
  %4495 = vmatpush1.bf16.msra.mxu0 0
  %4496 = vmatprep.subr.bf16.mxu0 0
  %4497 = vmatpush1.bf16.msra.mxu0 0
  %4498 = vmatprep.subr.bf16.mxu0 0
  %4499 = vmatpush1.bf16.msra.mxu0 0
  %4500 = vmatprep.mubr.bf16.mxu0 0
  %4501 = vmatmul.mubr.bf16.gmra.mrb[0].mxu0 %v4398
  %v4502 = vpop.f32.mrb[0].mxu0
  %v4503 = vadd.f32 0.0, %v4502
  %v4504 = vpop.f32.mrb[0].mxu0
  %v4505 = vadd.f32 0.0, %v4504
  %v4506 = vpop.f32.mrb[0].mxu0
  %v4507 = vpop.f32.mrb[0].mxu0
  %4508 = vdwg.mxu0
  %v4509 = vadd.f32 %v4375, %v4503
  %v4510 = vadd.f32 %v4376, %v4505
  %v4511 = vpack.c.bf16 %v3586, %v3586
  %4512 = vrot.lane.b32.xlu0 %v3593, 109
  %v4513 = vpop.permute.xlu0 %4512
  %4514 = vrot.lane.b32.xlu0 %v3594, 109
  %v4515 = vpop.permute.xlu0 %4514
  %4516 = vrot.lane.b32.xlu0 %v3595, 109
  %v4517 = vpop.permute.xlu0 %4516
  %4518 = vrot.lane.b32.xlu0 %v3596, 109
  %v4519 = vpop.permute.xlu0 %4518
  %4520 = vrot.lane.b32.xlu0 %v3597, 109
  %v4521 = vpop.permute.xlu0 %4520
  %4522 = vrot.lane.b32.xlu0 %v3598, 109
  %v4523 = vpop.permute.xlu0 %4522
  %v4524 = vsel %vm2671, %v4513, %v4515
  %v4525 = vsel %vm2671, %v4517, %v4519
  %v4526 = vsel %vm2671, %v4521, %v4523
  %v4532 = vsel %vm3630, %v4511, 0
  %v4535 = vsel %vm3634, %v4526, 0
  %v4538 = vsel %vm3634, %v4523, 0
  %4540 = vmatprep.subr.bf16.mxu0 %v4515
  %4541 = vmatpush1.bf16.msra.mxu0 %v4524
  %4542 = vmatprep.subr.bf16.mxu0 %v4519
  %4543 = vmatpush1.bf16.msra.mxu0 %v4525
  %4544 = vmatprep.subr.bf16.mxu0 %v4538
  %4545 = vmatpush1.bf16.msra.mxu0 %v4535
  %4546 = vmatprep.subr.bf16.mxu0 0
  %4547 = vmatpush1.bf16.msra.mxu0 0
  %4548 = vmatprep.subr.bf16.mxu0 0
  %4549 = vmatpush1.bf16.msra.mxu0 0
  %4550 = vmatprep.subr.bf16.mxu0 0
  %4551 = vmatpush1.bf16.msra.mxu0 0
  %4552 = vmatprep.subr.bf16.mxu0 0
  %4553 = vmatpush1.bf16.msra.mxu0 0
  %4554 = vmatprep.subr.bf16.mxu0 0
  %4555 = vmatpush1.bf16.msra.mxu0 0
  %4556 = vmatprep.subr.bf16.mxu0 0
  %4557 = vmatpush1.bf16.msra.mxu0 0
  %4558 = vmatprep.subr.bf16.mxu0 0
  %4559 = vmatpush1.bf16.msra.mxu0 0
  %4560 = vmatprep.subr.bf16.mxu0 0
  %4561 = vmatpush1.bf16.msra.mxu0 0
  %4562 = vmatprep.subr.bf16.mxu0 0
  %4563 = vmatpush1.bf16.msra.mxu0 0
  %4564 = vmatprep.subr.bf16.mxu0 0
  %4565 = vmatpush1.bf16.msra.mxu0 0
  %4566 = vmatprep.subr.bf16.mxu0 0
  %4567 = vmatpush1.bf16.msra.mxu0 0
  %4568 = vmatprep.subr.bf16.mxu0 0
  %4569 = vmatpush1.bf16.msra.mxu0 0
  %4570 = vmatprep.subr.bf16.mxu0 0
  %4571 = vmatpush1.bf16.msra.mxu0 0
  %4572 = vmatprep.mubr.bf16.mxu0 0
  %4573 = vmatmul.mubr.bf16.gmra.mrb[0].mxu0 %v4532
  %v4574 = vpop.f32.mrb[0].mxu0
  %v4575 = vadd.f32 0.0, %v4574
  %v4576 = vpop.f32.mrb[0].mxu0
  %v4577 = vadd.f32 0.0, %v4576
  %v4578 = vpop.f32.mrb[0].mxu0
  %v4579 = vpop.f32.mrb[0].mxu0
  %4580 = vdwg.mxu0
  %v4581 = vadd.f32 %v4447, %v4575
  %v4582 = vadd.f32 %v4448, %v4577
  %4583 = vrot.lane.b32.xlu0 %v3599, 109
  %v4584 = vpop.permute.xlu0 %4583
  %4585 = vrot.lane.b32.xlu0 %v3600, 109
  %v4586 = vpop.permute.xlu0 %4585
  %4587 = vrot.lane.b32.xlu0 %v3601, 109
  %v4588 = vpop.permute.xlu0 %4587
  %4589 = vrot.lane.b32.xlu0 %v3602, 109
  %v4590 = vpop.permute.xlu0 %4589
  %4591 = vrot.lane.b32.xlu0 %v3603, 109
  %v4592 = vpop.permute.xlu0 %4591
  %v4593 = vsel %vm2671, %v4584, %v4586
  %v4594 = vsel %vm2671, %v4588, %v4590
  %v4600 = vsel %vm3634, %v4592, 0
  %4602 = vmatprep.subr.bf16.mxu0 %v4586
  %4603 = vmatpush1.bf16.msra.mxu0 %v4593
  %4604 = vmatprep.subr.bf16.mxu0 %v4590
  %4605 = vmatpush1.bf16.msra.mxu0 %v4594
  %4606 = vmatprep.subr.bf16.mxu0 %v4600
  %4607 = vmatpush1.bf16.msra.mxu0 %v4600
  %4608 = vmatprep.subr.bf16.mxu0 0
  %4609 = vmatpush1.bf16.msra.mxu0 0
  %4610 = vmatprep.subr.bf16.mxu0 0
  %4611 = vmatpush1.bf16.msra.mxu0 0
  %4612 = vmatprep.subr.bf16.mxu0 0
  %4613 = vmatpush1.bf16.msra.mxu0 0
  %4614 = vmatprep.subr.bf16.mxu0 0
  %4615 = vmatpush1.bf16.msra.mxu0 0
  %4616 = vmatprep.subr.bf16.mxu0 0
  %4617 = vmatpush1.bf16.msra.mxu0 0
  %4618 = vmatprep.subr.bf16.mxu0 0
  %4619 = vmatpush1.bf16.msra.mxu0 0
  %4620 = vmatprep.subr.bf16.mxu0 0
  %4621 = vmatpush1.bf16.msra.mxu0 0
  %4622 = vmatprep.subr.bf16.mxu0 0
  %4623 = vmatpush1.bf16.msra.mxu0 0
  %4624 = vmatprep.subr.bf16.mxu0 0
  %4625 = vmatpush1.bf16.msra.mxu0 0
  %4626 = vmatprep.subr.bf16.mxu0 0
  %4627 = vmatpush1.bf16.msra.mxu0 0
  %4628 = vmatprep.subr.bf16.mxu0 0
  %4629 = vmatpush1.bf16.msra.mxu0 0
  %4630 = vmatprep.subr.bf16.mxu0 0
  %4631 = vmatpush1.bf16.msra.mxu0 0
  %4632 = vmatprep.subr.bf16.mxu0 0
  %4633 = vmatpush1.bf16.msra.mxu0 0
  %4634 = vmatprep.mubr.bf16.mxu0 0
  %4635 = vmatmul.mubr.bf16.gmra.mrb[0].mxu0 %v4532
  %v4636 = vpop.f32.mrb[0].mxu0
  %v4637 = vadd.f32 0.0, %v4636
  %v4638 = vpop.f32.mrb[0].mxu0
  %v4639 = vadd.f32 0.0, %v4638
  %v4640 = vpop.f32.mrb[0].mxu0
  %v4641 = vpop.f32.mrb[0].mxu0
  %4642 = vdwg.mxu0
  %v4643 = vadd.f32 %v4509, %v4637
  %v4644 = vadd.f32 %v4510, %v4639
  %v4645 = vpack.c.bf16 %v3587, %v3587
  %4646 = vrot.lane.b32.xlu0 %v3593, 108
  %v4647 = vpop.permute.xlu0 %4646
  %4648 = vrot.lane.b32.xlu0 %v3594, 108
  %v4649 = vpop.permute.xlu0 %4648
  %4650 = vrot.lane.b32.xlu0 %v3595, 108
  %v4651 = vpop.permute.xlu0 %4650
  %4652 = vrot.lane.b32.xlu0 %v3596, 108
  %v4653 = vpop.permute.xlu0 %4652
  %4654 = vrot.lane.b32.xlu0 %v3597, 108
  %v4655 = vpop.permute.xlu0 %4654
  %4656 = vrot.lane.b32.xlu0 %v3598, 108
  %v4657 = vpop.permute.xlu0 %4656
  %v4658 = vsel %vm3042, %v4647, %v4649
  %v4659 = vsel %vm3042, %v4651, %v4653
  %v4660 = vsel %vm3042, %v4655, %v4657
  %v4666 = vsel %vm3630, %v4645, 0
  %v4669 = vsel %vm3634, %v4660, 0
  %v4672 = vsel %vm3634, %v4657, 0
  %4674 = vmatprep.subr.bf16.mxu0 %v4649
  %4675 = vmatpush1.bf16.msra.mxu0 %v4658
  %4676 = vmatprep.subr.bf16.mxu0 %v4653
  %4677 = vmatpush1.bf16.msra.mxu0 %v4659
  %4678 = vmatprep.subr.bf16.mxu0 %v4672
  %4679 = vmatpush1.bf16.msra.mxu0 %v4669
  %4680 = vmatprep.subr.bf16.mxu0 0
  %4681 = vmatpush1.bf16.msra.mxu0 0
  %4682 = vmatprep.subr.bf16.mxu0 0
  %4683 = vmatpush1.bf16.msra.mxu0 0
  %4684 = vmatprep.subr.bf16.mxu0 0
  %4685 = vmatpush1.bf16.msra.mxu0 0
  %4686 = vmatprep.subr.bf16.mxu0 0
  %4687 = vmatpush1.bf16.msra.mxu0 0
  %4688 = vmatprep.subr.bf16.mxu0 0
  %4689 = vmatpush1.bf16.msra.mxu0 0
  %4690 = vmatprep.subr.bf16.mxu0 0
  %4691 = vmatpush1.bf16.msra.mxu0 0
  %4692 = vmatprep.subr.bf16.mxu0 0
  %4693 = vmatpush1.bf16.msra.mxu0 0
  %4694 = vmatprep.subr.bf16.mxu0 0
  %4695 = vmatpush1.bf16.msra.mxu0 0
  %4696 = vmatprep.subr.bf16.mxu0 0
  %4697 = vmatpush1.bf16.msra.mxu0 0
  %4698 = vmatprep.subr.bf16.mxu0 0
  %4699 = vmatpush1.bf16.msra.mxu0 0
  %4700 = vmatprep.subr.bf16.mxu0 0
  %4701 = vmatpush1.bf16.msra.mxu0 0
  %4702 = vmatprep.subr.bf16.mxu0 0
  %4703 = vmatpush1.bf16.msra.mxu0 0
  %4704 = vmatprep.subr.bf16.mxu0 0
  %4705 = vmatpush1.bf16.msra.mxu0 0
  %4706 = vmatprep.mubr.bf16.mxu0 0
  %4707 = vmatmul.mubr.bf16.gmra.mrb[0].mxu0 %v4666
  %v4708 = vpop.f32.mrb[0].mxu0
  %v4709 = vadd.f32 0.0, %v4708
  %v4710 = vpop.f32.mrb[0].mxu0
  %v4711 = vadd.f32 0.0, %v4710
  %v4712 = vpop.f32.mrb[0].mxu0
  %v4713 = vpop.f32.mrb[0].mxu0
  %4714 = vdwg.mxu0
  %v4715 = vadd.f32 %v4581, %v4709
  %v4716 = vadd.f32 %v4582, %v4711
  %4717 = vrot.lane.b32.xlu0 %v3599, 108
  %v4718 = vpop.permute.xlu0 %4717
  %4719 = vrot.lane.b32.xlu0 %v3600, 108
  %v4720 = vpop.permute.xlu0 %4719
  %4721 = vrot.lane.b32.xlu0 %v3601, 108
  %v4722 = vpop.permute.xlu0 %4721
  %4723 = vrot.lane.b32.xlu0 %v3602, 108
  %v4724 = vpop.permute.xlu0 %4723
  %4725 = vrot.lane.b32.xlu0 %v3603, 108
  %v4726 = vpop.permute.xlu0 %4725
  %v4727 = vsel %vm3042, %v4718, %v4720
  %v4728 = vsel %vm3042, %v4722, %v4724
  %v4734 = vsel %vm3634, %v4726, 0
  %4736 = vmatprep.subr.bf16.mxu0 %v4720
  %4737 = vmatpush1.bf16.msra.mxu0 %v4727
  %4738 = vmatprep.subr.bf16.mxu0 %v4724
  %4739 = vmatpush1.bf16.msra.mxu0 %v4728
  %4740 = vmatprep.subr.bf16.mxu0 %v4734
  %4741 = vmatpush1.bf16.msra.mxu0 %v4734
  %4742 = vmatprep.subr.bf16.mxu0 0
  %4743 = vmatpush1.bf16.msra.mxu0 0
  %4744 = vmatprep.subr.bf16.mxu0 0
  %4745 = vmatpush1.bf16.msra.mxu0 0
  %4746 = vmatprep.subr.bf16.mxu0 0
  %4747 = vmatpush1.bf16.msra.mxu0 0
  %4748 = vmatprep.subr.bf16.mxu0 0
  %4749 = vmatpush1.bf16.msra.mxu0 0
  %4750 = vmatprep.subr.bf16.mxu0 0
  %4751 = vmatpush1.bf16.msra.mxu0 0
  %4752 = vmatprep.subr.bf16.mxu0 0
  %4753 = vmatpush1.bf16.msra.mxu0 0
  %4754 = vmatprep.subr.bf16.mxu0 0
  %4755 = vmatpush1.bf16.msra.mxu0 0
  %4756 = vmatprep.subr.bf16.mxu0 0
  %4757 = vmatpush1.bf16.msra.mxu0 0
  %4758 = vmatprep.subr.bf16.mxu0 0
  %4759 = vmatpush1.bf16.msra.mxu0 0
  %4760 = vmatprep.subr.bf16.mxu0 0
  %4761 = vmatpush1.bf16.msra.mxu0 0
  %4762 = vmatprep.subr.bf16.mxu0 0
  %4763 = vmatpush1.bf16.msra.mxu0 0
  %4764 = vmatprep.subr.bf16.mxu0 0
  %4765 = vmatpush1.bf16.msra.mxu0 0
  %4766 = vmatprep.subr.bf16.mxu0 0
  %4767 = vmatpush1.bf16.msra.mxu0 0
  %4768 = vmatprep.mubr.bf16.mxu0 0
  %4769 = vmatmul.mubr.bf16.gmra.mrb[0].mxu0 %v4666
  %v4770 = vpop.f32.mrb[0].mxu0
  %v4771 = vadd.f32 0.0, %v4770
  %v4772 = vpop.f32.mrb[0].mxu0
  %v4773 = vadd.f32 0.0, %v4772
  %v4774 = vpop.f32.mrb[0].mxu0
  %v4775 = vpop.f32.mrb[0].mxu0
  %4776 = vdwg.mxu0
  %v4777 = vadd.f32 %v4643, %v4771
  %v4778 = vadd.f32 %v4644, %v4773
  %4780 = vset.pattern.permute.xlu0 0
  %4781 = vperm.xlu0 %4780, %v3588
  %v4782 = vpop.permute.xlu0 %4781
  %v4784 = vadd.f32 %v4715, %v4782
  %v4785 = vadd.f32 %v4716, %v4782
  %v4786 = vmax.f32 %v4784, 0.0
  %v4787 = vmax.f32 %v4785, 0.0
  %v4788 = vadd.f32 %v4777, %v4782
  %v4789 = vadd.f32 %v4778, %v4782
  %v4790 = vmax.f32 %v4788, 0.0
  %v4791 = vmax.f32 %v4789, 0.0
  %v4793 = vlaneseq
  %v4794 = vshrl.u32 %v4793, 7
  %v4795 = vsub.s32 0, %v4794
  %v4796 = vrot.slane %v3591, %v4795
  %v4797 = vlaneseq
  %v4798 = vshrl.u32 %v4797, 7
  %v4799 = vsub.s32 1, %v4798
  %v4800 = vrot.slane %v3591, %v4799
  %v4803 = vmul.f32 %v4786, %v4796
  %v4804 = vmul.f32 %v4787, %v4800
  %v4805 = vsel %vm3446, %v4804, 0.0
  %v4806 = vadd.f32 %v4803, %v4805
  %4807 = vadd.xlane.f32.xlu0 %v4806
  %v4808 = vpop.xlane.xlu0 %4807
  %v4809 = vadd.f32 %v4808, 0.0
  %v4810 = vmul.f32 %v4803, %v4786
  %v4811 = vmul.f32 %v4804, %v4787
  %v4812 = vsel %vm3446, %v4811, 0.0
  %v4813 = vadd.f32 %v4810, %v4812
  %4814 = vadd.xlane.f32.xlu0 %v4813
  %v4815 = vpop.xlane.xlu0 %4814
  %v4816 = vadd.f32 %v4815, 0.0
  %v4817 = vmul.f32 %v4790, %v4796
  %v4818 = vmul.f32 %v4791, %v4800
  %v4819 = vsel %vm3446, %v4818, 0.0
  %v4820 = vadd.f32 %v4817, %v4819
  %4821 = vadd.xlane.f32.xlu0 %v4820
  %v4822 = vpop.xlane.xlu0 %4821
  %v4823 = vadd.f32 %v4809, %v4822
  %v4824 = vmul.f32 %v4817, %v4790
  %v4825 = vmul.f32 %v4818, %v4791
  %v4826 = vsel %vm3446, %v4825, 0.0
  %v4827 = vadd.f32 %v4824, %v4826
  %4828 = vadd.xlane.f32.xlu0 %v4827
  %v4829 = vpop.xlane.xlu0 %4828
  %v4830 = vadd.f32 %v4816, %v4829
  %v4831 = vmul.f32 %v4823, 0.01
  %v4832 = vmul.f32 %v4830, 0.01
  %v4833 = vmul.f32 %v4831, %v4831
  %v4834 = vsub.f32 %v4832, %v4833
  %v4835 = vmax.f32 %v4834, 0.0
  %v4836 = vadd.f32 %v4835, 1e-05
  %v4837 = vrsqrt.pop %v4836
  %v4838 = vmul.f32 %v3589, %v4837
  %v4839 = vmul.f32 %v4831, %v4838
  %v4840 = vsub.f32 %v3590, %v4839
  %4842 = vset.pattern.permute.xlu0 0
  %4843 = vperm.xlu0 %4842, %v4838
  %v4844 = vpop.permute.xlu0 %4843
  %v4846 = vmul.f32 %v4786, %v4844
  %v4847 = vmul.f32 %v4787, %v4844
  %4849 = vset.pattern.permute.xlu0 0
  %4850 = vperm.xlu0 %4849, %v4840
  %v4851 = vpop.permute.xlu0 %4850
  %v4853 = vadd.f32 %v4846, %v4851
  %v4854 = vadd.f32 %v4847, %v4851
  %v4855 = vmul.f32 %v4790, %v4844
  %v4856 = vmul.f32 %v4791, %v4844
  %v4857 = vadd.f32 %v4855, %v4851
  %v4858 = vadd.f32 %v4856, %v4851
  %v4859 = vsel %vm3446, %v4854, 0.0
  %v4860 = vsel %vm3446, %v4858, 0.0
  %v4861 = vld [vmem:[%s3] sm:$0xff]
  %v4862 = vld [vmem:[%s3 + $0x8] sm:$0xff]
  %v4863 = vld [vmem:[%s3 + $0x10] sm:$0xff]
  %v4864 = vld [vmem:[%s3 + $0x18] sm:$0xff]
  %v4865 = vld [vmem:[%s3 + $0x20] sm:$0xff]
  %v4866 = vld [vmem:[%s3 + $0x28] sm:$0xff]
  %v4867 = vld [vmem:[%s3 + $0x30] sm:$0xff]
  %v4868 = vld [vmem:[%s3 + $0x38] sm:$0xff]
  %v4869 = vld [vmem:[%s3 + $0x40] sm:$0xff]
  %v4870 = vld [vmem:[%s10] sm:$0xff]
  %v4871 = vld [vmem:[%s11] sm:$0xff]
  %v4872 = vld [vmem:[%s12] sm:$0xff]
  %v4873 = vld [vmem:[%s15] sm:$0x3]
  %v4874 = vpack.c.bf16 %v4861, %v4861
  %v4875 = vpack.c.bf16 %v4857, %v4853
  %v4876 = vpack.c.bf16 %v4860, %v4859
  %v4877 = vpack.c.bf16 %v4862, %v4862
  %4880 = vrot.lane.b32.xlu0 %v4875, 127
  %v4881 = vpop.permute.xlu0 %4880
  %4882 = vrot.lane.b32.xlu0 %v4876, 127
  %v4883 = vpop.permute.xlu0 %4882
  %v4884 = vsel %vm125, %v4881, %v4883
  %v4889 = vsel %vm3630, %v4877, 0
  %4891 = vmatprep.subr.bf16.mxu0 %v3746
  %4892 = vmatpush1.bf16.msra.mxu0 %v3746
  %4893 = vmatprep.subr.bf16.mxu0 %v4883
  %4894 = vmatpush1.bf16.msra.mxu0 %v4884
  %4895 = vmatprep.subr.bf16.mxu0 %v3754
  %4896 = vmatpush1.bf16.msra.mxu0 %v3754
  %4897 = vmatprep.subr.bf16.mxu0 0
  %4898 = vmatpush1.bf16.msra.mxu0 0
  %4899 = vmatprep.subr.bf16.mxu0 0
  %4900 = vmatpush1.bf16.msra.mxu0 0
  %4901 = vmatprep.subr.bf16.mxu0 0
  %4902 = vmatpush1.bf16.msra.mxu0 0
  %4903 = vmatprep.subr.bf16.mxu0 0
  %4904 = vmatpush1.bf16.msra.mxu0 0
  %4905 = vmatprep.subr.bf16.mxu0 0
  %4906 = vmatpush1.bf16.msra.mxu0 0
  %4907 = vmatprep.subr.bf16.mxu0 0
  %4908 = vmatpush1.bf16.msra.mxu0 0
  %4909 = vmatprep.subr.bf16.mxu0 0
  %4910 = vmatpush1.bf16.msra.mxu0 0
  %4911 = vmatprep.subr.bf16.mxu0 0
  %4912 = vmatpush1.bf16.msra.mxu0 0
  %4913 = vmatprep.subr.bf16.mxu0 0
  %4914 = vmatpush1.bf16.msra.mxu0 0
  %4915 = vmatprep.subr.bf16.mxu0 0
  %4916 = vmatpush1.bf16.msra.mxu0 0
  %4917 = vmatprep.subr.bf16.mxu0 0
  %4918 = vmatpush1.bf16.msra.mxu0 0
  %4919 = vmatprep.subr.bf16.mxu0 0
  %4920 = vmatpush1.bf16.msra.mxu0 0
  %4921 = vmatprep.subr.bf16.mxu0 0
  %4922 = vmatpush1.bf16.msra.mxu0 0
  %4923 = vmatprep.mubr.bf16.mxu0 0
  %4924 = vmatmul.mubr.bf16.gmra.mrb[0].mxu0 %v4889
  %v4925 = vpop.f32.mrb[0].mxu0
  %v4926 = vadd.f32 0.0, %v4925
  %v4927 = vpop.f32.mrb[0].mxu0
  %v4928 = vadd.f32 0.0, %v4927
  %v4929 = vpop.f32.mrb[0].mxu0
  %v4930 = vpop.f32.mrb[0].mxu0
  %4931 = vdwg.mxu0
  %v4933 = vsel %vm3630, %v4874, 0
  %4935 = vmatprep.subr.bf16.mxu0 %v3603
  %4936 = vmatpush1.bf16.msra.mxu0 %v3603
  %4937 = vmatprep.subr.bf16.mxu0 %v4876
  %4938 = vmatpush1.bf16.msra.mxu0 %v4875
  %4939 = vmatprep.subr.bf16.mxu0 %v3798
  %4940 = vmatpush1.bf16.msra.mxu0 %v3798
  %4941 = vmatprep.subr.bf16.mxu0 0
  %4942 = vmatpush1.bf16.msra.mxu0 0
  %4943 = vmatprep.subr.bf16.mxu0 0
  %4944 = vmatpush1.bf16.msra.mxu0 0
  %4945 = vmatprep.subr.bf16.mxu0 0
  %4946 = vmatpush1.bf16.msra.mxu0 0
  %4947 = vmatprep.subr.bf16.mxu0 0
  %4948 = vmatpush1.bf16.msra.mxu0 0
  %4949 = vmatprep.subr.bf16.mxu0 0
  %4950 = vmatpush1.bf16.msra.mxu0 0
  %4951 = vmatprep.subr.bf16.mxu0 0
  %4952 = vmatpush1.bf16.msra.mxu0 0
  %4953 = vmatprep.subr.bf16.mxu0 0
  %4954 = vmatpush1.bf16.msra.mxu0 0
  %4955 = vmatprep.subr.bf16.mxu0 0
  %4956 = vmatpush1.bf16.msra.mxu0 0
  %4957 = vmatprep.subr.bf16.mxu0 0
  %4958 = vmatpush1.bf16.msra.mxu0 0
  %4959 = vmatprep.subr.bf16.mxu0 0
  %4960 = vmatpush1.bf16.msra.mxu0 0
  %4961 = vmatprep.subr.bf16.mxu0 0
  %4962 = vmatpush1.bf16.msra.mxu0 0
  %4963 = vmatprep.subr.bf16.mxu0 0
  %4964 = vmatpush1.bf16.msra.mxu0 0
  %4965 = vmatprep.subr.bf16.mxu0 0
  %4966 = vmatpush1.bf16.msra.mxu0 0
  %4967 = vmatprep.mubr.bf16.mxu0 0
  %4968 = vmatmul.mubr.bf16.gmra.mrb[0].mxu0 %v4933
  %v4969 = vpop.f32.mrb[0].mxu0
  %v4970 = vadd.f32 %v4926, %v4969
  %v4971 = vpop.f32.mrb[0].mxu0
  %v4972 = vadd.f32 %v4928, %v4971
  %v4973 = vpop.f32.mrb[0].mxu0
  %v4974 = vpop.f32.mrb[0].mxu0
  %4975 = vdwg.mxu0
  %v4976 = vpack.c.bf16 %v4863, %v4863
  %4977 = vrot.lane.b32.xlu0 %v4875, 126
  %v4978 = vpop.permute.xlu0 %4977
  %4979 = vrot.lane.b32.xlu0 %v4876, 126
  %v4980 = vpop.permute.xlu0 %4979
  %v4981 = vsel %vm816, %v4978, %v4980
  %v4986 = vsel %vm3630, %v4976, 0
  %4988 = vmatprep.subr.bf16.mxu0 %v3922
  %4989 = vmatpush1.bf16.msra.mxu0 %v3922
  %4990 = vmatprep.subr.bf16.mxu0 %v4980
  %4991 = vmatpush1.bf16.msra.mxu0 %v4981
  %4992 = vmatprep.subr.bf16.mxu0 %v3930
  %4993 = vmatpush1.bf16.msra.mxu0 %v3930
  %4994 = vmatprep.subr.bf16.mxu0 0
  %4995 = vmatpush1.bf16.msra.mxu0 0
  %4996 = vmatprep.subr.bf16.mxu0 0
  %4997 = vmatpush1.bf16.msra.mxu0 0
  %4998 = vmatprep.subr.bf16.mxu0 0
  %4999 = vmatpush1.bf16.msra.mxu0 0
  %5000 = vmatprep.subr.bf16.mxu0 0
  %5001 = vmatpush1.bf16.msra.mxu0 0
  %5002 = vmatprep.subr.bf16.mxu0 0
  %5003 = vmatpush1.bf16.msra.mxu0 0
  %5004 = vmatprep.subr.bf16.mxu0 0
  %5005 = vmatpush1.bf16.msra.mxu0 0
  %5006 = vmatprep.subr.bf16.mxu0 0
  %5007 = vmatpush1.bf16.msra.mxu0 0
  %5008 = vmatprep.subr.bf16.mxu0 0
  %5009 = vmatpush1.bf16.msra.mxu0 0
  %5010 = vmatprep.subr.bf16.mxu0 0
  %5011 = vmatpush1.bf16.msra.mxu0 0
  %5012 = vmatprep.subr.bf16.mxu0 0
  %5013 = vmatpush1.bf16.msra.mxu0 0
  %5014 = vmatprep.subr.bf16.mxu0 0
  %5015 = vmatpush1.bf16.msra.mxu0 0
  %5016 = vmatprep.subr.bf16.mxu0 0
  %5017 = vmatpush1.bf16.msra.mxu0 0
  %5018 = vmatprep.subr.bf16.mxu0 0
  %5019 = vmatpush1.bf16.msra.mxu0 0
  %5020 = vmatprep.mubr.bf16.mxu0 0
  %5021 = vmatmul.mubr.bf16.gmra.mrb[0].mxu0 %v4986
  %v5022 = vpop.f32.mrb[0].mxu0
  %v5023 = vadd.f32 0.0, %v5022
  %v5024 = vpop.f32.mrb[0].mxu0
  %v5025 = vadd.f32 0.0, %v5024
  %v5026 = vpop.f32.mrb[0].mxu0
  %v5027 = vpop.f32.mrb[0].mxu0
  %5028 = vdwg.mxu0
  %v5029 = vadd.f32 %v4970, %v5023
  %v5030 = vadd.f32 %v4972, %v5025
  %v5031 = vpack.c.bf16 %v4864, %v4864
  %5032 = vrot.lane.b32.xlu0 %v4875, 119
  %v5033 = vpop.permute.xlu0 %5032
  %5034 = vrot.lane.b32.xlu0 %v4876, 119
  %v5035 = vpop.permute.xlu0 %5034
  %v5036 = vsel %vm1187, %v5033, %v5035
  %v5041 = vsel %vm3630, %v5031, 0
  %5043 = vmatprep.subr.bf16.mxu0 %v4056
  %5044 = vmatpush1.bf16.msra.mxu0 %v4056
  %5045 = vmatprep.subr.bf16.mxu0 %v5035
  %5046 = vmatpush1.bf16.msra.mxu0 %v5036
  %5047 = vmatprep.subr.bf16.mxu0 %v4064
  %5048 = vmatpush1.bf16.msra.mxu0 %v4064
  %5049 = vmatprep.subr.bf16.mxu0 0
  %5050 = vmatpush1.bf16.msra.mxu0 0
  %5051 = vmatprep.subr.bf16.mxu0 0
  %5052 = vmatpush1.bf16.msra.mxu0 0
  %5053 = vmatprep.subr.bf16.mxu0 0
  %5054 = vmatpush1.bf16.msra.mxu0 0
  %5055 = vmatprep.subr.bf16.mxu0 0
  %5056 = vmatpush1.bf16.msra.mxu0 0
  %5057 = vmatprep.subr.bf16.mxu0 0
  %5058 = vmatpush1.bf16.msra.mxu0 0
  %5059 = vmatprep.subr.bf16.mxu0 0
  %5060 = vmatpush1.bf16.msra.mxu0 0
  %5061 = vmatprep.subr.bf16.mxu0 0
  %5062 = vmatpush1.bf16.msra.mxu0 0
  %5063 = vmatprep.subr.bf16.mxu0 0
  %5064 = vmatpush1.bf16.msra.mxu0 0
  %5065 = vmatprep.subr.bf16.mxu0 0
  %5066 = vmatpush1.bf16.msra.mxu0 0
  %5067 = vmatprep.subr.bf16.mxu0 0
  %5068 = vmatpush1.bf16.msra.mxu0 0
  %5069 = vmatprep.subr.bf16.mxu0 0
  %5070 = vmatpush1.bf16.msra.mxu0 0
  %5071 = vmatprep.subr.bf16.mxu0 0
  %5072 = vmatpush1.bf16.msra.mxu0 0
  %5073 = vmatprep.subr.bf16.mxu0 0
  %5074 = vmatpush1.bf16.msra.mxu0 0
  %5075 = vmatprep.mubr.bf16.mxu0 0
  %5076 = vmatmul.mubr.bf16.gmra.mrb[0].mxu0 %v5041
  %v5077 = vpop.f32.mrb[0].mxu0
  %v5078 = vadd.f32 0.0, %v5077
  %v5079 = vpop.f32.mrb[0].mxu0
  %v5080 = vadd.f32 0.0, %v5079
  %v5081 = vpop.f32.mrb[0].mxu0
  %v5082 = vpop.f32.mrb[0].mxu0
  %5083 = vdwg.mxu0
  %v5084 = vadd.f32 %v5029, %v5078
  %v5085 = vadd.f32 %v5030, %v5080
  %v5086 = vpack.c.bf16 %v4865, %v4865
  %5087 = vrot.lane.b32.xlu0 %v4875, 118
  %v5088 = vpop.permute.xlu0 %5087
  %5089 = vrot.lane.b32.xlu0 %v4876, 118
  %v5090 = vpop.permute.xlu0 %5089
  %v5091 = vsel %vm1558, %v5088, %v5090
  %v5096 = vsel %vm3630, %v5086, 0
  %5098 = vmatprep.subr.bf16.mxu0 %v4190
  %5099 = vmatpush1.bf16.msra.mxu0 %v4190
  %5100 = vmatprep.subr.bf16.mxu0 %v5090
  %5101 = vmatpush1.bf16.msra.mxu0 %v5091
  %5102 = vmatprep.subr.bf16.mxu0 %v4198
  %5103 = vmatpush1.bf16.msra.mxu0 %v4198
  %5104 = vmatprep.subr.bf16.mxu0 0
  %5105 = vmatpush1.bf16.msra.mxu0 0
  %5106 = vmatprep.subr.bf16.mxu0 0
  %5107 = vmatpush1.bf16.msra.mxu0 0
  %5108 = vmatprep.subr.bf16.mxu0 0
  %5109 = vmatpush1.bf16.msra.mxu0 0
  %5110 = vmatprep.subr.bf16.mxu0 0
  %5111 = vmatpush1.bf16.msra.mxu0 0
  %5112 = vmatprep.subr.bf16.mxu0 0
  %5113 = vmatpush1.bf16.msra.mxu0 0
  %5114 = vmatprep.subr.bf16.mxu0 0
  %5115 = vmatpush1.bf16.msra.mxu0 0
  %5116 = vmatprep.subr.bf16.mxu0 0
  %5117 = vmatpush1.bf16.msra.mxu0 0
  %5118 = vmatprep.subr.bf16.mxu0 0
  %5119 = vmatpush1.bf16.msra.mxu0 0
  %5120 = vmatprep.subr.bf16.mxu0 0
  %5121 = vmatpush1.bf16.msra.mxu0 0
  %5122 = vmatprep.subr.bf16.mxu0 0
  %5123 = vmatpush1.bf16.msra.mxu0 0
  %5124 = vmatprep.subr.bf16.mxu0 0
  %5125 = vmatpush1.bf16.msra.mxu0 0
  %5126 = vmatprep.subr.bf16.mxu0 0
  %5127 = vmatpush1.bf16.msra.mxu0 0
  %5128 = vmatprep.subr.bf16.mxu0 0
  %5129 = vmatpush1.bf16.msra.mxu0 0
  %5130 = vmatprep.mubr.bf16.mxu0 0
  %5131 = vmatmul.mubr.bf16.gmra.mrb[0].mxu0 %v5096
  %v5132 = vpop.f32.mrb[0].mxu0
  %v5133 = vadd.f32 0.0, %v5132
  %v5134 = vpop.f32.mrb[0].mxu0
  %v5135 = vadd.f32 0.0, %v5134
  %v5136 = vpop.f32.mrb[0].mxu0
  %v5137 = vpop.f32.mrb[0].mxu0
  %5138 = vdwg.mxu0
  %v5139 = vadd.f32 %v5084, %v5133
  %v5140 = vadd.f32 %v5085, %v5135
  %v5141 = vpack.c.bf16 %v4866, %v4866
  %5142 = vrot.lane.b32.xlu0 %v4875, 117
  %v5143 = vpop.permute.xlu0 %5142
  %5144 = vrot.lane.b32.xlu0 %v4876, 117
  %v5145 = vpop.permute.xlu0 %5144
  %v5146 = vsel %vm1929, %v5143, %v5145
  %v5151 = vsel %vm3630, %v5141, 0
  %5153 = vmatprep.subr.bf16.mxu0 %v4324
  %5154 = vmatpush1.bf16.msra.mxu0 %v4324
  %5155 = vmatprep.subr.bf16.mxu0 %v5145
  %5156 = vmatpush1.bf16.msra.mxu0 %v5146
  %5157 = vmatprep.subr.bf16.mxu0 %v4332
  %5158 = vmatpush1.bf16.msra.mxu0 %v4332
  %5159 = vmatprep.subr.bf16.mxu0 0
  %5160 = vmatpush1.bf16.msra.mxu0 0
  %5161 = vmatprep.subr.bf16.mxu0 0
  %5162 = vmatpush1.bf16.msra.mxu0 0
  %5163 = vmatprep.subr.bf16.mxu0 0
  %5164 = vmatpush1.bf16.msra.mxu0 0
  %5165 = vmatprep.subr.bf16.mxu0 0
  %5166 = vmatpush1.bf16.msra.mxu0 0
  %5167 = vmatprep.subr.bf16.mxu0 0
  %5168 = vmatpush1.bf16.msra.mxu0 0
  %5169 = vmatprep.subr.bf16.mxu0 0
  %5170 = vmatpush1.bf16.msra.mxu0 0
  %5171 = vmatprep.subr.bf16.mxu0 0
  %5172 = vmatpush1.bf16.msra.mxu0 0
  %5173 = vmatprep.subr.bf16.mxu0 0
  %5174 = vmatpush1.bf16.msra.mxu0 0
  %5175 = vmatprep.subr.bf16.mxu0 0
  %5176 = vmatpush1.bf16.msra.mxu0 0
  %5177 = vmatprep.subr.bf16.mxu0 0
  %5178 = vmatpush1.bf16.msra.mxu0 0
  %5179 = vmatprep.subr.bf16.mxu0 0
  %5180 = vmatpush1.bf16.msra.mxu0 0
  %5181 = vmatprep.subr.bf16.mxu0 0
  %5182 = vmatpush1.bf16.msra.mxu0 0
  %5183 = vmatprep.subr.bf16.mxu0 0
  %5184 = vmatpush1.bf16.msra.mxu0 0
  %5185 = vmatprep.mubr.bf16.mxu0 0
  %5186 = vmatmul.mubr.bf16.gmra.mrb[0].mxu0 %v5151
  %v5187 = vpop.f32.mrb[0].mxu0
  %v5188 = vadd.f32 0.0, %v5187
  %v5189 = vpop.f32.mrb[0].mxu0
  %v5190 = vadd.f32 0.0, %v5189
  %v5191 = vpop.f32.mrb[0].mxu0
  %v5192 = vpop.f32.mrb[0].mxu0
  %5193 = vdwg.mxu0
  %v5194 = vadd.f32 %v5139, %v5188
  %v5195 = vadd.f32 %v5140, %v5190
  %v5196 = vpack.c.bf16 %v4867, %v4867
  %5197 = vrot.lane.b32.xlu0 %v4875, 110
  %v5198 = vpop.permute.xlu0 %5197
  %5199 = vrot.lane.b32.xlu0 %v4876, 110
  %v5200 = vpop.permute.xlu0 %5199
  %v5201 = vsel %vm2300, %v5198, %v5200
  %v5206 = vsel %vm3630, %v5196, 0
  %5208 = vmatprep.subr.bf16.mxu0 %v4458
  %5209 = vmatpush1.bf16.msra.mxu0 %v4458
  %5210 = vmatprep.subr.bf16.mxu0 %v5200
  %5211 = vmatpush1.bf16.msra.mxu0 %v5201
  %5212 = vmatprep.subr.bf16.mxu0 %v4466
  %5213 = vmatpush1.bf16.msra.mxu0 %v4466
  %5214 = vmatprep.subr.bf16.mxu0 0
  %5215 = vmatpush1.bf16.msra.mxu0 0
  %5216 = vmatprep.subr.bf16.mxu0 0
  %5217 = vmatpush1.bf16.msra.mxu0 0
  %5218 = vmatprep.subr.bf16.mxu0 0
  %5219 = vmatpush1.bf16.msra.mxu0 0
  %5220 = vmatprep.subr.bf16.mxu0 0
  %5221 = vmatpush1.bf16.msra.mxu0 0
  %5222 = vmatprep.subr.bf16.mxu0 0
  %5223 = vmatpush1.bf16.msra.mxu0 0
  %5224 = vmatprep.subr.bf16.mxu0 0
  %5225 = vmatpush1.bf16.msra.mxu0 0
  %5226 = vmatprep.subr.bf16.mxu0 0
  %5227 = vmatpush1.bf16.msra.mxu0 0
  %5228 = vmatprep.subr.bf16.mxu0 0
  %5229 = vmatpush1.bf16.msra.mxu0 0
  %5230 = vmatprep.subr.bf16.mxu0 0
  %5231 = vmatpush1.bf16.msra.mxu0 0
  %5232 = vmatprep.subr.bf16.mxu0 0
  %5233 = vmatpush1.bf16.msra.mxu0 0
  %5234 = vmatprep.subr.bf16.mxu0 0
  %5235 = vmatpush1.bf16.msra.mxu0 0
  %5236 = vmatprep.subr.bf16.mxu0 0
  %5237 = vmatpush1.bf16.msra.mxu0 0
  %5238 = vmatprep.subr.bf16.mxu0 0
  %5239 = vmatpush1.bf16.msra.mxu0 0
  %5240 = vmatprep.mubr.bf16.mxu0 0
  %5241 = vmatmul.mubr.bf16.gmra.mrb[0].mxu0 %v5206
  %v5242 = vpop.f32.mrb[0].mxu0
  %v5243 = vadd.f32 0.0, %v5242
  %v5244 = vpop.f32.mrb[0].mxu0
  %v5245 = vadd.f32 0.0, %v5244
  %v5246 = vpop.f32.mrb[0].mxu0
  %v5247 = vpop.f32.mrb[0].mxu0
  %5248 = vdwg.mxu0
  %v5249 = vadd.f32 %v5194, %v5243
  %v5250 = vadd.f32 %v5195, %v5245
  %v5251 = vpack.c.bf16 %v4868, %v4868
  %5252 = vrot.lane.b32.xlu0 %v4875, 109
  %v5253 = vpop.permute.xlu0 %5252
  %5254 = vrot.lane.b32.xlu0 %v4876, 109
  %v5255 = vpop.permute.xlu0 %5254
  %v5256 = vsel %vm2671, %v5253, %v5255
  %v5261 = vsel %vm3630, %v5251, 0
  %5263 = vmatprep.subr.bf16.mxu0 %v4592
  %5264 = vmatpush1.bf16.msra.mxu0 %v4592
  %5265 = vmatprep.subr.bf16.mxu0 %v5255
  %5266 = vmatpush1.bf16.msra.mxu0 %v5256
  %5267 = vmatprep.subr.bf16.mxu0 %v4600
  %5268 = vmatpush1.bf16.msra.mxu0 %v4600
  %5269 = vmatprep.subr.bf16.mxu0 0
  %5270 = vmatpush1.bf16.msra.mxu0 0
  %5271 = vmatprep.subr.bf16.mxu0 0
  %5272 = vmatpush1.bf16.msra.mxu0 0
  %5273 = vmatprep.subr.bf16.mxu0 0
  %5274 = vmatpush1.bf16.msra.mxu0 0
  %5275 = vmatprep.subr.bf16.mxu0 0
  %5276 = vmatpush1.bf16.msra.mxu0 0
  %5277 = vmatprep.subr.bf16.mxu0 0
  %5278 = vmatpush1.bf16.msra.mxu0 0
  %5279 = vmatprep.subr.bf16.mxu0 0
  %5280 = vmatpush1.bf16.msra.mxu0 0
  %5281 = vmatprep.subr.bf16.mxu0 0
  %5282 = vmatpush1.bf16.msra.mxu0 0
  %5283 = vmatprep.subr.bf16.mxu0 0
  %5284 = vmatpush1.bf16.msra.mxu0 0
  %5285 = vmatprep.subr.bf16.mxu0 0
  %5286 = vmatpush1.bf16.msra.mxu0 0
  %5287 = vmatprep.subr.bf16.mxu0 0
  %5288 = vmatpush1.bf16.msra.mxu0 0
  %5289 = vmatprep.subr.bf16.mxu0 0
  %5290 = vmatpush1.bf16.msra.mxu0 0
  %5291 = vmatprep.subr.bf16.mxu0 0
  %5292 = vmatpush1.bf16.msra.mxu0 0
  %5293 = vmatprep.subr.bf16.mxu0 0
  %5294 = vmatpush1.bf16.msra.mxu0 0
  %5295 = vmatprep.mubr.bf16.mxu0 0
  %5296 = vmatmul.mubr.bf16.gmra.mrb[0].mxu0 %v5261
  %v5297 = vpop.f32.mrb[0].mxu0
  %v5298 = vadd.f32 0.0, %v5297
  %v5299 = vpop.f32.mrb[0].mxu0
  %v5300 = vadd.f32 0.0, %v5299
  %v5301 = vpop.f32.mrb[0].mxu0
  %v5302 = vpop.f32.mrb[0].mxu0
  %5303 = vdwg.mxu0
  %v5304 = vadd.f32 %v5249, %v5298
  %v5305 = vadd.f32 %v5250, %v5300
  %v5306 = vpack.c.bf16 %v4869, %v4869
  %5307 = vrot.lane.b32.xlu0 %v4875, 108
  %v5308 = vpop.permute.xlu0 %5307
  %5309 = vrot.lane.b32.xlu0 %v4876, 108
  %v5310 = vpop.permute.xlu0 %5309
  %v5311 = vsel %vm3042, %v5308, %v5310
  %v5316 = vsel %vm3630, %v5306, 0
  %5318 = vmatprep.subr.bf16.mxu0 %v4726
  %5319 = vmatpush1.bf16.msra.mxu0 %v4726
  %5320 = vmatprep.subr.bf16.mxu0 %v5310
  %5321 = vmatpush1.bf16.msra.mxu0 %v5311
  %5322 = vmatprep.subr.bf16.mxu0 %v4734
  %5323 = vmatpush1.bf16.msra.mxu0 %v4734
  %5324 = vmatprep.subr.bf16.mxu0 0
  %5325 = vmatpush1.bf16.msra.mxu0 0
  %5326 = vmatprep.subr.bf16.mxu0 0
  %5327 = vmatpush1.bf16.msra.mxu0 0
  %5328 = vmatprep.subr.bf16.mxu0 0
  %5329 = vmatpush1.bf16.msra.mxu0 0
  %5330 = vmatprep.subr.bf16.mxu0 0
  %5331 = vmatpush1.bf16.msra.mxu0 0
  %5332 = vmatprep.subr.bf16.mxu0 0
  %5333 = vmatpush1.bf16.msra.mxu0 0
  %5334 = vmatprep.subr.bf16.mxu0 0
  %5335 = vmatpush1.bf16.msra.mxu0 0
  %5336 = vmatprep.subr.bf16.mxu0 0
  %5337 = vmatpush1.bf16.msra.mxu0 0
  %5338 = vmatprep.subr.bf16.mxu0 0
  %5339 = vmatpush1.bf16.msra.mxu0 0
  %5340 = vmatprep.subr.bf16.mxu0 0
  %5341 = vmatpush1.bf16.msra.mxu0 0
  %5342 = vmatprep.subr.bf16.mxu0 0
  %5343 = vmatpush1.bf16.msra.mxu0 0
  %5344 = vmatprep.subr.bf16.mxu0 0
  %5345 = vmatpush1.bf16.msra.mxu0 0
  %5346 = vmatprep.subr.bf16.mxu0 0
  %5347 = vmatpush1.bf16.msra.mxu0 0
  %5348 = vmatprep.subr.bf16.mxu0 0
  %5349 = vmatpush1.bf16.msra.mxu0 0
  %5350 = vmatprep.mubr.bf16.mxu0 0
  %5351 = vmatmul.mubr.bf16.gmra.mrb[0].mxu0 %v5316
  %v5352 = vpop.f32.mrb[0].mxu0
  %v5353 = vadd.f32 0.0, %v5352
  %v5354 = vpop.f32.mrb[0].mxu0
  %v5355 = vadd.f32 0.0, %v5354
  %v5356 = vpop.f32.mrb[0].mxu0
  %v5357 = vpop.f32.mrb[0].mxu0
  %5358 = vdwg.mxu0
  %v5359 = vadd.f32 %v5304, %v5353
  %v5360 = vadd.f32 %v5305, %v5355
  %5362 = vset.pattern.permute.xlu0 0
  %5363 = vperm.xlu0 %5362, %v4870
  %v5364 = vpop.permute.xlu0 %5363
  %v5366 = vadd.f32 %v5359, %v5364
  %v5367 = vadd.f32 %v5360, %v5364
  %v5368 = vmax.f32 %v5366, 0.0
  %v5369 = vmax.f32 %v5367, 0.0
  %v5371 = vlaneseq
  %v5372 = vshrl.u32 %v5371, 7
  %v5373 = vsub.s32 0, %v5372
  %v5374 = vrot.slane %v4873, %v5373
  %v5375 = vlaneseq
  %v5376 = vshrl.u32 %v5375, 7
  %v5377 = vsub.s32 1, %v5376
  %v5378 = vrot.slane %v4873, %v5377
  %v5381 = vmul.f32 %v5368, %v5374
  %v5382 = vmul.f32 %v5369, %v5378
  %v5383 = vsel %vm3446, %v5382, 0.0
  %v5384 = vadd.f32 %v5381, %v5383
  %5385 = vadd.xlane.f32.xlu0 %v5384
  %v5386 = vpop.xlane.xlu0 %5385
  %v5387 = vadd.f32 %v5386, 0.0
  %v5388 = vmul.f32 %v5381, %v5368
  %v5389 = vmul.f32 %v5382, %v5369
  %v5390 = vsel %vm3446, %v5389, 0.0
  %v5391 = vadd.f32 %v5388, %v5390
  %5392 = vadd.xlane.f32.xlu0 %v5391
  %v5393 = vpop.xlane.xlu0 %5392
  %v5394 = vadd.f32 %v5393, 0.0
  %v5395 = vmul.f32 %v5387, 0.055555556
  %v5396 = vmul.f32 %v5394, 0.055555556
  %v5397 = vmul.f32 %v5395, %v5395
  %v5398 = vsub.f32 %v5396, %v5397
  %v5399 = vmax.f32 %v5398, 0.0
  %v5400 = vadd.f32 %v5399, 1e-05
  %v5401 = vrsqrt.pop %v5400
  %v5402 = vmul.f32 %v4871, %v5401
  %v5403 = vmul.f32 %v5395, %v5402
  %v5404 = vsub.f32 %v4872, %v5403
  %5406 = vset.pattern.permute.xlu0 0
  %5407 = vperm.xlu0 %5406, %v5402
  %v5408 = vpop.permute.xlu0 %5407
  %v5410 = vmul.f32 %v5368, %v5408
  %v5411 = vmul.f32 %v5369, %v5408
  %5413 = vset.pattern.permute.xlu0 0
  %5414 = vperm.xlu0 %5413, %v5404
  %v5415 = vpop.permute.xlu0 %5414
  %v5417 = vadd.f32 %v5410, %v5415
  %v5418 = vadd.f32 %v5411, %v5415
  %vm5419 = vcmp.gt.f32.partialorder %v4873, 0.5
  %v5420 = vsel %vm5419, 1, 0
  %v5421 = vlaneseq
  %v5422 = vshrl.u32 %v5421, 7
  %v5423 = vsub.s32 0, %v5422
  %v5424 = vrot.slane %v5420, %v5423
  %vm5425 = vcmp.eq.s32.totalorder %v5424, 1
  %v5426 = vsel %vm5425, %v5417, -inf
  %vm5427 = vcmask 662528
  %v5428 = vsel %vm5427, %v5426, -inf
  %5429 = vmax.xlane.f32.xlu0 %v5428
  %v5430 = vpop.xlane.xlu0 %5429
  %v5431 = vlaneseq
  %v5432 = vshrl.u32 %v5431, 7
  %v5433 = vsub.s32 1, %v5432
  %v5434 = vrot.slane %v5420, %v5433
  %vm5435 = vcmp.eq.s32.totalorder %v5434, 1
  %v5436 = vsel %vm5435, %v5418, -inf
  %vm5437 = vcmask 1048200
  %v5438 = vsel %vm5437, %v5426, -inf
  %v5439 = vsel %vm3446, %v5436, -inf
  %v5440 = vmax.f32 %v5438, %v5439
  %5441 = vmax.xlane.f32.xlu0 %v5440
  %v5442 = vpop.xlane.xlu0 %5441
  %vm5443 = vcmask 7168
  %v5444 = vsel %vm5443, %v5430, %v5442
  %vm5445 = vcmask 15360
  %5446 = vst.msk [vmem:[%s16] sm:$0xff] %vm5445, %v5444
  // Predicated region
  $region66: #{forward.1} parent=0 // pred_check
    _
  $region67: #{forward.1} parent=0 // pred_check_branch
    %5448 = sbr.rel (0) target = $region69
  $region68: #{forward.1} parent=0 // pred_region
    _
  $region69: #{forward.1} parent=0 // pred_fallthru
    _
  // Predicated region
  $region70: #{forward.1} parent=0 // pred_check
    _
  $region71: #{forward.1} parent=0 // pred_check_branch
    %5450 = sbr.rel (0) target = $region73
  $region72: #{forward.1} parent=0 // pred_region
    _
  $region73: #{forward.1} parent=0 // pred_fallthru
    _

</llo_original>
